<compile_context>
chip_gen: v7x
topology: tpu7x:2x2x1
jax: 0.10.0
libtpu: 0.0.40
codegen_flags: <defaults>
</compile_context>

<pallas_src>
import functools

import jax
import jax.numpy as jnp
from jax.experimental import pallas as pl
from jax.experimental.pallas import tpu as pltpu

EPS = 1e-5
NEG_SLOPE = 0.2


def _leaky(v):
    # LeakyReLU(0.2): for v>=0 max(v, 0.2v)=v, for v<0 max=0.2v  -> one fewer VALU op.
    return jnp.maximum(v, NEG_SLOPE * v)


# ----------------------------------------------------------------------------------------
# Shared fc1_1 (MXU) + fc1_2 (VPU) + fc2 (split weight, no concat) block.
# ----------------------------------------------------------------------------------------
def _fc1_fc2(x, y, w11_ref, b11_ref, w12_ref, b12_ref, w2a_ref, w2b_ref, b2_ref):
    # fc1_1: bf16 weights on the MXU, f32 accumulation, f32 epilogue.
    h1 = _leaky(jnp.dot(x.astype(jnp.bfloat16), w11_ref[...],
                        preferred_element_type=jnp.float32) + b11_ref[...])    # (T,1024)

    # fc1_2: K=3 -> three VPU broadcast-FMAs instead of a degenerate MXU matmul.
    # TODO(synk): on v6e/v7x a one-hot-label table (leaky(W12+b12) pre-imaged under w2b)
    #             would remove this VPU work entirely; kept generic here.
    w12 = w12_ref[...]                                                          # (3,1024)
    z12 = (y[:, 0:1] * w12[0:1, :]
           + y[:, 1:2] * w12[1:2, :]
           + y[:, 2:3] * w12[2:3, :]) + b12_ref[...]
    h2 = _leaky(z12)                                                            # (T,1024)

    # fc2 without materializing the (T,2048) concat: split-weight accumulation.
    z2 = (jnp.dot(h1.astype(jnp.bfloat16), w2a_ref[...],
                  preferred_element_type=jnp.float32)
          + jnp.dot(h2.astype(jnp.bfloat16), w2b_ref[...],
                    preferred_element_type=jnp.float32)
          + b2_ref[...])                                                        # (T,512)
    return z2


def _bn_fold(mu, var, gamma, beta):
    scale = gamma * jax.lax.rsqrt(jnp.maximum(var, 0.0) + EPS)
    shift = beta - mu * scale
    return scale, shift


# ----------------------------------------------------------------------------------------
# Fully fused single-tile kernel (whole batch in one tile; BN stats are batch stats).
# ----------------------------------------------------------------------------------------
def fused_kernel(x_ref, y_ref, w11_ref, b11_ref, w12_ref, b12_ref,
                 w2a_ref, w2b_ref, b2_ref, g2_ref, be2_ref,
                 w3_ref, b3_ref, g3_ref, be3_ref, w4t_ref, b4_ref,
                 out_ref, *, batch):
    inv_b = 1.0 / batch

    z2 = _fc1_fc2(x_ref[...], y_ref[...], w11_ref, b11_ref, w12_ref, b12_ref,
                  w2a_ref, w2b_ref, b2_ref)                                     # (B,512)

    mu2 = jnp.sum(z2, axis=0, keepdims=True) * inv_b
    var2 = jnp.sum(z2 * z2, axis=0, keepdims=True) * inv_b - mu2 * mu2
    sc2, sh2 = _bn_fold(mu2, var2, g2_ref[...], be2_ref[...])
    h = _leaky(z2 * sc2 + sh2)

    z3 = jnp.dot(h.astype(jnp.bfloat16), w3_ref[...],
                 preferred_element_type=jnp.float32) + b3_ref[...]              # (B,256)

    mu3 = jnp.sum(z3, axis=0, keepdims=True) * inv_b
    var3 = jnp.sum(z3 * z3, axis=0, keepdims=True) * inv_b - mu3 * mu3
    sc3, sh3 = _bn_fold(mu3, var3, g3_ref[...], be3_ref[...])
    h = _leaky(z3 * sc3 + sh3)

    # fc4 (out_features == 1): broadcast-multiply + lane reduction.
    z4 = jnp.sum(h * w4t_ref[...], axis=1, keepdims=True) + b4_ref[...]         # (B,1)
    out_ref[...] = 1.0 / (1.0 + jnp.exp(-z4))


# ----------------------------------------------------------------------------------------
# Multi-tile pass 1: fc1/fc2, emit z2 and per-core partial BN2 statistics.
# Grid = (n_split, tiles_per); leading axis "parallel" (both v7x cores), trailing
# "arbitrary" (stats accumulate in a resident (1,512) block per core).
# ----------------------------------------------------------------------------------------
def fc1_fc2_kernel(x_ref, y_ref, w11_ref, b11_ref, w12_ref, b12_ref,
                   w2a_ref, w2b_ref, b2_ref,
                   z2_ref, s2_ref, ss2_ref):
    i = pl.program_id(1)

    z2 = _fc1_fc2(x_ref[...], y_ref[...], w11_ref, b11_ref, w12_ref, b12_ref,
                  w2a_ref, w2b_ref, b2_ref)
    z2_ref[...] = z2

    @pl.when(i == 0)
    def _():
        s2_ref[...] = jnp.zeros_like(s2_ref)
        ss2_ref[...] = jnp.zeros_like(ss2_ref)

    s2_ref[...] += jnp.sum(z2, axis=0, keepdims=True)
    ss2_ref[...] += jnp.sum(z2 * z2, axis=0, keepdims=True)


# ----------------------------------------------------------------------------------------
# Multi-tile pass 2: apply folded BN2 (scale/shift precomputed), fc3, partial BN3 stats.
# ----------------------------------------------------------------------------------------
def bn2_fc3_kernel(z2_ref, sc2_ref, sh2_ref, w3_ref, b3_ref,
                   z3_ref, s3_ref, ss3_ref):
    i = pl.program_id(1)

    h = _leaky(z2_ref[...] * sc2_ref[...] + sh2_ref[...])
    z3 = jnp.dot(h.astype(jnp.bfloat16), w3_ref[...],
                 preferred_element_type=jnp.float32) + b3_ref[...]
    z3_ref[...] = z3

    @pl.when(i == 0)
    def _():
        s3_ref[...] = jnp.zeros_like(s3_ref)
        ss3_ref[...] = jnp.zeros_like(ss3_ref)

    s3_ref[...] += jnp.sum(z3, axis=0, keepdims=True)
    ss3_ref[...] += jnp.sum(z3 * z3, axis=0, keepdims=True)


# ----------------------------------------------------------------------------------------
# Multi-tile pass 3: apply folded BN3, fc4, sigmoid.  Fully parallel over batch tiles.
# ----------------------------------------------------------------------------------------
def bn3_fc4_kernel(z3_ref, sc3_ref, sh3_ref, w4t_ref, b4_ref, out_ref):
    h = _leaky(z3_ref[...] * sc3_ref[...] + sh3_ref[...])
    z4 = jnp.sum(h * w4t_ref[...], axis=1, keepdims=True) + b4_ref[...]
    out_ref[...] = 1.0 / (1.0 + jnp.exp(-z4))


# ----------------------------------------------------------------------------------------
# Wrapper
# ----------------------------------------------------------------------------------------
TILE_CAP = 1024   # fits 48 MiB scoped VMEM with headroom on every generation (incl. v7x)


def _pick_tile(batch, cap=TILE_CAP):
    if batch <= cap:
        return batch            # single tile -> fully fused path
    # Largest divisor of batch that is <= cap (prefer multiples of 8 for (8,128) tiling);
    # never fall back to an oversized tile (v7x VMEM safety).
    for cand in range(cap - (cap % 8), 7, -8):
        if batch % cand == 0:
            return cand
    for cand in range(cap, 0, -1):
        if batch % cand == 0:
            return cand
    return 1


def _cparams(semantics):
    # <= 48 MiB scoped VMEM: fits v7x's 64 MiB physical VMEM per TC (legal on v5e/v6e too).
    return pltpu.CompilerParams(dimension_semantics=semantics,
                                vmem_limit_bytes=48 << 20)


def _fold_bn_host(s, ss, gamma, beta, batch):
    # Tiny (1,N) XLA op between passes: fold BN stats into per-feature scale/shift.
    mu = s / batch
    var = jnp.maximum(ss / batch - mu * mu, 0.0)
    scale = gamma * jax.lax.rsqrt(var + EPS)
    shift = beta - mu * scale
    return scale, shift


def discriminator_forward(x, label, params, tile=None):
    B = x.shape[0]
    if tile is None or B % tile != 0 or tile > B:
        tile = _pick_tile(B)
    n_tiles = B // tile

    p = params
    fullblk = lambda i: (0, 0)

    # ---------------- fused single-kernel path (common GAN batch sizes) -----------------
    if n_tiles == 1:
        return pl.pallas_call(
            functools.partial(fused_kernel, batch=float(B)),
            grid=(1,),
            in_specs=[
                pl.BlockSpec((B, 784), fullblk),
                pl.BlockSpec((B, 3), fullblk),
                pl.BlockSpec((784, 1024), fullblk),
                pl.BlockSpec((1, 1024), fullblk),
                pl.BlockSpec((3, 1024), fullblk),
                pl.BlockSpec((1, 1024), fullblk),
                pl.BlockSpec((1024, 512), fullblk),
                pl.BlockSpec((1024, 512), fullblk),
                pl.BlockSpec((1, 512), fullblk),
                pl.BlockSpec((1, 512), fullblk),
                pl.BlockSpec((1, 512), fullblk),
                pl.BlockSpec((512, 256), fullblk),
                pl.BlockSpec((1, 256), fullblk),
                pl.BlockSpec((1, 256), fullblk),
                pl.BlockSpec((1, 256), fullblk),
                pl.BlockSpec((1, 256), fullblk),
                pl.BlockSpec((1, 1), fullblk),
            ],
            out_specs=pl.BlockSpec((B, 1), fullblk),
            out_shape=jax.ShapeDtypeStruct((B, 1), jnp.float32),
            compiler_params=_cparams(("arbitrary",)),
        )(x, label, p["w11"], p["b11"], p["w12"], p["b12"],
          p["w2a"], p["w2b"], p["b2"], p["g2"], p["be2"],
          p["w3"], p["b3"], p["g3"], p["be3"], p["w4t"], p["b4"])

    # ---------------- tiled three-pass path (large batches) -----------------------------
    # Split the batch-tile loop across (up to) two TensorCores; each core accumulates its
    # own partial BN statistics row, summed with a tiny XLA op between passes.
    n_split = 2 if (n_tiles % 2 == 0) else 1
    tiles_per = n_tiles // n_split

    rows = lambda c, i: (c * tiles_per + i, 0)     # per-batch-tile blocks
    const = lambda c, i: (0, 0)                    # replicated weight/bias blocks
    stats = lambda c, i: (c, 0)                    # per-core resident stats accumulator

    # ---- pass 1: fc1_1 + fc1_2 + fc2, accumulate BN2 stats ----------------------------
    z2, s2p, ss2p = pl.pallas_call(
        fc1_fc2_kernel,
        grid=(n_split, tiles_per),
        in_specs=[
            pl.BlockSpec((tile, 784), rows),
            pl.BlockSpec((tile, 3), rows),
            pl.BlockSpec((784, 1024), const),
            pl.BlockSpec((1, 1024), const),
            pl.BlockSpec((3, 1024), const),
            pl.BlockSpec((1, 1024), const),
            pl.BlockSpec((1024, 512), const),
            pl.BlockSpec((1024, 512), const),
            pl.BlockSpec((1, 512), const),
        ],
        out_specs=(
            pl.BlockSpec((tile, 512), rows),
            pl.BlockSpec((1, 512), stats),
            pl.BlockSpec((1, 512), stats),
        ),
        out_shape=(
            jax.ShapeDtypeStruct((B, 512), jnp.float32),
            jax.ShapeDtypeStruct((n_split, 512), jnp.float32),
            jax.ShapeDtypeStruct((n_split, 512), jnp.float32),
        ),
        compiler_params=_cparams(("parallel", "arbitrary")),
    )(x, label, p["w11"], p["b11"], p["w12"], p["b12"], p["w2a"], p["w2b"], p["b2"])

    sc2, sh2 = _fold_bn_host(jnp.sum(s2p, axis=0, keepdims=True),
                             jnp.sum(ss2p, axis=0, keepdims=True),
                             p["g2"], p["be2"], float(B))

    # ---- pass 2: folded BN2 + LeakyReLU + fc3, accumulate BN3 stats -------------------
    z3, s3p, ss3p = pl.pallas_call(
        bn2_fc3_kernel,
        grid=(n_split, tiles_per),
        in_specs=[
            pl.BlockSpec((tile, 512), rows),
            pl.BlockSpec((1, 512), const),
            pl.BlockSpec((1, 512), const),
            pl.BlockSpec((512, 256), const),
            pl.BlockSpec((1, 256), const),
        ],
        out_specs=(
            pl.BlockSpec((tile, 256), rows),
            pl.BlockSpec((1, 256), stats),
            pl.BlockSpec((1, 256), stats),
        ),
        out_shape=(
            jax.ShapeDtypeStruct((B, 256), jnp.float32),
            jax.ShapeDtypeStruct((n_split, 256), jnp.float32),
            jax.ShapeDtypeStruct((n_split, 256), jnp.float32),
        ),
        compiler_params=_cparams(("parallel", "arbitrary")),
    )(z2, sc2, sh2, p["w3"], p["b3"])

    sc3, sh3 = _fold_bn_host(jnp.sum(s3p, axis=0, keepdims=True),
                             jnp.sum(ss3p, axis=0, keepdims=True),
                             p["g3"], p["be3"], float(B))

    # ---- pass 3: folded BN3 + LeakyReLU + fc4 + sigmoid --------------------------------
    rows1 = lambda i: (i, 0)
    const1 = lambda i: (0, 0)
    out = pl.pallas_call(
        bn3_fc4_kernel,
        grid=(n_tiles,),
        in_specs=[
            pl.BlockSpec((tile, 256), rows1),
            pl.BlockSpec((1, 256), const1),
            pl.BlockSpec((1, 256), const1),
            pl.BlockSpec((1, 256), const1),
            pl.BlockSpec((1, 1), const1),
        ],
        out_specs=pl.BlockSpec((tile, 1), rows1),
        out_shape=jax.ShapeDtypeStruct((B, 1), jnp.float32),
        compiler_params=_cparams(("parallel",)),
    )(z3, sc3, sh3, p["w4t"], p["b4"])

    return out


# ----------------------------------------------------------------------------------------
# Parameter init (matches weight_init(mean=0, std=0.02): Linear W ~ N(0, 0.02), b = 0;
# BatchNorm1d affine defaults gamma=1, beta=0).  Large weights are stored in bf16.
# ----------------------------------------------------------------------------------------
def init_params(key):
    ks = jax.random.split(key, 5)
    std = 0.02
    f32 = jnp.float32
    bf16 = jnp.bfloat16

    def lin(k, n_in, n_out, w_dtype):
        # PyTorch stores weight as (out, in); keep it transposed as (in, out).
        w = (std * jax.random.normal(k, (n_out, n_in), dtype=f32)).T
        return w.astype(w_dtype), jnp.zeros((1, n_out), f32)

    w11, b11 = lin(ks[0], 784, 1024, bf16)
    w12, b12 = lin(ks[1], 3, 1024, f32)          # tiny; handled on the VPU in f32
    w2, b2 = lin(ks[2], 2048, 512, bf16)
    w3, b3 = lin(ks[3], 512, 256, bf16)
    w4, b4 = lin(ks[4], 256, 1, f32)

    return dict(
        w11=w11, b11=b11,
        w12=w12, b12=b12,
        w2a=w2[:1024], w2b=w2[1024:], b2=b2,     # split fc2 weight -> no concat needed
        g2=jnp.ones((1, 512), f32), be2=jnp.zeros((1, 512), f32),
        w3=w3, b3=b3,
        g3=jnp.ones((1, 256), f32), be3=jnp.zeros((1, 256), f32),
        w4t=w4.reshape(1, 256), b4=b4.reshape(1, 1),
    )


# ----------------------------------------------------------------------------------------
# Pure-JAX reference with identical math (bf16 weights / split fc2 / folded batch-stat BN).
# ----------------------------------------------------------------------------------------
def _bn_ref(z, gamma, beta, batch):
    mu = jnp.sum(z, axis=0, keepdims=True) / batch
    var = jnp.maximum(jnp.sum(z * z, axis=0, keepdims=True) / batch - mu * mu, 0.0)
    scale = gamma * jax.lax.rsqrt(var + EPS)
    shift = beta - mu * scale
    return z * scale + shift


def reference_forward(x, label, p):
    B = x.shape[0]
    h1 = _leaky(jnp.dot(x.astype(jnp.bfloat16), p["w11"],
                        preferred_element_type=jnp.float32) + p["b11"])
    w12 = p["w12"]
    h2 = _leaky(label[:, 0:1] * w12[0:1, :] + label[:, 1:2] * w12[1:2, :]
                + label[:, 2:3] * w12[2:3, :] + p["b12"])
    z2 = (jnp.dot(h1.astype(jnp.bfloat16), p["w2a"], preferred_element_type=jnp.float32)
          + jnp.dot(h2.astype(jnp.bfloat16), p["w2b"], preferred_element_type=jnp.float32)
          + p["b2"])
    h = _leaky(_bn_ref(z2, p["g2"], p["be2"], float(B)))
    z3 = jnp.dot(h.astype(jnp.bfloat16), p["w3"], preferred_element_type=jnp.float32) + p["b3"]
    h = _leaky(_bn_ref(z3, p["g3"], p["be3"], float(B)))
    z4 = jnp.sum(h * p["w4t"], axis=1, keepdims=True) + p["b4"]
    return 1.0 / (1.0 + jnp.exp(-z4))


if __name__ == "__main__":
    key = jax.random.PRNGKey(0)
    k_x, k_y, k_p = jax.random.split(key, 3)
    params = init_params(k_p)

    # Small single-tile case (B=8) -> exercises the fully fused kernel.
    B = 8
    x = jax.random.normal(k_x, (B, 784), dtype=jnp.float32)            # MNIST-flat image
    label = jax.nn.one_hot(jax.random.randint(k_y, (B,), 0, 3), 3,
                           dtype=jnp.float32)                          # 3-dim condition
    out = jax.block_until_ready(discriminator_forward(x, label, params))
    ref = reference_forward(x, label, params)
    assert out.shape == (B, 1)
    assert jnp.allclose(out, ref, atol=1e-4, rtol=1e-4), "mismatch vs reference (B=8, fused)"

    # Multi-tile case exercising the batch grid, the two-core stats split and the
    # two-phase full-batch BatchNorm.
    B2 = 64
    x2 = jax.random.normal(k_x, (B2, 784), dtype=jnp.float32)
    label2 = jax.nn.one_hot(jax.random.randint(k_y, (B2,), 0, 3), 3, dtype=jnp.float32)
    out2 = jax.block_until_ready(discriminator_forward(x2, label2, params, tile=16))
    ref2 = reference_forward(x2, label2, params)
    assert out2.shape == (B2, 1)
    assert jnp.allclose(out2, ref2, atol=1e-4, rtol=1e-4), "mismatch vs reference (B=64, tiled)"

    print("KERNEL_OK")
</pallas_src>

<mosaic_0001>
module attributes {stable_mosaic.version = 11 : i64} {
  func.func @fused_kernel(%arg0: i32, %arg1: memref<8x784xf32, #tpu.memory_space<vmem>>, %arg2: memref<8x3xf32, #tpu.memory_space<vmem>>, %arg3: memref<784x1024xbf16, #tpu.memory_space<vmem>>, %arg4: memref<1x1024xf32, #tpu.memory_space<vmem>>, %arg5: memref<3x1024xf32, #tpu.memory_space<vmem>>, %arg6: memref<1x1024xf32, #tpu.memory_space<vmem>>, %arg7: memref<1024x512xbf16, #tpu.memory_space<vmem>>, %arg8: memref<1024x512xbf16, #tpu.memory_space<vmem>>, %arg9: memref<1x512xf32, #tpu.memory_space<vmem>>, %arg10: memref<1x512xf32, #tpu.memory_space<vmem>>, %arg11: memref<1x512xf32, #tpu.memory_space<vmem>>, %arg12: memref<512x256xbf16, #tpu.memory_space<vmem>>, %arg13: memref<1x256xf32, #tpu.memory_space<vmem>>, %arg14: memref<1x256xf32, #tpu.memory_space<vmem>>, %arg15: memref<1x256xf32, #tpu.memory_space<vmem>>, %arg16: memref<1x256xf32, #tpu.memory_space<vmem>>, %arg17: memref<1x1xf32, #tpu.memory_space<vmem>>, %arg18: memref<8x1xf32, #tpu.memory_space<vmem>>) attributes {dimension_semantics = [#tpu.dimension_semantics<arbitrary>], iteration_bounds = array<i64: 1>, scalar_prefetch = 0 : i64, scratch_operands = 0 : i64, tpu.core_type = #tpu.core_type<tc>, window_params = [{pipeline_mode = #tpu.pipeline_mode<synchronous>, transform_indices = @transform_0, window_bounds = array<i64: 8, 784>}, {pipeline_mode = #tpu.pipeline_mode<synchronous>, transform_indices = @transform_1, window_bounds = array<i64: 8, 3>}, {pipeline_mode = #tpu.pipeline_mode<synchronous>, transform_indices = @transform_2, window_bounds = array<i64: 784, 1024>}, {pipeline_mode = #tpu.pipeline_mode<synchronous>, transform_indices = @transform_3, window_bounds = array<i64: 1, 1024>}, {pipeline_mode = #tpu.pipeline_mode<synchronous>, transform_indices = @transform_4, window_bounds = array<i64: 3, 1024>}, {pipeline_mode = #tpu.pipeline_mode<synchronous>, transform_indices = @transform_5, window_bounds = array<i64: 1, 1024>}, {pipeline_mode = #tpu.pipeline_mode<synchronous>, transform_indices = @transform_6, window_bounds = array<i64: 1024, 512>}, {pipeline_mode = #tpu.pipeline_mode<synchronous>, transform_indices = @transform_7, window_bounds = array<i64: 1024, 512>}, {pipeline_mode = #tpu.pipeline_mode<synchronous>, transform_indices = @transform_8, window_bounds = array<i64: 1, 512>}, {pipeline_mode = #tpu.pipeline_mode<synchronous>, transform_indices = @transform_9, window_bounds = array<i64: 1, 512>}, {pipeline_mode = #tpu.pipeline_mode<synchronous>, transform_indices = @transform_10, window_bounds = array<i64: 1, 512>}, {pipeline_mode = #tpu.pipeline_mode<synchronous>, transform_indices = @transform_11, window_bounds = array<i64: 512, 256>}, {pipeline_mode = #tpu.pipeline_mode<synchronous>, transform_indices = @transform_12, window_bounds = array<i64: 1, 256>}, {pipeline_mode = #tpu.pipeline_mode<synchronous>, transform_indices = @transform_13, window_bounds = array<i64: 1, 256>}, {pipeline_mode = #tpu.pipeline_mode<synchronous>, transform_indices = @transform_14, window_bounds = array<i64: 1, 256>}, {pipeline_mode = #tpu.pipeline_mode<synchronous>, transform_indices = @transform_15, window_bounds = array<i64: 1, 256>}, {pipeline_mode = #tpu.pipeline_mode<synchronous>, transform_indices = @transform_16, window_bounds = array<i64: 1, 1>}, {pipeline_mode = #tpu.pipeline_mode<synchronous>, transform_indices = @transform_17, window_bounds = array<i64: 8, 1>}]} {
    %c0 = arith.constant 0 : index
    %c0_0 = arith.constant 0 : index
    %0 = vector.load %arg1[%c0, %c0_0] : memref<8x784xf32, #tpu.memory_space<vmem>>, vector<8x784xf32>
    %c0_1 = arith.constant 0 : index
    %c0_2 = arith.constant 0 : index
    %1 = vector.load %arg2[%c0_1, %c0_2] : memref<8x3xf32, #tpu.memory_space<vmem>>, vector<8x3xf32>
    %2 = arith.truncf %0 : vector<8x784xf32> to vector<8x784xbf16>
    %c0_3 = arith.constant 0 : index
    %c0_4 = arith.constant 0 : index
    %3 = vector.load %arg3[%c0_3, %c0_4] : memref<784x1024xbf16, #tpu.memory_space<vmem>>, vector<784x1024xbf16>
    %cst = arith.constant dense<0.000000e+00> : vector<8x1024xf32>
    %4 = tpu.matmul %2, %3, %cst {dimension_numbers = #tpu.dot_dimension_numbers<[1], [0], [0], [1], [0, 0, 1, 1], [], []>} : vector<8x784xbf16>, vector<784x1024xbf16>, vector<8x1024xf32> -> vector<8x1024xf32>
    %c0_5 = arith.constant 0 : index
    %c0_6 = arith.constant 0 : index
    %5 = vector.load %arg4[%c0_5, %c0_6] : memref<1x1024xf32, #tpu.memory_space<vmem>>, vector<1x1024xf32>
    %6 = vector.broadcast %5 : vector<1x1024xf32> to vector<8x1024xf32>
    %7 = arith.addf %4, %6 : vector<8x1024xf32>
    %cst_7 = arith.constant 2.000000e-01 : f32
    %8 = vector.broadcast %cst_7 : f32 to vector<8x1024xf32>
    %9 = arith.mulf %8, %7 : vector<8x1024xf32>
    %10 = arith.maximumf %7, %9 : vector<8x1024xf32>
    %c0_8 = arith.constant 0 : index
    %c0_9 = arith.constant 0 : index
    %11 = vector.load %arg5[%c0_8, %c0_9] : memref<3x1024xf32, #tpu.memory_space<vmem>>, vector<3x1024xf32>
    %12 = vector.extract_strided_slice %1 {offsets = [0, 0], sizes = [8, 1], strides = [1, 1]} : vector<8x3xf32> to vector<8x1xf32>
    %13 = vector.extract_strided_slice %11 {offsets = [0, 0], sizes = [1, 1024], strides = [1, 1]} : vector<3x1024xf32> to vector<1x1024xf32>
    %14 = vector.broadcast %12 : vector<8x1xf32> to vector<8x1024xf32>
    %15 = vector.broadcast %13 : vector<1x1024xf32> to vector<8x1024xf32>
    %16 = arith.mulf %14, %15 : vector<8x1024xf32>
    %17 = vector.extract_strided_slice %1 {offsets = [0, 1], sizes = [8, 1], strides = [1, 1]} : vector<8x3xf32> to vector<8x1xf32>
    %18 = vector.extract_strided_slice %11 {offsets = [1, 0], sizes = [1, 1024], strides = [1, 1]} : vector<3x1024xf32> to vector<1x1024xf32>
    %19 = vector.broadcast %17 : vector<8x1xf32> to vector<8x1024xf32>
    %20 = vector.broadcast %18 : vector<1x1024xf32> to vector<8x1024xf32>
    %21 = arith.mulf %19, %20 : vector<8x1024xf32>
    %22 = arith.addf %16, %21 : vector<8x1024xf32>
    %23 = vector.extract_strided_slice %1 {offsets = [0, 2], sizes = [8, 1], strides = [1, 1]} : vector<8x3xf32> to vector<8x1xf32>
    %24 = vector.extract_strided_slice %11 {offsets = [2, 0], sizes = [1, 1024], strides = [1, 1]} : vector<3x1024xf32> to vector<1x1024xf32>
    %25 = vector.broadcast %23 : vector<8x1xf32> to vector<8x1024xf32>
    %26 = vector.broadcast %24 : vector<1x1024xf32> to vector<8x1024xf32>
    %27 = arith.mulf %25, %26 : vector<8x1024xf32>
    %28 = arith.addf %22, %27 : vector<8x1024xf32>
    %c0_10 = arith.constant 0 : index
    %c0_11 = arith.constant 0 : index
    %29 = vector.load %arg6[%c0_10, %c0_11] : memref<1x1024xf32, #tpu.memory_space<vmem>>, vector<1x1024xf32>
    %30 = vector.broadcast %29 : vector<1x1024xf32> to vector<8x1024xf32>
    %31 = arith.addf %28, %30 : vector<8x1024xf32>
    %cst_12 = arith.constant 2.000000e-01 : f32
    %32 = vector.broadcast %cst_12 : f32 to vector<8x1024xf32>
    %33 = arith.mulf %32, %31 : vector<8x1024xf32>
    %34 = arith.maximumf %31, %33 : vector<8x1024xf32>
    %35 = arith.truncf %10 : vector<8x1024xf32> to vector<8x1024xbf16>
    %c0_13 = arith.constant 0 : index
    %c0_14 = arith.constant 0 : index
    %36 = vector.load %arg7[%c0_13, %c0_14] : memref<1024x512xbf16, #tpu.memory_space<vmem>>, vector<1024x512xbf16>
    %cst_15 = arith.constant dense<0.000000e+00> : vector<8x512xf32>
    %37 = tpu.matmul %35, %36, %cst_15 {dimension_numbers = #tpu.dot_dimension_numbers<[1], [0], [0], [1], [0, 0, 1, 1], [], []>} : vector<8x1024xbf16>, vector<1024x512xbf16>, vector<8x512xf32> -> vector<8x512xf32>
    %38 = arith.truncf %34 : vector<8x1024xf32> to vector<8x1024xbf16>
    %c0_16 = arith.constant 0 : index
    %c0_17 = arith.constant 0 : index
    %39 = vector.load %arg8[%c0_16, %c0_17] : memref<1024x512xbf16, #tpu.memory_space<vmem>>, vector<1024x512xbf16>
    %cst_18 = arith.constant dense<0.000000e+00> : vector<8x512xf32>
    %40 = tpu.matmul %38, %39, %cst_18 {dimension_numbers = #tpu.dot_dimension_numbers<[1], [0], [0], [1], [0, 0, 1, 1], [], []>} : vector<8x1024xbf16>, vector<1024x512xbf16>, vector<8x512xf32> -> vector<8x512xf32>
    %41 = arith.addf %37, %40 : vector<8x512xf32>
    %c0_19 = arith.constant 0 : index
    %c0_20 = arith.constant 0 : index
    %42 = vector.load %arg9[%c0_19, %c0_20] : memref<1x512xf32, #tpu.memory_space<vmem>>, vector<1x512xf32>
    %43 = vector.broadcast %42 : vector<1x512xf32> to vector<8x512xf32>
    %44 = arith.addf %41, %43 : vector<8x512xf32>
    %cst_21 = arith.constant dense<0.000000e+00> : vector<512xf32>
    %45 = vector.multi_reduction <add>, %44, %cst_21 [0] : vector<8x512xf32> to vector<512xf32>
    %46 = vector.shape_cast %45 : vector<512xf32> to vector<1x512xf32>
    %cst_22 = arith.constant 1.250000e-01 : f32
    %47 = vector.broadcast %cst_22 : f32 to vector<1x512xf32>
    %48 = arith.mulf %46, %47 : vector<1x512xf32>
    %49 = arith.mulf %44, %44 : vector<8x512xf32>
    %cst_23 = arith.constant dense<0.000000e+00> : vector<512xf32>
    %50 = vector.multi_reduction <add>, %49, %cst_23 [0] : vector<8x512xf32> to vector<512xf32>
    %51 = vector.shape_cast %50 : vector<512xf32> to vector<1x512xf32>
    %cst_24 = arith.constant 1.250000e-01 : f32
    %52 = vector.broadcast %cst_24 : f32 to vector<1x512xf32>
    %53 = arith.mulf %51, %52 : vector<1x512xf32>
    %54 = arith.mulf %48, %48 : vector<1x512xf32>
    %55 = arith.subf %53, %54 : vector<1x512xf32>
    %c0_25 = arith.constant 0 : index
    %c0_26 = arith.constant 0 : index
    %56 = vector.load %arg10[%c0_25, %c0_26] : memref<1x512xf32, #tpu.memory_space<vmem>>, vector<1x512xf32>
    %c0_27 = arith.constant 0 : index
    %c0_28 = arith.constant 0 : index
    %57 = vector.load %arg11[%c0_27, %c0_28] : memref<1x512xf32, #tpu.memory_space<vmem>>, vector<1x512xf32>
    %cst_29 = arith.constant 0.000000e+00 : f32
    %58 = vector.broadcast %cst_29 : f32 to vector<1x512xf32>
    %59 = arith.maximumf %55, %58 : vector<1x512xf32>
    %cst_30 = arith.constant 9.99999974E-6 : f32
    %60 = vector.broadcast %cst_30 : f32 to vector<1x512xf32>
    %61 = arith.addf %59, %60 : vector<1x512xf32>
    %62 = math.rsqrt %61 : vector<1x512xf32>
    %63 = arith.mulf %56, %62 : vector<1x512xf32>
    %64 = arith.mulf %48, %63 : vector<1x512xf32>
    %65 = arith.subf %57, %64 : vector<1x512xf32>
    %66 = vector.broadcast %63 : vector<1x512xf32> to vector<8x512xf32>
    %67 = arith.mulf %44, %66 : vector<8x512xf32>
    %68 = vector.broadcast %65 : vector<1x512xf32> to vector<8x512xf32>
    %69 = arith.addf %67, %68 : vector<8x512xf32>
    %cst_31 = arith.constant 2.000000e-01 : f32
    %70 = vector.broadcast %cst_31 : f32 to vector<8x512xf32>
    %71 = arith.mulf %70, %69 : vector<8x512xf32>
    %72 = arith.maximumf %69, %71 : vector<8x512xf32>
    %73 = arith.truncf %72 : vector<8x512xf32> to vector<8x512xbf16>
    %c0_32 = arith.constant 0 : index
    %c0_33 = arith.constant 0 : index
    %74 = vector.load %arg12[%c0_32, %c0_33] : memref<512x256xbf16, #tpu.memory_space<vmem>>, vector<512x256xbf16>
    %cst_34 = arith.constant dense<0.000000e+00> : vector<8x256xf32>
    %75 = tpu.matmul %73, %74, %cst_34 {dimension_numbers = #tpu.dot_dimension_numbers<[1], [0], [0], [1], [0, 0, 1, 1], [], []>} : vector<8x512xbf16>, vector<512x256xbf16>, vector<8x256xf32> -> vector<8x256xf32>
    %c0_35 = arith.constant 0 : index
    %c0_36 = arith.constant 0 : index
    %76 = vector.load %arg13[%c0_35, %c0_36] : memref<1x256xf32, #tpu.memory_space<vmem>>, vector<1x256xf32>
    %77 = vector.broadcast %76 : vector<1x256xf32> to vector<8x256xf32>
    %78 = arith.addf %75, %77 : vector<8x256xf32>
    %cst_37 = arith.constant dense<0.000000e+00> : vector<256xf32>
    %79 = vector.multi_reduction <add>, %78, %cst_37 [0] : vector<8x256xf32> to vector<256xf32>
    %80 = vector.shape_cast %79 : vector<256xf32> to vector<1x256xf32>
    %cst_38 = arith.constant 1.250000e-01 : f32
    %81 = vector.broadcast %cst_38 : f32 to vector<1x256xf32>
    %82 = arith.mulf %80, %81 : vector<1x256xf32>
    %83 = arith.mulf %78, %78 : vector<8x256xf32>
    %cst_39 = arith.constant dense<0.000000e+00> : vector<256xf32>
    %84 = vector.multi_reduction <add>, %83, %cst_39 [0] : vector<8x256xf32> to vector<256xf32>
    %85 = vector.shape_cast %84 : vector<256xf32> to vector<1x256xf32>
    %cst_40 = arith.constant 1.250000e-01 : f32
    %86 = vector.broadcast %cst_40 : f32 to vector<1x256xf32>
    %87 = arith.mulf %85, %86 : vector<1x256xf32>
    %88 = arith.mulf %82, %82 : vector<1x256xf32>
    %89 = arith.subf %87, %88 : vector<1x256xf32>
    %c0_41 = arith.constant 0 : index
    %c0_42 = arith.constant 0 : index
    %90 = vector.load %arg14[%c0_41, %c0_42] : memref<1x256xf32, #tpu.memory_space<vmem>>, vector<1x256xf32>
    %c0_43 = arith.constant 0 : index
    %c0_44 = arith.constant 0 : index
    %91 = vector.load %arg15[%c0_43, %c0_44] : memref<1x256xf32, #tpu.memory_space<vmem>>, vector<1x256xf32>
    %cst_45 = arith.constant 0.000000e+00 : f32
    %92 = vector.broadcast %cst_45 : f32 to vector<1x256xf32>
    %93 = arith.maximumf %89, %92 : vector<1x256xf32>
    %cst_46 = arith.constant 9.99999974E-6 : f32
    %94 = vector.broadcast %cst_46 : f32 to vector<1x256xf32>
    %95 = arith.addf %93, %94 : vector<1x256xf32>
    %96 = math.rsqrt %95 : vector<1x256xf32>
    %97 = arith.mulf %90, %96 : vector<1x256xf32>
    %98 = arith.mulf %82, %97 : vector<1x256xf32>
    %99 = arith.subf %91, %98 : vector<1x256xf32>
    %100 = vector.broadcast %97 : vector<1x256xf32> to vector<8x256xf32>
    %101 = arith.mulf %78, %100 : vector<8x256xf32>
    %102 = vector.broadcast %99 : vector<1x256xf32> to vector<8x256xf32>
    %103 = arith.addf %101, %102 : vector<8x256xf32>
    %cst_47 = arith.constant 2.000000e-01 : f32
    %104 = vector.broadcast %cst_47 : f32 to vector<8x256xf32>
    %105 = arith.mulf %104, %103 : vector<8x256xf32>
    %106 = arith.maximumf %103, %105 : vector<8x256xf32>
    %c0_48 = arith.constant 0 : index
    %c0_49 = arith.constant 0 : index
    %107 = vector.load %arg16[%c0_48, %c0_49] : memref<1x256xf32, #tpu.memory_space<vmem>>, vector<1x256xf32>
    %108 = vector.broadcast %107 : vector<1x256xf32> to vector<8x256xf32>
    %109 = arith.mulf %106, %108 : vector<8x256xf32>
    %cst_50 = arith.constant dense<0.000000e+00> : vector<8xf32>
    %110 = vector.multi_reduction <add>, %109, %cst_50 [1] : vector<8x256xf32> to vector<8xf32>
    %111 = vector.shape_cast %110 : vector<8xf32> to vector<8x1xf32>
    %c0_51 = arith.constant 0 : index
    %c0_52 = arith.constant 0 : index
    %112 = vector.load %arg17[%c0_51, %c0_52] : memref<1x1xf32, #tpu.memory_space<vmem>>, vector<1x1xf32>
    %113 = vector.broadcast %112 : vector<1x1xf32> to vector<8x1xf32>
    %114 = arith.addf %111, %113 : vector<8x1xf32>
    %cst_53 = arith.constant 0.000000e+00 : f32
    %115 = vector.broadcast %cst_53 : f32 to vector<8x1xf32>
    %116 = arith.subf %115, %114 : vector<8x1xf32>
    %117 = math.exp %116 : vector<8x1xf32>
    %cst_54 = arith.constant 1.000000e+00 : f32
    %118 = vector.broadcast %cst_54 : f32 to vector<8x1xf32>
    %119 = arith.addf %118, %117 : vector<8x1xf32>
    %cst_55 = arith.constant 1.000000e+00 : f32
    %120 = vector.broadcast %cst_55 : f32 to vector<8x1xf32>
    %121 = arith.divf %120, %119 : vector<8x1xf32>
    %c0_56 = arith.constant 0 : index
    %c0_57 = arith.constant 0 : index
    %122 = vector.load %arg18[%c0_56, %c0_57] : memref<8x1xf32, #tpu.memory_space<vmem>>, vector<8x1xf32>
    tpu.vector_store %arg18[%c0_56, %c0_57], %121 {strides = array<i32>} : memref<8x1xf32, #tpu.memory_space<vmem>>, vector<8x1xf32>,
    return
  }
  func.func @transform_0(%arg0: i32) -> (i32, i32) {
    %c0_i32 = arith.constant 0 : i32
    %c0_i32_0 = arith.constant 0 : i32
    %c0_i32_1 = arith.constant 0 : i32
    return %c0_i32, %c0_i32_0 : i32, i32
  }
  func.func @transform_1(%arg0: i32) -> (i32, i32) {
    %c0_i32 = arith.constant 0 : i32
    %c0_i32_0 = arith.constant 0 : i32
    %c0_i32_1 = arith.constant 0 : i32
    return %c0_i32, %c0_i32_0 : i32, i32
  }
  func.func @transform_2(%arg0: i32) -> (i32, i32) {
    %c0_i32 = arith.constant 0 : i32
    %c0_i32_0 = arith.constant 0 : i32
    %c0_i32_1 = arith.constant 0 : i32
    return %c0_i32, %c0_i32_0 : i32, i32
  }
  func.func @transform_3(%arg0: i32) -> (i32, i32) {
    %c0_i32 = arith.constant 0 : i32
    %c0_i32_0 = arith.constant 0 : i32
    %c0_i32_1 = arith.constant 0 : i32
    return %c0_i32, %c0_i32_0 : i32, i32
  }
  func.func @transform_4(%arg0: i32) -> (i32, i32) {
    %c0_i32 = arith.constant 0 : i32
    %c0_i32_0 = arith.constant 0 : i32
    %c0_i32_1 = arith.constant 0 : i32
    return %c0_i32, %c0_i32_0 : i32, i32
  }
  func.func @transform_5(%arg0: i32) -> (i32, i32) {
    %c0_i32 = arith.constant 0 : i32
    %c0_i32_0 = arith.constant 0 : i32
    %c0_i32_1 = arith.constant 0 : i32
    return %c0_i32, %c0_i32_0 : i32, i32
  }
  func.func @transform_6(%arg0: i32) -> (i32, i32) {
    %c0_i32 = arith.constant 0 : i32
    %c0_i32_0 = arith.constant 0 : i32
    %c0_i32_1 = arith.constant 0 : i32
    return %c0_i32, %c0_i32_0 : i32, i32
  }
  func.func @transform_7(%arg0: i32) -> (i32, i32) {
    %c0_i32 = arith.constant 0 : i32
    %c0_i32_0 = arith.constant 0 : i32
    %c0_i32_1 = arith.constant 0 : i32
    return %c0_i32, %c0_i32_0 : i32, i32
  }
  func.func @transform_8(%arg0: i32) -> (i32, i32) {
    %c0_i32 = arith.constant 0 : i32
    %c0_i32_0 = arith.constant 0 : i32
    %c0_i32_1 = arith.constant 0 : i32
    return %c0_i32, %c0_i32_0 : i32, i32
  }
  func.func @transform_9(%arg0: i32) -> (i32, i32) {
    %c0_i32 = arith.constant 0 : i32
    %c0_i32_0 = arith.constant 0 : i32
    %c0_i32_1 = arith.constant 0 : i32
    return %c0_i32, %c0_i32_0 : i32, i32
  }
  func.func @transform_10(%arg0: i32) -> (i32, i32) {
    %c0_i32 = arith.constant 0 : i32
    %c0_i32_0 = arith.constant 0 : i32
    %c0_i32_1 = arith.constant 0 : i32
    return %c0_i32, %c0_i32_0 : i32, i32
  }
  func.func @transform_11(%arg0: i32) -> (i32, i32) {
    %c0_i32 = arith.constant 0 : i32
    %c0_i32_0 = arith.constant 0 : i32
    %c0_i32_1 = arith.constant 0 : i32
    return %c0_i32, %c0_i32_0 : i32, i32
  }
  func.func @transform_12(%arg0: i32) -> (i32, i32) {
    %c0_i32 = arith.constant 0 : i32
    %c0_i32_0 = arith.constant 0 : i32
    %c0_i32_1 = arith.constant 0 : i32
    return %c0_i32, %c0_i32_0 : i32, i32
  }
  func.func @transform_13(%arg0: i32) -> (i32, i32) {
    %c0_i32 = arith.constant 0 : i32
    %c0_i32_0 = arith.constant 0 : i32
    %c0_i32_1 = arith.constant 0 : i32
    return %c0_i32, %c0_i32_0 : i32, i32
  }
  func.func @transform_14(%arg0: i32) -> (i32, i32) {
    %c0_i32 = arith.constant 0 : i32
    %c0_i32_0 = arith.constant 0 : i32
    %c0_i32_1 = arith.constant 0 : i32
    return %c0_i32, %c0_i32_0 : i32, i32
  }
  func.func @transform_15(%arg0: i32) -> (i32, i32) {
    %c0_i32 = arith.constant 0 : i32
    %c0_i32_0 = arith.constant 0 : i32
    %c0_i32_1 = arith.constant 0 : i32
    return %c0_i32, %c0_i32_0 : i32, i32
  }
  func.func @transform_16(%arg0: i32) -> (i32, i32) {
    %c0_i32 = arith.constant 0 : i32
    %c0_i32_0 = arith.constant 0 : i32
    %c0_i32_1 = arith.constant 0 : i32
    return %c0_i32, %c0_i32_0 : i32, i32
  }
  func.func @transform_17(%arg0: i32) -> (i32, i32) {
    %c0_i32 = arith.constant 0 : i32
    %c0_i32_0 = arith.constant 0 : i32
    %c0_i32_1 = arith.constant 0 : i32
    return %c0_i32, %c0_i32_0 : i32, i32
  }
}

</mosaic_0001>

<llo_original>
// kernel: tpu_custom_call.1
$region0: #{tpu_custom_call.1}
  #allocation0 [shape = 'u32[]', space=smem, size = 0x4, offset = 0x4, fixed_abs, tag = 'smem constant byte address 0x4 - core index']
  #allocation1 [shape = 'u32[144,128]{1,0:T(1,128)}', space=vmem, size = 0x12000, scoped, tag = 'internal scratch']
  #allocation2 [shape = 'f32[1,1]{1,0:T(1,128)S(1)}', space=vmem, size = 0x200, scoped, tag = 'scoped memory for tpu_custom_call.1']
  %s0 = inlined_call_operand.hbm [shape: f32[8,784], index: 0, kind: input, shape index: {}]
  %s1 = inlined_call_operand.vmem [shape: f32[8,3], index: 1, kind: input, shape index: {}]
  %s2 = inlined_call_operand.hbm [shape: bf16[784,1024], index: 2, kind: input, shape index: {}]
  %s3 = inlined_call_operand.hbm [shape: f32[1,1024], index: 3, kind: input, shape index: {}]
  %s4 = inlined_call_operand.hbm [shape: f32[3,1024], index: 4, kind: input, shape index: {}]
  %s5 = inlined_call_operand.hbm [shape: f32[1,1024], index: 5, kind: input, shape index: {}]
  %s6 = inlined_call_operand.hbm [shape: bf16[1024,512], index: 6, kind: input, shape index: {}]
  %s7 = inlined_call_operand.hbm [shape: bf16[1024,512], index: 7, kind: input, shape index: {}]
  %s8 = inlined_call_operand.hbm [shape: f32[1,512], index: 8, kind: input, shape index: {}]
  %s9 = inlined_call_operand.hbm [shape: f32[1,512], index: 9, kind: input, shape index: {}]
  %s10 = inlined_call_operand.hbm [shape: f32[1,512], index: 10, kind: input, shape index: {}]
  %s11 = inlined_call_operand.hbm [shape: bf16[512,256], index: 11, kind: input, shape index: {}]
  %s12 = inlined_call_operand.hbm [shape: f32[1,256], index: 12, kind: input, shape index: {}]
  %s13 = inlined_call_operand.hbm [shape: f32[1,256], index: 13, kind: input, shape index: {}]
  %s14 = inlined_call_operand.hbm [shape: f32[1,256], index: 14, kind: input, shape index: {}]
  %s15 = inlined_call_operand.hbm [shape: f32[1,256], index: 15, kind: input, shape index: {}]
  %s16 = inlined_call_operand.<no memory space> [shape: f32[1,1], index: 16, kind: input, shape index: {}]
  %s17 = inlined_call_operand.vmem [shape: f32[8,1], index: 17, kind: output, shape index: {}]
  %s18 = sld [smem:[#allocation0]]
  $region138: #{tpu_custom_call.1} parent=0
    _
  %s20 = ssub.s32 1, %s18
  %s21 = scalar_select 0, %s20, %s18
  %v22 = vstv %s16
  %23 = vst [vmem:[#allocation2] sm:$0x1] %v22
  $region1: #{tpu_custom_call.1} parent=0
    #allocation3 [shape = 'u8[28672]{0}', space=vmem, size = 0x7000, scoped, tag = 'input window, operand 0, single buffered']
    #allocation4 [shape = 's32[1]{0}', space=sflag, size = 0x4, scoped, tag = 'scoped memory for tpu_custom_call.1']
    #allocation5 [shape = 'u8[1605632]{0}', space=vmem, size = 0x188000, scoped, tag = 'input window, operand 2, single buffered']
    #allocation6 [shape = 's32[1]{0}', space=sflag, size = 0x4, scoped, tag = 'scoped memory for tpu_custom_call.1']
    #allocation7 [shape = 'u8[4096]{0}', space=vmem, size = 0x1000, scoped, tag = 'input window, operand 3, single buffered']
    #allocation8 [shape = 'u8[16384]{0}', space=vmem, size = 0x4000, scoped, tag = 'input window, operand 4, single buffered']
    #allocation9 [shape = 's32[1]{0}', space=sflag, size = 0x4, scoped, tag = 'scoped memory for tpu_custom_call.1']
    #allocation10 [shape = 'u8[4096]{0}', space=vmem, size = 0x1000, scoped, tag = 'input window, operand 5, single buffered']
    #allocation11 [shape = 'u8[1048576]{0}', space=vmem, size = 0x100000, scoped, tag = 'input window, operand 6, single buffered']
    #allocation12 [shape = 's32[1]{0}', space=sflag, size = 0x4, scoped, tag = 'scoped memory for tpu_custom_call.1']
    #allocation13 [shape = 'u8[1048576]{0}', space=vmem, size = 0x100000, scoped, tag = 'input window, operand 7, single buffered']
    #allocation14 [shape = 'u8[2048]{0}', space=vmem, size = 0x800, scoped, tag = 'input window, operand 8, single buffered']
    #allocation15 [shape = 's32[1]{0}', space=sflag, size = 0x4, scoped, tag = 'scoped memory for tpu_custom_call.1']
    #allocation16 [shape = 'u8[2048]{0}', space=vmem, size = 0x800, scoped, tag = 'input window, operand 9, single buffered']
    #allocation17 [shape = 'u8[2048]{0}', space=vmem, size = 0x800, scoped, tag = 'input window, operand 10, single buffered']
    #allocation18 [shape = 's32[1]{0}', space=sflag, size = 0x4, scoped, tag = 'scoped memory for tpu_custom_call.1']
    #allocation19 [shape = 'u8[262144]{0}', space=vmem, size = 0x40000, scoped, tag = 'input window, operand 11, single buffered']
    #allocation20 [shape = 'u8[1024]{0}', space=vmem, size = 0x400, scoped, tag = 'input window, operand 12, single buffered']
    #allocation21 [shape = 's32[1]{0}', space=sflag, size = 0x4, scoped, tag = 'scoped memory for tpu_custom_call.1']
    #allocation22 [shape = 'u8[1024]{0}', space=vmem, size = 0x400, scoped, tag = 'input window, operand 13, single buffered']
    #allocation23 [shape = 'u8[1024]{0}', space=vmem, size = 0x400, scoped, tag = 'input window, operand 14, single buffered']
    #allocation24 [shape = 's32[1]{0}', space=sflag, size = 0x4, scoped, tag = 'scoped memory for tpu_custom_call.1']
    #allocation25 [shape = 'u8[1024]{0}', space=vmem, size = 0x400, scoped, tag = 'input window, operand 15, single buffered']
    %24 = vsyncpa [#allocation4], 0
    %25 = vsyncpa [#allocation6], 0
    %26 = vsyncpa [#allocation9], 0
    %27 = vsyncpa [#allocation12], 0
    %28 = vsyncpa [#allocation15], 0
    %29 = vsyncpa [#allocation18], 0
    %30 = vsyncpa [#allocation21], 0
    %31 = vsyncpa [#allocation24], 0
    // Predicated region
    $region2: #{tpu_custom_call.1} parent=1 // pred_check
      _
    $region3: #{tpu_custom_call.1} parent=1 // pred_check_branch
      %33 = sbr.rel (0) target = $region5
    $region4: #{tpu_custom_call.1} parent=1 // pred_region
      %s35 = ssub.s32 896, 896
      %36 = vsyncadd [#allocation4], %s35
      %s38 = sshll.u32 [#allocation3], 4
      %s39 = int_to_ptr.vmem [resolvable:$true] %s38
      %41 = dma.hbm_to_vmem [thread:$0]  %s0, 896, %s39, [#allocation4]
    $region5: #{tpu_custom_call.1} parent=1 // pred_fallthru
      _
    // Predicated region
    $region6: #{tpu_custom_call.1} parent=1 // pred_check
      _
    $region7: #{tpu_custom_call.1} parent=1 // pred_check_branch
      %43 = sbr.rel (0) target = $region9
    $region8: #{tpu_custom_call.1} parent=1 // pred_region
      _
    $region9: #{tpu_custom_call.1} parent=1 // pred_fallthru
      _
    // Predicated region
    $region10: #{tpu_custom_call.1} parent=1 // pred_check
      _
    $region11: #{tpu_custom_call.1} parent=1 // pred_check_branch
      %45 = sbr.rel (0) target = $region13
    $region12: #{tpu_custom_call.1} parent=1 // pred_region
      %s47 = ssub.s32 50176, 50176
      %48 = vsyncadd [#allocation6], %s47
      %s49 = sshll.u32 [#allocation5], 4
      %s50 = int_to_ptr.vmem [resolvable:$true] %s49
      %55 = dma.hbm_to_vmem [thread:$0]  %s2, 50176, %s50, [#allocation6], 512, 512, 32
    $region13: #{tpu_custom_call.1} parent=1 // pred_fallthru
      _
    // Predicated region
    $region14: #{tpu_custom_call.1} parent=1 // pred_check
      _
    $region15: #{tpu_custom_call.1} parent=1 // pred_check_branch
      %57 = sbr.rel (0) target = $region17
    $region16: #{tpu_custom_call.1} parent=1 // pred_region
      %s59 = ssub.s32 128, 128
      %60 = vsyncadd [#allocation6], %s59
      %s62 = sshll.u32 [#allocation7], 4
      %s63 = int_to_ptr.vmem [resolvable:$true] %s62
      %65 = dma.hbm_to_vmem [thread:$0]  %s3, 128, %s63, [#allocation6]
    $region17: #{tpu_custom_call.1} parent=1 // pred_fallthru
      _
    // Predicated region
    $region18: #{tpu_custom_call.1} parent=1 // pred_check
      _
    $region19: #{tpu_custom_call.1} parent=1 // pred_check_branch
      %67 = sbr.rel (0) target = $region21
    $region20: #{tpu_custom_call.1} parent=1 // pred_region
      %s69 = ssub.s32 512, 512
      %70 = vsyncadd [#allocation9], %s69
      %s72 = sshll.u32 [#allocation8], 4
      %s73 = int_to_ptr.vmem [resolvable:$true] %s72
      %75 = dma.hbm_to_vmem [thread:$0]  %s4, 512, %s73, [#allocation9]
    $region21: #{tpu_custom_call.1} parent=1 // pred_fallthru
      _
    // Predicated region
    $region22: #{tpu_custom_call.1} parent=1 // pred_check
      _
    $region23: #{tpu_custom_call.1} parent=1 // pred_check_branch
      %77 = sbr.rel (0) target = $region25
    $region24: #{tpu_custom_call.1} parent=1 // pred_region
      %s79 = ssub.s32 128, 128
      %80 = vsyncadd [#allocation9], %s79
      %s82 = sshll.u32 [#allocation10], 4
      %s83 = int_to_ptr.vmem [resolvable:$true] %s82
      %85 = dma.hbm_to_vmem [thread:$0]  %s5, 128, %s83, [#allocation9]
    $region25: #{tpu_custom_call.1} parent=1 // pred_fallthru
      _
    // Predicated region
    $region26: #{tpu_custom_call.1} parent=1 // pred_check
      _
    $region27: #{tpu_custom_call.1} parent=1 // pred_check_branch
      %87 = sbr.rel (0) target = $region29
    $region28: #{tpu_custom_call.1} parent=1 // pred_region
      %s89 = ssub.s32 32768, 32768
      %90 = vsyncadd [#allocation12], %s89
      %s91 = sshll.u32 [#allocation11], 4
      %s92 = int_to_ptr.vmem [resolvable:$true] %s91
      %97 = dma.hbm_to_vmem [thread:$0]  %s6, 32768, %s92, [#allocation12], 256, 256, 16
    $region29: #{tpu_custom_call.1} parent=1 // pred_fallthru
      _
    // Predicated region
    $region30: #{tpu_custom_call.1} parent=1 // pred_check
      _
    $region31: #{tpu_custom_call.1} parent=1 // pred_check_branch
      %99 = sbr.rel (0) target = $region33
    $region32: #{tpu_custom_call.1} parent=1 // pred_region
      %s101 = ssub.s32 32768, 32768
      %102 = vsyncadd [#allocation12], %s101
      %s103 = sshll.u32 [#allocation13], 4
      %s104 = int_to_ptr.vmem [resolvable:$true] %s103
      %109 = dma.hbm_to_vmem [thread:$0]  %s7, 32768, %s104, [#allocation12], 256, 256, 16
    $region33: #{tpu_custom_call.1} parent=1 // pred_fallthru
      _
    // Predicated region
    $region34: #{tpu_custom_call.1} parent=1 // pred_check
      _
    $region35: #{tpu_custom_call.1} parent=1 // pred_check_branch
      %111 = sbr.rel (0) target = $region37
    $region36: #{tpu_custom_call.1} parent=1 // pred_region
      %s113 = ssub.s32 64, 64
      %114 = vsyncadd [#allocation15], %s113
      %s116 = sshll.u32 [#allocation14], 4
      %s117 = int_to_ptr.vmem [resolvable:$true] %s116
      %119 = dma.hbm_to_vmem [thread:$0]  %s8, 64, %s117, [#allocation15]
    $region37: #{tpu_custom_call.1} parent=1 // pred_fallthru
      _
    // Predicated region
    $region38: #{tpu_custom_call.1} parent=1 // pred_check
      _
    $region39: #{tpu_custom_call.1} parent=1 // pred_check_branch
      %121 = sbr.rel (0) target = $region41
    $region40: #{tpu_custom_call.1} parent=1 // pred_region
      %s123 = ssub.s32 64, 64
      %124 = vsyncadd [#allocation15], %s123
      %s126 = sshll.u32 [#allocation16], 4
      %s127 = int_to_ptr.vmem [resolvable:$true] %s126
      %129 = dma.hbm_to_vmem [thread:$0]  %s9, 64, %s127, [#allocation15]
    $region41: #{tpu_custom_call.1} parent=1 // pred_fallthru
      _
    // Predicated region
    $region42: #{tpu_custom_call.1} parent=1 // pred_check
      _
    $region43: #{tpu_custom_call.1} parent=1 // pred_check_branch
      %131 = sbr.rel (0) target = $region45
    $region44: #{tpu_custom_call.1} parent=1 // pred_region
      %s133 = ssub.s32 64, 64
      %134 = vsyncadd [#allocation18], %s133
      %s136 = sshll.u32 [#allocation17], 4
      %s137 = int_to_ptr.vmem [resolvable:$true] %s136
      %139 = dma.hbm_to_vmem [thread:$0]  %s10, 64, %s137, [#allocation18]
    $region45: #{tpu_custom_call.1} parent=1 // pred_fallthru
      _
    // Predicated region
    $region46: #{tpu_custom_call.1} parent=1 // pred_check
      _
    $region47: #{tpu_custom_call.1} parent=1 // pred_check_branch
      %141 = sbr.rel (0) target = $region49
    $region48: #{tpu_custom_call.1} parent=1 // pred_region
      %s143 = ssub.s32 8192, 8192
      %144 = vsyncadd [#allocation18], %s143
      %s145 = sshll.u32 [#allocation19], 4
      %s146 = int_to_ptr.vmem [resolvable:$true] %s145
      %151 = dma.hbm_to_vmem [thread:$0]  %s11, 8192, %s146, [#allocation18], 128, 128, 8
    $region49: #{tpu_custom_call.1} parent=1 // pred_fallthru
      _
    // Predicated region
    $region50: #{tpu_custom_call.1} parent=1 // pred_check
      _
    $region51: #{tpu_custom_call.1} parent=1 // pred_check_branch
      %153 = sbr.rel (0) target = $region53
    $region52: #{tpu_custom_call.1} parent=1 // pred_region
      %s155 = ssub.s32 32, 32
      %156 = vsyncadd [#allocation21], %s155
      %s158 = sshll.u32 [#allocation20], 4
      %s159 = int_to_ptr.vmem [resolvable:$true] %s158
      %161 = dma.hbm_to_vmem [thread:$0]  %s12, 32, %s159, [#allocation21]
    $region53: #{tpu_custom_call.1} parent=1 // pred_fallthru
      _
    // Predicated region
    $region54: #{tpu_custom_call.1} parent=1 // pred_check
      _
    $region55: #{tpu_custom_call.1} parent=1 // pred_check_branch
      %163 = sbr.rel (0) target = $region57
    $region56: #{tpu_custom_call.1} parent=1 // pred_region
      %s165 = ssub.s32 32, 32
      %166 = vsyncadd [#allocation21], %s165
      %s168 = sshll.u32 [#allocation22], 4
      %s169 = int_to_ptr.vmem [resolvable:$true] %s168
      %171 = dma.hbm_to_vmem [thread:$0]  %s13, 32, %s169, [#allocation21]
    $region57: #{tpu_custom_call.1} parent=1 // pred_fallthru
      _
    // Predicated region
    $region58: #{tpu_custom_call.1} parent=1 // pred_check
      _
    $region59: #{tpu_custom_call.1} parent=1 // pred_check_branch
      %173 = sbr.rel (0) target = $region61
    $region60: #{tpu_custom_call.1} parent=1 // pred_region
      %s175 = ssub.s32 32, 32
      %176 = vsyncadd [#allocation24], %s175
      %s178 = sshll.u32 [#allocation23], 4
      %s179 = int_to_ptr.vmem [resolvable:$true] %s178
      %181 = dma.hbm_to_vmem [thread:$0]  %s14, 32, %s179, [#allocation24]
    $region61: #{tpu_custom_call.1} parent=1 // pred_fallthru
      _
    // Predicated region
    $region62: #{tpu_custom_call.1} parent=1 // pred_check
      _
    $region63: #{tpu_custom_call.1} parent=1 // pred_check_branch
      %183 = sbr.rel (0) target = $region65
    $region64: #{tpu_custom_call.1} parent=1 // pred_region
      %s185 = ssub.s32 32, 32
      %186 = vsyncadd [#allocation24], %s185
      %s188 = sshll.u32 [#allocation25], 4
      %s189 = int_to_ptr.vmem [resolvable:$true] %s188
      %191 = dma.hbm_to_vmem [thread:$0]  %s15, 32, %s189, [#allocation24]
    $region65: #{tpu_custom_call.1} parent=1 // pred_fallthru
      _
    // Predicated region
    $region66: #{tpu_custom_call.1} parent=1 // pred_check
      _
    $region67: #{tpu_custom_call.1} parent=1 // pred_check_branch
      %193 = sbr.rel (0) target = $region69
    $region68: #{tpu_custom_call.1} parent=1 // pred_region
      _
    $region69: #{tpu_custom_call.1} parent=1 // pred_fallthru
      _
    // Predicated region
    $region70: #{tpu_custom_call.1} parent=1 // pred_check
      _
    $region71: #{tpu_custom_call.1} parent=1 // pred_check_branch
      %195 = sbr.rel (0) target = $region73
    $region72: #{tpu_custom_call.1} parent=1 // pred_region
      %196 = dma.done [#allocation4], 896
    $region73: #{tpu_custom_call.1} parent=1 // pred_fallthru
      _
    // Predicated region
    $region74: #{tpu_custom_call.1} parent=1 // pred_check
      _
    $region75: #{tpu_custom_call.1} parent=1 // pred_check_branch
      %198 = sbr.rel (0) target = $region77
    $region76: #{tpu_custom_call.1} parent=1 // pred_region
      %199 = dma.done [#allocation6], 50176
    $region77: #{tpu_custom_call.1} parent=1 // pred_fallthru
      _
    // Predicated region
    $region78: #{tpu_custom_call.1} parent=1 // pred_check
      _
    $region79: #{tpu_custom_call.1} parent=1 // pred_check_branch
      %201 = sbr.rel (0) target = $region81
    $region80: #{tpu_custom_call.1} parent=1 // pred_region
      %202 = dma.done [#allocation6], 128
    $region81: #{tpu_custom_call.1} parent=1 // pred_fallthru
      _
    // Predicated region
    $region82: #{tpu_custom_call.1} parent=1 // pred_check
      _
    $region83: #{tpu_custom_call.1} parent=1 // pred_check_branch
      %204 = sbr.rel (0) target = $region85
    $region84: #{tpu_custom_call.1} parent=1 // pred_region
      %205 = dma.done [#allocation9], 512
    $region85: #{tpu_custom_call.1} parent=1 // pred_fallthru
      _
    // Predicated region
    $region86: #{tpu_custom_call.1} parent=1 // pred_check
      _
    $region87: #{tpu_custom_call.1} parent=1 // pred_check_branch
      %207 = sbr.rel (0) target = $region89
    $region88: #{tpu_custom_call.1} parent=1 // pred_region
      %208 = dma.done [#allocation9], 128
    $region89: #{tpu_custom_call.1} parent=1 // pred_fallthru
      _
    // Predicated region
    $region90: #{tpu_custom_call.1} parent=1 // pred_check
      _
    $region91: #{tpu_custom_call.1} parent=1 // pred_check_branch
      %210 = sbr.rel (0) target = $region93
    $region92: #{tpu_custom_call.1} parent=1 // pred_region
      %211 = dma.done [#allocation12], 32768
    $region93: #{tpu_custom_call.1} parent=1 // pred_fallthru
      _
    // Predicated region
    $region94: #{tpu_custom_call.1} parent=1 // pred_check
      _
    $region95: #{tpu_custom_call.1} parent=1 // pred_check_branch
      %213 = sbr.rel (0) target = $region97
    $region96: #{tpu_custom_call.1} parent=1 // pred_region
      %214 = dma.done [#allocation12], 32768
    $region97: #{tpu_custom_call.1} parent=1 // pred_fallthru
      _
    // Predicated region
    $region98: #{tpu_custom_call.1} parent=1 // pred_check
      _
    $region99: #{tpu_custom_call.1} parent=1 // pred_check_branch
      %216 = sbr.rel (0) target = $region101
    $region100: #{tpu_custom_call.1} parent=1 // pred_region
      %217 = dma.done [#allocation15], 64
    $region101: #{tpu_custom_call.1} parent=1 // pred_fallthru
      _
    // Predicated region
    $region102: #{tpu_custom_call.1} parent=1 // pred_check
      _
    $region103: #{tpu_custom_call.1} parent=1 // pred_check_branch
      %219 = sbr.rel (0) target = $region105
    $region104: #{tpu_custom_call.1} parent=1 // pred_region
      %220 = dma.done [#allocation15], 64
    $region105: #{tpu_custom_call.1} parent=1 // pred_fallthru
      _
    // Predicated region
    $region106: #{tpu_custom_call.1} parent=1 // pred_check
      _
    $region107: #{tpu_custom_call.1} parent=1 // pred_check_branch
      %222 = sbr.rel (0) target = $region109
    $region108: #{tpu_custom_call.1} parent=1 // pred_region
      %223 = dma.done [#allocation18], 64
    $region109: #{tpu_custom_call.1} parent=1 // pred_fallthru
      _
    // Predicated region
    $region110: #{tpu_custom_call.1} parent=1 // pred_check
      _
    $region111: #{tpu_custom_call.1} parent=1 // pred_check_branch
      %225 = sbr.rel (0) target = $region113
    $region112: #{tpu_custom_call.1} parent=1 // pred_region
      %226 = dma.done [#allocation18], 8192
    $region113: #{tpu_custom_call.1} parent=1 // pred_fallthru
      _
    // Predicated region
    $region114: #{tpu_custom_call.1} parent=1 // pred_check
      _
    $region115: #{tpu_custom_call.1} parent=1 // pred_check_branch
      %228 = sbr.rel (0) target = $region117
    $region116: #{tpu_custom_call.1} parent=1 // pred_region
      %229 = dma.done [#allocation21], 32
    $region117: #{tpu_custom_call.1} parent=1 // pred_fallthru
      _
    // Predicated region
    $region118: #{tpu_custom_call.1} parent=1 // pred_check
      _
    $region119: #{tpu_custom_call.1} parent=1 // pred_check_branch
      %231 = sbr.rel (0) target = $region121
    $region120: #{tpu_custom_call.1} parent=1 // pred_region
      %232 = dma.done [#allocation21], 32
    $region121: #{tpu_custom_call.1} parent=1 // pred_fallthru
      _
    // Predicated region
    $region122: #{tpu_custom_call.1} parent=1 // pred_check
      _
    $region123: #{tpu_custom_call.1} parent=1 // pred_check_branch
      %234 = sbr.rel (0) target = $region125
    $region124: #{tpu_custom_call.1} parent=1 // pred_region
      %235 = dma.done [#allocation24], 32
    $region125: #{tpu_custom_call.1} parent=1 // pred_fallthru
      _
    // Predicated region
    $region126: #{tpu_custom_call.1} parent=1 // pred_check
      _
    $region127: #{tpu_custom_call.1} parent=1 // pred_check_branch
      %237 = sbr.rel (0) target = $region129
    $region128: #{tpu_custom_call.1} parent=1 // pred_region
      %238 = dma.done [#allocation24], 32
    $region129: #{tpu_custom_call.1} parent=1 // pred_fallthru
      _
    %v240 = vld [vmem:[#allocation3] sm:$0xff]
    %v241 = vld [vmem:[#allocation3 + $0x8] sm:$0xff]
    %v242 = vld [vmem:[#allocation3 + $0x10] sm:$0xff]
    %v243 = vld [vmem:[#allocation3 + $0x18] sm:$0xff]
    %v244 = vld [vmem:[#allocation3 + $0x20] sm:$0xff]
    %v245 = vld [vmem:[#allocation3 + $0x28] sm:$0xff]
    %v246 = vld [vmem:[#allocation3 + $0x30] sm:$0xff]
    %v247 = vld [vmem:[%s1] sm:$0xff]
    %v248 = vpack.c.bf16 %v240, %v240
    %v249 = vpack.c.bf16 %v241, %v241
    %v250 = vpack.c.bf16 %v242, %v242
    %v251 = vpack.c.bf16 %v243, %v243
    %v252 = vpack.c.bf16 %v244, %v244
    %v253 = vpack.c.bf16 %v245, %v245
    %v254 = vpack.c.bf16 %v246, %v246
    %v255 = vld [vmem:[#allocation5] sm:$0xff]
    %v256 = vld [vmem:[#allocation5 + $0x8] sm:$0xff]
    %v257 = vld [vmem:[#allocation5 + $0x10] sm:$0xff]
    %v258 = vld [vmem:[#allocation5 + $0x18] sm:$0xff]
    %v259 = vld [vmem:[#allocation5 + $0x20] sm:$0xff]
    %v260 = vld [vmem:[#allocation5 + $0x28] sm:$0xff]
    %v261 = vld [vmem:[#allocation5 + $0x30] sm:$0xff]
    %v262 = vld [vmem:[#allocation5 + $0x38] sm:$0xff]
    %v263 = vld [vmem:[#allocation5 + $0x40] sm:$0xff]
    %v264 = vld [vmem:[#allocation5 + $0x48] sm:$0xff]
    %v265 = vld [vmem:[#allocation5 + $0x50] sm:$0xff]
    %v266 = vld [vmem:[#allocation5 + $0x58] sm:$0xff]
    %v267 = vld [vmem:[#allocation5 + $0x60] sm:$0xff]
    %v268 = vld [vmem:[#allocation5 + $0x68] sm:$0xff]
    %v269 = vld [vmem:[#allocation5 + $0x70] sm:$0xff]
    %v270 = vld [vmem:[#allocation5 + $0x78] sm:$0xff]
    %v271 = vld [vmem:[#allocation5 + $0x80] sm:$0xff]
    %v272 = vld [vmem:[#allocation5 + $0x88] sm:$0xff]
    %v273 = vld [vmem:[#allocation5 + $0x90] sm:$0xff]
    %v274 = vld [vmem:[#allocation5 + $0x98] sm:$0xff]
    %v275 = vld [vmem:[#allocation5 + $0xa0] sm:$0xff]
    %v276 = vld [vmem:[#allocation5 + $0xa8] sm:$0xff]
    %v277 = vld [vmem:[#allocation5 + $0xb0] sm:$0xff]
    %v278 = vld [vmem:[#allocation5 + $0xb8] sm:$0xff]
    %v279 = vld [vmem:[#allocation5 + $0xc0] sm:$0xff]
    %v280 = vld [vmem:[#allocation5 + $0xc8] sm:$0xff]
    %v281 = vld [vmem:[#allocation5 + $0xd0] sm:$0xff]
    %v282 = vld [vmem:[#allocation5 + $0xd8] sm:$0xff]
    %v283 = vld [vmem:[#allocation5 + $0xe0] sm:$0xff]
    %v284 = vld [vmem:[#allocation5 + $0xe8] sm:$0xff]
    %v285 = vld [vmem:[#allocation5 + $0xf0] sm:$0xff]
    %v286 = vld [vmem:[#allocation5 + $0xf8] sm:$0xff]
    %v287 = vld [vmem:[#allocation5 + $0x100] sm:$0xff]
    %v288 = vld [vmem:[#allocation5 + $0x108] sm:$0xff]
    %v289 = vld [vmem:[#allocation5 + $0x110] sm:$0xff]
    %v290 = vld [vmem:[#allocation5 + $0x118] sm:$0xff]
    %v291 = vld [vmem:[#allocation5 + $0x120] sm:$0xff]
    %v292 = vld [vmem:[#allocation5 + $0x128] sm:$0xff]
    %v293 = vld [vmem:[#allocation5 + $0x130] sm:$0xff]
    %v294 = vld [vmem:[#allocation5 + $0x138] sm:$0xff]
    %v295 = vld [vmem:[#allocation5 + $0x140] sm:$0xff]
    %v296 = vld [vmem:[#allocation5 + $0x148] sm:$0xff]
    %v297 = vld [vmem:[#allocation5 + $0x150] sm:$0xff]
    %v298 = vld [vmem:[#allocation5 + $0x158] sm:$0xff]
    %v299 = vld [vmem:[#allocation5 + $0x160] sm:$0xff]
    %v300 = vld [vmem:[#allocation5 + $0x168] sm:$0xff]
    %v301 = vld [vmem:[#allocation5 + $0x170] sm:$0xff]
    %v302 = vld [vmem:[#allocation5 + $0x178] sm:$0xff]
    %v303 = vld [vmem:[#allocation5 + $0x180] sm:$0xff]
    %v304 = vld [vmem:[#allocation5 + $0x188] sm:$0xff]
    %v305 = vld [vmem:[#allocation5 + $0x190] sm:$0xff]
    %v306 = vld [vmem:[#allocation5 + $0x198] sm:$0xff]
    %v307 = vld [vmem:[#allocation5 + $0x1a0] sm:$0xff]
    %v308 = vld [vmem:[#allocation5 + $0x1a8] sm:$0xff]
    %v309 = vld [vmem:[#allocation5 + $0x1b0] sm:$0xff]
    %v310 = vld [vmem:[#allocation5 + $0x1b8] sm:$0xff]
    %v311 = vld [vmem:[#allocation5 + $0x1c0] sm:$0xff]
    %v312 = vld [vmem:[#allocation5 + $0x1c8] sm:$0xff]
    %v313 = vld [vmem:[#allocation5 + $0x1d0] sm:$0xff]
    %v314 = vld [vmem:[#allocation5 + $0x1d8] sm:$0xff]
    %v315 = vld [vmem:[#allocation5 + $0x1e0] sm:$0xff]
    %v316 = vld [vmem:[#allocation5 + $0x1e8] sm:$0xff]
    %v317 = vld [vmem:[#allocation5 + $0x1f0] sm:$0xff]
    %v318 = vld [vmem:[#allocation5 + $0x1f8] sm:$0xff]
    %v319 = vld [vmem:[#allocation5 + $0x200] sm:$0xff]
    %v320 = vld [vmem:[#allocation5 + $0x208] sm:$0xff]
    %v321 = vld [vmem:[#allocation5 + $0x210] sm:$0xff]
    %v322 = vld [vmem:[#allocation5 + $0x218] sm:$0xff]
    %v323 = vld [vmem:[#allocation5 + $0x220] sm:$0xff]
    %v324 = vld [vmem:[#allocation5 + $0x228] sm:$0xff]
    %v325 = vld [vmem:[#allocation5 + $0x230] sm:$0xff]
    %v326 = vld [vmem:[#allocation5 + $0x238] sm:$0xff]
    %v327 = vld [vmem:[#allocation5 + $0x240] sm:$0xff]
    %v328 = vld [vmem:[#allocation5 + $0x248] sm:$0xff]
    %v329 = vld [vmem:[#allocation5 + $0x250] sm:$0xff]
    %v330 = vld [vmem:[#allocation5 + $0x258] sm:$0xff]
    %v331 = vld [vmem:[#allocation5 + $0x260] sm:$0xff]
    %v332 = vld [vmem:[#allocation5 + $0x268] sm:$0xff]
    %v333 = vld [vmem:[#allocation5 + $0x270] sm:$0xff]
    %v334 = vld [vmem:[#allocation5 + $0x278] sm:$0xff]
    %v335 = vld [vmem:[#allocation5 + $0x280] sm:$0xff]
    %v336 = vld [vmem:[#allocation5 + $0x288] sm:$0xff]
    %v337 = vld [vmem:[#allocation5 + $0x290] sm:$0xff]
    %v338 = vld [vmem:[#allocation5 + $0x298] sm:$0xff]
    %v339 = vld [vmem:[#allocation5 + $0x2a0] sm:$0xff]
    %v340 = vld [vmem:[#allocation5 + $0x2a8] sm:$0xff]
    %v341 = vld [vmem:[#allocation5 + $0x2b0] sm:$0xff]
    %v342 = vld [vmem:[#allocation5 + $0x2b8] sm:$0xff]
    %v343 = vld [vmem:[#allocation5 + $0x2c0] sm:$0xff]
    %v344 = vld [vmem:[#allocation5 + $0x2c8] sm:$0xff]
    %v345 = vld [vmem:[#allocation5 + $0x2d0] sm:$0xff]
    %v346 = vld [vmem:[#allocation5 + $0x2d8] sm:$0xff]
    %v347 = vld [vmem:[#allocation5 + $0x2e0] sm:$0xff]
    %v348 = vld [vmem:[#allocation5 + $0x2e8] sm:$0xff]
    %v349 = vld [vmem:[#allocation5 + $0x2f0] sm:$0xff]
    %v350 = vld [vmem:[#allocation5 + $0x2f8] sm:$0xff]
    %v351 = vld [vmem:[#allocation5 + $0x300] sm:$0xff]
    %v352 = vld [vmem:[#allocation5 + $0x308] sm:$0xff]
    %v353 = vld [vmem:[#allocation5 + $0x310] sm:$0xff]
    %v354 = vld [vmem:[#allocation5 + $0x318] sm:$0xff]
    %v355 = vld [vmem:[#allocation5 + $0x320] sm:$0xff]
    %v356 = vld [vmem:[#allocation5 + $0x328] sm:$0xff]
    %v357 = vld [vmem:[#allocation5 + $0x330] sm:$0xff]
    %v358 = vld [vmem:[#allocation5 + $0x338] sm:$0xff]
    %v359 = vld [vmem:[#allocation5 + $0x340] sm:$0xff]
    %v360 = vld [vmem:[#allocation5 + $0x348] sm:$0xff]
    %v361 = vld [vmem:[#allocation5 + $0x350] sm:$0xff]
    %v362 = vld [vmem:[#allocation5 + $0x358] sm:$0xff]
    %v363 = vld [vmem:[#allocation5 + $0x360] sm:$0xff]
    %v364 = vld [vmem:[#allocation5 + $0x368] sm:$0xff]
    %v365 = vld [vmem:[#allocation5 + $0x370] sm:$0xff]
    %v366 = vld [vmem:[#allocation5 + $0x378] sm:$0xff]
    %v367 = vld [vmem:[#allocation5 + $0x380] sm:$0xff]
    %v368 = vld [vmem:[#allocation5 + $0x388] sm:$0xff]
    %v369 = vld [vmem:[#allocation5 + $0x390] sm:$0xff]
    %v370 = vld [vmem:[#allocation5 + $0x398] sm:$0xff]
    %v371 = vld [vmem:[#allocation5 + $0x3a0] sm:$0xff]
    %v372 = vld [vmem:[#allocation5 + $0x3a8] sm:$0xff]
    %v373 = vld [vmem:[#allocation5 + $0x3b0] sm:$0xff]
    %v374 = vld [vmem:[#allocation5 + $0x3b8] sm:$0xff]
    %v375 = vld [vmem:[#allocation5 + $0x3c0] sm:$0xff]
    %v376 = vld [vmem:[#allocation5 + $0x3c8] sm:$0xff]
    %v377 = vld [vmem:[#allocation5 + $0x3d0] sm:$0xff]
    %v378 = vld [vmem:[#allocation5 + $0x3d8] sm:$0xff]
    %v379 = vld [vmem:[#allocation5 + $0x3e0] sm:$0xff]
    %v380 = vld [vmem:[#allocation5 + $0x3e8] sm:$0xff]
    %v381 = vld [vmem:[#allocation5 + $0x3f0] sm:$0xff]
    %v382 = vld [vmem:[#allocation5 + $0x3f8] sm:$0xff]
    %v383 = vld [vmem:[#allocation5 + $0x400] sm:$0xff]
    %v384 = vld [vmem:[#allocation5 + $0x408] sm:$0xff]
    %v385 = vld [vmem:[#allocation5 + $0x410] sm:$0xff]
    %v386 = vld [vmem:[#allocation5 + $0x418] sm:$0xff]
    %v387 = vld [vmem:[#allocation5 + $0x420] sm:$0xff]
    %v388 = vld [vmem:[#allocation5 + $0x428] sm:$0xff]
    %v389 = vld [vmem:[#allocation5 + $0x430] sm:$0xff]
    %v390 = vld [vmem:[#allocation5 + $0x438] sm:$0xff]
    %v391 = vld [vmem:[#allocation5 + $0x440] sm:$0xff]
    %v392 = vld [vmem:[#allocation5 + $0x448] sm:$0xff]
    %v393 = vld [vmem:[#allocation5 + $0x450] sm:$0xff]
    %v394 = vld [vmem:[#allocation5 + $0x458] sm:$0xff]
    %v395 = vld [vmem:[#allocation5 + $0x460] sm:$0xff]
    %v396 = vld [vmem:[#allocation5 + $0x468] sm:$0xff]
    %v397 = vld [vmem:[#allocation5 + $0x470] sm:$0xff]
    %v398 = vld [vmem:[#allocation5 + $0x478] sm:$0xff]
    %v399 = vld [vmem:[#allocation5 + $0x480] sm:$0xff]
    %v400 = vld [vmem:[#allocation5 + $0x488] sm:$0xff]
    %v401 = vld [vmem:[#allocation5 + $0x490] sm:$0xff]
    %v402 = vld [vmem:[#allocation5 + $0x498] sm:$0xff]
    %v403 = vld [vmem:[#allocation5 + $0x4a0] sm:$0xff]
    %v404 = vld [vmem:[#allocation5 + $0x4a8] sm:$0xff]
    %v405 = vld [vmem:[#allocation5 + $0x4b0] sm:$0xff]
    %v406 = vld [vmem:[#allocation5 + $0x4b8] sm:$0xff]
    %v407 = vld [vmem:[#allocation5 + $0x4c0] sm:$0xff]
    %v408 = vld [vmem:[#allocation5 + $0x4c8] sm:$0xff]
    %v409 = vld [vmem:[#allocation5 + $0x4d0] sm:$0xff]
    %v410 = vld [vmem:[#allocation5 + $0x4d8] sm:$0xff]
    %v411 = vld [vmem:[#allocation5 + $0x4e0] sm:$0xff]
    %v412 = vld [vmem:[#allocation5 + $0x4e8] sm:$0xff]
    %v413 = vld [vmem:[#allocation5 + $0x4f0] sm:$0xff]
    %v414 = vld [vmem:[#allocation5 + $0x4f8] sm:$0xff]
    %v415 = vld [vmem:[#allocation5 + $0x500] sm:$0xff]
    %v416 = vld [vmem:[#allocation5 + $0x508] sm:$0xff]
    %v417 = vld [vmem:[#allocation5 + $0x510] sm:$0xff]
    %v418 = vld [vmem:[#allocation5 + $0x518] sm:$0xff]
    %v419 = vld [vmem:[#allocation5 + $0x520] sm:$0xff]
    %v420 = vld [vmem:[#allocation5 + $0x528] sm:$0xff]
    %v421 = vld [vmem:[#allocation5 + $0x530] sm:$0xff]
    %v422 = vld [vmem:[#allocation5 + $0x538] sm:$0xff]
    %v423 = vld [vmem:[#allocation5 + $0x540] sm:$0xff]
    %v424 = vld [vmem:[#allocation5 + $0x548] sm:$0xff]
    %v425 = vld [vmem:[#allocation5 + $0x550] sm:$0xff]
    %v426 = vld [vmem:[#allocation5 + $0x558] sm:$0xff]
    %v427 = vld [vmem:[#allocation5 + $0x560] sm:$0xff]
    %v428 = vld [vmem:[#allocation5 + $0x568] sm:$0xff]
    %v429 = vld [vmem:[#allocation5 + $0x570] sm:$0xff]
    %v430 = vld [vmem:[#allocation5 + $0x578] sm:$0xff]
    %v431 = vld [vmem:[#allocation5 + $0x580] sm:$0xff]
    %v432 = vld [vmem:[#allocation5 + $0x588] sm:$0xff]
    %v433 = vld [vmem:[#allocation5 + $0x590] sm:$0xff]
    %v434 = vld [vmem:[#allocation5 + $0x598] sm:$0xff]
    %v435 = vld [vmem:[#allocation5 + $0x5a0] sm:$0xff]
    %v436 = vld [vmem:[#allocation5 + $0x5a8] sm:$0xff]
    %v437 = vld [vmem:[#allocation5 + $0x5b0] sm:$0xff]
    %v438 = vld [vmem:[#allocation5 + $0x5b8] sm:$0xff]
    %v439 = vld [vmem:[#allocation5 + $0x5c0] sm:$0xff]
    %v440 = vld [vmem:[#allocation5 + $0x5c8] sm:$0xff]
    %v441 = vld [vmem:[#allocation5 + $0x5d0] sm:$0xff]
    %v442 = vld [vmem:[#allocation5 + $0x5d8] sm:$0xff]
    %v443 = vld [vmem:[#allocation5 + $0x5e0] sm:$0xff]
    %v444 = vld [vmem:[#allocation5 + $0x5e8] sm:$0xff]
    %v445 = vld [vmem:[#allocation5 + $0x5f0] sm:$0xff]
    %v446 = vld [vmem:[#allocation5 + $0x5f8] sm:$0xff]
    %v447 = vld [vmem:[#allocation5 + $0x600] sm:$0xff]
    %v448 = vld [vmem:[#allocation5 + $0x608] sm:$0xff]
    %v449 = vld [vmem:[#allocation5 + $0x610] sm:$0xff]
    %v450 = vld [vmem:[#allocation5 + $0x618] sm:$0xff]
    %v451 = vld [vmem:[#allocation5 + $0x620] sm:$0xff]
    %v452 = vld [vmem:[#allocation5 + $0x628] sm:$0xff]
    %v453 = vld [vmem:[#allocation5 + $0x630] sm:$0xff]
    %v454 = vld [vmem:[#allocation5 + $0x638] sm:$0xff]
    %v455 = vld [vmem:[#allocation5 + $0x640] sm:$0xff]
    %v456 = vld [vmem:[#allocation5 + $0x648] sm:$0xff]
    %v457 = vld [vmem:[#allocation5 + $0x650] sm:$0xff]
    %v458 = vld [vmem:[#allocation5 + $0x658] sm:$0xff]
    %v459 = vld [vmem:[#allocation5 + $0x660] sm:$0xff]
    %v460 = vld [vmem:[#allocation5 + $0x668] sm:$0xff]
    %v461 = vld [vmem:[#allocation5 + $0x670] sm:$0xff]
    %v462 = vld [vmem:[#allocation5 + $0x678] sm:$0xff]
    %v463 = vld [vmem:[#allocation5 + $0x680] sm:$0xff]
    %v464 = vld [vmem:[#allocation5 + $0x688] sm:$0xff]
    %v465 = vld [vmem:[#allocation5 + $0x690] sm:$0xff]
    %v466 = vld [vmem:[#allocation5 + $0x698] sm:$0xff]
    %v467 = vld [vmem:[#allocation5 + $0x6a0] sm:$0xff]
    %v468 = vld [vmem:[#allocation5 + $0x6a8] sm:$0xff]
    %v469 = vld [vmem:[#allocation5 + $0x6b0] sm:$0xff]
    %v470 = vld [vmem:[#allocation5 + $0x6b8] sm:$0xff]
    %v471 = vld [vmem:[#allocation5 + $0x6c0] sm:$0xff]
    %v472 = vld [vmem:[#allocation5 + $0x6c8] sm:$0xff]
    %v473 = vld [vmem:[#allocation5 + $0x6d0] sm:$0xff]
    %v474 = vld [vmem:[#allocation5 + $0x6d8] sm:$0xff]
    %v475 = vld [vmem:[#allocation5 + $0x6e0] sm:$0xff]
    %v476 = vld [vmem:[#allocation5 + $0x6e8] sm:$0xff]
    %v477 = vld [vmem:[#allocation5 + $0x6f0] sm:$0xff]
    %v478 = vld [vmem:[#allocation5 + $0x6f8] sm:$0xff]
    %v479 = vld [vmem:[#allocation5 + $0x700] sm:$0xff]
    %v480 = vld [vmem:[#allocation5 + $0x708] sm:$0xff]
    %v481 = vld [vmem:[#allocation5 + $0x710] sm:$0xff]
    %v482 = vld [vmem:[#allocation5 + $0x718] sm:$0xff]
    %v483 = vld [vmem:[#allocation5 + $0x720] sm:$0xff]
    %v484 = vld [vmem:[#allocation5 + $0x728] sm:$0xff]
    %v485 = vld [vmem:[#allocation5 + $0x730] sm:$0xff]
    %v486 = vld [vmem:[#allocation5 + $0x738] sm:$0xff]
    %v487 = vld [vmem:[#allocation5 + $0x740] sm:$0xff]
    %v488 = vld [vmem:[#allocation5 + $0x748] sm:$0xff]
    %v489 = vld [vmem:[#allocation5 + $0x750] sm:$0xff]
    %v490 = vld [vmem:[#allocation5 + $0x758] sm:$0xff]
    %v491 = vld [vmem:[#allocation5 + $0x760] sm:$0xff]
    %v492 = vld [vmem:[#allocation5 + $0x768] sm:$0xff]
    %v493 = vld [vmem:[#allocation5 + $0x770] sm:$0xff]
    %v494 = vld [vmem:[#allocation5 + $0x778] sm:$0xff]
    %v495 = vld [vmem:[#allocation5 + $0x780] sm:$0xff]
    %v496 = vld [vmem:[#allocation5 + $0x788] sm:$0xff]
    %v497 = vld [vmem:[#allocation5 + $0x790] sm:$0xff]
    %v498 = vld [vmem:[#allocation5 + $0x798] sm:$0xff]
    %v499 = vld [vmem:[#allocation5 + $0x7a0] sm:$0xff]
    %v500 = vld [vmem:[#allocation5 + $0x7a8] sm:$0xff]
    %v501 = vld [vmem:[#allocation5 + $0x7b0] sm:$0xff]
    %v502 = vld [vmem:[#allocation5 + $0x7b8] sm:$0xff]
    %v503 = vld [vmem:[#allocation5 + $0x7c0] sm:$0xff]
    %v504 = vld [vmem:[#allocation5 + $0x7c8] sm:$0xff]
    %v505 = vld [vmem:[#allocation5 + $0x7d0] sm:$0xff]
    %v506 = vld [vmem:[#allocation5 + $0x7d8] sm:$0xff]
    %v507 = vld [vmem:[#allocation5 + $0x7e0] sm:$0xff]
    %v508 = vld [vmem:[#allocation5 + $0x7e8] sm:$0xff]
    %v509 = vld [vmem:[#allocation5 + $0x7f0] sm:$0xff]
    %v510 = vld [vmem:[#allocation5 + $0x7f8] sm:$0xff]
    %v511 = vld [vmem:[#allocation5 + $0x800] sm:$0xff]
    %v512 = vld [vmem:[#allocation5 + $0x808] sm:$0xff]
    %v513 = vld [vmem:[#allocation5 + $0x810] sm:$0xff]
    %v514 = vld [vmem:[#allocation5 + $0x818] sm:$0xff]
    %v515 = vld [vmem:[#allocation5 + $0x820] sm:$0xff]
    %v516 = vld [vmem:[#allocation5 + $0x828] sm:$0xff]
    %v517 = vld [vmem:[#allocation5 + $0x830] sm:$0xff]
    %v518 = vld [vmem:[#allocation5 + $0x838] sm:$0xff]
    %v519 = vld [vmem:[#allocation5 + $0x840] sm:$0xff]
    %v520 = vld [vmem:[#allocation5 + $0x848] sm:$0xff]
    %v521 = vld [vmem:[#allocation5 + $0x850] sm:$0xff]
    %v522 = vld [vmem:[#allocation5 + $0x858] sm:$0xff]
    %v523 = vld [vmem:[#allocation5 + $0x860] sm:$0xff]
    %v524 = vld [vmem:[#allocation5 + $0x868] sm:$0xff]
    %v525 = vld [vmem:[#allocation5 + $0x870] sm:$0xff]
    %v526 = vld [vmem:[#allocation5 + $0x878] sm:$0xff]
    %v527 = vld [vmem:[#allocation5 + $0x880] sm:$0xff]
    %v528 = vld [vmem:[#allocation5 + $0x888] sm:$0xff]
    %v529 = vld [vmem:[#allocation5 + $0x890] sm:$0xff]
    %v530 = vld [vmem:[#allocation5 + $0x898] sm:$0xff]
    %v531 = vld [vmem:[#allocation5 + $0x8a0] sm:$0xff]
    %v532 = vld [vmem:[#allocation5 + $0x8a8] sm:$0xff]
    %v533 = vld [vmem:[#allocation5 + $0x8b0] sm:$0xff]
    %v534 = vld [vmem:[#allocation5 + $0x8b8] sm:$0xff]
    %v535 = vld [vmem:[#allocation5 + $0x8c0] sm:$0xff]
    %v536 = vld [vmem:[#allocation5 + $0x8c8] sm:$0xff]
    %v537 = vld [vmem:[#allocation5 + $0x8d0] sm:$0xff]
    %v538 = vld [vmem:[#allocation5 + $0x8d8] sm:$0xff]
    %v539 = vld [vmem:[#allocation5 + $0x8e0] sm:$0xff]
    %v540 = vld [vmem:[#allocation5 + $0x8e8] sm:$0xff]
    %v541 = vld [vmem:[#allocation5 + $0x8f0] sm:$0xff]
    %v542 = vld [vmem:[#allocation5 + $0x8f8] sm:$0xff]
    %v543 = vld [vmem:[#allocation5 + $0x900] sm:$0xff]
    %v544 = vld [vmem:[#allocation5 + $0x908] sm:$0xff]
    %v545 = vld [vmem:[#allocation5 + $0x910] sm:$0xff]
    %v546 = vld [vmem:[#allocation5 + $0x918] sm:$0xff]
    %v547 = vld [vmem:[#allocation5 + $0x920] sm:$0xff]
    %v548 = vld [vmem:[#allocation5 + $0x928] sm:$0xff]
    %v549 = vld [vmem:[#allocation5 + $0x930] sm:$0xff]
    %v550 = vld [vmem:[#allocation5 + $0x938] sm:$0xff]
    %v551 = vld [vmem:[#allocation5 + $0x940] sm:$0xff]
    %v552 = vld [vmem:[#allocation5 + $0x948] sm:$0xff]
    %v553 = vld [vmem:[#allocation5 + $0x950] sm:$0xff]
    %v554 = vld [vmem:[#allocation5 + $0x958] sm:$0xff]
    %v555 = vld [vmem:[#allocation5 + $0x960] sm:$0xff]
    %v556 = vld [vmem:[#allocation5 + $0x968] sm:$0xff]
    %v557 = vld [vmem:[#allocation5 + $0x970] sm:$0xff]
    %v558 = vld [vmem:[#allocation5 + $0x978] sm:$0xff]
    %v559 = vld [vmem:[#allocation5 + $0x980] sm:$0xff]
    %v560 = vld [vmem:[#allocation5 + $0x988] sm:$0xff]
    %v561 = vld [vmem:[#allocation5 + $0x990] sm:$0xff]
    %v562 = vld [vmem:[#allocation5 + $0x998] sm:$0xff]
    %v563 = vld [vmem:[#allocation5 + $0x9a0] sm:$0xff]
    %v564 = vld [vmem:[#allocation5 + $0x9a8] sm:$0xff]
    %v565 = vld [vmem:[#allocation5 + $0x9b0] sm:$0xff]
    %v566 = vld [vmem:[#allocation5 + $0x9b8] sm:$0xff]
    %v567 = vld [vmem:[#allocation5 + $0x9c0] sm:$0xff]
    %v568 = vld [vmem:[#allocation5 + $0x9c8] sm:$0xff]
    %v569 = vld [vmem:[#allocation5 + $0x9d0] sm:$0xff]
    %v570 = vld [vmem:[#allocation5 + $0x9d8] sm:$0xff]
    %v571 = vld [vmem:[#allocation5 + $0x9e0] sm:$0xff]
    %v572 = vld [vmem:[#allocation5 + $0x9e8] sm:$0xff]
    %v573 = vld [vmem:[#allocation5 + $0x9f0] sm:$0xff]
    %v574 = vld [vmem:[#allocation5 + $0x9f8] sm:$0xff]
    %v575 = vld [vmem:[#allocation5 + $0xa00] sm:$0xff]
    %v576 = vld [vmem:[#allocation5 + $0xa08] sm:$0xff]
    %v577 = vld [vmem:[#allocation5 + $0xa10] sm:$0xff]
    %v578 = vld [vmem:[#allocation5 + $0xa18] sm:$0xff]
    %v579 = vld [vmem:[#allocation5 + $0xa20] sm:$0xff]
    %v580 = vld [vmem:[#allocation5 + $0xa28] sm:$0xff]
    %v581 = vld [vmem:[#allocation5 + $0xa30] sm:$0xff]
    %v582 = vld [vmem:[#allocation5 + $0xa38] sm:$0xff]
    %v583 = vld [vmem:[#allocation5 + $0xa40] sm:$0xff]
    %v584 = vld [vmem:[#allocation5 + $0xa48] sm:$0xff]
    %v585 = vld [vmem:[#allocation5 + $0xa50] sm:$0xff]
    %v586 = vld [vmem:[#allocation5 + $0xa58] sm:$0xff]
    %v587 = vld [vmem:[#allocation5 + $0xa60] sm:$0xff]
    %v588 = vld [vmem:[#allocation5 + $0xa68] sm:$0xff]
    %v589 = vld [vmem:[#allocation5 + $0xa70] sm:$0xff]
    %v590 = vld [vmem:[#allocation5 + $0xa78] sm:$0xff]
    %v591 = vld [vmem:[#allocation5 + $0xa80] sm:$0xff]
    %v592 = vld [vmem:[#allocation5 + $0xa88] sm:$0xff]
    %v593 = vld [vmem:[#allocation5 + $0xa90] sm:$0xff]
    %v594 = vld [vmem:[#allocation5 + $0xa98] sm:$0xff]
    %v595 = vld [vmem:[#allocation5 + $0xaa0] sm:$0xff]
    %v596 = vld [vmem:[#allocation5 + $0xaa8] sm:$0xff]
    %v597 = vld [vmem:[#allocation5 + $0xab0] sm:$0xff]
    %v598 = vld [vmem:[#allocation5 + $0xab8] sm:$0xff]
    %v599 = vld [vmem:[#allocation5 + $0xac0] sm:$0xff]
    %v600 = vld [vmem:[#allocation5 + $0xac8] sm:$0xff]
    %v601 = vld [vmem:[#allocation5 + $0xad0] sm:$0xff]
    %v602 = vld [vmem:[#allocation5 + $0xad8] sm:$0xff]
    %v603 = vld [vmem:[#allocation5 + $0xae0] sm:$0xff]
    %v604 = vld [vmem:[#allocation5 + $0xae8] sm:$0xff]
    %v605 = vld [vmem:[#allocation5 + $0xaf0] sm:$0xff]
    %v606 = vld [vmem:[#allocation5 + $0xaf8] sm:$0xff]
    %v607 = vld [vmem:[#allocation5 + $0xb00] sm:$0xff]
    %v608 = vld [vmem:[#allocation5 + $0xb08] sm:$0xff]
    %v609 = vld [vmem:[#allocation5 + $0xb10] sm:$0xff]
    %v610 = vld [vmem:[#allocation5 + $0xb18] sm:$0xff]
    %v611 = vld [vmem:[#allocation5 + $0xb20] sm:$0xff]
    %v612 = vld [vmem:[#allocation5 + $0xb28] sm:$0xff]
    %v613 = vld [vmem:[#allocation5 + $0xb30] sm:$0xff]
    %v614 = vld [vmem:[#allocation5 + $0xb38] sm:$0xff]
    %v615 = vld [vmem:[#allocation5 + $0xb40] sm:$0xff]
    %v616 = vld [vmem:[#allocation5 + $0xb48] sm:$0xff]
    %v617 = vld [vmem:[#allocation5 + $0xb50] sm:$0xff]
    %v618 = vld [vmem:[#allocation5 + $0xb58] sm:$0xff]
    %v619 = vld [vmem:[#allocation5 + $0xb60] sm:$0xff]
    %v620 = vld [vmem:[#allocation5 + $0xb68] sm:$0xff]
    %v621 = vld [vmem:[#allocation5 + $0xb70] sm:$0xff]
    %v622 = vld [vmem:[#allocation5 + $0xb78] sm:$0xff]
    %v623 = vld [vmem:[#allocation5 + $0xb80] sm:$0xff]
    %v624 = vld [vmem:[#allocation5 + $0xb88] sm:$0xff]
    %v625 = vld [vmem:[#allocation5 + $0xb90] sm:$0xff]
    %v626 = vld [vmem:[#allocation5 + $0xb98] sm:$0xff]
    %v627 = vld [vmem:[#allocation5 + $0xba0] sm:$0xff]
    %v628 = vld [vmem:[#allocation5 + $0xba8] sm:$0xff]
    %v629 = vld [vmem:[#allocation5 + $0xbb0] sm:$0xff]
    %v630 = vld [vmem:[#allocation5 + $0xbb8] sm:$0xff]
    %v631 = vld [vmem:[#allocation5 + $0xbc0] sm:$0xff]
    %v632 = vld [vmem:[#allocation5 + $0xbc8] sm:$0xff]
    %v633 = vld [vmem:[#allocation5 + $0xbd0] sm:$0xff]
    %v634 = vld [vmem:[#allocation5 + $0xbd8] sm:$0xff]
    %v635 = vld [vmem:[#allocation5 + $0xbe0] sm:$0xff]
    %v636 = vld [vmem:[#allocation5 + $0xbe8] sm:$0xff]
    %v637 = vld [vmem:[#allocation5 + $0xbf0] sm:$0xff]
    %v638 = vld [vmem:[#allocation5 + $0xbf8] sm:$0xff]
    %v639 = vld [vmem:[#allocation5 + $0xc00] sm:$0xff]
    %v640 = vld [vmem:[#allocation5 + $0xc08] sm:$0xff]
    %v641 = vld [vmem:[#allocation5 + $0xc10] sm:$0xff]
    %v642 = vld [vmem:[#allocation5 + $0xc18] sm:$0xff]
    %v643 = vld [vmem:[#allocation5 + $0xc20] sm:$0xff]
    %v644 = vld [vmem:[#allocation5 + $0xc28] sm:$0xff]
    %v645 = vld [vmem:[#allocation5 + $0xc30] sm:$0xff]
    %v646 = vld [vmem:[#allocation5 + $0xc38] sm:$0xff]
    %v647 = vld [vmem:[#allocation7] sm:$0xff]
    %v649 = vlaneseq
    %v650 = vshrl.u32 %v649, 7
    %v651 = vsub.s32 0, %v650
    %v652 = vrot.slane %v647, %v651
    %v653 = vlaneseq
    %v654 = vshrl.u32 %v653, 7
    %v655 = vsub.s32 1, %v654
    %v656 = vrot.slane %v647, %v655
    %v657 = vlaneseq
    %v658 = vshrl.u32 %v657, 7
    %v659 = vsub.s32 2, %v658
    %v660 = vrot.slane %v647, %v659
    %v661 = vlaneseq
    %v662 = vshrl.u32 %v661, 7
    %v663 = vsub.s32 3, %v662
    %v664 = vrot.slane %v647, %v663
    %v665 = vlaneseq
    %v666 = vshrl.u32 %v665, 7
    %v667 = vsub.s32 4, %v666
    %v668 = vrot.slane %v647, %v667
    %v669 = vlaneseq
    %v670 = vshrl.u32 %v669, 7
    %v671 = vsub.s32 5, %v670
    %v672 = vrot.slane %v647, %v671
    %v673 = vlaneseq
    %v674 = vshrl.u32 %v673, 7
    %v675 = vsub.s32 6, %v674
    %v676 = vrot.slane %v647, %v675
    %v677 = vlaneseq
    %v678 = vshrl.u32 %v677, 7
    %v679 = vsub.s32 7, %v678
    %v680 = vrot.slane %v647, %v679
    %v1081 = vunpack.c.l.b16 %v255
    %v1082 = vunpack.c.h.b16 %v255
    %v1083 = vunpack.c.l.b16 %v256
    %v1084 = vunpack.c.h.b16 %v256
    %v1085 = vunpack.c.l.b16 %v257
    %v1086 = vunpack.c.h.b16 %v257
    %v1087 = vunpack.c.l.b16 %v258
    %v1088 = vunpack.c.h.b16 %v258
    %v1089 = vunpack.c.l.b16 %v259
    %v1090 = vunpack.c.h.b16 %v259
    %v1091 = vunpack.c.l.b16 %v260
    %v1092 = vunpack.c.h.b16 %v260
    %v1093 = vunpack.c.l.b16 %v261
    %v1094 = vunpack.c.h.b16 %v261
    %v1095 = vunpack.c.l.b16 %v262
    %v1096 = vunpack.c.h.b16 %v262
    %v1097 = vunpack.c.l.b16 %v263
    %v1098 = vunpack.c.h.b16 %v263
    %v1099 = vunpack.c.l.b16 %v264
    %v1100 = vunpack.c.h.b16 %v264
    %v1101 = vunpack.c.l.b16 %v265
    %v1102 = vunpack.c.h.b16 %v265
    %v1103 = vunpack.c.l.b16 %v266
    %v1104 = vunpack.c.h.b16 %v266
    %v1105 = vunpack.c.l.b16 %v267
    %v1106 = vunpack.c.h.b16 %v267
    %v1107 = vunpack.c.l.b16 %v268
    %v1108 = vunpack.c.h.b16 %v268
    %v1109 = vunpack.c.l.b16 %v269
    %v1110 = vunpack.c.h.b16 %v269
    %v1111 = vunpack.c.l.b16 %v270
    %v1112 = vunpack.c.h.b16 %v270
    %v1113 = vunpack.c.l.b16 %v271
    %v1114 = vunpack.c.h.b16 %v271
    %v1115 = vunpack.c.l.b16 %v272
    %v1116 = vunpack.c.h.b16 %v272
    %v1117 = vunpack.c.l.b16 %v273
    %v1118 = vunpack.c.h.b16 %v273
    %v1119 = vunpack.c.l.b16 %v274
    %v1120 = vunpack.c.h.b16 %v274
    %v1121 = vunpack.c.l.b16 %v275
    %v1122 = vunpack.c.h.b16 %v275
    %v1123 = vunpack.c.l.b16 %v276
    %v1124 = vunpack.c.h.b16 %v276
    %v1125 = vunpack.c.l.b16 %v277
    %v1126 = vunpack.c.h.b16 %v277
    %v1127 = vunpack.c.l.b16 %v278
    %v1128 = vunpack.c.h.b16 %v278
    %v1129 = vunpack.c.l.b16 %v279
    %v1130 = vunpack.c.h.b16 %v279
    %v1131 = vunpack.c.l.b16 %v280
    %v1132 = vunpack.c.h.b16 %v280
    %v1133 = vunpack.c.l.b16 %v281
    %v1134 = vunpack.c.h.b16 %v281
    %v1135 = vunpack.c.l.b16 %v282
    %v1136 = vunpack.c.h.b16 %v282
    %v1137 = vunpack.c.l.b16 %v283
    %v1138 = vunpack.c.h.b16 %v283
    %v1139 = vunpack.c.l.b16 %v284
    %v1140 = vunpack.c.h.b16 %v284
    %v1141 = vunpack.c.l.b16 %v285
    %v1142 = vunpack.c.h.b16 %v285
    %v1143 = vunpack.c.l.b16 %v286
    %v1144 = vunpack.c.h.b16 %v286
    %v1145 = vunpack.c.l.b16 %v287
    %v1146 = vunpack.c.h.b16 %v287
    %v1147 = vunpack.c.l.b16 %v288
    %v1148 = vunpack.c.h.b16 %v288
    %v1149 = vunpack.c.l.b16 %v289
    %v1150 = vunpack.c.h.b16 %v289
    %v1151 = vunpack.c.l.b16 %v290
    %v1152 = vunpack.c.h.b16 %v290
    %v1153 = vunpack.c.l.b16 %v291
    %v1154 = vunpack.c.h.b16 %v291
    %v1155 = vunpack.c.l.b16 %v292
    %v1156 = vunpack.c.h.b16 %v292
    %v1157 = vunpack.c.l.b16 %v293
    %v1158 = vunpack.c.h.b16 %v293
    %v1159 = vunpack.c.l.b16 %v294
    %v1160 = vunpack.c.h.b16 %v294
    %v1161 = vunpack.c.l.b16 %v295
    %v1162 = vunpack.c.h.b16 %v295
    %v1163 = vunpack.c.l.b16 %v296
    %v1164 = vunpack.c.h.b16 %v296
    %v1165 = vunpack.c.l.b16 %v297
    %v1166 = vunpack.c.h.b16 %v297
    %v1167 = vunpack.c.l.b16 %v298
    %v1168 = vunpack.c.h.b16 %v298
    %v1169 = vunpack.c.l.b16 %v299
    %v1170 = vunpack.c.h.b16 %v299
    %v1171 = vunpack.c.l.b16 %v300
    %v1172 = vunpack.c.h.b16 %v300
    %v1173 = vunpack.c.l.b16 %v301
    %v1174 = vunpack.c.h.b16 %v301
    %v1175 = vunpack.c.l.b16 %v302
    %v1176 = vunpack.c.h.b16 %v302
    %v1177 = vunpack.c.l.b16 %v303
    %v1178 = vunpack.c.h.b16 %v303
    %v1179 = vunpack.c.l.b16 %v304
    %v1180 = vunpack.c.h.b16 %v304
    %v1181 = vunpack.c.l.b16 %v305
    %v1182 = vunpack.c.h.b16 %v305
    %v1183 = vunpack.c.l.b16 %v306
    %v1184 = vunpack.c.h.b16 %v306
    %v1185 = vunpack.c.l.b16 %v307
    %v1186 = vunpack.c.h.b16 %v307
    %v1187 = vunpack.c.l.b16 %v308
    %v1188 = vunpack.c.h.b16 %v308
    %v1189 = vunpack.c.l.b16 %v309
    %v1190 = vunpack.c.h.b16 %v309
    %v1191 = vunpack.c.l.b16 %v310
    %v1192 = vunpack.c.h.b16 %v310
    %v1193 = vunpack.c.l.b16 %v311
    %v1194 = vunpack.c.h.b16 %v311
    %v1195 = vunpack.c.l.b16 %v312
    %v1196 = vunpack.c.h.b16 %v312
    %v1197 = vunpack.c.l.b16 %v313
    %v1198 = vunpack.c.h.b16 %v313
    %v1199 = vunpack.c.l.b16 %v314
    %v1200 = vunpack.c.h.b16 %v314
    %v1201 = vunpack.c.l.b16 %v315
    %v1202 = vunpack.c.h.b16 %v315
    %v1203 = vunpack.c.l.b16 %v316
    %v1204 = vunpack.c.h.b16 %v316
    %v1205 = vunpack.c.l.b16 %v317
    %v1206 = vunpack.c.h.b16 %v317
    %v1207 = vunpack.c.l.b16 %v318
    %v1208 = vunpack.c.h.b16 %v318
    %v1209 = vunpack.c.l.b16 %v319
    %v1210 = vunpack.c.h.b16 %v319
    %v1211 = vunpack.c.l.b16 %v320
    %v1212 = vunpack.c.h.b16 %v320
    %v1213 = vunpack.c.l.b16 %v321
    %v1214 = vunpack.c.h.b16 %v321
    %v1215 = vunpack.c.l.b16 %v322
    %v1216 = vunpack.c.h.b16 %v322
    %v1217 = vunpack.c.l.b16 %v323
    %v1218 = vunpack.c.h.b16 %v323
    %v1219 = vunpack.c.l.b16 %v324
    %v1220 = vunpack.c.h.b16 %v324
    %v1221 = vunpack.c.l.b16 %v325
    %v1222 = vunpack.c.h.b16 %v325
    %v1223 = vunpack.c.l.b16 %v326
    %v1224 = vunpack.c.h.b16 %v326
    %v1225 = vunpack.c.l.b16 %v327
    %v1226 = vunpack.c.h.b16 %v327
    %v1227 = vunpack.c.l.b16 %v328
    %v1228 = vunpack.c.h.b16 %v328
    %v1229 = vunpack.c.l.b16 %v329
    %v1230 = vunpack.c.h.b16 %v329
    %v1231 = vunpack.c.l.b16 %v330
    %v1232 = vunpack.c.h.b16 %v330
    %v1233 = vunpack.c.l.b16 %v331
    %v1234 = vunpack.c.h.b16 %v331
    %v1235 = vunpack.c.l.b16 %v332
    %v1236 = vunpack.c.h.b16 %v332
    %v1237 = vunpack.c.l.b16 %v333
    %v1238 = vunpack.c.h.b16 %v333
    %v1239 = vunpack.c.l.b16 %v334
    %v1240 = vunpack.c.h.b16 %v334
    %v1241 = vunpack.c.l.b16 %v335
    %v1242 = vunpack.c.h.b16 %v335
    %v1243 = vunpack.c.l.b16 %v336
    %v1244 = vunpack.c.h.b16 %v336
    %v1245 = vunpack.c.l.b16 %v337
    %v1246 = vunpack.c.h.b16 %v337
    %v1247 = vunpack.c.l.b16 %v338
    %v1248 = vunpack.c.h.b16 %v338
    %v1249 = vunpack.c.l.b16 %v339
    %v1250 = vunpack.c.h.b16 %v339
    %v1251 = vunpack.c.l.b16 %v340
    %v1252 = vunpack.c.h.b16 %v340
    %v1253 = vunpack.c.l.b16 %v341
    %v1254 = vunpack.c.h.b16 %v341
    %v1255 = vunpack.c.l.b16 %v342
    %v1256 = vunpack.c.h.b16 %v342
    %v1257 = vunpack.c.l.b16 %v343
    %v1258 = vunpack.c.h.b16 %v343
    %v1259 = vunpack.c.l.b16 %v344
    %v1260 = vunpack.c.h.b16 %v344
    %v1261 = vunpack.c.l.b16 %v345
    %v1262 = vunpack.c.h.b16 %v345
    %v1263 = vunpack.c.l.b16 %v346
    %v1264 = vunpack.c.h.b16 %v346
    %v1265 = vunpack.c.l.b16 %v347
    %v1266 = vunpack.c.h.b16 %v347
    %v1267 = vunpack.c.l.b16 %v348
    %v1268 = vunpack.c.h.b16 %v348
    %v1269 = vunpack.c.l.b16 %v349
    %v1270 = vunpack.c.h.b16 %v349
    %v1271 = vunpack.c.l.b16 %v350
    %v1272 = vunpack.c.h.b16 %v350
    %v1273 = vunpack.c.l.b16 %v351
    %v1274 = vunpack.c.h.b16 %v351
    %v1275 = vunpack.c.l.b16 %v352
    %v1276 = vunpack.c.h.b16 %v352
    %v1277 = vunpack.c.l.b16 %v353
    %v1278 = vunpack.c.h.b16 %v353
    %v1279 = vunpack.c.l.b16 %v354
    %v1280 = vunpack.c.h.b16 %v354
    %v1281 = vunpack.c.l.b16 %v355
    %v1282 = vunpack.c.h.b16 %v355
    %v1283 = vunpack.c.l.b16 %v356
    %v1284 = vunpack.c.h.b16 %v356
    %v1285 = vunpack.c.l.b16 %v357
    %v1286 = vunpack.c.h.b16 %v357
    %v1287 = vunpack.c.l.b16 %v358
    %v1288 = vunpack.c.h.b16 %v358
    %v1289 = vunpack.c.l.b16 %v359
    %v1290 = vunpack.c.h.b16 %v359
    %v1291 = vunpack.c.l.b16 %v360
    %v1292 = vunpack.c.h.b16 %v360
    %v1293 = vunpack.c.l.b16 %v361
    %v1294 = vunpack.c.h.b16 %v361
    %v1295 = vunpack.c.l.b16 %v362
    %v1296 = vunpack.c.h.b16 %v362
    %v1297 = vunpack.c.l.b16 %v363
    %v1298 = vunpack.c.h.b16 %v363
    %v1299 = vunpack.c.l.b16 %v364
    %v1300 = vunpack.c.h.b16 %v364
    %v1301 = vunpack.c.l.b16 %v365
    %v1302 = vunpack.c.h.b16 %v365
    %v1303 = vunpack.c.l.b16 %v366
    %v1304 = vunpack.c.h.b16 %v366
    %v1305 = vunpack.c.l.b16 %v367
    %v1306 = vunpack.c.h.b16 %v367
    %v1307 = vunpack.c.l.b16 %v368
    %v1308 = vunpack.c.h.b16 %v368
    %v1309 = vunpack.c.l.b16 %v369
    %v1310 = vunpack.c.h.b16 %v369
    %v1311 = vunpack.c.l.b16 %v370
    %v1312 = vunpack.c.h.b16 %v370
    %v1313 = vunpack.c.l.b16 %v371
    %v1314 = vunpack.c.h.b16 %v371
    %v1315 = vunpack.c.l.b16 %v372
    %v1316 = vunpack.c.h.b16 %v372
    %v1317 = vunpack.c.l.b16 %v373
    %v1318 = vunpack.c.h.b16 %v373
    %v1319 = vunpack.c.l.b16 %v374
    %v1320 = vunpack.c.h.b16 %v374
    %v1321 = vunpack.c.l.b16 %v375
    %v1322 = vunpack.c.h.b16 %v375
    %v1323 = vunpack.c.l.b16 %v376
    %v1324 = vunpack.c.h.b16 %v376
    %v1325 = vunpack.c.l.b16 %v377
    %v1326 = vunpack.c.h.b16 %v377
    %v1327 = vunpack.c.l.b16 %v378
    %v1328 = vunpack.c.h.b16 %v378
    %v1329 = vunpack.c.l.b16 %v379
    %v1330 = vunpack.c.h.b16 %v379
    %v1331 = vunpack.c.l.b16 %v380
    %v1332 = vunpack.c.h.b16 %v380
    %v1333 = vunpack.c.l.b16 %v381
    %v1334 = vunpack.c.h.b16 %v381
    %v1335 = vunpack.c.l.b16 %v382
    %v1336 = vunpack.c.h.b16 %v382
    %v1337 = vunpack.c.l.b16 %v383
    %v1338 = vunpack.c.h.b16 %v383
    %v1339 = vunpack.c.l.b16 %v384
    %v1340 = vunpack.c.h.b16 %v384
    %v1341 = vunpack.c.l.b16 %v385
    %v1342 = vunpack.c.h.b16 %v385
    %v1343 = vunpack.c.l.b16 %v386
    %v1344 = vunpack.c.h.b16 %v386
    %v1345 = vunpack.c.l.b16 %v387
    %v1346 = vunpack.c.h.b16 %v387
    %v1347 = vunpack.c.l.b16 %v388
    %v1348 = vunpack.c.h.b16 %v388
    %v1349 = vunpack.c.l.b16 %v389
    %v1350 = vunpack.c.h.b16 %v389
    %v1351 = vunpack.c.l.b16 %v390
    %v1352 = vunpack.c.h.b16 %v390
    %v1353 = vunpack.c.l.b16 %v391
    %v1354 = vunpack.c.h.b16 %v391
    %v1355 = vunpack.c.l.b16 %v392
    %v1356 = vunpack.c.h.b16 %v392
    %v1357 = vunpack.c.l.b16 %v393
    %v1358 = vunpack.c.h.b16 %v393
    %v1359 = vunpack.c.l.b16 %v394
    %v1360 = vunpack.c.h.b16 %v394
    %v1361 = vunpack.c.l.b16 %v395
    %v1362 = vunpack.c.h.b16 %v395
    %v1363 = vunpack.c.l.b16 %v396
    %v1364 = vunpack.c.h.b16 %v396
    %v1365 = vunpack.c.l.b16 %v397
    %v1366 = vunpack.c.h.b16 %v397
    %v1367 = vunpack.c.l.b16 %v398
    %v1368 = vunpack.c.h.b16 %v398
    %v1369 = vunpack.c.l.b16 %v399
    %v1370 = vunpack.c.h.b16 %v399
    %v1371 = vunpack.c.l.b16 %v400
    %v1372 = vunpack.c.h.b16 %v400
    %v1373 = vunpack.c.l.b16 %v401
    %v1374 = vunpack.c.h.b16 %v401
    %v1375 = vunpack.c.l.b16 %v402
    %v1376 = vunpack.c.h.b16 %v402
    %v1377 = vunpack.c.l.b16 %v403
    %v1378 = vunpack.c.h.b16 %v403
    %v1379 = vunpack.c.l.b16 %v404
    %v1380 = vunpack.c.h.b16 %v404
    %v1381 = vunpack.c.l.b16 %v405
    %v1382 = vunpack.c.h.b16 %v405
    %v1383 = vunpack.c.l.b16 %v406
    %v1384 = vunpack.c.h.b16 %v406
    %v1385 = vunpack.c.l.b16 %v407
    %v1386 = vunpack.c.h.b16 %v407
    %v1387 = vunpack.c.l.b16 %v408
    %v1388 = vunpack.c.h.b16 %v408
    %v1389 = vunpack.c.l.b16 %v409
    %v1390 = vunpack.c.h.b16 %v409
    %v1391 = vunpack.c.l.b16 %v410
    %v1392 = vunpack.c.h.b16 %v410
    %v1393 = vunpack.c.l.b16 %v411
    %v1394 = vunpack.c.h.b16 %v411
    %v1395 = vunpack.c.l.b16 %v412
    %v1396 = vunpack.c.h.b16 %v412
    %v1397 = vunpack.c.l.b16 %v413
    %v1398 = vunpack.c.h.b16 %v413
    %v1399 = vunpack.c.l.b16 %v414
    %v1400 = vunpack.c.h.b16 %v414
    %v1401 = vunpack.c.l.b16 %v415
    %v1402 = vunpack.c.h.b16 %v415
    %v1403 = vunpack.c.l.b16 %v416
    %v1404 = vunpack.c.h.b16 %v416
    %v1405 = vunpack.c.l.b16 %v417
    %v1406 = vunpack.c.h.b16 %v417
    %v1407 = vunpack.c.l.b16 %v418
    %v1408 = vunpack.c.h.b16 %v418
    %v1409 = vunpack.c.l.b16 %v419
    %v1410 = vunpack.c.h.b16 %v419
    %v1411 = vunpack.c.l.b16 %v420
    %v1412 = vunpack.c.h.b16 %v420
    %v1413 = vunpack.c.l.b16 %v421
    %v1414 = vunpack.c.h.b16 %v421
    %v1415 = vunpack.c.l.b16 %v422
    %v1416 = vunpack.c.h.b16 %v422
    %v1417 = vunpack.c.l.b16 %v423
    %v1418 = vunpack.c.h.b16 %v423
    %v1419 = vunpack.c.l.b16 %v424
    %v1420 = vunpack.c.h.b16 %v424
    %v1421 = vunpack.c.l.b16 %v425
    %v1422 = vunpack.c.h.b16 %v425
    %v1423 = vunpack.c.l.b16 %v426
    %v1424 = vunpack.c.h.b16 %v426
    %v1425 = vunpack.c.l.b16 %v427
    %v1426 = vunpack.c.h.b16 %v427
    %v1427 = vunpack.c.l.b16 %v428
    %v1428 = vunpack.c.h.b16 %v428
    %v1429 = vunpack.c.l.b16 %v429
    %v1430 = vunpack.c.h.b16 %v429
    %v1431 = vunpack.c.l.b16 %v430
    %v1432 = vunpack.c.h.b16 %v430
    %v1433 = vunpack.c.l.b16 %v431
    %v1434 = vunpack.c.h.b16 %v431
    %v1435 = vunpack.c.l.b16 %v432
    %v1436 = vunpack.c.h.b16 %v432
    %v1437 = vunpack.c.l.b16 %v433
    %v1438 = vunpack.c.h.b16 %v433
    %v1439 = vunpack.c.l.b16 %v434
    %v1440 = vunpack.c.h.b16 %v434
    %v1441 = vunpack.c.l.b16 %v435
    %v1442 = vunpack.c.h.b16 %v435
    %v1443 = vunpack.c.l.b16 %v436
    %v1444 = vunpack.c.h.b16 %v436
    %v1445 = vunpack.c.l.b16 %v437
    %v1446 = vunpack.c.h.b16 %v437
    %v1447 = vunpack.c.l.b16 %v438
    %v1448 = vunpack.c.h.b16 %v438
    %v1449 = vunpack.c.l.b16 %v439
    %v1450 = vunpack.c.h.b16 %v439
    %v1451 = vunpack.c.l.b16 %v440
    %v1452 = vunpack.c.h.b16 %v440
    %v1453 = vunpack.c.l.b16 %v441
    %v1454 = vunpack.c.h.b16 %v441
    %v1455 = vunpack.c.l.b16 %v442
    %v1456 = vunpack.c.h.b16 %v442
    %v1457 = vunpack.c.l.b16 %v443
    %v1458 = vunpack.c.h.b16 %v443
    %v1459 = vunpack.c.l.b16 %v444
    %v1460 = vunpack.c.h.b16 %v444
    %v1461 = vunpack.c.l.b16 %v445
    %v1462 = vunpack.c.h.b16 %v445
    %v1463 = vunpack.c.l.b16 %v446
    %v1464 = vunpack.c.h.b16 %v446
    %v1465 = vunpack.c.l.b16 %v447
    %v1466 = vunpack.c.h.b16 %v447
    %v1467 = vunpack.c.l.b16 %v448
    %v1468 = vunpack.c.h.b16 %v448
    %v1469 = vunpack.c.l.b16 %v449
    %v1470 = vunpack.c.h.b16 %v449
    %v1471 = vunpack.c.l.b16 %v450
    %v1472 = vunpack.c.h.b16 %v450
    %v1473 = vunpack.c.l.b16 %v451
    %v1474 = vunpack.c.h.b16 %v451
    %v1475 = vunpack.c.l.b16 %v452
    %v1476 = vunpack.c.h.b16 %v452
    %v1477 = vunpack.c.l.b16 %v453
    %v1478 = vunpack.c.h.b16 %v453
    %v1479 = vunpack.c.l.b16 %v454
    %v1480 = vunpack.c.h.b16 %v454
    %v1481 = vunpack.c.l.b16 %v455
    %v1482 = vunpack.c.h.b16 %v455
    %v1483 = vunpack.c.l.b16 %v456
    %v1484 = vunpack.c.h.b16 %v456
    %v1485 = vunpack.c.l.b16 %v457
    %v1486 = vunpack.c.h.b16 %v457
    %v1487 = vunpack.c.l.b16 %v458
    %v1488 = vunpack.c.h.b16 %v458
    %v1489 = vunpack.c.l.b16 %v459
    %v1490 = vunpack.c.h.b16 %v459
    %v1491 = vunpack.c.l.b16 %v460
    %v1492 = vunpack.c.h.b16 %v460
    %v1493 = vunpack.c.l.b16 %v461
    %v1494 = vunpack.c.h.b16 %v461
    %v1495 = vunpack.c.l.b16 %v462
    %v1496 = vunpack.c.h.b16 %v462
    %v1497 = vunpack.c.l.b16 %v463
    %v1498 = vunpack.c.h.b16 %v463
    %v1499 = vunpack.c.l.b16 %v464
    %v1500 = vunpack.c.h.b16 %v464
    %v1501 = vunpack.c.l.b16 %v465
    %v1502 = vunpack.c.h.b16 %v465
    %v1503 = vunpack.c.l.b16 %v466
    %v1504 = vunpack.c.h.b16 %v466
    %v1505 = vunpack.c.l.b16 %v467
    %v1506 = vunpack.c.h.b16 %v467
    %v1507 = vunpack.c.l.b16 %v468
    %v1508 = vunpack.c.h.b16 %v468
    %v1509 = vunpack.c.l.b16 %v469
    %v1510 = vunpack.c.h.b16 %v469
    %v1511 = vunpack.c.l.b16 %v470
    %v1512 = vunpack.c.h.b16 %v470
    %v1513 = vunpack.c.l.b16 %v471
    %v1514 = vunpack.c.h.b16 %v471
    %v1515 = vunpack.c.l.b16 %v472
    %v1516 = vunpack.c.h.b16 %v472
    %v1517 = vunpack.c.l.b16 %v473
    %v1518 = vunpack.c.h.b16 %v473
    %v1519 = vunpack.c.l.b16 %v474
    %v1520 = vunpack.c.h.b16 %v474
    %v1521 = vunpack.c.l.b16 %v475
    %v1522 = vunpack.c.h.b16 %v475
    %v1523 = vunpack.c.l.b16 %v476
    %v1524 = vunpack.c.h.b16 %v476
    %v1525 = vunpack.c.l.b16 %v477
    %v1526 = vunpack.c.h.b16 %v477
    %v1527 = vunpack.c.l.b16 %v478
    %v1528 = vunpack.c.h.b16 %v478
    %v1529 = vunpack.c.l.b16 %v479
    %v1530 = vunpack.c.h.b16 %v479
    %v1531 = vunpack.c.l.b16 %v480
    %v1532 = vunpack.c.h.b16 %v480
    %v1533 = vunpack.c.l.b16 %v481
    %v1534 = vunpack.c.h.b16 %v481
    %v1535 = vunpack.c.l.b16 %v482
    %v1536 = vunpack.c.h.b16 %v482
    %v1537 = vunpack.c.l.b16 %v483
    %v1538 = vunpack.c.h.b16 %v483
    %v1539 = vunpack.c.l.b16 %v484
    %v1540 = vunpack.c.h.b16 %v484
    %v1541 = vunpack.c.l.b16 %v485
    %v1542 = vunpack.c.h.b16 %v485
    %v1543 = vunpack.c.l.b16 %v486
    %v1544 = vunpack.c.h.b16 %v486
    %v1545 = vunpack.c.l.b16 %v487
    %v1546 = vunpack.c.h.b16 %v487
    %v1547 = vunpack.c.l.b16 %v488
    %v1548 = vunpack.c.h.b16 %v488
    %v1549 = vunpack.c.l.b16 %v489
    %v1550 = vunpack.c.h.b16 %v489
    %v1551 = vunpack.c.l.b16 %v490
    %v1552 = vunpack.c.h.b16 %v490
    %v1553 = vunpack.c.l.b16 %v491
    %v1554 = vunpack.c.h.b16 %v491
    %v1555 = vunpack.c.l.b16 %v492
    %v1556 = vunpack.c.h.b16 %v492
    %v1557 = vunpack.c.l.b16 %v493
    %v1558 = vunpack.c.h.b16 %v493
    %v1559 = vunpack.c.l.b16 %v494
    %v1560 = vunpack.c.h.b16 %v494
    %v1561 = vunpack.c.l.b16 %v495
    %v1562 = vunpack.c.h.b16 %v495
    %v1563 = vunpack.c.l.b16 %v496
    %v1564 = vunpack.c.h.b16 %v496
    %v1565 = vunpack.c.l.b16 %v497
    %v1566 = vunpack.c.h.b16 %v497
    %v1567 = vunpack.c.l.b16 %v498
    %v1568 = vunpack.c.h.b16 %v498
    %v1569 = vunpack.c.l.b16 %v499
    %v1570 = vunpack.c.h.b16 %v499
    %v1571 = vunpack.c.l.b16 %v500
    %v1572 = vunpack.c.h.b16 %v500
    %v1573 = vunpack.c.l.b16 %v501
    %v1574 = vunpack.c.h.b16 %v501
    %v1575 = vunpack.c.l.b16 %v502
    %v1576 = vunpack.c.h.b16 %v502
    %v1577 = vunpack.c.l.b16 %v503
    %v1578 = vunpack.c.h.b16 %v503
    %v1579 = vunpack.c.l.b16 %v504
    %v1580 = vunpack.c.h.b16 %v504
    %v1581 = vunpack.c.l.b16 %v505
    %v1582 = vunpack.c.h.b16 %v505
    %v1583 = vunpack.c.l.b16 %v506
    %v1584 = vunpack.c.h.b16 %v506
    %v1585 = vunpack.c.l.b16 %v507
    %v1586 = vunpack.c.h.b16 %v507
    %v1587 = vunpack.c.l.b16 %v508
    %v1588 = vunpack.c.h.b16 %v508
    %v1589 = vunpack.c.l.b16 %v509
    %v1590 = vunpack.c.h.b16 %v509
    %v1591 = vunpack.c.l.b16 %v510
    %v1592 = vunpack.c.h.b16 %v510
    %v1593 = vunpack.c.l.b16 %v511
    %v1594 = vunpack.c.h.b16 %v511
    %v1595 = vunpack.c.l.b16 %v512
    %v1596 = vunpack.c.h.b16 %v512
    %v1597 = vunpack.c.l.b16 %v513
    %v1598 = vunpack.c.h.b16 %v513
    %v1599 = vunpack.c.l.b16 %v514
    %v1600 = vunpack.c.h.b16 %v514
    %v1601 = vunpack.c.l.b16 %v515
    %v1602 = vunpack.c.h.b16 %v515
    %v1603 = vunpack.c.l.b16 %v516
    %v1604 = vunpack.c.h.b16 %v516
    %v1605 = vunpack.c.l.b16 %v517
    %v1606 = vunpack.c.h.b16 %v517
    %v1607 = vunpack.c.l.b16 %v518
    %v1608 = vunpack.c.h.b16 %v518
    %v1609 = vunpack.c.l.b16 %v519
    %v1610 = vunpack.c.h.b16 %v519
    %v1611 = vunpack.c.l.b16 %v520
    %v1612 = vunpack.c.h.b16 %v520
    %v1613 = vunpack.c.l.b16 %v521
    %v1614 = vunpack.c.h.b16 %v521
    %v1615 = vunpack.c.l.b16 %v522
    %v1616 = vunpack.c.h.b16 %v522
    %v1617 = vunpack.c.l.b16 %v523
    %v1618 = vunpack.c.h.b16 %v523
    %v1619 = vunpack.c.l.b16 %v524
    %v1620 = vunpack.c.h.b16 %v524
    %v1621 = vunpack.c.l.b16 %v525
    %v1622 = vunpack.c.h.b16 %v525
    %v1623 = vunpack.c.l.b16 %v526
    %v1624 = vunpack.c.h.b16 %v526
    %v1625 = vunpack.c.l.b16 %v527
    %v1626 = vunpack.c.h.b16 %v527
    %v1627 = vunpack.c.l.b16 %v528
    %v1628 = vunpack.c.h.b16 %v528
    %v1629 = vunpack.c.l.b16 %v529
    %v1630 = vunpack.c.h.b16 %v529
    %v1631 = vunpack.c.l.b16 %v530
    %v1632 = vunpack.c.h.b16 %v530
    %v1633 = vunpack.c.l.b16 %v531
    %v1634 = vunpack.c.h.b16 %v531
    %v1635 = vunpack.c.l.b16 %v532
    %v1636 = vunpack.c.h.b16 %v532
    %v1637 = vunpack.c.l.b16 %v533
    %v1638 = vunpack.c.h.b16 %v533
    %v1639 = vunpack.c.l.b16 %v534
    %v1640 = vunpack.c.h.b16 %v534
    %v1641 = vunpack.c.l.b16 %v535
    %v1642 = vunpack.c.h.b16 %v535
    %v1643 = vunpack.c.l.b16 %v536
    %v1644 = vunpack.c.h.b16 %v536
    %v1645 = vunpack.c.l.b16 %v537
    %v1646 = vunpack.c.h.b16 %v537
    %v1647 = vunpack.c.l.b16 %v538
    %v1648 = vunpack.c.h.b16 %v538
    %v1649 = vunpack.c.l.b16 %v539
    %v1650 = vunpack.c.h.b16 %v539
    %v1651 = vunpack.c.l.b16 %v540
    %v1652 = vunpack.c.h.b16 %v540
    %v1653 = vunpack.c.l.b16 %v541
    %v1654 = vunpack.c.h.b16 %v541
    %v1655 = vunpack.c.l.b16 %v542
    %v1656 = vunpack.c.h.b16 %v542
    %v1657 = vunpack.c.l.b16 %v543
    %v1658 = vunpack.c.h.b16 %v543
    %v1659 = vunpack.c.l.b16 %v544
    %v1660 = vunpack.c.h.b16 %v544
    %v1661 = vunpack.c.l.b16 %v545
    %v1662 = vunpack.c.h.b16 %v545
    %v1663 = vunpack.c.l.b16 %v546
    %v1664 = vunpack.c.h.b16 %v546
    %v1665 = vunpack.c.l.b16 %v547
    %v1666 = vunpack.c.h.b16 %v547
    %v1667 = vunpack.c.l.b16 %v548
    %v1668 = vunpack.c.h.b16 %v548
    %v1669 = vunpack.c.l.b16 %v549
    %v1670 = vunpack.c.h.b16 %v549
    %v1671 = vunpack.c.l.b16 %v550
    %v1672 = vunpack.c.h.b16 %v550
    %v1673 = vunpack.c.l.b16 %v551
    %v1674 = vunpack.c.h.b16 %v551
    %v1675 = vunpack.c.l.b16 %v552
    %v1676 = vunpack.c.h.b16 %v552
    %v1677 = vunpack.c.l.b16 %v553
    %v1678 = vunpack.c.h.b16 %v553
    %v1679 = vunpack.c.l.b16 %v554
    %v1680 = vunpack.c.h.b16 %v554
    %v1681 = vunpack.c.l.b16 %v555
    %v1682 = vunpack.c.h.b16 %v555
    %v1683 = vunpack.c.l.b16 %v556
    %v1684 = vunpack.c.h.b16 %v556
    %v1685 = vunpack.c.l.b16 %v557
    %v1686 = vunpack.c.h.b16 %v557
    %v1687 = vunpack.c.l.b16 %v558
    %v1688 = vunpack.c.h.b16 %v558
    %v1689 = vunpack.c.l.b16 %v559
    %v1690 = vunpack.c.h.b16 %v559
    %v1691 = vunpack.c.l.b16 %v560
    %v1692 = vunpack.c.h.b16 %v560
    %v1693 = vunpack.c.l.b16 %v561
    %v1694 = vunpack.c.h.b16 %v561
    %v1695 = vunpack.c.l.b16 %v562
    %v1696 = vunpack.c.h.b16 %v562
    %v1697 = vunpack.c.l.b16 %v563
    %v1698 = vunpack.c.h.b16 %v563
    %v1699 = vunpack.c.l.b16 %v564
    %v1700 = vunpack.c.h.b16 %v564
    %v1701 = vunpack.c.l.b16 %v565
    %v1702 = vunpack.c.h.b16 %v565
    %v1703 = vunpack.c.l.b16 %v566
    %v1704 = vunpack.c.h.b16 %v566
    %v1705 = vunpack.c.l.b16 %v567
    %v1706 = vunpack.c.h.b16 %v567
    %v1707 = vunpack.c.l.b16 %v568
    %v1708 = vunpack.c.h.b16 %v568
    %v1709 = vunpack.c.l.b16 %v569
    %v1710 = vunpack.c.h.b16 %v569
    %v1711 = vunpack.c.l.b16 %v570
    %v1712 = vunpack.c.h.b16 %v570
    %v1713 = vunpack.c.l.b16 %v571
    %v1714 = vunpack.c.h.b16 %v571
    %v1715 = vunpack.c.l.b16 %v572
    %v1716 = vunpack.c.h.b16 %v572
    %v1717 = vunpack.c.l.b16 %v573
    %v1718 = vunpack.c.h.b16 %v573
    %v1719 = vunpack.c.l.b16 %v574
    %v1720 = vunpack.c.h.b16 %v574
    %v1721 = vunpack.c.l.b16 %v575
    %v1722 = vunpack.c.h.b16 %v575
    %v1723 = vunpack.c.l.b16 %v576
    %v1724 = vunpack.c.h.b16 %v576
    %v1725 = vunpack.c.l.b16 %v577
    %v1726 = vunpack.c.h.b16 %v577
    %v1727 = vunpack.c.l.b16 %v578
    %v1728 = vunpack.c.h.b16 %v578
    %v1729 = vunpack.c.l.b16 %v579
    %v1730 = vunpack.c.h.b16 %v579
    %v1731 = vunpack.c.l.b16 %v580
    %v1732 = vunpack.c.h.b16 %v580
    %v1733 = vunpack.c.l.b16 %v581
    %v1734 = vunpack.c.h.b16 %v581
    %v1735 = vunpack.c.l.b16 %v582
    %v1736 = vunpack.c.h.b16 %v582
    %v1737 = vunpack.c.l.b16 %v583
    %v1738 = vunpack.c.h.b16 %v583
    %v1739 = vunpack.c.l.b16 %v584
    %v1740 = vunpack.c.h.b16 %v584
    %v1741 = vunpack.c.l.b16 %v585
    %v1742 = vunpack.c.h.b16 %v585
    %v1743 = vunpack.c.l.b16 %v586
    %v1744 = vunpack.c.h.b16 %v586
    %v1745 = vunpack.c.l.b16 %v587
    %v1746 = vunpack.c.h.b16 %v587
    %v1747 = vunpack.c.l.b16 %v588
    %v1748 = vunpack.c.h.b16 %v588
    %v1749 = vunpack.c.l.b16 %v589
    %v1750 = vunpack.c.h.b16 %v589
    %v1751 = vunpack.c.l.b16 %v590
    %v1752 = vunpack.c.h.b16 %v590
    %v1753 = vunpack.c.l.b16 %v591
    %v1754 = vunpack.c.h.b16 %v591
    %v1755 = vunpack.c.l.b16 %v592
    %v1756 = vunpack.c.h.b16 %v592
    %v1757 = vunpack.c.l.b16 %v593
    %v1758 = vunpack.c.h.b16 %v593
    %v1759 = vunpack.c.l.b16 %v594
    %v1760 = vunpack.c.h.b16 %v594
    %v1761 = vunpack.c.l.b16 %v595
    %v1762 = vunpack.c.h.b16 %v595
    %v1763 = vunpack.c.l.b16 %v596
    %v1764 = vunpack.c.h.b16 %v596
    %v1765 = vunpack.c.l.b16 %v597
    %v1766 = vunpack.c.h.b16 %v597
    %v1767 = vunpack.c.l.b16 %v598
    %v1768 = vunpack.c.h.b16 %v598
    %v1769 = vunpack.c.l.b16 %v599
    %v1770 = vunpack.c.h.b16 %v599
    %v1771 = vunpack.c.l.b16 %v600
    %v1772 = vunpack.c.h.b16 %v600
    %v1773 = vunpack.c.l.b16 %v601
    %v1774 = vunpack.c.h.b16 %v601
    %v1775 = vunpack.c.l.b16 %v602
    %v1776 = vunpack.c.h.b16 %v602
    %v1777 = vunpack.c.l.b16 %v603
    %v1778 = vunpack.c.h.b16 %v603
    %v1779 = vunpack.c.l.b16 %v604
    %v1780 = vunpack.c.h.b16 %v604
    %v1781 = vunpack.c.l.b16 %v605
    %v1782 = vunpack.c.h.b16 %v605
    %v1783 = vunpack.c.l.b16 %v606
    %v1784 = vunpack.c.h.b16 %v606
    %v1785 = vunpack.c.l.b16 %v607
    %v1786 = vunpack.c.h.b16 %v607
    %v1787 = vunpack.c.l.b16 %v608
    %v1788 = vunpack.c.h.b16 %v608
    %v1789 = vunpack.c.l.b16 %v609
    %v1790 = vunpack.c.h.b16 %v609
    %v1791 = vunpack.c.l.b16 %v610
    %v1792 = vunpack.c.h.b16 %v610
    %v1793 = vunpack.c.l.b16 %v611
    %v1794 = vunpack.c.h.b16 %v611
    %v1795 = vunpack.c.l.b16 %v612
    %v1796 = vunpack.c.h.b16 %v612
    %v1797 = vunpack.c.l.b16 %v613
    %v1798 = vunpack.c.h.b16 %v613
    %v1799 = vunpack.c.l.b16 %v614
    %v1800 = vunpack.c.h.b16 %v614
    %v1801 = vunpack.c.l.b16 %v615
    %v1802 = vunpack.c.h.b16 %v615
    %v1803 = vunpack.c.l.b16 %v616
    %v1804 = vunpack.c.h.b16 %v616
    %v1805 = vunpack.c.l.b16 %v617
    %v1806 = vunpack.c.h.b16 %v617
    %v1807 = vunpack.c.l.b16 %v618
    %v1808 = vunpack.c.h.b16 %v618
    %v1809 = vunpack.c.l.b16 %v619
    %v1810 = vunpack.c.h.b16 %v619
    %v1811 = vunpack.c.l.b16 %v620
    %v1812 = vunpack.c.h.b16 %v620
    %v1813 = vunpack.c.l.b16 %v621
    %v1814 = vunpack.c.h.b16 %v621
    %v1815 = vunpack.c.l.b16 %v622
    %v1816 = vunpack.c.h.b16 %v622
    %v1817 = vunpack.c.l.b16 %v623
    %v1818 = vunpack.c.h.b16 %v623
    %v1819 = vunpack.c.l.b16 %v624
    %v1820 = vunpack.c.h.b16 %v624
    %v1821 = vunpack.c.l.b16 %v625
    %v1822 = vunpack.c.h.b16 %v625
    %v1823 = vunpack.c.l.b16 %v626
    %v1824 = vunpack.c.h.b16 %v626
    %v1825 = vunpack.c.l.b16 %v627
    %v1826 = vunpack.c.h.b16 %v627
    %v1827 = vunpack.c.l.b16 %v628
    %v1828 = vunpack.c.h.b16 %v628
    %v1829 = vunpack.c.l.b16 %v629
    %v1830 = vunpack.c.h.b16 %v629
    %v1831 = vunpack.c.l.b16 %v630
    %v1832 = vunpack.c.h.b16 %v630
    %v1833 = vunpack.c.l.b16 %v631
    %v1834 = vunpack.c.h.b16 %v631
    %v1835 = vunpack.c.l.b16 %v632
    %v1836 = vunpack.c.h.b16 %v632
    %v1837 = vunpack.c.l.b16 %v633
    %v1838 = vunpack.c.h.b16 %v633
    %v1839 = vunpack.c.l.b16 %v634
    %v1840 = vunpack.c.h.b16 %v634
    %v1841 = vunpack.c.l.b16 %v635
    %v1842 = vunpack.c.h.b16 %v635
    %v1843 = vunpack.c.l.b16 %v636
    %v1844 = vunpack.c.h.b16 %v636
    %v1845 = vunpack.c.l.b16 %v637
    %v1846 = vunpack.c.h.b16 %v637
    %v1847 = vunpack.c.l.b16 %v638
    %v1848 = vunpack.c.h.b16 %v638
    %v1849 = vunpack.c.l.b16 %v639
    %v1850 = vunpack.c.h.b16 %v639
    %v1851 = vunpack.c.l.b16 %v640
    %v1852 = vunpack.c.h.b16 %v640
    %v1853 = vunpack.c.l.b16 %v641
    %v1854 = vunpack.c.h.b16 %v641
    %v1855 = vunpack.c.l.b16 %v642
    %v1856 = vunpack.c.h.b16 %v642
    %v1857 = vunpack.c.l.b16 %v643
    %v1858 = vunpack.c.h.b16 %v643
    %v1859 = vunpack.c.l.b16 %v644
    %v1860 = vunpack.c.h.b16 %v644
    %v1861 = vunpack.c.l.b16 %v645
    %v1862 = vunpack.c.h.b16 %v645
    %v1863 = vunpack.c.l.b16 %v646
    %v1864 = vunpack.c.h.b16 %v646
    %v1865 = vpack.c.b16 %v1089, %v1081
    %v1866 = vpack.c.b16 %v1090, %v1082
    %v1867 = vpack.c.b16 %v1091, %v1083
    %v1868 = vpack.c.b16 %v1092, %v1084
    %v1869 = vpack.c.b16 %v1093, %v1085
    %v1870 = vpack.c.b16 %v1094, %v1086
    %v1871 = vpack.c.b16 %v1095, %v1087
    %v1872 = vpack.c.b16 %v1096, %v1088
    %v1873 = vpack.c.b16 %v1105, %v1097
    %v1874 = vpack.c.b16 %v1106, %v1098
    %v1875 = vpack.c.b16 %v1107, %v1099
    %v1876 = vpack.c.b16 %v1108, %v1100
    %v1877 = vpack.c.b16 %v1109, %v1101
    %v1878 = vpack.c.b16 %v1110, %v1102
    %v1879 = vpack.c.b16 %v1111, %v1103
    %v1880 = vpack.c.b16 %v1112, %v1104
    %v1881 = vpack.c.b16 %v1121, %v1113
    %v1882 = vpack.c.b16 %v1122, %v1114
    %v1883 = vpack.c.b16 %v1123, %v1115
    %v1884 = vpack.c.b16 %v1124, %v1116
    %v1885 = vpack.c.b16 %v1125, %v1117
    %v1886 = vpack.c.b16 %v1126, %v1118
    %v1887 = vpack.c.b16 %v1127, %v1119
    %v1888 = vpack.c.b16 %v1128, %v1120
    %v1889 = vpack.c.b16 %v1137, %v1129
    %v1890 = vpack.c.b16 %v1138, %v1130
    %v1891 = vpack.c.b16 %v1139, %v1131
    %v1892 = vpack.c.b16 %v1140, %v1132
    %v1893 = vpack.c.b16 %v1141, %v1133
    %v1894 = vpack.c.b16 %v1142, %v1134
    %v1895 = vpack.c.b16 %v1143, %v1135
    %v1896 = vpack.c.b16 %v1144, %v1136
    %v1897 = vpack.c.b16 %v1153, %v1145
    %v1898 = vpack.c.b16 %v1154, %v1146
    %v1899 = vpack.c.b16 %v1155, %v1147
    %v1900 = vpack.c.b16 %v1156, %v1148
    %v1901 = vpack.c.b16 %v1157, %v1149
    %v1902 = vpack.c.b16 %v1158, %v1150
    %v1903 = vpack.c.b16 %v1159, %v1151
    %v1904 = vpack.c.b16 %v1160, %v1152
    %v1905 = vpack.c.b16 %v1169, %v1161
    %v1906 = vpack.c.b16 %v1170, %v1162
    %v1907 = vpack.c.b16 %v1171, %v1163
    %v1908 = vpack.c.b16 %v1172, %v1164
    %v1909 = vpack.c.b16 %v1173, %v1165
    %v1910 = vpack.c.b16 %v1174, %v1166
    %v1911 = vpack.c.b16 %v1175, %v1167
    %v1912 = vpack.c.b16 %v1176, %v1168
    %v1913 = vpack.c.b16 %v1185, %v1177
    %v1914 = vpack.c.b16 %v1186, %v1178
    %v1915 = vpack.c.b16 %v1187, %v1179
    %v1916 = vpack.c.b16 %v1188, %v1180
    %v1917 = vpack.c.b16 %v1189, %v1181
    %v1918 = vpack.c.b16 %v1190, %v1182
    %v1919 = vpack.c.b16 %v1191, %v1183
    %v1920 = vpack.c.b16 %v1192, %v1184
    %v1921 = vpack.c.b16 %v1201, %v1193
    %v1922 = vpack.c.b16 %v1202, %v1194
    %v1923 = vpack.c.b16 %v1203, %v1195
    %v1924 = vpack.c.b16 %v1204, %v1196
    %v1925 = vpack.c.b16 %v1205, %v1197
    %v1926 = vpack.c.b16 %v1206, %v1198
    %v1927 = vpack.c.b16 %v1207, %v1199
    %v1928 = vpack.c.b16 %v1208, %v1200
    %v1929 = vpack.c.b16 %v1217, %v1209
    %v1930 = vpack.c.b16 %v1218, %v1210
    %v1931 = vpack.c.b16 %v1219, %v1211
    %v1932 = vpack.c.b16 %v1220, %v1212
    %v1933 = vpack.c.b16 %v1221, %v1213
    %v1934 = vpack.c.b16 %v1222, %v1214
    %v1935 = vpack.c.b16 %v1223, %v1215
    %v1936 = vpack.c.b16 %v1224, %v1216
    %v1937 = vpack.c.b16 %v1233, %v1225
    %v1938 = vpack.c.b16 %v1234, %v1226
    %v1939 = vpack.c.b16 %v1235, %v1227
    %v1940 = vpack.c.b16 %v1236, %v1228
    %v1941 = vpack.c.b16 %v1237, %v1229
    %v1942 = vpack.c.b16 %v1238, %v1230
    %v1943 = vpack.c.b16 %v1239, %v1231
    %v1944 = vpack.c.b16 %v1240, %v1232
    %v1945 = vpack.c.b16 %v1249, %v1241
    %v1946 = vpack.c.b16 %v1250, %v1242
    %v1947 = vpack.c.b16 %v1251, %v1243
    %v1948 = vpack.c.b16 %v1252, %v1244
    %v1949 = vpack.c.b16 %v1253, %v1245
    %v1950 = vpack.c.b16 %v1254, %v1246
    %v1951 = vpack.c.b16 %v1255, %v1247
    %v1952 = vpack.c.b16 %v1256, %v1248
    %v1953 = vpack.c.b16 %v1265, %v1257
    %v1954 = vpack.c.b16 %v1266, %v1258
    %v1955 = vpack.c.b16 %v1267, %v1259
    %v1956 = vpack.c.b16 %v1268, %v1260
    %v1957 = vpack.c.b16 %v1269, %v1261
    %v1958 = vpack.c.b16 %v1270, %v1262
    %v1959 = vpack.c.b16 %v1271, %v1263
    %v1960 = vpack.c.b16 %v1272, %v1264
    %v1961 = vpack.c.b16 %v1281, %v1273
    %v1962 = vpack.c.b16 %v1282, %v1274
    %v1963 = vpack.c.b16 %v1283, %v1275
    %v1964 = vpack.c.b16 %v1284, %v1276
    %v1965 = vpack.c.b16 %v1285, %v1277
    %v1966 = vpack.c.b16 %v1286, %v1278
    %v1967 = vpack.c.b16 %v1287, %v1279
    %v1968 = vpack.c.b16 %v1288, %v1280
    %v1969 = vpack.c.b16 %v1297, %v1289
    %v1970 = vpack.c.b16 %v1298, %v1290
    %v1971 = vpack.c.b16 %v1299, %v1291
    %v1972 = vpack.c.b16 %v1300, %v1292
    %v1973 = vpack.c.b16 %v1301, %v1293
    %v1974 = vpack.c.b16 %v1302, %v1294
    %v1975 = vpack.c.b16 %v1303, %v1295
    %v1976 = vpack.c.b16 %v1304, %v1296
    %v1977 = vpack.c.b16 %v1313, %v1305
    %v1978 = vpack.c.b16 %v1314, %v1306
    %v1979 = vpack.c.b16 %v1315, %v1307
    %v1980 = vpack.c.b16 %v1316, %v1308
    %v1981 = vpack.c.b16 %v1317, %v1309
    %v1982 = vpack.c.b16 %v1318, %v1310
    %v1983 = vpack.c.b16 %v1319, %v1311
    %v1984 = vpack.c.b16 %v1320, %v1312
    %v1985 = vpack.c.b16 %v1329, %v1321
    %v1986 = vpack.c.b16 %v1330, %v1322
    %v1987 = vpack.c.b16 %v1331, %v1323
    %v1988 = vpack.c.b16 %v1332, %v1324
    %v1989 = vpack.c.b16 %v1333, %v1325
    %v1990 = vpack.c.b16 %v1334, %v1326
    %v1991 = vpack.c.b16 %v1335, %v1327
    %v1992 = vpack.c.b16 %v1336, %v1328
    %v1993 = vpack.c.b16 %v1345, %v1337
    %v1994 = vpack.c.b16 %v1346, %v1338
    %v1995 = vpack.c.b16 %v1347, %v1339
    %v1996 = vpack.c.b16 %v1348, %v1340
    %v1997 = vpack.c.b16 %v1349, %v1341
    %v1998 = vpack.c.b16 %v1350, %v1342
    %v1999 = vpack.c.b16 %v1351, %v1343
    %v2000 = vpack.c.b16 %v1352, %v1344
    %v2001 = vpack.c.b16 %v1361, %v1353
    %v2002 = vpack.c.b16 %v1362, %v1354
    %v2003 = vpack.c.b16 %v1363, %v1355
    %v2004 = vpack.c.b16 %v1364, %v1356
    %v2005 = vpack.c.b16 %v1365, %v1357
    %v2006 = vpack.c.b16 %v1366, %v1358
    %v2007 = vpack.c.b16 %v1367, %v1359
    %v2008 = vpack.c.b16 %v1368, %v1360
    %v2009 = vpack.c.b16 %v1377, %v1369
    %v2010 = vpack.c.b16 %v1378, %v1370
    %v2011 = vpack.c.b16 %v1379, %v1371
    %v2012 = vpack.c.b16 %v1380, %v1372
    %v2013 = vpack.c.b16 %v1381, %v1373
    %v2014 = vpack.c.b16 %v1382, %v1374
    %v2015 = vpack.c.b16 %v1383, %v1375
    %v2016 = vpack.c.b16 %v1384, %v1376
    %v2017 = vpack.c.b16 %v1393, %v1385
    %v2018 = vpack.c.b16 %v1394, %v1386
    %v2019 = vpack.c.b16 %v1395, %v1387
    %v2020 = vpack.c.b16 %v1396, %v1388
    %v2021 = vpack.c.b16 %v1397, %v1389
    %v2022 = vpack.c.b16 %v1398, %v1390
    %v2023 = vpack.c.b16 %v1399, %v1391
    %v2024 = vpack.c.b16 %v1400, %v1392
    %v2025 = vpack.c.b16 %v1409, %v1401
    %v2026 = vpack.c.b16 %v1410, %v1402
    %v2027 = vpack.c.b16 %v1411, %v1403
    %v2028 = vpack.c.b16 %v1412, %v1404
    %v2029 = vpack.c.b16 %v1413, %v1405
    %v2030 = vpack.c.b16 %v1414, %v1406
    %v2031 = vpack.c.b16 %v1415, %v1407
    %v2032 = vpack.c.b16 %v1416, %v1408
    %v2033 = vpack.c.b16 %v1425, %v1417
    %v2034 = vpack.c.b16 %v1426, %v1418
    %v2035 = vpack.c.b16 %v1427, %v1419
    %v2036 = vpack.c.b16 %v1428, %v1420
    %v2037 = vpack.c.b16 %v1429, %v1421
    %v2038 = vpack.c.b16 %v1430, %v1422
    %v2039 = vpack.c.b16 %v1431, %v1423
    %v2040 = vpack.c.b16 %v1432, %v1424
    %v2041 = vpack.c.b16 %v1441, %v1433
    %v2042 = vpack.c.b16 %v1442, %v1434
    %v2043 = vpack.c.b16 %v1443, %v1435
    %v2044 = vpack.c.b16 %v1444, %v1436
    %v2045 = vpack.c.b16 %v1445, %v1437
    %v2046 = vpack.c.b16 %v1446, %v1438
    %v2047 = vpack.c.b16 %v1447, %v1439
    %v2048 = vpack.c.b16 %v1448, %v1440
    %v2049 = vpack.c.b16 %v1457, %v1449
    %v2050 = vpack.c.b16 %v1458, %v1450
    %v2051 = vpack.c.b16 %v1459, %v1451
    %v2052 = vpack.c.b16 %v1460, %v1452
    %v2053 = vpack.c.b16 %v1461, %v1453
    %v2054 = vpack.c.b16 %v1462, %v1454
    %v2055 = vpack.c.b16 %v1463, %v1455
    %v2056 = vpack.c.b16 %v1464, %v1456
    %v2057 = vpack.c.b16 %v1473, %v1465
    %v2058 = vpack.c.b16 %v1474, %v1466
    %v2059 = vpack.c.b16 %v1475, %v1467
    %v2060 = vpack.c.b16 %v1476, %v1468
    %v2061 = vpack.c.b16 %v1477, %v1469
    %v2062 = vpack.c.b16 %v1478, %v1470
    %v2063 = vpack.c.b16 %v1479, %v1471
    %v2064 = vpack.c.b16 %v1480, %v1472
    %v2065 = vpack.c.b16 %v1489, %v1481
    %v2066 = vpack.c.b16 %v1490, %v1482
    %v2067 = vpack.c.b16 %v1491, %v1483
    %v2068 = vpack.c.b16 %v1492, %v1484
    %v2069 = vpack.c.b16 %v1493, %v1485
    %v2070 = vpack.c.b16 %v1494, %v1486
    %v2071 = vpack.c.b16 %v1495, %v1487
    %v2072 = vpack.c.b16 %v1496, %v1488
    %v2073 = vpack.c.b16 %v1505, %v1497
    %v2074 = vpack.c.b16 %v1506, %v1498
    %v2075 = vpack.c.b16 %v1507, %v1499
    %v2076 = vpack.c.b16 %v1508, %v1500
    %v2077 = vpack.c.b16 %v1509, %v1501
    %v2078 = vpack.c.b16 %v1510, %v1502
    %v2079 = vpack.c.b16 %v1511, %v1503
    %v2080 = vpack.c.b16 %v1512, %v1504
    %v2081 = vpack.c.b16 %v1521, %v1513
    %v2082 = vpack.c.b16 %v1522, %v1514
    %v2083 = vpack.c.b16 %v1523, %v1515
    %v2084 = vpack.c.b16 %v1524, %v1516
    %v2085 = vpack.c.b16 %v1525, %v1517
    %v2086 = vpack.c.b16 %v1526, %v1518
    %v2087 = vpack.c.b16 %v1527, %v1519
    %v2088 = vpack.c.b16 %v1528, %v1520
    %v2089 = vpack.c.b16 %v1537, %v1529
    %v2090 = vpack.c.b16 %v1538, %v1530
    %v2091 = vpack.c.b16 %v1539, %v1531
    %v2092 = vpack.c.b16 %v1540, %v1532
    %v2093 = vpack.c.b16 %v1541, %v1533
    %v2094 = vpack.c.b16 %v1542, %v1534
    %v2095 = vpack.c.b16 %v1543, %v1535
    %v2096 = vpack.c.b16 %v1544, %v1536
    %v2097 = vpack.c.b16 %v1553, %v1545
    %v2098 = vpack.c.b16 %v1554, %v1546
    %v2099 = vpack.c.b16 %v1555, %v1547
    %v2100 = vpack.c.b16 %v1556, %v1548
    %v2101 = vpack.c.b16 %v1557, %v1549
    %v2102 = vpack.c.b16 %v1558, %v1550
    %v2103 = vpack.c.b16 %v1559, %v1551
    %v2104 = vpack.c.b16 %v1560, %v1552
    %v2105 = vpack.c.b16 %v1569, %v1561
    %v2106 = vpack.c.b16 %v1570, %v1562
    %v2107 = vpack.c.b16 %v1571, %v1563
    %v2108 = vpack.c.b16 %v1572, %v1564
    %v2109 = vpack.c.b16 %v1573, %v1565
    %v2110 = vpack.c.b16 %v1574, %v1566
    %v2111 = vpack.c.b16 %v1575, %v1567
    %v2112 = vpack.c.b16 %v1576, %v1568
    %v2113 = vpack.c.b16 %v1585, %v1577
    %v2114 = vpack.c.b16 %v1586, %v1578
    %v2115 = vpack.c.b16 %v1587, %v1579
    %v2116 = vpack.c.b16 %v1588, %v1580
    %v2117 = vpack.c.b16 %v1589, %v1581
    %v2118 = vpack.c.b16 %v1590, %v1582
    %v2119 = vpack.c.b16 %v1591, %v1583
    %v2120 = vpack.c.b16 %v1592, %v1584
    %v2121 = vpack.c.b16 %v1601, %v1593
    %v2122 = vpack.c.b16 %v1602, %v1594
    %v2123 = vpack.c.b16 %v1603, %v1595
    %v2124 = vpack.c.b16 %v1604, %v1596
    %v2125 = vpack.c.b16 %v1605, %v1597
    %v2126 = vpack.c.b16 %v1606, %v1598
    %v2127 = vpack.c.b16 %v1607, %v1599
    %v2128 = vpack.c.b16 %v1608, %v1600
    %v2129 = vpack.c.b16 %v1617, %v1609
    %v2130 = vpack.c.b16 %v1618, %v1610
    %v2131 = vpack.c.b16 %v1619, %v1611
    %v2132 = vpack.c.b16 %v1620, %v1612
    %v2133 = vpack.c.b16 %v1621, %v1613
    %v2134 = vpack.c.b16 %v1622, %v1614
    %v2135 = vpack.c.b16 %v1623, %v1615
    %v2136 = vpack.c.b16 %v1624, %v1616
    %v2137 = vpack.c.b16 %v1633, %v1625
    %v2138 = vpack.c.b16 %v1634, %v1626
    %v2139 = vpack.c.b16 %v1635, %v1627
    %v2140 = vpack.c.b16 %v1636, %v1628
    %v2141 = vpack.c.b16 %v1637, %v1629
    %v2142 = vpack.c.b16 %v1638, %v1630
    %v2143 = vpack.c.b16 %v1639, %v1631
    %v2144 = vpack.c.b16 %v1640, %v1632
    %v2145 = vpack.c.b16 %v1649, %v1641
    %v2146 = vpack.c.b16 %v1650, %v1642
    %v2147 = vpack.c.b16 %v1651, %v1643
    %v2148 = vpack.c.b16 %v1652, %v1644
    %v2149 = vpack.c.b16 %v1653, %v1645
    %v2150 = vpack.c.b16 %v1654, %v1646
    %v2151 = vpack.c.b16 %v1655, %v1647
    %v2152 = vpack.c.b16 %v1656, %v1648
    %v2153 = vpack.c.b16 %v1665, %v1657
    %v2154 = vpack.c.b16 %v1666, %v1658
    %v2155 = vpack.c.b16 %v1667, %v1659
    %v2156 = vpack.c.b16 %v1668, %v1660
    %v2157 = vpack.c.b16 %v1669, %v1661
    %v2158 = vpack.c.b16 %v1670, %v1662
    %v2159 = vpack.c.b16 %v1671, %v1663
    %v2160 = vpack.c.b16 %v1672, %v1664
    %v2161 = vpack.c.b16 %v1681, %v1673
    %v2162 = vpack.c.b16 %v1682, %v1674
    %v2163 = vpack.c.b16 %v1683, %v1675
    %v2164 = vpack.c.b16 %v1684, %v1676
    %v2165 = vpack.c.b16 %v1685, %v1677
    %v2166 = vpack.c.b16 %v1686, %v1678
    %v2167 = vpack.c.b16 %v1687, %v1679
    %v2168 = vpack.c.b16 %v1688, %v1680
    %v2169 = vpack.c.b16 %v1697, %v1689
    %v2170 = vpack.c.b16 %v1698, %v1690
    %v2171 = vpack.c.b16 %v1699, %v1691
    %v2172 = vpack.c.b16 %v1700, %v1692
    %v2173 = vpack.c.b16 %v1701, %v1693
    %v2174 = vpack.c.b16 %v1702, %v1694
    %v2175 = vpack.c.b16 %v1703, %v1695
    %v2176 = vpack.c.b16 %v1704, %v1696
    %v2177 = vpack.c.b16 %v1713, %v1705
    %v2178 = vpack.c.b16 %v1714, %v1706
    %v2179 = vpack.c.b16 %v1715, %v1707
    %v2180 = vpack.c.b16 %v1716, %v1708
    %v2181 = vpack.c.b16 %v1717, %v1709
    %v2182 = vpack.c.b16 %v1718, %v1710
    %v2183 = vpack.c.b16 %v1719, %v1711
    %v2184 = vpack.c.b16 %v1720, %v1712
    %v2185 = vpack.c.b16 %v1729, %v1721
    %v2186 = vpack.c.b16 %v1730, %v1722
    %v2187 = vpack.c.b16 %v1731, %v1723
    %v2188 = vpack.c.b16 %v1732, %v1724
    %v2189 = vpack.c.b16 %v1733, %v1725
    %v2190 = vpack.c.b16 %v1734, %v1726
    %v2191 = vpack.c.b16 %v1735, %v1727
    %v2192 = vpack.c.b16 %v1736, %v1728
    %v2193 = vpack.c.b16 %v1745, %v1737
    %v2194 = vpack.c.b16 %v1746, %v1738
    %v2195 = vpack.c.b16 %v1747, %v1739
    %v2196 = vpack.c.b16 %v1748, %v1740
    %v2197 = vpack.c.b16 %v1749, %v1741
    %v2198 = vpack.c.b16 %v1750, %v1742
    %v2199 = vpack.c.b16 %v1751, %v1743
    %v2200 = vpack.c.b16 %v1752, %v1744
    %v2201 = vpack.c.b16 %v1761, %v1753
    %v2202 = vpack.c.b16 %v1762, %v1754
    %v2203 = vpack.c.b16 %v1763, %v1755
    %v2204 = vpack.c.b16 %v1764, %v1756
    %v2205 = vpack.c.b16 %v1765, %v1757
    %v2206 = vpack.c.b16 %v1766, %v1758
    %v2207 = vpack.c.b16 %v1767, %v1759
    %v2208 = vpack.c.b16 %v1768, %v1760
    %v2209 = vpack.c.b16 %v1777, %v1769
    %v2210 = vpack.c.b16 %v1778, %v1770
    %v2211 = vpack.c.b16 %v1779, %v1771
    %v2212 = vpack.c.b16 %v1780, %v1772
    %v2213 = vpack.c.b16 %v1781, %v1773
    %v2214 = vpack.c.b16 %v1782, %v1774
    %v2215 = vpack.c.b16 %v1783, %v1775
    %v2216 = vpack.c.b16 %v1784, %v1776
    %v2217 = vpack.c.b16 %v1793, %v1785
    %v2218 = vpack.c.b16 %v1794, %v1786
    %v2219 = vpack.c.b16 %v1795, %v1787
    %v2220 = vpack.c.b16 %v1796, %v1788
    %v2221 = vpack.c.b16 %v1797, %v1789
    %v2222 = vpack.c.b16 %v1798, %v1790
    %v2223 = vpack.c.b16 %v1799, %v1791
    %v2224 = vpack.c.b16 %v1800, %v1792
    %v2225 = vpack.c.b16 %v1809, %v1801
    %v2226 = vpack.c.b16 %v1810, %v1802
    %v2227 = vpack.c.b16 %v1811, %v1803
    %v2228 = vpack.c.b16 %v1812, %v1804
    %v2229 = vpack.c.b16 %v1813, %v1805
    %v2230 = vpack.c.b16 %v1814, %v1806
    %v2231 = vpack.c.b16 %v1815, %v1807
    %v2232 = vpack.c.b16 %v1816, %v1808
    %v2233 = vpack.c.b16 %v1825, %v1817
    %v2234 = vpack.c.b16 %v1826, %v1818
    %v2235 = vpack.c.b16 %v1827, %v1819
    %v2236 = vpack.c.b16 %v1828, %v1820
    %v2237 = vpack.c.b16 %v1829, %v1821
    %v2238 = vpack.c.b16 %v1830, %v1822
    %v2239 = vpack.c.b16 %v1831, %v1823
    %v2240 = vpack.c.b16 %v1832, %v1824
    %v2241 = vpack.c.b16 %v1841, %v1833
    %v2242 = vpack.c.b16 %v1842, %v1834
    %v2243 = vpack.c.b16 %v1843, %v1835
    %v2244 = vpack.c.b16 %v1844, %v1836
    %v2245 = vpack.c.b16 %v1845, %v1837
    %v2246 = vpack.c.b16 %v1846, %v1838
    %v2247 = vpack.c.b16 %v1847, %v1839
    %v2248 = vpack.c.b16 %v1848, %v1840
    %v2249 = vpack.c.b16 %v1857, %v1849
    %v2250 = vpack.c.b16 %v1858, %v1850
    %v2251 = vpack.c.b16 %v1859, %v1851
    %v2252 = vpack.c.b16 %v1860, %v1852
    %v2253 = vpack.c.b16 %v1861, %v1853
    %v2254 = vpack.c.b16 %v1862, %v1854
    %v2255 = vpack.c.b16 %v1863, %v1855
    %v2256 = vpack.c.b16 %v1864, %v1856
    %vm2649 = vcmask 130048
    %v2651 = vsel %vm2649, %v254, 0
    %2653 = vmatprep.subr.bf16.mxu0 %v1866
    %2654 = vmatpush1.bf16.msra.mxu0 %v1865
    %2655 = vmatprep.subr.bf16.mxu0 %v1874
    %2656 = vmatpush1.bf16.msra.mxu0 %v1873
    %2657 = vmatprep.subr.bf16.mxu0 %v1882
    %2658 = vmatpush1.bf16.msra.mxu0 %v1881
    %2659 = vmatprep.subr.bf16.mxu0 %v1890
    %2660 = vmatpush1.bf16.msra.mxu0 %v1889
    %2661 = vmatprep.subr.bf16.mxu0 %v1898
    %2662 = vmatpush1.bf16.msra.mxu0 %v1897
    %2663 = vmatprep.subr.bf16.mxu0 %v1906
    %2664 = vmatpush1.bf16.msra.mxu0 %v1905
    %2665 = vmatprep.subr.bf16.mxu0 %v1914
    %2666 = vmatpush1.bf16.msra.mxu0 %v1913
    %2667 = vmatprep.subr.bf16.mxu0 %v1922
    %2668 = vmatpush1.bf16.msra.mxu0 %v1921
    %2669 = vmatprep.subr.bf16.mxu0 %v1930
    %2670 = vmatpush1.bf16.msra.mxu0 %v1929
    %2671 = vmatprep.subr.bf16.mxu0 %v1938
    %2672 = vmatpush1.bf16.msra.mxu0 %v1937
    %2673 = vmatprep.subr.bf16.mxu0 %v1946
    %2674 = vmatpush1.bf16.msra.mxu0 %v1945
    %2675 = vmatprep.subr.bf16.mxu0 %v1954
    %2676 = vmatpush1.bf16.msra.mxu0 %v1953
    %2677 = vmatprep.subr.bf16.mxu0 %v1962
    %2678 = vmatpush1.bf16.msra.mxu0 %v1961
    %2679 = vmatprep.subr.bf16.mxu0 %v1970
    %2680 = vmatpush1.bf16.msra.mxu0 %v1969
    %2681 = vmatprep.subr.bf16.mxu0 %v1978
    %2682 = vmatpush1.bf16.msra.mxu0 %v1977
    %2683 = vmatprep.subr.bf16.mxu0 %v1986
    %2684 = vmatpush1.bf16.msra.mxu0 %v1985
    %2685 = vmatprep.mubr.bf16.mxu0 %v249
    %2686 = vmatmul.mubr.bf16.gmra.mrb[0].mxu0 %v248
    %v2687 = vpop.f32.mrb[0].mxu0
    %v2688 = vadd.f32 %v652, %v2687
    %v2689 = vpop.f32.mrb[0].mxu0
    %v2690 = vadd.f32 %v656, %v2689
    %v2691 = vpop.f32.mrb[0].mxu0
    %v2692 = vpop.f32.mrb[0].mxu0
    %2693 = vdwg.mxu0
    %2694 = vmatprep.subr.bf16.mxu0 %v1994
    %2695 = vmatpush1.bf16.msra.mxu0 %v1993
    %2696 = vmatprep.subr.bf16.mxu0 %v2002
    %2697 = vmatpush1.bf16.msra.mxu0 %v2001
    %2698 = vmatprep.subr.bf16.mxu0 %v2010
    %2699 = vmatpush1.bf16.msra.mxu0 %v2009
    %2700 = vmatprep.subr.bf16.mxu0 %v2018
    %2701 = vmatpush1.bf16.msra.mxu0 %v2017
    %2702 = vmatprep.subr.bf16.mxu0 %v2026
    %2703 = vmatpush1.bf16.msra.mxu0 %v2025
    %2704 = vmatprep.subr.bf16.mxu0 %v2034
    %2705 = vmatpush1.bf16.msra.mxu0 %v2033
    %2706 = vmatprep.subr.bf16.mxu0 %v2042
    %2707 = vmatpush1.bf16.msra.mxu0 %v2041
    %2708 = vmatprep.subr.bf16.mxu0 %v2050
    %2709 = vmatpush1.bf16.msra.mxu0 %v2049
    %2710 = vmatprep.subr.bf16.mxu0 %v2058
    %2711 = vmatpush1.bf16.msra.mxu0 %v2057
    %2712 = vmatprep.subr.bf16.mxu0 %v2066
    %2713 = vmatpush1.bf16.msra.mxu0 %v2065
    %2714 = vmatprep.subr.bf16.mxu0 %v2074
    %2715 = vmatpush1.bf16.msra.mxu0 %v2073
    %2716 = vmatprep.subr.bf16.mxu0 %v2082
    %2717 = vmatpush1.bf16.msra.mxu0 %v2081
    %2718 = vmatprep.subr.bf16.mxu0 %v2090
    %2719 = vmatpush1.bf16.msra.mxu0 %v2089
    %2720 = vmatprep.subr.bf16.mxu0 %v2098
    %2721 = vmatpush1.bf16.msra.mxu0 %v2097
    %2722 = vmatprep.subr.bf16.mxu0 %v2106
    %2723 = vmatpush1.bf16.msra.mxu0 %v2105
    %2724 = vmatprep.subr.bf16.mxu0 %v2114
    %2725 = vmatpush1.bf16.msra.mxu0 %v2113
    %2726 = vmatprep.mubr.bf16.mxu0 %v251
    %2727 = vmatmul.mubr.bf16.gmra.mrb[0].mxu0 %v250
    %v2728 = vpop.f32.mrb[0].mxu0
    %v2729 = vadd.f32 %v2688, %v2728
    %v2730 = vpop.f32.mrb[0].mxu0
    %v2731 = vadd.f32 %v2690, %v2730
    %v2732 = vpop.f32.mrb[0].mxu0
    %v2733 = vpop.f32.mrb[0].mxu0
    %2734 = vdwg.mxu0
    %2735 = vmatprep.subr.bf16.mxu0 %v2122
    %2736 = vmatpush1.bf16.msra.mxu0 %v2121
    %2737 = vmatprep.subr.bf16.mxu0 %v2130
    %2738 = vmatpush1.bf16.msra.mxu0 %v2129
    %2739 = vmatprep.subr.bf16.mxu0 %v2138
    %2740 = vmatpush1.bf16.msra.mxu0 %v2137
    %2741 = vmatprep.subr.bf16.mxu0 %v2146
    %2742 = vmatpush1.bf16.msra.mxu0 %v2145
    %2743 = vmatprep.subr.bf16.mxu0 %v2154
    %2744 = vmatpush1.bf16.msra.mxu0 %v2153
    %2745 = vmatprep.subr.bf16.mxu0 %v2162
    %2746 = vmatpush1.bf16.msra.mxu0 %v2161
    %2747 = vmatprep.subr.bf16.mxu0 %v2170
    %2748 = vmatpush1.bf16.msra.mxu0 %v2169
    %2749 = vmatprep.subr.bf16.mxu0 %v2178
    %2750 = vmatpush1.bf16.msra.mxu0 %v2177
    %2751 = vmatprep.subr.bf16.mxu0 %v2186
    %2752 = vmatpush1.bf16.msra.mxu0 %v2185
    %2753 = vmatprep.subr.bf16.mxu0 %v2194
    %2754 = vmatpush1.bf16.msra.mxu0 %v2193
    %2755 = vmatprep.subr.bf16.mxu0 %v2202
    %2756 = vmatpush1.bf16.msra.mxu0 %v2201
    %2757 = vmatprep.subr.bf16.mxu0 %v2210
    %2758 = vmatpush1.bf16.msra.mxu0 %v2209
    %2759 = vmatprep.subr.bf16.mxu0 %v2218
    %2760 = vmatpush1.bf16.msra.mxu0 %v2217
    %2761 = vmatprep.subr.bf16.mxu0 %v2226
    %2762 = vmatpush1.bf16.msra.mxu0 %v2225
    %2763 = vmatprep.subr.bf16.mxu0 %v2234
    %2764 = vmatpush1.bf16.msra.mxu0 %v2233
    %2765 = vmatprep.subr.bf16.mxu0 %v2242
    %2766 = vmatpush1.bf16.msra.mxu0 %v2241
    %2767 = vmatprep.mubr.bf16.mxu0 %v253
    %2768 = vmatmul.mubr.bf16.gmra.mrb[0].mxu0 %v252
    %v2769 = vpop.f32.mrb[0].mxu0
    %v2770 = vadd.f32 %v2729, %v2769
    %v2771 = vpop.f32.mrb[0].mxu0
    %v2772 = vadd.f32 %v2731, %v2771
    %v2773 = vpop.f32.mrb[0].mxu0
    %v2774 = vpop.f32.mrb[0].mxu0
    %2775 = vdwg.mxu0
    %2776 = vmatprep.subr.bf16.mxu0 %v2250
    %2777 = vmatpush1.bf16.msra.mxu0 %v2249
    %2778 = vmatprep.subr.bf16.mxu0 0
    %2779 = vmatpush1.bf16.msra.mxu0 0
    %2780 = vmatprep.subr.bf16.mxu0 0
    %2781 = vmatpush1.bf16.msra.mxu0 0
    %2782 = vmatprep.subr.bf16.mxu0 0
    %2783 = vmatpush1.bf16.msra.mxu0 0
    %2784 = vmatprep.subr.bf16.mxu0 0
    %2785 = vmatpush1.bf16.msra.mxu0 0
    %2786 = vmatprep.subr.bf16.mxu0 0
    %2787 = vmatpush1.bf16.msra.mxu0 0
    %2788 = vmatprep.subr.bf16.mxu0 0
    %2789 = vmatpush1.bf16.msra.mxu0 0
    %2790 = vmatprep.subr.bf16.mxu0 0
    %2791 = vmatpush1.bf16.msra.mxu0 0
    %2792 = vmatprep.subr.bf16.mxu0 0
    %2793 = vmatpush1.bf16.msra.mxu0 0
    %2794 = vmatprep.subr.bf16.mxu0 0
    %2795 = vmatpush1.bf16.msra.mxu0 0
    %2796 = vmatprep.subr.bf16.mxu0 0
    %2797 = vmatpush1.bf16.msra.mxu0 0
    %2798 = vmatprep.subr.bf16.mxu0 0
    %2799 = vmatpush1.bf16.msra.mxu0 0
    %2800 = vmatprep.subr.bf16.mxu0 0
    %2801 = vmatpush1.bf16.msra.mxu0 0
    %2802 = vmatprep.subr.bf16.mxu0 0
    %2803 = vmatpush1.bf16.msra.mxu0 0
    %2804 = vmatprep.subr.bf16.mxu0 0
    %2805 = vmatpush1.bf16.msra.mxu0 0
    %2806 = vmatprep.subr.bf16.mxu0 0
    %2807 = vmatpush1.bf16.msra.mxu0 0
    %2808 = vmatprep.mubr.bf16.mxu0 0
    %2809 = vmatmul.mubr.bf16.gmra.mrb[0].mxu0 %v2651
    %v2810 = vpop.f32.mrb[0].mxu0
    %v2811 = vadd.f32 %v2770, %v2810
    %v2812 = vpop.f32.mrb[0].mxu0
    %v2813 = vadd.f32 %v2772, %v2812
    %v2814 = vpop.f32.mrb[0].mxu0
    %v2815 = vpop.f32.mrb[0].mxu0
    %2816 = vdwg.mxu0
    %2817 = vmatprep.subr.bf16.mxu0 %v1868
    %2818 = vmatpush1.bf16.msra.mxu0 %v1867
    %2819 = vmatprep.subr.bf16.mxu0 %v1876
    %2820 = vmatpush1.bf16.msra.mxu0 %v1875
    %2821 = vmatprep.subr.bf16.mxu0 %v1884
    %2822 = vmatpush1.bf16.msra.mxu0 %v1883
    %2823 = vmatprep.subr.bf16.mxu0 %v1892
    %2824 = vmatpush1.bf16.msra.mxu0 %v1891
    %2825 = vmatprep.subr.bf16.mxu0 %v1900
    %2826 = vmatpush1.bf16.msra.mxu0 %v1899
    %2827 = vmatprep.subr.bf16.mxu0 %v1908
    %2828 = vmatpush1.bf16.msra.mxu0 %v1907
    %2829 = vmatprep.subr.bf16.mxu0 %v1916
    %2830 = vmatpush1.bf16.msra.mxu0 %v1915
    %2831 = vmatprep.subr.bf16.mxu0 %v1924
    %2832 = vmatpush1.bf16.msra.mxu0 %v1923
    %2833 = vmatprep.subr.bf16.mxu0 %v1932
    %2834 = vmatpush1.bf16.msra.mxu0 %v1931
    %2835 = vmatprep.subr.bf16.mxu0 %v1940
    %2836 = vmatpush1.bf16.msra.mxu0 %v1939
    %2837 = vmatprep.subr.bf16.mxu0 %v1948
    %2838 = vmatpush1.bf16.msra.mxu0 %v1947
    %2839 = vmatprep.subr.bf16.mxu0 %v1956
    %2840 = vmatpush1.bf16.msra.mxu0 %v1955
    %2841 = vmatprep.subr.bf16.mxu0 %v1964
    %2842 = vmatpush1.bf16.msra.mxu0 %v1963
    %2843 = vmatprep.subr.bf16.mxu0 %v1972
    %2844 = vmatpush1.bf16.msra.mxu0 %v1971
    %2845 = vmatprep.subr.bf16.mxu0 %v1980
    %2846 = vmatpush1.bf16.msra.mxu0 %v1979
    %2847 = vmatprep.subr.bf16.mxu0 %v1988
    %2848 = vmatpush1.bf16.msra.mxu0 %v1987
    %2849 = vmatprep.mubr.bf16.mxu0 %v249
    %2850 = vmatmul.mubr.bf16.gmra.mrb[0].mxu0 %v248
    %v2851 = vpop.f32.mrb[0].mxu0
    %v2852 = vadd.f32 %v660, %v2851
    %v2853 = vpop.f32.mrb[0].mxu0
    %v2854 = vadd.f32 %v664, %v2853
    %v2855 = vpop.f32.mrb[0].mxu0
    %v2856 = vpop.f32.mrb[0].mxu0
    %2857 = vdwg.mxu0
    %2858 = vmatprep.subr.bf16.mxu0 %v1996
    %2859 = vmatpush1.bf16.msra.mxu0 %v1995
    %2860 = vmatprep.subr.bf16.mxu0 %v2004
    %2861 = vmatpush1.bf16.msra.mxu0 %v2003
    %2862 = vmatprep.subr.bf16.mxu0 %v2012
    %2863 = vmatpush1.bf16.msra.mxu0 %v2011
    %2864 = vmatprep.subr.bf16.mxu0 %v2020
    %2865 = vmatpush1.bf16.msra.mxu0 %v2019
    %2866 = vmatprep.subr.bf16.mxu0 %v2028
    %2867 = vmatpush1.bf16.msra.mxu0 %v2027
    %2868 = vmatprep.subr.bf16.mxu0 %v2036
    %2869 = vmatpush1.bf16.msra.mxu0 %v2035
    %2870 = vmatprep.subr.bf16.mxu0 %v2044
    %2871 = vmatpush1.bf16.msra.mxu0 %v2043
    %2872 = vmatprep.subr.bf16.mxu0 %v2052
    %2873 = vmatpush1.bf16.msra.mxu0 %v2051
    %2874 = vmatprep.subr.bf16.mxu0 %v2060
    %2875 = vmatpush1.bf16.msra.mxu0 %v2059
    %2876 = vmatprep.subr.bf16.mxu0 %v2068
    %2877 = vmatpush1.bf16.msra.mxu0 %v2067
    %2878 = vmatprep.subr.bf16.mxu0 %v2076
    %2879 = vmatpush1.bf16.msra.mxu0 %v2075
    %2880 = vmatprep.subr.bf16.mxu0 %v2084
    %2881 = vmatpush1.bf16.msra.mxu0 %v2083
    %2882 = vmatprep.subr.bf16.mxu0 %v2092
    %2883 = vmatpush1.bf16.msra.mxu0 %v2091
    %2884 = vmatprep.subr.bf16.mxu0 %v2100
    %2885 = vmatpush1.bf16.msra.mxu0 %v2099
    %2886 = vmatprep.subr.bf16.mxu0 %v2108
    %2887 = vmatpush1.bf16.msra.mxu0 %v2107
    %2888 = vmatprep.subr.bf16.mxu0 %v2116
    %2889 = vmatpush1.bf16.msra.mxu0 %v2115
    %2890 = vmatprep.mubr.bf16.mxu0 %v251
    %2891 = vmatmul.mubr.bf16.gmra.mrb[0].mxu0 %v250
    %v2892 = vpop.f32.mrb[0].mxu0
    %v2893 = vadd.f32 %v2852, %v2892
    %v2894 = vpop.f32.mrb[0].mxu0
    %v2895 = vadd.f32 %v2854, %v2894
    %v2896 = vpop.f32.mrb[0].mxu0
    %v2897 = vpop.f32.mrb[0].mxu0
    %2898 = vdwg.mxu0
    %2899 = vmatprep.subr.bf16.mxu0 %v2124
    %2900 = vmatpush1.bf16.msra.mxu0 %v2123
    %2901 = vmatprep.subr.bf16.mxu0 %v2132
    %2902 = vmatpush1.bf16.msra.mxu0 %v2131
    %2903 = vmatprep.subr.bf16.mxu0 %v2140
    %2904 = vmatpush1.bf16.msra.mxu0 %v2139
    %2905 = vmatprep.subr.bf16.mxu0 %v2148
    %2906 = vmatpush1.bf16.msra.mxu0 %v2147
    %2907 = vmatprep.subr.bf16.mxu0 %v2156
    %2908 = vmatpush1.bf16.msra.mxu0 %v2155
    %2909 = vmatprep.subr.bf16.mxu0 %v2164
    %2910 = vmatpush1.bf16.msra.mxu0 %v2163
    %2911 = vmatprep.subr.bf16.mxu0 %v2172
    %2912 = vmatpush1.bf16.msra.mxu0 %v2171
    %2913 = vmatprep.subr.bf16.mxu0 %v2180
    %2914 = vmatpush1.bf16.msra.mxu0 %v2179
    %2915 = vmatprep.subr.bf16.mxu0 %v2188
    %2916 = vmatpush1.bf16.msra.mxu0 %v2187
    %2917 = vmatprep.subr.bf16.mxu0 %v2196
    %2918 = vmatpush1.bf16.msra.mxu0 %v2195
    %2919 = vmatprep.subr.bf16.mxu0 %v2204
    %2920 = vmatpush1.bf16.msra.mxu0 %v2203
    %2921 = vmatprep.subr.bf16.mxu0 %v2212
    %2922 = vmatpush1.bf16.msra.mxu0 %v2211
    %2923 = vmatprep.subr.bf16.mxu0 %v2220
    %2924 = vmatpush1.bf16.msra.mxu0 %v2219
    %2925 = vmatprep.subr.bf16.mxu0 %v2228
    %2926 = vmatpush1.bf16.msra.mxu0 %v2227
    %2927 = vmatprep.subr.bf16.mxu0 %v2236
    %2928 = vmatpush1.bf16.msra.mxu0 %v2235
    %2929 = vmatprep.subr.bf16.mxu0 %v2244
    %2930 = vmatpush1.bf16.msra.mxu0 %v2243
    %2931 = vmatprep.mubr.bf16.mxu0 %v253
    %2932 = vmatmul.mubr.bf16.gmra.mrb[0].mxu0 %v252
    %v2933 = vpop.f32.mrb[0].mxu0
    %v2934 = vadd.f32 %v2893, %v2933
    %v2935 = vpop.f32.mrb[0].mxu0
    %v2936 = vadd.f32 %v2895, %v2935
    %v2937 = vpop.f32.mrb[0].mxu0
    %v2938 = vpop.f32.mrb[0].mxu0
    %2939 = vdwg.mxu0
    %2940 = vmatprep.subr.bf16.mxu0 %v2252
    %2941 = vmatpush1.bf16.msra.mxu0 %v2251
    %2942 = vmatprep.subr.bf16.mxu0 0
    %2943 = vmatpush1.bf16.msra.mxu0 0
    %2944 = vmatprep.subr.bf16.mxu0 0
    %2945 = vmatpush1.bf16.msra.mxu0 0
    %2946 = vmatprep.subr.bf16.mxu0 0
    %2947 = vmatpush1.bf16.msra.mxu0 0
    %2948 = vmatprep.subr.bf16.mxu0 0
    %2949 = vmatpush1.bf16.msra.mxu0 0
    %2950 = vmatprep.subr.bf16.mxu0 0
    %2951 = vmatpush1.bf16.msra.mxu0 0
    %2952 = vmatprep.subr.bf16.mxu0 0
    %2953 = vmatpush1.bf16.msra.mxu0 0
    %2954 = vmatprep.subr.bf16.mxu0 0
    %2955 = vmatpush1.bf16.msra.mxu0 0
    %2956 = vmatprep.subr.bf16.mxu0 0
    %2957 = vmatpush1.bf16.msra.mxu0 0
    %2958 = vmatprep.subr.bf16.mxu0 0
    %2959 = vmatpush1.bf16.msra.mxu0 0
    %2960 = vmatprep.subr.bf16.mxu0 0
    %2961 = vmatpush1.bf16.msra.mxu0 0
    %2962 = vmatprep.subr.bf16.mxu0 0
    %2963 = vmatpush1.bf16.msra.mxu0 0
    %2964 = vmatprep.subr.bf16.mxu0 0
    %2965 = vmatpush1.bf16.msra.mxu0 0
    %2966 = vmatprep.subr.bf16.mxu0 0
    %2967 = vmatpush1.bf16.msra.mxu0 0
    %2968 = vmatprep.subr.bf16.mxu0 0
    %2969 = vmatpush1.bf16.msra.mxu0 0
    %2970 = vmatprep.subr.bf16.mxu0 0
    %2971 = vmatpush1.bf16.msra.mxu0 0
    %2972 = vmatprep.mubr.bf16.mxu0 0
    %2973 = vmatmul.mubr.bf16.gmra.mrb[0].mxu0 %v2651
    %v2974 = vpop.f32.mrb[0].mxu0
    %v2975 = vadd.f32 %v2934, %v2974
    %v2976 = vpop.f32.mrb[0].mxu0
    %v2977 = vadd.f32 %v2936, %v2976
    %v2978 = vpop.f32.mrb[0].mxu0
    %v2979 = vpop.f32.mrb[0].mxu0
    %2980 = vdwg.mxu0
    %2981 = vmatprep.subr.bf16.mxu0 %v1870
    %2982 = vmatpush1.bf16.msra.mxu0 %v1869
    %2983 = vmatprep.subr.bf16.mxu0 %v1878
    %2984 = vmatpush1.bf16.msra.mxu0 %v1877
    %2985 = vmatprep.subr.bf16.mxu0 %v1886
    %2986 = vmatpush1.bf16.msra.mxu0 %v1885
    %2987 = vmatprep.subr.bf16.mxu0 %v1894
    %2988 = vmatpush1.bf16.msra.mxu0 %v1893
    %2989 = vmatprep.subr.bf16.mxu0 %v1902
    %2990 = vmatpush1.bf16.msra.mxu0 %v1901
    %2991 = vmatprep.subr.bf16.mxu0 %v1910
    %2992 = vmatpush1.bf16.msra.mxu0 %v1909
    %2993 = vmatprep.subr.bf16.mxu0 %v1918
    %2994 = vmatpush1.bf16.msra.mxu0 %v1917
    %2995 = vmatprep.subr.bf16.mxu0 %v1926
    %2996 = vmatpush1.bf16.msra.mxu0 %v1925
    %2997 = vmatprep.subr.bf16.mxu0 %v1934
    %2998 = vmatpush1.bf16.msra.mxu0 %v1933
    %2999 = vmatprep.subr.bf16.mxu0 %v1942
    %3000 = vmatpush1.bf16.msra.mxu0 %v1941
    %3001 = vmatprep.subr.bf16.mxu0 %v1950
    %3002 = vmatpush1.bf16.msra.mxu0 %v1949
    %3003 = vmatprep.subr.bf16.mxu0 %v1958
    %3004 = vmatpush1.bf16.msra.mxu0 %v1957
    %3005 = vmatprep.subr.bf16.mxu0 %v1966
    %3006 = vmatpush1.bf16.msra.mxu0 %v1965
    %3007 = vmatprep.subr.bf16.mxu0 %v1974
    %3008 = vmatpush1.bf16.msra.mxu0 %v1973
    %3009 = vmatprep.subr.bf16.mxu0 %v1982
    %3010 = vmatpush1.bf16.msra.mxu0 %v1981
    %3011 = vmatprep.subr.bf16.mxu0 %v1990
    %3012 = vmatpush1.bf16.msra.mxu0 %v1989
    %3013 = vmatprep.mubr.bf16.mxu0 %v249
    %3014 = vmatmul.mubr.bf16.gmra.mrb[0].mxu0 %v248
    %v3015 = vpop.f32.mrb[0].mxu0
    %v3016 = vadd.f32 %v668, %v3015
    %v3017 = vpop.f32.mrb[0].mxu0
    %v3018 = vadd.f32 %v672, %v3017
    %v3019 = vpop.f32.mrb[0].mxu0
    %v3020 = vpop.f32.mrb[0].mxu0
    %3021 = vdwg.mxu0
    %3022 = vmatprep.subr.bf16.mxu0 %v1998
    %3023 = vmatpush1.bf16.msra.mxu0 %v1997
    %3024 = vmatprep.subr.bf16.mxu0 %v2006
    %3025 = vmatpush1.bf16.msra.mxu0 %v2005
    %3026 = vmatprep.subr.bf16.mxu0 %v2014
    %3027 = vmatpush1.bf16.msra.mxu0 %v2013
    %3028 = vmatprep.subr.bf16.mxu0 %v2022
    %3029 = vmatpush1.bf16.msra.mxu0 %v2021
    %3030 = vmatprep.subr.bf16.mxu0 %v2030
    %3031 = vmatpush1.bf16.msra.mxu0 %v2029
    %3032 = vmatprep.subr.bf16.mxu0 %v2038
    %3033 = vmatpush1.bf16.msra.mxu0 %v2037
    %3034 = vmatprep.subr.bf16.mxu0 %v2046
    %3035 = vmatpush1.bf16.msra.mxu0 %v2045
    %3036 = vmatprep.subr.bf16.mxu0 %v2054
    %3037 = vmatpush1.bf16.msra.mxu0 %v2053
    %3038 = vmatprep.subr.bf16.mxu0 %v2062
    %3039 = vmatpush1.bf16.msra.mxu0 %v2061
    %3040 = vmatprep.subr.bf16.mxu0 %v2070
    %3041 = vmatpush1.bf16.msra.mxu0 %v2069
    %3042 = vmatprep.subr.bf16.mxu0 %v2078
    %3043 = vmatpush1.bf16.msra.mxu0 %v2077
    %3044 = vmatprep.subr.bf16.mxu0 %v2086
    %3045 = vmatpush1.bf16.msra.mxu0 %v2085
    %3046 = vmatprep.subr.bf16.mxu0 %v2094
    %3047 = vmatpush1.bf16.msra.mxu0 %v2093
    %3048 = vmatprep.subr.bf16.mxu0 %v2102
    %3049 = vmatpush1.bf16.msra.mxu0 %v2101
    %3050 = vmatprep.subr.bf16.mxu0 %v2110
    %3051 = vmatpush1.bf16.msra.mxu0 %v2109
    %3052 = vmatprep.subr.bf16.mxu0 %v2118
    %3053 = vmatpush1.bf16.msra.mxu0 %v2117
    %3054 = vmatprep.mubr.bf16.mxu0 %v251
    %3055 = vmatmul.mubr.bf16.gmra.mrb[0].mxu0 %v250
    %v3056 = vpop.f32.mrb[0].mxu0
    %v3057 = vadd.f32 %v3016, %v3056
    %v3058 = vpop.f32.mrb[0].mxu0
    %v3059 = vadd.f32 %v3018, %v3058
    %v3060 = vpop.f32.mrb[0].mxu0
    %v3061 = vpop.f32.mrb[0].mxu0
    %3062 = vdwg.mxu0
    %3063 = vmatprep.subr.bf16.mxu0 %v2126
    %3064 = vmatpush1.bf16.msra.mxu0 %v2125
    %3065 = vmatprep.subr.bf16.mxu0 %v2134
    %3066 = vmatpush1.bf16.msra.mxu0 %v2133
    %3067 = vmatprep.subr.bf16.mxu0 %v2142
    %3068 = vmatpush1.bf16.msra.mxu0 %v2141
    %3069 = vmatprep.subr.bf16.mxu0 %v2150
    %3070 = vmatpush1.bf16.msra.mxu0 %v2149
    %3071 = vmatprep.subr.bf16.mxu0 %v2158
    %3072 = vmatpush1.bf16.msra.mxu0 %v2157
    %3073 = vmatprep.subr.bf16.mxu0 %v2166
    %3074 = vmatpush1.bf16.msra.mxu0 %v2165
    %3075 = vmatprep.subr.bf16.mxu0 %v2174
    %3076 = vmatpush1.bf16.msra.mxu0 %v2173
    %3077 = vmatprep.subr.bf16.mxu0 %v2182
    %3078 = vmatpush1.bf16.msra.mxu0 %v2181
    %3079 = vmatprep.subr.bf16.mxu0 %v2190
    %3080 = vmatpush1.bf16.msra.mxu0 %v2189
    %3081 = vmatprep.subr.bf16.mxu0 %v2198
    %3082 = vmatpush1.bf16.msra.mxu0 %v2197
    %3083 = vmatprep.subr.bf16.mxu0 %v2206
    %3084 = vmatpush1.bf16.msra.mxu0 %v2205
    %3085 = vmatprep.subr.bf16.mxu0 %v2214
    %3086 = vmatpush1.bf16.msra.mxu0 %v2213
    %3087 = vmatprep.subr.bf16.mxu0 %v2222
    %3088 = vmatpush1.bf16.msra.mxu0 %v2221
    %3089 = vmatprep.subr.bf16.mxu0 %v2230
    %3090 = vmatpush1.bf16.msra.mxu0 %v2229
    %3091 = vmatprep.subr.bf16.mxu0 %v2238
    %3092 = vmatpush1.bf16.msra.mxu0 %v2237
    %3093 = vmatprep.subr.bf16.mxu0 %v2246
    %3094 = vmatpush1.bf16.msra.mxu0 %v2245
    %3095 = vmatprep.mubr.bf16.mxu0 %v253
    %3096 = vmatmul.mubr.bf16.gmra.mrb[0].mxu0 %v252
    %v3097 = vpop.f32.mrb[0].mxu0
    %v3098 = vadd.f32 %v3057, %v3097
    %v3099 = vpop.f32.mrb[0].mxu0
    %v3100 = vadd.f32 %v3059, %v3099
    %v3101 = vpop.f32.mrb[0].mxu0
    %v3102 = vpop.f32.mrb[0].mxu0
    %3103 = vdwg.mxu0
    %3104 = vmatprep.subr.bf16.mxu0 %v2254
    %3105 = vmatpush1.bf16.msra.mxu0 %v2253
    %3106 = vmatprep.subr.bf16.mxu0 0
    %3107 = vmatpush1.bf16.msra.mxu0 0
    %3108 = vmatprep.subr.bf16.mxu0 0
    %3109 = vmatpush1.bf16.msra.mxu0 0
    %3110 = vmatprep.subr.bf16.mxu0 0
    %3111 = vmatpush1.bf16.msra.mxu0 0
    %3112 = vmatprep.subr.bf16.mxu0 0
    %3113 = vmatpush1.bf16.msra.mxu0 0
    %3114 = vmatprep.subr.bf16.mxu0 0
    %3115 = vmatpush1.bf16.msra.mxu0 0
    %3116 = vmatprep.subr.bf16.mxu0 0
    %3117 = vmatpush1.bf16.msra.mxu0 0
    %3118 = vmatprep.subr.bf16.mxu0 0
    %3119 = vmatpush1.bf16.msra.mxu0 0
    %3120 = vmatprep.subr.bf16.mxu0 0
    %3121 = vmatpush1.bf16.msra.mxu0 0
    %3122 = vmatprep.subr.bf16.mxu0 0
    %3123 = vmatpush1.bf16.msra.mxu0 0
    %3124 = vmatprep.subr.bf16.mxu0 0
    %3125 = vmatpush1.bf16.msra.mxu0 0
    %3126 = vmatprep.subr.bf16.mxu0 0
    %3127 = vmatpush1.bf16.msra.mxu0 0
    %3128 = vmatprep.subr.bf16.mxu0 0
    %3129 = vmatpush1.bf16.msra.mxu0 0
    %3130 = vmatprep.subr.bf16.mxu0 0
    %3131 = vmatpush1.bf16.msra.mxu0 0
    %3132 = vmatprep.subr.bf16.mxu0 0
    %3133 = vmatpush1.bf16.msra.mxu0 0
    %3134 = vmatprep.subr.bf16.mxu0 0
    %3135 = vmatpush1.bf16.msra.mxu0 0
    %3136 = vmatprep.mubr.bf16.mxu0 0
    %3137 = vmatmul.mubr.bf16.gmra.mrb[0].mxu0 %v2651
    %v3138 = vpop.f32.mrb[0].mxu0
    %v3139 = vadd.f32 %v3098, %v3138
    %v3140 = vpop.f32.mrb[0].mxu0
    %v3141 = vadd.f32 %v3100, %v3140
    %v3142 = vpop.f32.mrb[0].mxu0
    %v3143 = vpop.f32.mrb[0].mxu0
    %3144 = vdwg.mxu0
    %3145 = vmatprep.subr.bf16.mxu0 %v1872
    %3146 = vmatpush1.bf16.msra.mxu0 %v1871
    %3147 = vmatprep.subr.bf16.mxu0 %v1880
    %3148 = vmatpush1.bf16.msra.mxu0 %v1879
    %3149 = vmatprep.subr.bf16.mxu0 %v1888
    %3150 = vmatpush1.bf16.msra.mxu0 %v1887
    %3151 = vmatprep.subr.bf16.mxu0 %v1896
    %3152 = vmatpush1.bf16.msra.mxu0 %v1895
    %3153 = vmatprep.subr.bf16.mxu0 %v1904
    %3154 = vmatpush1.bf16.msra.mxu0 %v1903
    %3155 = vmatprep.subr.bf16.mxu0 %v1912
    %3156 = vmatpush1.bf16.msra.mxu0 %v1911
    %3157 = vmatprep.subr.bf16.mxu0 %v1920
    %3158 = vmatpush1.bf16.msra.mxu0 %v1919
    %3159 = vmatprep.subr.bf16.mxu0 %v1928
    %3160 = vmatpush1.bf16.msra.mxu0 %v1927
    %3161 = vmatprep.subr.bf16.mxu0 %v1936
    %3162 = vmatpush1.bf16.msra.mxu0 %v1935
    %3163 = vmatprep.subr.bf16.mxu0 %v1944
    %3164 = vmatpush1.bf16.msra.mxu0 %v1943
    %3165 = vmatprep.subr.bf16.mxu0 %v1952
    %3166 = vmatpush1.bf16.msra.mxu0 %v1951
    %3167 = vmatprep.subr.bf16.mxu0 %v1960
    %3168 = vmatpush1.bf16.msra.mxu0 %v1959
    %3169 = vmatprep.subr.bf16.mxu0 %v1968
    %3170 = vmatpush1.bf16.msra.mxu0 %v1967
    %3171 = vmatprep.subr.bf16.mxu0 %v1976
    %3172 = vmatpush1.bf16.msra.mxu0 %v1975
    %3173 = vmatprep.subr.bf16.mxu0 %v1984
    %3174 = vmatpush1.bf16.msra.mxu0 %v1983
    %3175 = vmatprep.subr.bf16.mxu0 %v1992
    %3176 = vmatpush1.bf16.msra.mxu0 %v1991
    %3177 = vmatprep.mubr.bf16.mxu0 %v249
    %3178 = vmatmul.mubr.bf16.gmra.mrb[0].mxu0 %v248
    %v3179 = vpop.f32.mrb[0].mxu0
    %v3180 = vadd.f32 %v676, %v3179
    %v3181 = vpop.f32.mrb[0].mxu0
    %v3182 = vadd.f32 %v680, %v3181
    %v3183 = vpop.f32.mrb[0].mxu0
    %v3184 = vpop.f32.mrb[0].mxu0
    %3185 = vdwg.mxu0
    %3186 = vmatprep.subr.bf16.mxu0 %v2000
    %3187 = vmatpush1.bf16.msra.mxu0 %v1999
    %3188 = vmatprep.subr.bf16.mxu0 %v2008
    %3189 = vmatpush1.bf16.msra.mxu0 %v2007
    %3190 = vmatprep.subr.bf16.mxu0 %v2016
    %3191 = vmatpush1.bf16.msra.mxu0 %v2015
    %3192 = vmatprep.subr.bf16.mxu0 %v2024
    %3193 = vmatpush1.bf16.msra.mxu0 %v2023
    %3194 = vmatprep.subr.bf16.mxu0 %v2032
    %3195 = vmatpush1.bf16.msra.mxu0 %v2031
    %3196 = vmatprep.subr.bf16.mxu0 %v2040
    %3197 = vmatpush1.bf16.msra.mxu0 %v2039
    %3198 = vmatprep.subr.bf16.mxu0 %v2048
    %3199 = vmatpush1.bf16.msra.mxu0 %v2047
    %3200 = vmatprep.subr.bf16.mxu0 %v2056
    %3201 = vmatpush1.bf16.msra.mxu0 %v2055
    %3202 = vmatprep.subr.bf16.mxu0 %v2064
    %3203 = vmatpush1.bf16.msra.mxu0 %v2063
    %3204 = vmatprep.subr.bf16.mxu0 %v2072
    %3205 = vmatpush1.bf16.msra.mxu0 %v2071
    %3206 = vmatprep.subr.bf16.mxu0 %v2080
    %3207 = vmatpush1.bf16.msra.mxu0 %v2079
    %3208 = vmatprep.subr.bf16.mxu0 %v2088
    %3209 = vmatpush1.bf16.msra.mxu0 %v2087
    %3210 = vmatprep.subr.bf16.mxu0 %v2096
    %3211 = vmatpush1.bf16.msra.mxu0 %v2095
    %3212 = vmatprep.subr.bf16.mxu0 %v2104
    %3213 = vmatpush1.bf16.msra.mxu0 %v2103
    %3214 = vmatprep.subr.bf16.mxu0 %v2112
    %3215 = vmatpush1.bf16.msra.mxu0 %v2111
    %3216 = vmatprep.subr.bf16.mxu0 %v2120
    %3217 = vmatpush1.bf16.msra.mxu0 %v2119
    %3218 = vmatprep.mubr.bf16.mxu0 %v251
    %3219 = vmatmul.mubr.bf16.gmra.mrb[0].mxu0 %v250
    %v3220 = vpop.f32.mrb[0].mxu0
    %v3221 = vadd.f32 %v3180, %v3220
    %v3222 = vpop.f32.mrb[0].mxu0
    %v3223 = vadd.f32 %v3182, %v3222
    %v3224 = vpop.f32.mrb[0].mxu0
    %v3225 = vpop.f32.mrb[0].mxu0
    %3226 = vdwg.mxu0
    %3227 = vmatprep.subr.bf16.mxu0 %v2128
    %3228 = vmatpush1.bf16.msra.mxu0 %v2127
    %3229 = vmatprep.subr.bf16.mxu0 %v2136
    %3230 = vmatpush1.bf16.msra.mxu0 %v2135
    %3231 = vmatprep.subr.bf16.mxu0 %v2144
    %3232 = vmatpush1.bf16.msra.mxu0 %v2143
    %3233 = vmatprep.subr.bf16.mxu0 %v2152
    %3234 = vmatpush1.bf16.msra.mxu0 %v2151
    %3235 = vmatprep.subr.bf16.mxu0 %v2160
    %3236 = vmatpush1.bf16.msra.mxu0 %v2159
    %3237 = vmatprep.subr.bf16.mxu0 %v2168
    %3238 = vmatpush1.bf16.msra.mxu0 %v2167
    %3239 = vmatprep.subr.bf16.mxu0 %v2176
    %3240 = vmatpush1.bf16.msra.mxu0 %v2175
    %3241 = vmatprep.subr.bf16.mxu0 %v2184
    %3242 = vmatpush1.bf16.msra.mxu0 %v2183
    %3243 = vmatprep.subr.bf16.mxu0 %v2192
    %3244 = vmatpush1.bf16.msra.mxu0 %v2191
    %3245 = vmatprep.subr.bf16.mxu0 %v2200
    %3246 = vmatpush1.bf16.msra.mxu0 %v2199
    %3247 = vmatprep.subr.bf16.mxu0 %v2208
    %3248 = vmatpush1.bf16.msra.mxu0 %v2207
    %3249 = vmatprep.subr.bf16.mxu0 %v2216
    %3250 = vmatpush1.bf16.msra.mxu0 %v2215
    %3251 = vmatprep.subr.bf16.mxu0 %v2224
    %3252 = vmatpush1.bf16.msra.mxu0 %v2223
    %3253 = vmatprep.subr.bf16.mxu0 %v2232
    %3254 = vmatpush1.bf16.msra.mxu0 %v2231
    %3255 = vmatprep.subr.bf16.mxu0 %v2240
    %3256 = vmatpush1.bf16.msra.mxu0 %v2239
    %3257 = vmatprep.subr.bf16.mxu0 %v2248
    %3258 = vmatpush1.bf16.msra.mxu0 %v2247
    %3259 = vmatprep.mubr.bf16.mxu0 %v253
    %3260 = vmatmul.mubr.bf16.gmra.mrb[0].mxu0 %v252
    %v3261 = vpop.f32.mrb[0].mxu0
    %v3262 = vadd.f32 %v3221, %v3261
    %v3263 = vpop.f32.mrb[0].mxu0
    %v3264 = vadd.f32 %v3223, %v3263
    %v3265 = vpop.f32.mrb[0].mxu0
    %v3266 = vpop.f32.mrb[0].mxu0
    %3267 = vdwg.mxu0
    %3268 = vmatprep.subr.bf16.mxu0 %v2256
    %3269 = vmatpush1.bf16.msra.mxu0 %v2255
    %3270 = vmatprep.subr.bf16.mxu0 0
    %3271 = vmatpush1.bf16.msra.mxu0 0
    %3272 = vmatprep.subr.bf16.mxu0 0
    %3273 = vmatpush1.bf16.msra.mxu0 0
    %3274 = vmatprep.subr.bf16.mxu0 0
    %3275 = vmatpush1.bf16.msra.mxu0 0
    %3276 = vmatprep.subr.bf16.mxu0 0
    %3277 = vmatpush1.bf16.msra.mxu0 0
    %3278 = vmatprep.subr.bf16.mxu0 0
    %3279 = vmatpush1.bf16.msra.mxu0 0
    %3280 = vmatprep.subr.bf16.mxu0 0
    %3281 = vmatpush1.bf16.msra.mxu0 0
    %3282 = vmatprep.subr.bf16.mxu0 0
    %3283 = vmatpush1.bf16.msra.mxu0 0
    %3284 = vmatprep.subr.bf16.mxu0 0
    %3285 = vmatpush1.bf16.msra.mxu0 0
    %3286 = vmatprep.subr.bf16.mxu0 0
    %3287 = vmatpush1.bf16.msra.mxu0 0
    %3288 = vmatprep.subr.bf16.mxu0 0
    %3289 = vmatpush1.bf16.msra.mxu0 0
    %3290 = vmatprep.subr.bf16.mxu0 0
    %3291 = vmatpush1.bf16.msra.mxu0 0
    %3292 = vmatprep.subr.bf16.mxu0 0
    %3293 = vmatpush1.bf16.msra.mxu0 0
    %3294 = vmatprep.subr.bf16.mxu0 0
    %3295 = vmatpush1.bf16.msra.mxu0 0
    %3296 = vmatprep.subr.bf16.mxu0 0
    %3297 = vmatpush1.bf16.msra.mxu0 0
    %3298 = vmatprep.subr.bf16.mxu0 0
    %3299 = vmatpush1.bf16.msra.mxu0 0
    %3300 = vmatprep.mubr.bf16.mxu0 0
    %3301 = vmatmul.mubr.bf16.gmra.mrb[0].mxu0 %v2651
    %v3302 = vpop.f32.mrb[0].mxu0
    %v3303 = vadd.f32 %v3262, %v3302
    %v3304 = vpop.f32.mrb[0].mxu0
    %v3305 = vadd.f32 %v3264, %v3304
    %v3306 = vpop.f32.mrb[0].mxu0
    %v3307 = vpop.f32.mrb[0].mxu0
    %3308 = vdwg.mxu0
    %v3309 = vmul.f32 %v2811, 0.2
    %v3310 = vmul.f32 %v2813, 0.2
    %v3311 = vmul.f32 %v2975, 0.2
    %v3312 = vmul.f32 %v2977, 0.2
    %v3313 = vmul.f32 %v3139, 0.2
    %v3314 = vmul.f32 %v3141, 0.2
    %v3315 = vmul.f32 %v3303, 0.2
    %v3316 = vmul.f32 %v3305, 0.2
    %v3317 = vmax.f32 %v2811, %v3309
    %v3318 = vmax.f32 %v2813, %v3310
    %v3319 = vmax.f32 %v2975, %v3311
    %v3320 = vmax.f32 %v2977, %v3312
    %v3321 = vmax.f32 %v3139, %v3313
    %v3322 = vmax.f32 %v3141, %v3314
    %v3323 = vmax.f32 %v3303, %v3315
    %v3324 = vmax.f32 %v3305, %v3316
    %v3325 = vld [vmem:[#allocation8] sm:$0x77]
    %v3326 = vld [vmem:[#allocation8 + $0x8] sm:$0x77]
    %v3327 = vld [vmem:[#allocation8 + $0x10] sm:$0x77]
    %v3328 = vld [vmem:[#allocation8 + $0x18] sm:$0x77]
    %3330 = vset.pattern.permute.xlu0 0
    %3331 = vperm.xlu0 %3330, %v247
    %v3332 = vpop.permute.xlu0 %3331
    %v3338 = vlaneseq
    %v3339 = vshrl.u32 %v3338, 7
    %v3340 = vsub.s32 0, %v3339
    %v3341 = vrot.slane %v3325, %v3340
    %v3342 = vlaneseq
    %v3343 = vshrl.u32 %v3342, 7
    %v3344 = vsub.s32 4, %v3343
    %v3345 = vrot.slane %v3325, %v3344
    %v3346 = vlaneseq
    %v3347 = vshrl.u32 %v3346, 7
    %v3348 = vsub.s32 0, %v3347
    %v3349 = vrot.slane %v3326, %v3348
    %v3350 = vlaneseq
    %v3351 = vshrl.u32 %v3350, 7
    %v3352 = vsub.s32 4, %v3351
    %v3353 = vrot.slane %v3326, %v3352
    %v3354 = vlaneseq
    %v3355 = vshrl.u32 %v3354, 7
    %v3356 = vsub.s32 0, %v3355
    %v3357 = vrot.slane %v3327, %v3356
    %v3358 = vlaneseq
    %v3359 = vshrl.u32 %v3358, 7
    %v3360 = vsub.s32 4, %v3359
    %v3361 = vrot.slane %v3327, %v3360
    %v3362 = vlaneseq
    %v3363 = vshrl.u32 %v3362, 7
    %v3364 = vsub.s32 0, %v3363
    %v3365 = vrot.slane %v3328, %v3364
    %v3366 = vlaneseq
    %v3367 = vshrl.u32 %v3366, 7
    %v3368 = vsub.s32 4, %v3367
    %v3369 = vrot.slane %v3328, %v3368
    %v3378 = vlaneseq
    %v3379 = vshrl.u32 %v3378, 7
    %v3380 = vsub.s32 0, %v3379
    %v3381 = vrot.slane %v3341, %v3380
    %v3382 = vlaneseq
    %v3383 = vshrl.u32 %v3382, 7
    %v3384 = vsub.s32 0, %v3383
    %v3385 = vrot.slane %v3345, %v3384
    %v3386 = vlaneseq
    %v3387 = vshrl.u32 %v3386, 7
    %v3388 = vsub.s32 0, %v3387
    %v3389 = vrot.slane %v3349, %v3388
    %v3390 = vlaneseq
    %v3391 = vshrl.u32 %v3390, 7
    %v3392 = vsub.s32 0, %v3391
    %v3393 = vrot.slane %v3353, %v3392
    %v3394 = vlaneseq
    %v3395 = vshrl.u32 %v3394, 7
    %v3396 = vsub.s32 0, %v3395
    %v3397 = vrot.slane %v3357, %v3396
    %v3398 = vlaneseq
    %v3399 = vshrl.u32 %v3398, 7
    %v3400 = vsub.s32 0, %v3399
    %v3401 = vrot.slane %v3361, %v3400
    %v3402 = vlaneseq
    %v3403 = vshrl.u32 %v3402, 7
    %v3404 = vsub.s32 0, %v3403
    %v3405 = vrot.slane %v3365, %v3404
    %v3406 = vlaneseq
    %v3407 = vshrl.u32 %v3406, 7
    %v3408 = vsub.s32 0, %v3407
    %v3409 = vrot.slane %v3369, %v3408
    %v3410 = vmul.f32 %v3332, %v3381
    %v3411 = vmul.f32 %v3332, %v3385
    %v3412 = vmul.f32 %v3332, %v3389
    %v3413 = vmul.f32 %v3332, %v3393
    %v3414 = vmul.f32 %v3332, %v3397
    %v3415 = vmul.f32 %v3332, %v3401
    %v3416 = vmul.f32 %v3332, %v3405
    %v3417 = vmul.f32 %v3332, %v3409
    %3418 = vset.pattern.permute.xlu0 1
    %3419 = vperm.xlu0 %3418, %v247
    %v3420 = vpop.permute.xlu0 %3419
    %v3422 = vlaneseq
    %v3423 = vshrl.u32 %v3422, 7
    %v3424 = vsub.s32 1, %v3423
    %v3425 = vrot.slane %v3325, %v3424
    %v3426 = vlaneseq
    %v3427 = vshrl.u32 %v3426, 7
    %v3428 = vsub.s32 5, %v3427
    %v3429 = vrot.slane %v3325, %v3428
    %v3430 = vlaneseq
    %v3431 = vshrl.u32 %v3430, 7
    %v3432 = vsub.s32 1, %v3431
    %v3433 = vrot.slane %v3326, %v3432
    %v3434 = vlaneseq
    %v3435 = vshrl.u32 %v3434, 7
    %v3436 = vsub.s32 5, %v3435
    %v3437 = vrot.slane %v3326, %v3436
    %v3438 = vlaneseq
    %v3439 = vshrl.u32 %v3438, 7
    %v3440 = vsub.s32 1, %v3439
    %v3441 = vrot.slane %v3327, %v3440
    %v3442 = vlaneseq
    %v3443 = vshrl.u32 %v3442, 7
    %v3444 = vsub.s32 5, %v3443
    %v3445 = vrot.slane %v3327, %v3444
    %v3446 = vlaneseq
    %v3447 = vshrl.u32 %v3446, 7
    %v3448 = vsub.s32 1, %v3447
    %v3449 = vrot.slane %v3328, %v3448
    %v3450 = vlaneseq
    %v3451 = vshrl.u32 %v3450, 7
    %v3452 = vsub.s32 5, %v3451
    %v3453 = vrot.slane %v3328, %v3452
    %v3462 = vlaneseq
    %v3463 = vshrl.u32 %v3462, 7
    %v3464 = vsub.s32 1, %v3463
    %v3465 = vrot.slane %v3425, %v3464
    %v3466 = vlaneseq
    %v3467 = vshrl.u32 %v3466, 7
    %v3468 = vsub.s32 1, %v3467
    %v3469 = vrot.slane %v3429, %v3468
    %v3470 = vlaneseq
    %v3471 = vshrl.u32 %v3470, 7
    %v3472 = vsub.s32 1, %v3471
    %v3473 = vrot.slane %v3433, %v3472
    %v3474 = vlaneseq
    %v3475 = vshrl.u32 %v3474, 7
    %v3476 = vsub.s32 1, %v3475
    %v3477 = vrot.slane %v3437, %v3476
    %v3478 = vlaneseq
    %v3479 = vshrl.u32 %v3478, 7
    %v3480 = vsub.s32 1, %v3479
    %v3481 = vrot.slane %v3441, %v3480
    %v3482 = vlaneseq
    %v3483 = vshrl.u32 %v3482, 7
    %v3484 = vsub.s32 1, %v3483
    %v3485 = vrot.slane %v3445, %v3484
    %v3486 = vlaneseq
    %v3487 = vshrl.u32 %v3486, 7
    %v3488 = vsub.s32 1, %v3487
    %v3489 = vrot.slane %v3449, %v3488
    %v3490 = vlaneseq
    %v3491 = vshrl.u32 %v3490, 7
    %v3492 = vsub.s32 1, %v3491
    %v3493 = vrot.slane %v3453, %v3492
    %v3494 = vmul.f32 %v3420, %v3465
    %v3495 = vmul.f32 %v3420, %v3469
    %v3496 = vmul.f32 %v3420, %v3473
    %v3497 = vmul.f32 %v3420, %v3477
    %v3498 = vmul.f32 %v3420, %v3481
    %v3499 = vmul.f32 %v3420, %v3485
    %v3500 = vmul.f32 %v3420, %v3489
    %v3501 = vmul.f32 %v3420, %v3493
    %v3502 = vadd.f32 %v3410, %v3494
    %v3503 = vadd.f32 %v3411, %v3495
    %v3504 = vadd.f32 %v3412, %v3496
    %v3505 = vadd.f32 %v3413, %v3497
    %v3506 = vadd.f32 %v3414, %v3498
    %v3507 = vadd.f32 %v3415, %v3499
    %v3508 = vadd.f32 %v3416, %v3500
    %v3509 = vadd.f32 %v3417, %v3501
    %3510 = vset.pattern.permute.xlu0 2
    %3511 = vperm.xlu0 %3510, %v247
    %v3512 = vpop.permute.xlu0 %3511
    %v3514 = vlaneseq
    %v3515 = vshrl.u32 %v3514, 7
    %v3516 = vsub.s32 2, %v3515
    %v3517 = vrot.slane %v3325, %v3516
    %v3518 = vlaneseq
    %v3519 = vshrl.u32 %v3518, 7
    %v3520 = vsub.s32 6, %v3519
    %v3521 = vrot.slane %v3325, %v3520
    %v3522 = vlaneseq
    %v3523 = vshrl.u32 %v3522, 7
    %v3524 = vsub.s32 2, %v3523
    %v3525 = vrot.slane %v3326, %v3524
    %v3526 = vlaneseq
    %v3527 = vshrl.u32 %v3526, 7
    %v3528 = vsub.s32 6, %v3527
    %v3529 = vrot.slane %v3326, %v3528
    %v3530 = vlaneseq
    %v3531 = vshrl.u32 %v3530, 7
    %v3532 = vsub.s32 2, %v3531
    %v3533 = vrot.slane %v3327, %v3532
    %v3534 = vlaneseq
    %v3535 = vshrl.u32 %v3534, 7
    %v3536 = vsub.s32 6, %v3535
    %v3537 = vrot.slane %v3327, %v3536
    %v3538 = vlaneseq
    %v3539 = vshrl.u32 %v3538, 7
    %v3540 = vsub.s32 2, %v3539
    %v3541 = vrot.slane %v3328, %v3540
    %v3542 = vlaneseq
    %v3543 = vshrl.u32 %v3542, 7
    %v3544 = vsub.s32 6, %v3543
    %v3545 = vrot.slane %v3328, %v3544
    %v3554 = vlaneseq
    %v3555 = vshrl.u32 %v3554, 7
    %v3556 = vsub.s32 2, %v3555
    %v3557 = vrot.slane %v3517, %v3556
    %v3558 = vlaneseq
    %v3559 = vshrl.u32 %v3558, 7
    %v3560 = vsub.s32 2, %v3559
    %v3561 = vrot.slane %v3521, %v3560
    %v3562 = vlaneseq
    %v3563 = vshrl.u32 %v3562, 7
    %v3564 = vsub.s32 2, %v3563
    %v3565 = vrot.slane %v3525, %v3564
    %v3566 = vlaneseq
    %v3567 = vshrl.u32 %v3566, 7
    %v3568 = vsub.s32 2, %v3567
    %v3569 = vrot.slane %v3529, %v3568
    %v3570 = vlaneseq
    %v3571 = vshrl.u32 %v3570, 7
    %v3572 = vsub.s32 2, %v3571
    %v3573 = vrot.slane %v3533, %v3572
    %v3574 = vlaneseq
    %v3575 = vshrl.u32 %v3574, 7
    %v3576 = vsub.s32 2, %v3575
    %v3577 = vrot.slane %v3537, %v3576
    %v3578 = vlaneseq
    %v3579 = vshrl.u32 %v3578, 7
    %v3580 = vsub.s32 2, %v3579
    %v3581 = vrot.slane %v3541, %v3580
    %v3582 = vlaneseq
    %v3583 = vshrl.u32 %v3582, 7
    %v3584 = vsub.s32 2, %v3583
    %v3585 = vrot.slane %v3545, %v3584
    %v3586 = vmul.f32 %v3512, %v3557
    %v3587 = vmul.f32 %v3512, %v3561
    %v3588 = vmul.f32 %v3512, %v3565
    %v3589 = vmul.f32 %v3512, %v3569
    %v3590 = vmul.f32 %v3512, %v3573
    %v3591 = vmul.f32 %v3512, %v3577
    %v3592 = vmul.f32 %v3512, %v3581
    %v3593 = vmul.f32 %v3512, %v3585
    %v3594 = vadd.f32 %v3502, %v3586
    %v3595 = vadd.f32 %v3503, %v3587
    %v3596 = vadd.f32 %v3504, %v3588
    %v3597 = vadd.f32 %v3505, %v3589
    %v3598 = vadd.f32 %v3506, %v3590
    %v3599 = vadd.f32 %v3507, %v3591
    %v3600 = vadd.f32 %v3508, %v3592
    %v3601 = vadd.f32 %v3509, %v3593
    %v3602 = vld [vmem:[#allocation10] sm:$0xff]
    %v3604 = vlaneseq
    %v3605 = vshrl.u32 %v3604, 7
    %v3606 = vsub.s32 0, %v3605
    %v3607 = vrot.slane %v3602, %v3606
    %v3608 = vlaneseq
    %v3609 = vshrl.u32 %v3608, 7
    %v3610 = vsub.s32 1, %v3609
    %v3611 = vrot.slane %v3602, %v3610
    %v3612 = vlaneseq
    %v3613 = vshrl.u32 %v3612, 7
    %v3614 = vsub.s32 2, %v3613
    %v3615 = vrot.slane %v3602, %v3614
    %v3616 = vlaneseq
    %v3617 = vshrl.u32 %v3616, 7
    %v3618 = vsub.s32 3, %v3617
    %v3619 = vrot.slane %v3602, %v3618
    %v3620 = vlaneseq
    %v3621 = vshrl.u32 %v3620, 7
    %v3622 = vsub.s32 4, %v3621
    %v3623 = vrot.slane %v3602, %v3622
    %v3624 = vlaneseq
    %v3625 = vshrl.u32 %v3624, 7
    %v3626 = vsub.s32 5, %v3625
    %v3627 = vrot.slane %v3602, %v3626
    %v3628 = vlaneseq
    %v3629 = vshrl.u32 %v3628, 7
    %v3630 = vsub.s32 6, %v3629
    %v3631 = vrot.slane %v3602, %v3630
    %v3632 = vlaneseq
    %v3633 = vshrl.u32 %v3632, 7
    %v3634 = vsub.s32 7, %v3633
    %v3635 = vrot.slane %v3602, %v3634
    %v3644 = vadd.f32 %v3594, %v3607
    %v3645 = vadd.f32 %v3595, %v3611
    %v3646 = vadd.f32 %v3596, %v3615
    %v3647 = vadd.f32 %v3597, %v3619
    %v3648 = vadd.f32 %v3598, %v3623
    %v3649 = vadd.f32 %v3599, %v3627
    %v3650 = vadd.f32 %v3600, %v3631
    %v3651 = vadd.f32 %v3601, %v3635
    %v3652 = vmul.f32 %v3644, 0.2
    %v3653 = vmul.f32 %v3645, 0.2
    %v3654 = vmul.f32 %v3646, 0.2
    %v3655 = vmul.f32 %v3647, 0.2
    %v3656 = vmul.f32 %v3648, 0.2
    %v3657 = vmul.f32 %v3649, 0.2
    %v3658 = vmul.f32 %v3650, 0.2
    %v3659 = vmul.f32 %v3651, 0.2
    %v3660 = vmax.f32 %v3644, %v3652
    %v3661 = vmax.f32 %v3645, %v3653
    %v3662 = vmax.f32 %v3646, %v3654
    %v3663 = vmax.f32 %v3647, %v3655
    %v3664 = vmax.f32 %v3648, %v3656
    %v3665 = vmax.f32 %v3649, %v3657
    %v3666 = vmax.f32 %v3650, %v3658
    %v3667 = vmax.f32 %v3651, %v3659
    %v3668 = vpack.c.bf16 %v3317, %v3317
    %v3669 = vpack.c.bf16 %v3318, %v3318
    %v3670 = vpack.c.bf16 %v3319, %v3319
    %v3671 = vpack.c.bf16 %v3320, %v3320
    %v3672 = vpack.c.bf16 %v3321, %v3321
    %v3673 = vpack.c.bf16 %v3322, %v3322
    %v3674 = vpack.c.bf16 %v3323, %v3323
    %v3675 = vpack.c.bf16 %v3324, %v3324
    %v3676 = vld [vmem:[#allocation11] sm:$0xff]
    %v3677 = vld [vmem:[#allocation11 + $0x8] sm:$0xff]
    %v3678 = vld [vmem:[#allocation11 + $0x10] sm:$0xff]
    %v3679 = vld [vmem:[#allocation11 + $0x18] sm:$0xff]
    %v3680 = vld [vmem:[#allocation11 + $0x20] sm:$0xff]
    %v3681 = vld [vmem:[#allocation11 + $0x28] sm:$0xff]
    %v3682 = vld [vmem:[#allocation11 + $0x30] sm:$0xff]
    %v3683 = vld [vmem:[#allocation11 + $0x38] sm:$0xff]
    %v3684 = vld [vmem:[#allocation11 + $0x40] sm:$0xff]
    %v3685 = vld [vmem:[#allocation11 + $0x48] sm:$0xff]
    %v3686 = vld [vmem:[#allocation11 + $0x50] sm:$0xff]
    %v3687 = vld [vmem:[#allocation11 + $0x58] sm:$0xff]
    %v3688 = vld [vmem:[#allocation11 + $0x60] sm:$0xff]
    %v3689 = vld [vmem:[#allocation11 + $0x68] sm:$0xff]
    %v3690 = vld [vmem:[#allocation11 + $0x70] sm:$0xff]
    %v3691 = vld [vmem:[#allocation11 + $0x78] sm:$0xff]
    %v3692 = vld [vmem:[#allocation11 + $0x80] sm:$0xff]
    %v3693 = vld [vmem:[#allocation11 + $0x88] sm:$0xff]
    %v3694 = vld [vmem:[#allocation11 + $0x90] sm:$0xff]
    %v3695 = vld [vmem:[#allocation11 + $0x98] sm:$0xff]
    %v3696 = vld [vmem:[#allocation11 + $0xa0] sm:$0xff]
    %v3697 = vld [vmem:[#allocation11 + $0xa8] sm:$0xff]
    %v3698 = vld [vmem:[#allocation11 + $0xb0] sm:$0xff]
    %v3699 = vld [vmem:[#allocation11 + $0xb8] sm:$0xff]
    %v3700 = vld [vmem:[#allocation11 + $0xc0] sm:$0xff]
    %v3701 = vld [vmem:[#allocation11 + $0xc8] sm:$0xff]
    %v3702 = vld [vmem:[#allocation11 + $0xd0] sm:$0xff]
    %v3703 = vld [vmem:[#allocation11 + $0xd8] sm:$0xff]
    %v3704 = vld [vmem:[#allocation11 + $0xe0] sm:$0xff]
    %v3705 = vld [vmem:[#allocation11 + $0xe8] sm:$0xff]
    %v3706 = vld [vmem:[#allocation11 + $0xf0] sm:$0xff]
    %v3707 = vld [vmem:[#allocation11 + $0xf8] sm:$0xff]
    %v3708 = vld [vmem:[#allocation11 + $0x100] sm:$0xff]
    %v3709 = vld [vmem:[#allocation11 + $0x108] sm:$0xff]
    %v3710 = vld [vmem:[#allocation11 + $0x110] sm:$0xff]
    %v3711 = vld [vmem:[#allocation11 + $0x118] sm:$0xff]
    %v3712 = vld [vmem:[#allocation11 + $0x120] sm:$0xff]
    %v3713 = vld [vmem:[#allocation11 + $0x128] sm:$0xff]
    %v3714 = vld [vmem:[#allocation11 + $0x130] sm:$0xff]
    %v3715 = vld [vmem:[#allocation11 + $0x138] sm:$0xff]
    %v3716 = vld [vmem:[#allocation11 + $0x140] sm:$0xff]
    %v3717 = vld [vmem:[#allocation11 + $0x148] sm:$0xff]
    %v3718 = vld [vmem:[#allocation11 + $0x150] sm:$0xff]
    %v3719 = vld [vmem:[#allocation11 + $0x158] sm:$0xff]
    %v3720 = vld [vmem:[#allocation11 + $0x160] sm:$0xff]
    %v3721 = vld [vmem:[#allocation11 + $0x168] sm:$0xff]
    %v3722 = vld [vmem:[#allocation11 + $0x170] sm:$0xff]
    %v3723 = vld [vmem:[#allocation11 + $0x178] sm:$0xff]
    %v3724 = vld [vmem:[#allocation11 + $0x180] sm:$0xff]
    %v3725 = vld [vmem:[#allocation11 + $0x188] sm:$0xff]
    %v3726 = vld [vmem:[#allocation11 + $0x190] sm:$0xff]
    %v3727 = vld [vmem:[#allocation11 + $0x198] sm:$0xff]
    %v3728 = vld [vmem:[#allocation11 + $0x1a0] sm:$0xff]
    %v3729 = vld [vmem:[#allocation11 + $0x1a8] sm:$0xff]
    %v3730 = vld [vmem:[#allocation11 + $0x1b0] sm:$0xff]
    %v3731 = vld [vmem:[#allocation11 + $0x1b8] sm:$0xff]
    %v3732 = vld [vmem:[#allocation11 + $0x1c0] sm:$0xff]
    %v3733 = vld [vmem:[#allocation11 + $0x1c8] sm:$0xff]
    %v3734 = vld [vmem:[#allocation11 + $0x1d0] sm:$0xff]
    %v3735 = vld [vmem:[#allocation11 + $0x1d8] sm:$0xff]
    %v3736 = vld [vmem:[#allocation11 + $0x1e0] sm:$0xff]
    %v3737 = vld [vmem:[#allocation11 + $0x1e8] sm:$0xff]
    %v3738 = vld [vmem:[#allocation11 + $0x1f0] sm:$0xff]
    %v3739 = vld [vmem:[#allocation11 + $0x1f8] sm:$0xff]
    %v3740 = vld [vmem:[#allocation11 + $0x200] sm:$0xff]
    %v3741 = vld [vmem:[#allocation11 + $0x208] sm:$0xff]
    %v3742 = vld [vmem:[#allocation11 + $0x210] sm:$0xff]
    %v3743 = vld [vmem:[#allocation11 + $0x218] sm:$0xff]
    %v3744 = vld [vmem:[#allocation11 + $0x220] sm:$0xff]
    %v3745 = vld [vmem:[#allocation11 + $0x228] sm:$0xff]
    %v3746 = vld [vmem:[#allocation11 + $0x230] sm:$0xff]
    %v3747 = vld [vmem:[#allocation11 + $0x238] sm:$0xff]
    %v3748 = vld [vmem:[#allocation11 + $0x240] sm:$0xff]
    %v3749 = vld [vmem:[#allocation11 + $0x248] sm:$0xff]
    %v3750 = vld [vmem:[#allocation11 + $0x250] sm:$0xff]
    %v3751 = vld [vmem:[#allocation11 + $0x258] sm:$0xff]
    %v3752 = vld [vmem:[#allocation11 + $0x260] sm:$0xff]
    %v3753 = vld [vmem:[#allocation11 + $0x268] sm:$0xff]
    %v3754 = vld [vmem:[#allocation11 + $0x270] sm:$0xff]
    %v3755 = vld [vmem:[#allocation11 + $0x278] sm:$0xff]
    %v3756 = vld [vmem:[#allocation11 + $0x280] sm:$0xff]
    %v3757 = vld [vmem:[#allocation11 + $0x288] sm:$0xff]
    %v3758 = vld [vmem:[#allocation11 + $0x290] sm:$0xff]
    %v3759 = vld [vmem:[#allocation11 + $0x298] sm:$0xff]
    %v3760 = vld [vmem:[#allocation11 + $0x2a0] sm:$0xff]
    %v3761 = vld [vmem:[#allocation11 + $0x2a8] sm:$0xff]
    %v3762 = vld [vmem:[#allocation11 + $0x2b0] sm:$0xff]
    %v3763 = vld [vmem:[#allocation11 + $0x2b8] sm:$0xff]
    %v3764 = vld [vmem:[#allocation11 + $0x2c0] sm:$0xff]
    %v3765 = vld [vmem:[#allocation11 + $0x2c8] sm:$0xff]
    %v3766 = vld [vmem:[#allocation11 + $0x2d0] sm:$0xff]
    %v3767 = vld [vmem:[#allocation11 + $0x2d8] sm:$0xff]
    %v3768 = vld [vmem:[#allocation11 + $0x2e0] sm:$0xff]
    %v3769 = vld [vmem:[#allocation11 + $0x2e8] sm:$0xff]
    %v3770 = vld [vmem:[#allocation11 + $0x2f0] sm:$0xff]
    %v3771 = vld [vmem:[#allocation11 + $0x2f8] sm:$0xff]
    %v3772 = vld [vmem:[#allocation11 + $0x300] sm:$0xff]
    %v3773 = vld [vmem:[#allocation11 + $0x308] sm:$0xff]
    %v3774 = vld [vmem:[#allocation11 + $0x310] sm:$0xff]
    %v3775 = vld [vmem:[#allocation11 + $0x318] sm:$0xff]
    %v3776 = vld [vmem:[#allocation11 + $0x320] sm:$0xff]
    %v3777 = vld [vmem:[#allocation11 + $0x328] sm:$0xff]
    %v3778 = vld [vmem:[#allocation11 + $0x330] sm:$0xff]
    %v3779 = vld [vmem:[#allocation11 + $0x338] sm:$0xff]
    %v3780 = vld [vmem:[#allocation11 + $0x340] sm:$0xff]
    %v3781 = vld [vmem:[#allocation11 + $0x348] sm:$0xff]
    %v3782 = vld [vmem:[#allocation11 + $0x350] sm:$0xff]
    %v3783 = vld [vmem:[#allocation11 + $0x358] sm:$0xff]
    %v3784 = vld [vmem:[#allocation11 + $0x360] sm:$0xff]
    %v3785 = vld [vmem:[#allocation11 + $0x368] sm:$0xff]
    %v3786 = vld [vmem:[#allocation11 + $0x370] sm:$0xff]
    %v3787 = vld [vmem:[#allocation11 + $0x378] sm:$0xff]
    %v3788 = vld [vmem:[#allocation11 + $0x380] sm:$0xff]
    %v3789 = vld [vmem:[#allocation11 + $0x388] sm:$0xff]
    %v3790 = vld [vmem:[#allocation11 + $0x390] sm:$0xff]
    %v3791 = vld [vmem:[#allocation11 + $0x398] sm:$0xff]
    %v3792 = vld [vmem:[#allocation11 + $0x3a0] sm:$0xff]
    %v3793 = vld [vmem:[#allocation11 + $0x3a8] sm:$0xff]
    %v3794 = vld [vmem:[#allocation11 + $0x3b0] sm:$0xff]
    %v3795 = vld [vmem:[#allocation11 + $0x3b8] sm:$0xff]
    %v3796 = vld [vmem:[#allocation11 + $0x3c0] sm:$0xff]
    %v3797 = vld [vmem:[#allocation11 + $0x3c8] sm:$0xff]
    %v3798 = vld [vmem:[#allocation11 + $0x3d0] sm:$0xff]
    %v3799 = vld [vmem:[#allocation11 + $0x3d8] sm:$0xff]
    %v3800 = vld [vmem:[#allocation11 + $0x3e0] sm:$0xff]
    %v3801 = vld [vmem:[#allocation11 + $0x3e8] sm:$0xff]
    %v3802 = vld [vmem:[#allocation11 + $0x3f0] sm:$0xff]
    %v3803 = vld [vmem:[#allocation11 + $0x3f8] sm:$0xff]
    %v3804 = vld [vmem:[#allocation11 + $0x400] sm:$0xff]
    %v3805 = vld [vmem:[#allocation11 + $0x408] sm:$0xff]
    %v3806 = vld [vmem:[#allocation11 + $0x410] sm:$0xff]
    %v3807 = vld [vmem:[#allocation11 + $0x418] sm:$0xff]
    %v3808 = vld [vmem:[#allocation11 + $0x420] sm:$0xff]
    %v3809 = vld [vmem:[#allocation11 + $0x428] sm:$0xff]
    %v3810 = vld [vmem:[#allocation11 + $0x430] sm:$0xff]
    %v3811 = vld [vmem:[#allocation11 + $0x438] sm:$0xff]
    %v3812 = vld [vmem:[#allocation11 + $0x440] sm:$0xff]
    %v3813 = vld [vmem:[#allocation11 + $0x448] sm:$0xff]
    %v3814 = vld [vmem:[#allocation11 + $0x450] sm:$0xff]
    %v3815 = vld [vmem:[#allocation11 + $0x458] sm:$0xff]
    %v3816 = vld [vmem:[#allocation11 + $0x460] sm:$0xff]
    %v3817 = vld [vmem:[#allocation11 + $0x468] sm:$0xff]
    %v3818 = vld [vmem:[#allocation11 + $0x470] sm:$0xff]
    %v3819 = vld [vmem:[#allocation11 + $0x478] sm:$0xff]
    %v3820 = vld [vmem:[#allocation11 + $0x480] sm:$0xff]
    %v3821 = vld [vmem:[#allocation11 + $0x488] sm:$0xff]
    %v3822 = vld [vmem:[#allocation11 + $0x490] sm:$0xff]
    %v3823 = vld [vmem:[#allocation11 + $0x498] sm:$0xff]
    %v3824 = vld [vmem:[#allocation11 + $0x4a0] sm:$0xff]
    %v3825 = vld [vmem:[#allocation11 + $0x4a8] sm:$0xff]
    %v3826 = vld [vmem:[#allocation11 + $0x4b0] sm:$0xff]
    %v3827 = vld [vmem:[#allocation11 + $0x4b8] sm:$0xff]
    %v3828 = vld [vmem:[#allocation11 + $0x4c0] sm:$0xff]
    %v3829 = vld [vmem:[#allocation11 + $0x4c8] sm:$0xff]
    %v3830 = vld [vmem:[#allocation11 + $0x4d0] sm:$0xff]
    %v3831 = vld [vmem:[#allocation11 + $0x4d8] sm:$0xff]
    %v3832 = vld [vmem:[#allocation11 + $0x4e0] sm:$0xff]
    %v3833 = vld [vmem:[#allocation11 + $0x4e8] sm:$0xff]
    %v3834 = vld [vmem:[#allocation11 + $0x4f0] sm:$0xff]
    %v3835 = vld [vmem:[#allocation11 + $0x4f8] sm:$0xff]
    %v3836 = vld [vmem:[#allocation11 + $0x500] sm:$0xff]
    %v3837 = vld [vmem:[#allocation11 + $0x508] sm:$0xff]
    %v3838 = vld [vmem:[#allocation11 + $0x510] sm:$0xff]
    %v3839 = vld [vmem:[#allocation11 + $0x518] sm:$0xff]
    %v3840 = vld [vmem:[#allocation11 + $0x520] sm:$0xff]
    %v3841 = vld [vmem:[#allocation11 + $0x528] sm:$0xff]
    %v3842 = vld [vmem:[#allocation11 + $0x530] sm:$0xff]
    %v3843 = vld [vmem:[#allocation11 + $0x538] sm:$0xff]
    %v3844 = vld [vmem:[#allocation11 + $0x540] sm:$0xff]
    %v3845 = vld [vmem:[#allocation11 + $0x548] sm:$0xff]
    %v3846 = vld [vmem:[#allocation11 + $0x550] sm:$0xff]
    %v3847 = vld [vmem:[#allocation11 + $0x558] sm:$0xff]
    %v3848 = vld [vmem:[#allocation11 + $0x560] sm:$0xff]
    %v3849 = vld [vmem:[#allocation11 + $0x568] sm:$0xff]
    %v3850 = vld [vmem:[#allocation11 + $0x570] sm:$0xff]
    %v3851 = vld [vmem:[#allocation11 + $0x578] sm:$0xff]
    %v3852 = vld [vmem:[#allocation11 + $0x580] sm:$0xff]
    %v3853 = vld [vmem:[#allocation11 + $0x588] sm:$0xff]
    %v3854 = vld [vmem:[#allocation11 + $0x590] sm:$0xff]
    %v3855 = vld [vmem:[#allocation11 + $0x598] sm:$0xff]
    %v3856 = vld [vmem:[#allocation11 + $0x5a0] sm:$0xff]
    %v3857 = vld [vmem:[#allocation11 + $0x5a8] sm:$0xff]
    %v3858 = vld [vmem:[#allocation11 + $0x5b0] sm:$0xff]
    %v3859 = vld [vmem:[#allocation11 + $0x5b8] sm:$0xff]
    %v3860 = vld [vmem:[#allocation11 + $0x5c0] sm:$0xff]
    %v3861 = vld [vmem:[#allocation11 + $0x5c8] sm:$0xff]
    %v3862 = vld [vmem:[#allocation11 + $0x5d0] sm:$0xff]
    %v3863 = vld [vmem:[#allocation11 + $0x5d8] sm:$0xff]
    %v3864 = vld [vmem:[#allocation11 + $0x5e0] sm:$0xff]
    %v3865 = vld [vmem:[#allocation11 + $0x5e8] sm:$0xff]
    %v3866 = vld [vmem:[#allocation11 + $0x5f0] sm:$0xff]
    %v3867 = vld [vmem:[#allocation11 + $0x5f8] sm:$0xff]
    %v3868 = vld [vmem:[#allocation11 + $0x600] sm:$0xff]
    %v3869 = vld [vmem:[#allocation11 + $0x608] sm:$0xff]
    %v3870 = vld [vmem:[#allocation11 + $0x610] sm:$0xff]
    %v3871 = vld [vmem:[#allocation11 + $0x618] sm:$0xff]
    %v3872 = vld [vmem:[#allocation11 + $0x620] sm:$0xff]
    %v3873 = vld [vmem:[#allocation11 + $0x628] sm:$0xff]
    %v3874 = vld [vmem:[#allocation11 + $0x630] sm:$0xff]
    %v3875 = vld [vmem:[#allocation11 + $0x638] sm:$0xff]
    %v3876 = vld [vmem:[#allocation11 + $0x640] sm:$0xff]
    %v3877 = vld [vmem:[#allocation11 + $0x648] sm:$0xff]
    %v3878 = vld [vmem:[#allocation11 + $0x650] sm:$0xff]
    %v3879 = vld [vmem:[#allocation11 + $0x658] sm:$0xff]
    %v3880 = vld [vmem:[#allocation11 + $0x660] sm:$0xff]
    %v3881 = vld [vmem:[#allocation11 + $0x668] sm:$0xff]
    %v3882 = vld [vmem:[#allocation11 + $0x670] sm:$0xff]
    %v3883 = vld [vmem:[#allocation11 + $0x678] sm:$0xff]
    %v3884 = vld [vmem:[#allocation11 + $0x680] sm:$0xff]
    %v3885 = vld [vmem:[#allocation11 + $0x688] sm:$0xff]
    %v3886 = vld [vmem:[#allocation11 + $0x690] sm:$0xff]
    %v3887 = vld [vmem:[#allocation11 + $0x698] sm:$0xff]
    %v3888 = vld [vmem:[#allocation11 + $0x6a0] sm:$0xff]
    %v3889 = vld [vmem:[#allocation11 + $0x6a8] sm:$0xff]
    %v3890 = vld [vmem:[#allocation11 + $0x6b0] sm:$0xff]
    %v3891 = vld [vmem:[#allocation11 + $0x6b8] sm:$0xff]
    %v3892 = vld [vmem:[#allocation11 + $0x6c0] sm:$0xff]
    %v3893 = vld [vmem:[#allocation11 + $0x6c8] sm:$0xff]
    %v3894 = vld [vmem:[#allocation11 + $0x6d0] sm:$0xff]
    %v3895 = vld [vmem:[#allocation11 + $0x6d8] sm:$0xff]
    %v3896 = vld [vmem:[#allocation11 + $0x6e0] sm:$0xff]
    %v3897 = vld [vmem:[#allocation11 + $0x6e8] sm:$0xff]
    %v3898 = vld [vmem:[#allocation11 + $0x6f0] sm:$0xff]
    %v3899 = vld [vmem:[#allocation11 + $0x6f8] sm:$0xff]
    %v3900 = vld [vmem:[#allocation11 + $0x700] sm:$0xff]
    %v3901 = vld [vmem:[#allocation11 + $0x708] sm:$0xff]
    %v3902 = vld [vmem:[#allocation11 + $0x710] sm:$0xff]
    %v3903 = vld [vmem:[#allocation11 + $0x718] sm:$0xff]
    %v3904 = vld [vmem:[#allocation11 + $0x720] sm:$0xff]
    %v3905 = vld [vmem:[#allocation11 + $0x728] sm:$0xff]
    %v3906 = vld [vmem:[#allocation11 + $0x730] sm:$0xff]
    %v3907 = vld [vmem:[#allocation11 + $0x738] sm:$0xff]
    %v3908 = vld [vmem:[#allocation11 + $0x740] sm:$0xff]
    %v3909 = vld [vmem:[#allocation11 + $0x748] sm:$0xff]
    %v3910 = vld [vmem:[#allocation11 + $0x750] sm:$0xff]
    %v3911 = vld [vmem:[#allocation11 + $0x758] sm:$0xff]
    %v3912 = vld [vmem:[#allocation11 + $0x760] sm:$0xff]
    %v3913 = vld [vmem:[#allocation11 + $0x768] sm:$0xff]
    %v3914 = vld [vmem:[#allocation11 + $0x770] sm:$0xff]
    %v3915 = vld [vmem:[#allocation11 + $0x778] sm:$0xff]
    %v3916 = vld [vmem:[#allocation11 + $0x780] sm:$0xff]
    %v3917 = vld [vmem:[#allocation11 + $0x788] sm:$0xff]
    %v3918 = vld [vmem:[#allocation11 + $0x790] sm:$0xff]
    %v3919 = vld [vmem:[#allocation11 + $0x798] sm:$0xff]
    %v3920 = vld [vmem:[#allocation11 + $0x7a0] sm:$0xff]
    %v3921 = vld [vmem:[#allocation11 + $0x7a8] sm:$0xff]
    %v3922 = vld [vmem:[#allocation11 + $0x7b0] sm:$0xff]
    %v3923 = vld [vmem:[#allocation11 + $0x7b8] sm:$0xff]
    %v3924 = vld [vmem:[#allocation11 + $0x7c0] sm:$0xff]
    %v3925 = vld [vmem:[#allocation11 + $0x7c8] sm:$0xff]
    %v3926 = vld [vmem:[#allocation11 + $0x7d0] sm:$0xff]
    %v3927 = vld [vmem:[#allocation11 + $0x7d8] sm:$0xff]
    %v3928 = vld [vmem:[#allocation11 + $0x7e0] sm:$0xff]
    %v3929 = vld [vmem:[#allocation11 + $0x7e8] sm:$0xff]
    %v3930 = vld [vmem:[#allocation11 + $0x7f0] sm:$0xff]
    %v3931 = vld [vmem:[#allocation11 + $0x7f8] sm:$0xff]
    %v3932 = vpack.c.bf16 %v3660, %v3660
    %v3933 = vpack.c.bf16 %v3661, %v3661
    %v3934 = vpack.c.bf16 %v3662, %v3662
    %v3935 = vpack.c.bf16 %v3663, %v3663
    %v3936 = vpack.c.bf16 %v3664, %v3664
    %v3937 = vpack.c.bf16 %v3665, %v3665
    %v3938 = vpack.c.bf16 %v3666, %v3666
    %v3939 = vpack.c.bf16 %v3667, %v3667
    %v3940 = vld [vmem:[#allocation13] sm:$0xff]
    %v3941 = vld [vmem:[#allocation13 + $0x8] sm:$0xff]
    %v3942 = vld [vmem:[#allocation13 + $0x10] sm:$0xff]
    %v3943 = vld [vmem:[#allocation13 + $0x18] sm:$0xff]
    %v3944 = vld [vmem:[#allocation13 + $0x20] sm:$0xff]
    %v3945 = vld [vmem:[#allocation13 + $0x28] sm:$0xff]
    %v3946 = vld [vmem:[#allocation13 + $0x30] sm:$0xff]
    %v3947 = vld [vmem:[#allocation13 + $0x38] sm:$0xff]
    %v3948 = vld [vmem:[#allocation13 + $0x40] sm:$0xff]
    %v3949 = vld [vmem:[#allocation13 + $0x48] sm:$0xff]
    %v3950 = vld [vmem:[#allocation13 + $0x50] sm:$0xff]
    %v3951 = vld [vmem:[#allocation13 + $0x58] sm:$0xff]
    %v3952 = vld [vmem:[#allocation13 + $0x60] sm:$0xff]
    %v3953 = vld [vmem:[#allocation13 + $0x68] sm:$0xff]
    %v3954 = vld [vmem:[#allocation13 + $0x70] sm:$0xff]
    %v3955 = vld [vmem:[#allocation13 + $0x78] sm:$0xff]
    %v3956 = vld [vmem:[#allocation13 + $0x80] sm:$0xff]
    %v3957 = vld [vmem:[#allocation13 + $0x88] sm:$0xff]
    %v3958 = vld [vmem:[#allocation13 + $0x90] sm:$0xff]
    %v3959 = vld [vmem:[#allocation13 + $0x98] sm:$0xff]
    %v3960 = vld [vmem:[#allocation13 + $0xa0] sm:$0xff]
    %v3961 = vld [vmem:[#allocation13 + $0xa8] sm:$0xff]
    %v3962 = vld [vmem:[#allocation13 + $0xb0] sm:$0xff]
    %v3963 = vld [vmem:[#allocation13 + $0xb8] sm:$0xff]
    %v3964 = vld [vmem:[#allocation13 + $0xc0] sm:$0xff]
    %v3965 = vld [vmem:[#allocation13 + $0xc8] sm:$0xff]
    %v3966 = vld [vmem:[#allocation13 + $0xd0] sm:$0xff]
    %v3967 = vld [vmem:[#allocation13 + $0xd8] sm:$0xff]
    %v3968 = vld [vmem:[#allocation13 + $0xe0] sm:$0xff]
    %v3969 = vld [vmem:[#allocation13 + $0xe8] sm:$0xff]
    %v3970 = vld [vmem:[#allocation13 + $0xf0] sm:$0xff]
    %v3971 = vld [vmem:[#allocation13 + $0xf8] sm:$0xff]
    %v3972 = vld [vmem:[#allocation13 + $0x100] sm:$0xff]
    %v3973 = vld [vmem:[#allocation13 + $0x108] sm:$0xff]
    %v3974 = vld [vmem:[#allocation13 + $0x110] sm:$0xff]
    %v3975 = vld [vmem:[#allocation13 + $0x118] sm:$0xff]
    %v3976 = vld [vmem:[#allocation13 + $0x120] sm:$0xff]
    %v3977 = vld [vmem:[#allocation13 + $0x128] sm:$0xff]
    %v3978 = vld [vmem:[#allocation13 + $0x130] sm:$0xff]
    %v3979 = vld [vmem:[#allocation13 + $0x138] sm:$0xff]
    %v3980 = vld [vmem:[#allocation13 + $0x140] sm:$0xff]
    %v3981 = vld [vmem:[#allocation13 + $0x148] sm:$0xff]
    %v3982 = vld [vmem:[#allocation13 + $0x150] sm:$0xff]
    %v3983 = vld [vmem:[#allocation13 + $0x158] sm:$0xff]
    %v3984 = vld [vmem:[#allocation13 + $0x160] sm:$0xff]
    %v3985 = vld [vmem:[#allocation13 + $0x168] sm:$0xff]
    %v3986 = vld [vmem:[#allocation13 + $0x170] sm:$0xff]
    %v3987 = vld [vmem:[#allocation13 + $0x178] sm:$0xff]
    %v3988 = vld [vmem:[#allocation13 + $0x180] sm:$0xff]
    %v3989 = vld [vmem:[#allocation13 + $0x188] sm:$0xff]
    %v3990 = vld [vmem:[#allocation13 + $0x190] sm:$0xff]
    %v3991 = vld [vmem:[#allocation13 + $0x198] sm:$0xff]
    %v3992 = vld [vmem:[#allocation13 + $0x1a0] sm:$0xff]
    %v3993 = vld [vmem:[#allocation13 + $0x1a8] sm:$0xff]
    %v3994 = vld [vmem:[#allocation13 + $0x1b0] sm:$0xff]
    %v3995 = vld [vmem:[#allocation13 + $0x1b8] sm:$0xff]
    %v3996 = vld [vmem:[#allocation13 + $0x1c0] sm:$0xff]
    %v3997 = vld [vmem:[#allocation13 + $0x1c8] sm:$0xff]
    %v3998 = vld [vmem:[#allocation13 + $0x1d0] sm:$0xff]
    %v3999 = vld [vmem:[#allocation13 + $0x1d8] sm:$0xff]
    %v4000 = vld [vmem:[#allocation13 + $0x1e0] sm:$0xff]
    %v4001 = vld [vmem:[#allocation13 + $0x1e8] sm:$0xff]
    %v4002 = vld [vmem:[#allocation13 + $0x1f0] sm:$0xff]
    %v4003 = vld [vmem:[#allocation13 + $0x1f8] sm:$0xff]
    %v4004 = vld [vmem:[#allocation13 + $0x200] sm:$0xff]
    %v4005 = vld [vmem:[#allocation13 + $0x208] sm:$0xff]
    %v4006 = vld [vmem:[#allocation13 + $0x210] sm:$0xff]
    %v4007 = vld [vmem:[#allocation13 + $0x218] sm:$0xff]
    %v4008 = vld [vmem:[#allocation13 + $0x220] sm:$0xff]
    %v4009 = vld [vmem:[#allocation13 + $0x228] sm:$0xff]
    %v4010 = vld [vmem:[#allocation13 + $0x230] sm:$0xff]
    %v4011 = vld [vmem:[#allocation13 + $0x238] sm:$0xff]
    %v4012 = vld [vmem:[#allocation13 + $0x240] sm:$0xff]
    %v4013 = vld [vmem:[#allocation13 + $0x248] sm:$0xff]
    %v4014 = vld [vmem:[#allocation13 + $0x250] sm:$0xff]
    %v4015 = vld [vmem:[#allocation13 + $0x258] sm:$0xff]
    %v4016 = vld [vmem:[#allocation13 + $0x260] sm:$0xff]
    %v4017 = vld [vmem:[#allocation13 + $0x268] sm:$0xff]
    %v4018 = vld [vmem:[#allocation13 + $0x270] sm:$0xff]
    %v4019 = vld [vmem:[#allocation13 + $0x278] sm:$0xff]
    %v4020 = vld [vmem:[#allocation13 + $0x280] sm:$0xff]
    %v4021 = vld [vmem:[#allocation13 + $0x288] sm:$0xff]
    %v4022 = vld [vmem:[#allocation13 + $0x290] sm:$0xff]
    %v4023 = vld [vmem:[#allocation13 + $0x298] sm:$0xff]
    %v4024 = vld [vmem:[#allocation13 + $0x2a0] sm:$0xff]
    %v4025 = vld [vmem:[#allocation13 + $0x2a8] sm:$0xff]
    %v4026 = vld [vmem:[#allocation13 + $0x2b0] sm:$0xff]
    %v4027 = vld [vmem:[#allocation13 + $0x2b8] sm:$0xff]
    %v4028 = vld [vmem:[#allocation13 + $0x2c0] sm:$0xff]
    %v4029 = vld [vmem:[#allocation13 + $0x2c8] sm:$0xff]
    %v4030 = vld [vmem:[#allocation13 + $0x2d0] sm:$0xff]
    %v4031 = vld [vmem:[#allocation13 + $0x2d8] sm:$0xff]
    %v4032 = vld [vmem:[#allocation13 + $0x2e0] sm:$0xff]
    %v4033 = vld [vmem:[#allocation13 + $0x2e8] sm:$0xff]
    %v4034 = vld [vmem:[#allocation13 + $0x2f0] sm:$0xff]
    %v4035 = vld [vmem:[#allocation13 + $0x2f8] sm:$0xff]
    %v4036 = vld [vmem:[#allocation13 + $0x300] sm:$0xff]
    %v4037 = vld [vmem:[#allocation13 + $0x308] sm:$0xff]
    %v4038 = vld [vmem:[#allocation13 + $0x310] sm:$0xff]
    %v4039 = vld [vmem:[#allocation13 + $0x318] sm:$0xff]
    %v4040 = vld [vmem:[#allocation13 + $0x320] sm:$0xff]
    %v4041 = vld [vmem:[#allocation13 + $0x328] sm:$0xff]
    %v4042 = vld [vmem:[#allocation13 + $0x330] sm:$0xff]
    %v4043 = vld [vmem:[#allocation13 + $0x338] sm:$0xff]
    %v4044 = vld [vmem:[#allocation13 + $0x340] sm:$0xff]
    %v4045 = vld [vmem:[#allocation13 + $0x348] sm:$0xff]
    %v4046 = vld [vmem:[#allocation13 + $0x350] sm:$0xff]
    %v4047 = vld [vmem:[#allocation13 + $0x358] sm:$0xff]
    %v4048 = vld [vmem:[#allocation13 + $0x360] sm:$0xff]
    %v4049 = vld [vmem:[#allocation13 + $0x368] sm:$0xff]
    %v4050 = vld [vmem:[#allocation13 + $0x370] sm:$0xff]
    %v4051 = vld [vmem:[#allocation13 + $0x378] sm:$0xff]
    %v4052 = vld [vmem:[#allocation13 + $0x380] sm:$0xff]
    %v4053 = vld [vmem:[#allocation13 + $0x388] sm:$0xff]
    %v4054 = vld [vmem:[#allocation13 + $0x390] sm:$0xff]
    %v4055 = vld [vmem:[#allocation13 + $0x398] sm:$0xff]
    %v4056 = vld [vmem:[#allocation13 + $0x3a0] sm:$0xff]
    %v4057 = vld [vmem:[#allocation13 + $0x3a8] sm:$0xff]
    %v4058 = vld [vmem:[#allocation13 + $0x3b0] sm:$0xff]
    %v4059 = vld [vmem:[#allocation13 + $0x3b8] sm:$0xff]
    %v4060 = vld [vmem:[#allocation13 + $0x3c0] sm:$0xff]
    %v4061 = vld [vmem:[#allocation13 + $0x3c8] sm:$0xff]
    %v4062 = vld [vmem:[#allocation13 + $0x3d0] sm:$0xff]
    %v4063 = vld [vmem:[#allocation13 + $0x3d8] sm:$0xff]
    %v4064 = vld [vmem:[#allocation13 + $0x3e0] sm:$0xff]
    %v4065 = vld [vmem:[#allocation13 + $0x3e8] sm:$0xff]
    %v4066 = vld [vmem:[#allocation13 + $0x3f0] sm:$0xff]
    %v4067 = vld [vmem:[#allocation13 + $0x3f8] sm:$0xff]
    %v4068 = vld [vmem:[#allocation13 + $0x400] sm:$0xff]
    %v4069 = vld [vmem:[#allocation13 + $0x408] sm:$0xff]
    %v4070 = vld [vmem:[#allocation13 + $0x410] sm:$0xff]
    %v4071 = vld [vmem:[#allocation13 + $0x418] sm:$0xff]
    %v4072 = vld [vmem:[#allocation13 + $0x420] sm:$0xff]
    %v4073 = vld [vmem:[#allocation13 + $0x428] sm:$0xff]
    %v4074 = vld [vmem:[#allocation13 + $0x430] sm:$0xff]
    %v4075 = vld [vmem:[#allocation13 + $0x438] sm:$0xff]
    %v4076 = vld [vmem:[#allocation13 + $0x440] sm:$0xff]
    %v4077 = vld [vmem:[#allocation13 + $0x448] sm:$0xff]
    %v4078 = vld [vmem:[#allocation13 + $0x450] sm:$0xff]
    %v4079 = vld [vmem:[#allocation13 + $0x458] sm:$0xff]
    %v4080 = vld [vmem:[#allocation13 + $0x460] sm:$0xff]
    %v4081 = vld [vmem:[#allocation13 + $0x468] sm:$0xff]
    %v4082 = vld [vmem:[#allocation13 + $0x470] sm:$0xff]
    %v4083 = vld [vmem:[#allocation13 + $0x478] sm:$0xff]
    %v4084 = vld [vmem:[#allocation13 + $0x480] sm:$0xff]
    %v4085 = vld [vmem:[#allocation13 + $0x488] sm:$0xff]
    %v4086 = vld [vmem:[#allocation13 + $0x490] sm:$0xff]
    %v4087 = vld [vmem:[#allocation13 + $0x498] sm:$0xff]
    %v4088 = vld [vmem:[#allocation13 + $0x4a0] sm:$0xff]
    %v4089 = vld [vmem:[#allocation13 + $0x4a8] sm:$0xff]
    %v4090 = vld [vmem:[#allocation13 + $0x4b0] sm:$0xff]
    %v4091 = vld [vmem:[#allocation13 + $0x4b8] sm:$0xff]
    %v4092 = vld [vmem:[#allocation13 + $0x4c0] sm:$0xff]
    %v4093 = vld [vmem:[#allocation13 + $0x4c8] sm:$0xff]
    %v4094 = vld [vmem:[#allocation13 + $0x4d0] sm:$0xff]
    %v4095 = vld [vmem:[#allocation13 + $0x4d8] sm:$0xff]
    %v4096 = vld [vmem:[#allocation13 + $0x4e0] sm:$0xff]
    %v4097 = vld [vmem:[#allocation13 + $0x4e8] sm:$0xff]
    %v4098 = vld [vmem:[#allocation13 + $0x4f0] sm:$0xff]
    %v4099 = vld [vmem:[#allocation13 + $0x4f8] sm:$0xff]
    %v4100 = vld [vmem:[#allocation13 + $0x500] sm:$0xff]
    %v4101 = vld [vmem:[#allocation13 + $0x508] sm:$0xff]
    %v4102 = vld [vmem:[#allocation13 + $0x510] sm:$0xff]
    %v4103 = vld [vmem:[#allocation13 + $0x518] sm:$0xff]
    %v4104 = vld [vmem:[#allocation13 + $0x520] sm:$0xff]
    %v4105 = vld [vmem:[#allocation13 + $0x528] sm:$0xff]
    %v4106 = vld [vmem:[#allocation13 + $0x530] sm:$0xff]
    %v4107 = vld [vmem:[#allocation13 + $0x538] sm:$0xff]
    %v4108 = vld [vmem:[#allocation13 + $0x540] sm:$0xff]
    %v4109 = vld [vmem:[#allocation13 + $0x548] sm:$0xff]
    %v4110 = vld [vmem:[#allocation13 + $0x550] sm:$0xff]
    %v4111 = vld [vmem:[#allocation13 + $0x558] sm:$0xff]
    %v4112 = vld [vmem:[#allocation13 + $0x560] sm:$0xff]
    %v4113 = vld [vmem:[#allocation13 + $0x568] sm:$0xff]
    %v4114 = vld [vmem:[#allocation13 + $0x570] sm:$0xff]
    %v4115 = vld [vmem:[#allocation13 + $0x578] sm:$0xff]
    %v4116 = vld [vmem:[#allocation13 + $0x580] sm:$0xff]
    %v4117 = vld [vmem:[#allocation13 + $0x588] sm:$0xff]
    %v4118 = vld [vmem:[#allocation13 + $0x590] sm:$0xff]
    %v4119 = vld [vmem:[#allocation13 + $0x598] sm:$0xff]
    %v4120 = vld [vmem:[#allocation13 + $0x5a0] sm:$0xff]
    %v4121 = vld [vmem:[#allocation13 + $0x5a8] sm:$0xff]
    %v4122 = vld [vmem:[#allocation13 + $0x5b0] sm:$0xff]
    %v4123 = vld [vmem:[#allocation13 + $0x5b8] sm:$0xff]
    %v4124 = vld [vmem:[#allocation13 + $0x5c0] sm:$0xff]
    %v4125 = vld [vmem:[#allocation13 + $0x5c8] sm:$0xff]
    %v4126 = vld [vmem:[#allocation13 + $0x5d0] sm:$0xff]
    %v4127 = vld [vmem:[#allocation13 + $0x5d8] sm:$0xff]
    %v4128 = vld [vmem:[#allocation13 + $0x5e0] sm:$0xff]
    %v4129 = vld [vmem:[#allocation13 + $0x5e8] sm:$0xff]
    %v4130 = vld [vmem:[#allocation13 + $0x5f0] sm:$0xff]
    %v4131 = vld [vmem:[#allocation13 + $0x5f8] sm:$0xff]
    %v4132 = vld [vmem:[#allocation13 + $0x600] sm:$0xff]
    %v4133 = vld [vmem:[#allocation13 + $0x608] sm:$0xff]
    %v4134 = vld [vmem:[#allocation13 + $0x610] sm:$0xff]
    %v4135 = vld [vmem:[#allocation13 + $0x618] sm:$0xff]
    %v4136 = vld [vmem:[#allocation13 + $0x620] sm:$0xff]
    %v4137 = vld [vmem:[#allocation13 + $0x628] sm:$0xff]
    %v4138 = vld [vmem:[#allocation13 + $0x630] sm:$0xff]
    %v4139 = vld [vmem:[#allocation13 + $0x638] sm:$0xff]
    %v4140 = vld [vmem:[#allocation13 + $0x640] sm:$0xff]
    %v4141 = vld [vmem:[#allocation13 + $0x648] sm:$0xff]
    %v4142 = vld [vmem:[#allocation13 + $0x650] sm:$0xff]
    %v4143 = vld [vmem:[#allocation13 + $0x658] sm:$0xff]
    %v4144 = vld [vmem:[#allocation13 + $0x660] sm:$0xff]
    %v4145 = vld [vmem:[#allocation13 + $0x668] sm:$0xff]
    %v4146 = vld [vmem:[#allocation13 + $0x670] sm:$0xff]
    %v4147 = vld [vmem:[#allocation13 + $0x678] sm:$0xff]
    %v4148 = vld [vmem:[#allocation13 + $0x680] sm:$0xff]
    %v4149 = vld [vmem:[#allocation13 + $0x688] sm:$0xff]
    %v4150 = vld [vmem:[#allocation13 + $0x690] sm:$0xff]
    %v4151 = vld [vmem:[#allocation13 + $0x698] sm:$0xff]
    %v4152 = vld [vmem:[#allocation13 + $0x6a0] sm:$0xff]
    %v4153 = vld [vmem:[#allocation13 + $0x6a8] sm:$0xff]
    %v4154 = vld [vmem:[#allocation13 + $0x6b0] sm:$0xff]
    %v4155 = vld [vmem:[#allocation13 + $0x6b8] sm:$0xff]
    %v4156 = vld [vmem:[#allocation13 + $0x6c0] sm:$0xff]
    %v4157 = vld [vmem:[#allocation13 + $0x6c8] sm:$0xff]
    %v4158 = vld [vmem:[#allocation13 + $0x6d0] sm:$0xff]
    %v4159 = vld [vmem:[#allocation13 + $0x6d8] sm:$0xff]
    %v4160 = vld [vmem:[#allocation13 + $0x6e0] sm:$0xff]
    %v4161 = vld [vmem:[#allocation13 + $0x6e8] sm:$0xff]
    %v4162 = vld [vmem:[#allocation13 + $0x6f0] sm:$0xff]
    %v4163 = vld [vmem:[#allocation13 + $0x6f8] sm:$0xff]
    %v4164 = vld [vmem:[#allocation13 + $0x700] sm:$0xff]
    %v4165 = vld [vmem:[#allocation13 + $0x708] sm:$0xff]
    %v4166 = vld [vmem:[#allocation13 + $0x710] sm:$0xff]
    %v4167 = vld [vmem:[#allocation13 + $0x718] sm:$0xff]
    %v4168 = vld [vmem:[#allocation13 + $0x720] sm:$0xff]
    %v4169 = vld [vmem:[#allocation13 + $0x728] sm:$0xff]
    %v4170 = vld [vmem:[#allocation13 + $0x730] sm:$0xff]
    %v4171 = vld [vmem:[#allocation13 + $0x738] sm:$0xff]
    %v4172 = vld [vmem:[#allocation13 + $0x740] sm:$0xff]
    %v4173 = vld [vmem:[#allocation13 + $0x748] sm:$0xff]
    %v4174 = vld [vmem:[#allocation13 + $0x750] sm:$0xff]
    %v4175 = vld [vmem:[#allocation13 + $0x758] sm:$0xff]
    %v4176 = vld [vmem:[#allocation13 + $0x760] sm:$0xff]
    %v4177 = vld [vmem:[#allocation13 + $0x768] sm:$0xff]
    %v4178 = vld [vmem:[#allocation13 + $0x770] sm:$0xff]
    %v4179 = vld [vmem:[#allocation13 + $0x778] sm:$0xff]
    %v4180 = vld [vmem:[#allocation13 + $0x780] sm:$0xff]
    %v4181 = vld [vmem:[#allocation13 + $0x788] sm:$0xff]
    %v4182 = vld [vmem:[#allocation13 + $0x790] sm:$0xff]
    %v4183 = vld [vmem:[#allocation13 + $0x798] sm:$0xff]
    %v4184 = vld [vmem:[#allocation13 + $0x7a0] sm:$0xff]
    %v4185 = vld [vmem:[#allocation13 + $0x7a8] sm:$0xff]
    %v4186 = vld [vmem:[#allocation13 + $0x7b0] sm:$0xff]
    %v4187 = vld [vmem:[#allocation13 + $0x7b8] sm:$0xff]
    %v4188 = vld [vmem:[#allocation13 + $0x7c0] sm:$0xff]
    %v4189 = vld [vmem:[#allocation13 + $0x7c8] sm:$0xff]
    %v4190 = vld [vmem:[#allocation13 + $0x7d0] sm:$0xff]
    %v4191 = vld [vmem:[#allocation13 + $0x7d8] sm:$0xff]
    %v4192 = vld [vmem:[#allocation13 + $0x7e0] sm:$0xff]
    %v4193 = vld [vmem:[#allocation13 + $0x7e8] sm:$0xff]
    %v4194 = vld [vmem:[#allocation13 + $0x7f0] sm:$0xff]
    %v4195 = vld [vmem:[#allocation13 + $0x7f8] sm:$0xff]
    %v4452 = vunpack.c.l.b16 %v3940
    %v4453 = vunpack.c.h.b16 %v3940
    %v4454 = vunpack.c.l.b16 %v3941
    %v4455 = vunpack.c.h.b16 %v3941
    %v4456 = vunpack.c.l.b16 %v3942
    %v4457 = vunpack.c.h.b16 %v3942
    %v4458 = vunpack.c.l.b16 %v3943
    %v4459 = vunpack.c.h.b16 %v3943
    %v4460 = vunpack.c.l.b16 %v3944
    %v4461 = vunpack.c.h.b16 %v3944
    %v4462 = vunpack.c.l.b16 %v3945
    %v4463 = vunpack.c.h.b16 %v3945
    %v4464 = vunpack.c.l.b16 %v3946
    %v4465 = vunpack.c.h.b16 %v3946
    %v4466 = vunpack.c.l.b16 %v3947
    %v4467 = vunpack.c.h.b16 %v3947
    %v4468 = vunpack.c.l.b16 %v3948
    %v4469 = vunpack.c.h.b16 %v3948
    %v4470 = vunpack.c.l.b16 %v3949
    %v4471 = vunpack.c.h.b16 %v3949
    %v4472 = vunpack.c.l.b16 %v3950
    %v4473 = vunpack.c.h.b16 %v3950
    %v4474 = vunpack.c.l.b16 %v3951
    %v4475 = vunpack.c.h.b16 %v3951
    %v4476 = vunpack.c.l.b16 %v3952
    %v4477 = vunpack.c.h.b16 %v3952
    %v4478 = vunpack.c.l.b16 %v3953
    %v4479 = vunpack.c.h.b16 %v3953
    %v4480 = vunpack.c.l.b16 %v3954
    %v4481 = vunpack.c.h.b16 %v3954
    %v4482 = vunpack.c.l.b16 %v3955
    %v4483 = vunpack.c.h.b16 %v3955
    %v4484 = vunpack.c.l.b16 %v3956
    %v4485 = vunpack.c.h.b16 %v3956
    %v4486 = vunpack.c.l.b16 %v3957
    %v4487 = vunpack.c.h.b16 %v3957
    %v4488 = vunpack.c.l.b16 %v3958
    %v4489 = vunpack.c.h.b16 %v3958
    %v4490 = vunpack.c.l.b16 %v3959
    %v4491 = vunpack.c.h.b16 %v3959
    %v4492 = vunpack.c.l.b16 %v3960
    %v4493 = vunpack.c.h.b16 %v3960
    %v4494 = vunpack.c.l.b16 %v3961
    %v4495 = vunpack.c.h.b16 %v3961
    %v4496 = vunpack.c.l.b16 %v3962
    %v4497 = vunpack.c.h.b16 %v3962
    %v4498 = vunpack.c.l.b16 %v3963
    %v4499 = vunpack.c.h.b16 %v3963
    %v4500 = vunpack.c.l.b16 %v3964
    %v4501 = vunpack.c.h.b16 %v3964
    %v4502 = vunpack.c.l.b16 %v3965
    %v4503 = vunpack.c.h.b16 %v3965
    %v4504 = vunpack.c.l.b16 %v3966
    %v4505 = vunpack.c.h.b16 %v3966
    %v4506 = vunpack.c.l.b16 %v3967
    %v4507 = vunpack.c.h.b16 %v3967
    %v4508 = vunpack.c.l.b16 %v3968
    %v4509 = vunpack.c.h.b16 %v3968
    %v4510 = vunpack.c.l.b16 %v3969
    %v4511 = vunpack.c.h.b16 %v3969
    %v4512 = vunpack.c.l.b16 %v3970
    %v4513 = vunpack.c.h.b16 %v3970
    %v4514 = vunpack.c.l.b16 %v3971
    %v4515 = vunpack.c.h.b16 %v3971
    %v4516 = vunpack.c.l.b16 %v3972
    %v4517 = vunpack.c.h.b16 %v3972
    %v4518 = vunpack.c.l.b16 %v3973
    %v4519 = vunpack.c.h.b16 %v3973
    %v4520 = vunpack.c.l.b16 %v3974
    %v4521 = vunpack.c.h.b16 %v3974
    %v4522 = vunpack.c.l.b16 %v3975
    %v4523 = vunpack.c.h.b16 %v3975
    %v4524 = vunpack.c.l.b16 %v3976
    %v4525 = vunpack.c.h.b16 %v3976
    %v4526 = vunpack.c.l.b16 %v3977
    %v4527 = vunpack.c.h.b16 %v3977
    %v4528 = vunpack.c.l.b16 %v3978
    %v4529 = vunpack.c.h.b16 %v3978
    %v4530 = vunpack.c.l.b16 %v3979
    %v4531 = vunpack.c.h.b16 %v3979
    %v4532 = vunpack.c.l.b16 %v3980
    %v4533 = vunpack.c.h.b16 %v3980
    %v4534 = vunpack.c.l.b16 %v3981
    %v4535 = vunpack.c.h.b16 %v3981
    %v4536 = vunpack.c.l.b16 %v3982
    %v4537 = vunpack.c.h.b16 %v3982
    %v4538 = vunpack.c.l.b16 %v3983
    %v4539 = vunpack.c.h.b16 %v3983
    %v4540 = vunpack.c.l.b16 %v3984
    %v4541 = vunpack.c.h.b16 %v3984
    %v4542 = vunpack.c.l.b16 %v3985
    %v4543 = vunpack.c.h.b16 %v3985
    %v4544 = vunpack.c.l.b16 %v3986
    %v4545 = vunpack.c.h.b16 %v3986
    %v4546 = vunpack.c.l.b16 %v3987
    %v4547 = vunpack.c.h.b16 %v3987
    %v4548 = vunpack.c.l.b16 %v3988
    %v4549 = vunpack.c.h.b16 %v3988
    %v4550 = vunpack.c.l.b16 %v3989
    %v4551 = vunpack.c.h.b16 %v3989
    %v4552 = vunpack.c.l.b16 %v3990
    %v4553 = vunpack.c.h.b16 %v3990
    %v4554 = vunpack.c.l.b16 %v3991
    %v4555 = vunpack.c.h.b16 %v3991
    %v4556 = vunpack.c.l.b16 %v3992
    %v4557 = vunpack.c.h.b16 %v3992
    %v4558 = vunpack.c.l.b16 %v3993
    %v4559 = vunpack.c.h.b16 %v3993
    %v4560 = vunpack.c.l.b16 %v3994
    %v4561 = vunpack.c.h.b16 %v3994
    %v4562 = vunpack.c.l.b16 %v3995
    %v4563 = vunpack.c.h.b16 %v3995
    %v4564 = vunpack.c.l.b16 %v3996
    %v4565 = vunpack.c.h.b16 %v3996
    %v4566 = vunpack.c.l.b16 %v3997
    %v4567 = vunpack.c.h.b16 %v3997
    %v4568 = vunpack.c.l.b16 %v3998
    %v4569 = vunpack.c.h.b16 %v3998
    %v4570 = vunpack.c.l.b16 %v3999
    %v4571 = vunpack.c.h.b16 %v3999
    %v4572 = vunpack.c.l.b16 %v4000
    %v4573 = vunpack.c.h.b16 %v4000
    %v4574 = vunpack.c.l.b16 %v4001
    %v4575 = vunpack.c.h.b16 %v4001
    %v4576 = vunpack.c.l.b16 %v4002
    %v4577 = vunpack.c.h.b16 %v4002
    %v4578 = vunpack.c.l.b16 %v4003
    %v4579 = vunpack.c.h.b16 %v4003
    %v4580 = vunpack.c.l.b16 %v4004
    %v4581 = vunpack.c.h.b16 %v4004
    %v4582 = vunpack.c.l.b16 %v4005
    %v4583 = vunpack.c.h.b16 %v4005
    %v4584 = vunpack.c.l.b16 %v4006
    %v4585 = vunpack.c.h.b16 %v4006
    %v4586 = vunpack.c.l.b16 %v4007
    %v4587 = vunpack.c.h.b16 %v4007
    %v4588 = vunpack.c.l.b16 %v4008
    %v4589 = vunpack.c.h.b16 %v4008
    %v4590 = vunpack.c.l.b16 %v4009
    %v4591 = vunpack.c.h.b16 %v4009
    %v4592 = vunpack.c.l.b16 %v4010
    %v4593 = vunpack.c.h.b16 %v4010
    %v4594 = vunpack.c.l.b16 %v4011
    %v4595 = vunpack.c.h.b16 %v4011
    %v4596 = vunpack.c.l.b16 %v4012
    %v4597 = vunpack.c.h.b16 %v4012
    %v4598 = vunpack.c.l.b16 %v4013
    %v4599 = vunpack.c.h.b16 %v4013
    %v4600 = vunpack.c.l.b16 %v4014
    %v4601 = vunpack.c.h.b16 %v4014
    %v4602 = vunpack.c.l.b16 %v4015
    %v4603 = vunpack.c.h.b16 %v4015
    %v4604 = vunpack.c.l.b16 %v4016
    %v4605 = vunpack.c.h.b16 %v4016
    %v4606 = vunpack.c.l.b16 %v4017
    %v4607 = vunpack.c.h.b16 %v4017
    %v4608 = vunpack.c.l.b16 %v4018
    %v4609 = vunpack.c.h.b16 %v4018
    %v4610 = vunpack.c.l.b16 %v4019
    %v4611 = vunpack.c.h.b16 %v4019
    %v4612 = vunpack.c.l.b16 %v4020
    %v4613 = vunpack.c.h.b16 %v4020
    %v4614 = vunpack.c.l.b16 %v4021
    %v4615 = vunpack.c.h.b16 %v4021
    %v4616 = vunpack.c.l.b16 %v4022
    %v4617 = vunpack.c.h.b16 %v4022
    %v4618 = vunpack.c.l.b16 %v4023
    %v4619 = vunpack.c.h.b16 %v4023
    %v4620 = vunpack.c.l.b16 %v4024
    %v4621 = vunpack.c.h.b16 %v4024
    %v4622 = vunpack.c.l.b16 %v4025
    %v4623 = vunpack.c.h.b16 %v4025
    %v4624 = vunpack.c.l.b16 %v4026
    %v4625 = vunpack.c.h.b16 %v4026
    %v4626 = vunpack.c.l.b16 %v4027
    %v4627 = vunpack.c.h.b16 %v4027
    %v4628 = vunpack.c.l.b16 %v4028
    %v4629 = vunpack.c.h.b16 %v4028
    %v4630 = vunpack.c.l.b16 %v4029
    %v4631 = vunpack.c.h.b16 %v4029
    %v4632 = vunpack.c.l.b16 %v4030
    %v4633 = vunpack.c.h.b16 %v4030
    %v4634 = vunpack.c.l.b16 %v4031
    %v4635 = vunpack.c.h.b16 %v4031
    %v4636 = vunpack.c.l.b16 %v4032
    %v4637 = vunpack.c.h.b16 %v4032
    %v4638 = vunpack.c.l.b16 %v4033
    %v4639 = vunpack.c.h.b16 %v4033
    %v4640 = vunpack.c.l.b16 %v4034
    %v4641 = vunpack.c.h.b16 %v4034
    %v4642 = vunpack.c.l.b16 %v4035
    %v4643 = vunpack.c.h.b16 %v4035
    %v4644 = vunpack.c.l.b16 %v4036
    %v4645 = vunpack.c.h.b16 %v4036
    %v4646 = vunpack.c.l.b16 %v4037
    %v4647 = vunpack.c.h.b16 %v4037
    %v4648 = vunpack.c.l.b16 %v4038
    %v4649 = vunpack.c.h.b16 %v4038
    %v4650 = vunpack.c.l.b16 %v4039
    %v4651 = vunpack.c.h.b16 %v4039
    %v4652 = vunpack.c.l.b16 %v4040
    %v4653 = vunpack.c.h.b16 %v4040
    %v4654 = vunpack.c.l.b16 %v4041
    %v4655 = vunpack.c.h.b16 %v4041
    %v4656 = vunpack.c.l.b16 %v4042
    %v4657 = vunpack.c.h.b16 %v4042
    %v4658 = vunpack.c.l.b16 %v4043
    %v4659 = vunpack.c.h.b16 %v4043
    %v4660 = vunpack.c.l.b16 %v4044
    %v4661 = vunpack.c.h.b16 %v4044
    %v4662 = vunpack.c.l.b16 %v4045
    %v4663 = vunpack.c.h.b16 %v4045
    %v4664 = vunpack.c.l.b16 %v4046
    %v4665 = vunpack.c.h.b16 %v4046
    %v4666 = vunpack.c.l.b16 %v4047
    %v4667 = vunpack.c.h.b16 %v4047
    %v4668 = vunpack.c.l.b16 %v4048
    %v4669 = vunpack.c.h.b16 %v4048
    %v4670 = vunpack.c.l.b16 %v4049
    %v4671 = vunpack.c.h.b16 %v4049
    %v4672 = vunpack.c.l.b16 %v4050
    %v4673 = vunpack.c.h.b16 %v4050
    %v4674 = vunpack.c.l.b16 %v4051
    %v4675 = vunpack.c.h.b16 %v4051
    %v4676 = vunpack.c.l.b16 %v4052
    %v4677 = vunpack.c.h.b16 %v4052
    %v4678 = vunpack.c.l.b16 %v4053
    %v4679 = vunpack.c.h.b16 %v4053
    %v4680 = vunpack.c.l.b16 %v4054
    %v4681 = vunpack.c.h.b16 %v4054
    %v4682 = vunpack.c.l.b16 %v4055
    %v4683 = vunpack.c.h.b16 %v4055
    %v4684 = vunpack.c.l.b16 %v4056
    %v4685 = vunpack.c.h.b16 %v4056
    %v4686 = vunpack.c.l.b16 %v4057
    %v4687 = vunpack.c.h.b16 %v4057
    %v4688 = vunpack.c.l.b16 %v4058
    %v4689 = vunpack.c.h.b16 %v4058
    %v4690 = vunpack.c.l.b16 %v4059
    %v4691 = vunpack.c.h.b16 %v4059
    %v4692 = vunpack.c.l.b16 %v4060
    %v4693 = vunpack.c.h.b16 %v4060
    %v4694 = vunpack.c.l.b16 %v4061
    %v4695 = vunpack.c.h.b16 %v4061
    %v4696 = vunpack.c.l.b16 %v4062
    %v4697 = vunpack.c.h.b16 %v4062
    %v4698 = vunpack.c.l.b16 %v4063
    %v4699 = vunpack.c.h.b16 %v4063
    %v4700 = vunpack.c.l.b16 %v4064
    %v4701 = vunpack.c.h.b16 %v4064
    %v4702 = vunpack.c.l.b16 %v4065
    %v4703 = vunpack.c.h.b16 %v4065
    %v4704 = vunpack.c.l.b16 %v4066
    %v4705 = vunpack.c.h.b16 %v4066
    %v4706 = vunpack.c.l.b16 %v4067
    %v4707 = vunpack.c.h.b16 %v4067
    %v4708 = vunpack.c.l.b16 %v4068
    %v4709 = vunpack.c.h.b16 %v4068
    %v4710 = vunpack.c.l.b16 %v4069
    %v4711 = vunpack.c.h.b16 %v4069
    %v4712 = vunpack.c.l.b16 %v4070
    %v4713 = vunpack.c.h.b16 %v4070
    %v4714 = vunpack.c.l.b16 %v4071
    %v4715 = vunpack.c.h.b16 %v4071
    %v4716 = vunpack.c.l.b16 %v4072
    %v4717 = vunpack.c.h.b16 %v4072
    %v4718 = vunpack.c.l.b16 %v4073
    %v4719 = vunpack.c.h.b16 %v4073
    %v4720 = vunpack.c.l.b16 %v4074
    %v4721 = vunpack.c.h.b16 %v4074
    %v4722 = vunpack.c.l.b16 %v4075
    %v4723 = vunpack.c.h.b16 %v4075
    %v4724 = vunpack.c.l.b16 %v4076
    %v4725 = vunpack.c.h.b16 %v4076
    %v4726 = vunpack.c.l.b16 %v4077
    %v4727 = vunpack.c.h.b16 %v4077
    %v4728 = vunpack.c.l.b16 %v4078
    %v4729 = vunpack.c.h.b16 %v4078
    %v4730 = vunpack.c.l.b16 %v4079
    %v4731 = vunpack.c.h.b16 %v4079
    %v4732 = vunpack.c.l.b16 %v4080
    %v4733 = vunpack.c.h.b16 %v4080
    %v4734 = vunpack.c.l.b16 %v4081
    %v4735 = vunpack.c.h.b16 %v4081
    %v4736 = vunpack.c.l.b16 %v4082
    %v4737 = vunpack.c.h.b16 %v4082
    %v4738 = vunpack.c.l.b16 %v4083
    %v4739 = vunpack.c.h.b16 %v4083
    %v4740 = vunpack.c.l.b16 %v4084
    %v4741 = vunpack.c.h.b16 %v4084
    %v4742 = vunpack.c.l.b16 %v4085
    %v4743 = vunpack.c.h.b16 %v4085
    %v4744 = vunpack.c.l.b16 %v4086
    %v4745 = vunpack.c.h.b16 %v4086
    %v4746 = vunpack.c.l.b16 %v4087
    %v4747 = vunpack.c.h.b16 %v4087
    %v4748 = vunpack.c.l.b16 %v4088
    %v4749 = vunpack.c.h.b16 %v4088
    %v4750 = vunpack.c.l.b16 %v4089
    %v4751 = vunpack.c.h.b16 %v4089
    %v4752 = vunpack.c.l.b16 %v4090
    %v4753 = vunpack.c.h.b16 %v4090
    %v4754 = vunpack.c.l.b16 %v4091
    %v4755 = vunpack.c.h.b16 %v4091
    %v4756 = vunpack.c.l.b16 %v4092
    %v4757 = vunpack.c.h.b16 %v4092
    %v4758 = vunpack.c.l.b16 %v4093
    %v4759 = vunpack.c.h.b16 %v4093
    %v4760 = vunpack.c.l.b16 %v4094
    %v4761 = vunpack.c.h.b16 %v4094
    %v4762 = vunpack.c.l.b16 %v4095
    %v4763 = vunpack.c.h.b16 %v4095
    %v4764 = vunpack.c.l.b16 %v4096
    %v4765 = vunpack.c.h.b16 %v4096
    %v4766 = vunpack.c.l.b16 %v4097
    %v4767 = vunpack.c.h.b16 %v4097
    %v4768 = vunpack.c.l.b16 %v4098
    %v4769 = vunpack.c.h.b16 %v4098
    %v4770 = vunpack.c.l.b16 %v4099
    %v4771 = vunpack.c.h.b16 %v4099
    %v4772 = vunpack.c.l.b16 %v4100
    %v4773 = vunpack.c.h.b16 %v4100
    %v4774 = vunpack.c.l.b16 %v4101
    %v4775 = vunpack.c.h.b16 %v4101
    %v4776 = vunpack.c.l.b16 %v4102
    %v4777 = vunpack.c.h.b16 %v4102
    %v4778 = vunpack.c.l.b16 %v4103
    %v4779 = vunpack.c.h.b16 %v4103
    %v4780 = vunpack.c.l.b16 %v4104
    %v4781 = vunpack.c.h.b16 %v4104
    %v4782 = vunpack.c.l.b16 %v4105
    %v4783 = vunpack.c.h.b16 %v4105
    %v4784 = vunpack.c.l.b16 %v4106
    %v4785 = vunpack.c.h.b16 %v4106
    %v4786 = vunpack.c.l.b16 %v4107
    %v4787 = vunpack.c.h.b16 %v4107
    %v4788 = vunpack.c.l.b16 %v4108
    %v4789 = vunpack.c.h.b16 %v4108
    %v4790 = vunpack.c.l.b16 %v4109
    %v4791 = vunpack.c.h.b16 %v4109
    %v4792 = vunpack.c.l.b16 %v4110
    %v4793 = vunpack.c.h.b16 %v4110
    %v4794 = vunpack.c.l.b16 %v4111
    %v4795 = vunpack.c.h.b16 %v4111
    %v4796 = vunpack.c.l.b16 %v4112
    %v4797 = vunpack.c.h.b16 %v4112
    %v4798 = vunpack.c.l.b16 %v4113
    %v4799 = vunpack.c.h.b16 %v4113
    %v4800 = vunpack.c.l.b16 %v4114
    %v4801 = vunpack.c.h.b16 %v4114
    %v4802 = vunpack.c.l.b16 %v4115
    %v4803 = vunpack.c.h.b16 %v4115
    %v4804 = vunpack.c.l.b16 %v4116
    %v4805 = vunpack.c.h.b16 %v4116
    %v4806 = vunpack.c.l.b16 %v4117
    %v4807 = vunpack.c.h.b16 %v4117
    %v4808 = vunpack.c.l.b16 %v4118
    %v4809 = vunpack.c.h.b16 %v4118
    %v4810 = vunpack.c.l.b16 %v4119
    %v4811 = vunpack.c.h.b16 %v4119
    %v4812 = vunpack.c.l.b16 %v4120
    %v4813 = vunpack.c.h.b16 %v4120
    %v4814 = vunpack.c.l.b16 %v4121
    %v4815 = vunpack.c.h.b16 %v4121
    %v4816 = vunpack.c.l.b16 %v4122
    %v4817 = vunpack.c.h.b16 %v4122
    %v4818 = vunpack.c.l.b16 %v4123
    %v4819 = vunpack.c.h.b16 %v4123
    %v4820 = vunpack.c.l.b16 %v4124
    %v4821 = vunpack.c.h.b16 %v4124
    %v4822 = vunpack.c.l.b16 %v4125
    %v4823 = vunpack.c.h.b16 %v4125
    %v4824 = vunpack.c.l.b16 %v4126
    %v4825 = vunpack.c.h.b16 %v4126
    %v4826 = vunpack.c.l.b16 %v4127
    %v4827 = vunpack.c.h.b16 %v4127
    %v4828 = vunpack.c.l.b16 %v4128
    %v4829 = vunpack.c.h.b16 %v4128
    %v4830 = vunpack.c.l.b16 %v4129
    %v4831 = vunpack.c.h.b16 %v4129
    %v4832 = vunpack.c.l.b16 %v4130
    %v4833 = vunpack.c.h.b16 %v4130
    %v4834 = vunpack.c.l.b16 %v4131
    %v4835 = vunpack.c.h.b16 %v4131
    %v4836 = vunpack.c.l.b16 %v4132
    %v4837 = vunpack.c.h.b16 %v4132
    %v4838 = vunpack.c.l.b16 %v4133
    %v4839 = vunpack.c.h.b16 %v4133
    %v4840 = vunpack.c.l.b16 %v4134
    %v4841 = vunpack.c.h.b16 %v4134
    %v4842 = vunpack.c.l.b16 %v4135
    %v4843 = vunpack.c.h.b16 %v4135
    %v4844 = vunpack.c.l.b16 %v4136
    %v4845 = vunpack.c.h.b16 %v4136
    %v4846 = vunpack.c.l.b16 %v4137
    %v4847 = vunpack.c.h.b16 %v4137
    %v4848 = vunpack.c.l.b16 %v4138
    %v4849 = vunpack.c.h.b16 %v4138
    %v4850 = vunpack.c.l.b16 %v4139
    %v4851 = vunpack.c.h.b16 %v4139
    %v4852 = vunpack.c.l.b16 %v4140
    %v4853 = vunpack.c.h.b16 %v4140
    %v4854 = vunpack.c.l.b16 %v4141
    %v4855 = vunpack.c.h.b16 %v4141
    %v4856 = vunpack.c.l.b16 %v4142
    %v4857 = vunpack.c.h.b16 %v4142
    %v4858 = vunpack.c.l.b16 %v4143
    %v4859 = vunpack.c.h.b16 %v4143
    %v4860 = vunpack.c.l.b16 %v4144
    %v4861 = vunpack.c.h.b16 %v4144
    %v4862 = vunpack.c.l.b16 %v4145
    %v4863 = vunpack.c.h.b16 %v4145
    %v4864 = vunpack.c.l.b16 %v4146
    %v4865 = vunpack.c.h.b16 %v4146
    %v4866 = vunpack.c.l.b16 %v4147
    %v4867 = vunpack.c.h.b16 %v4147
    %v4868 = vunpack.c.l.b16 %v4148
    %v4869 = vunpack.c.h.b16 %v4148
    %v4870 = vunpack.c.l.b16 %v4149
    %v4871 = vunpack.c.h.b16 %v4149
    %v4872 = vunpack.c.l.b16 %v4150
    %v4873 = vunpack.c.h.b16 %v4150
    %v4874 = vunpack.c.l.b16 %v4151
    %v4875 = vunpack.c.h.b16 %v4151
    %v4876 = vunpack.c.l.b16 %v4152
    %v4877 = vunpack.c.h.b16 %v4152
    %v4878 = vunpack.c.l.b16 %v4153
    %v4879 = vunpack.c.h.b16 %v4153
    %v4880 = vunpack.c.l.b16 %v4154
    %v4881 = vunpack.c.h.b16 %v4154
    %v4882 = vunpack.c.l.b16 %v4155
    %v4883 = vunpack.c.h.b16 %v4155
    %v4884 = vunpack.c.l.b16 %v4156
    %v4885 = vunpack.c.h.b16 %v4156
    %v4886 = vunpack.c.l.b16 %v4157
    %v4887 = vunpack.c.h.b16 %v4157
    %v4888 = vunpack.c.l.b16 %v4158
    %v4889 = vunpack.c.h.b16 %v4158
    %v4890 = vunpack.c.l.b16 %v4159
    %v4891 = vunpack.c.h.b16 %v4159
    %v4892 = vunpack.c.l.b16 %v4160
    %v4893 = vunpack.c.h.b16 %v4160
    %v4894 = vunpack.c.l.b16 %v4161
    %v4895 = vunpack.c.h.b16 %v4161
    %v4896 = vunpack.c.l.b16 %v4162
    %v4897 = vunpack.c.h.b16 %v4162
    %v4898 = vunpack.c.l.b16 %v4163
    %v4899 = vunpack.c.h.b16 %v4163
    %v4900 = vunpack.c.l.b16 %v4164
    %v4901 = vunpack.c.h.b16 %v4164
    %v4902 = vunpack.c.l.b16 %v4165
    %v4903 = vunpack.c.h.b16 %v4165
    %v4904 = vunpack.c.l.b16 %v4166
    %v4905 = vunpack.c.h.b16 %v4166
    %v4906 = vunpack.c.l.b16 %v4167
    %v4907 = vunpack.c.h.b16 %v4167
    %v4908 = vunpack.c.l.b16 %v4168
    %v4909 = vunpack.c.h.b16 %v4168
    %v4910 = vunpack.c.l.b16 %v4169
    %v4911 = vunpack.c.h.b16 %v4169
    %v4912 = vunpack.c.l.b16 %v4170
    %v4913 = vunpack.c.h.b16 %v4170
    %v4914 = vunpack.c.l.b16 %v4171
    %v4915 = vunpack.c.h.b16 %v4171
    %v4916 = vunpack.c.l.b16 %v4172
    %v4917 = vunpack.c.h.b16 %v4172
    %v4918 = vunpack.c.l.b16 %v4173
    %v4919 = vunpack.c.h.b16 %v4173
    %v4920 = vunpack.c.l.b16 %v4174
    %v4921 = vunpack.c.h.b16 %v4174
    %v4922 = vunpack.c.l.b16 %v4175
    %v4923 = vunpack.c.h.b16 %v4175
    %v4924 = vunpack.c.l.b16 %v4176
    %v4925 = vunpack.c.h.b16 %v4176
    %v4926 = vunpack.c.l.b16 %v4177
    %v4927 = vunpack.c.h.b16 %v4177
    %v4928 = vunpack.c.l.b16 %v4178
    %v4929 = vunpack.c.h.b16 %v4178
    %v4930 = vunpack.c.l.b16 %v4179
    %v4931 = vunpack.c.h.b16 %v4179
    %v4932 = vunpack.c.l.b16 %v4180
    %v4933 = vunpack.c.h.b16 %v4180
    %v4934 = vunpack.c.l.b16 %v4181
    %v4935 = vunpack.c.h.b16 %v4181
    %v4936 = vunpack.c.l.b16 %v4182
    %v4937 = vunpack.c.h.b16 %v4182
    %v4938 = vunpack.c.l.b16 %v4183
    %v4939 = vunpack.c.h.b16 %v4183
    %v4940 = vunpack.c.l.b16 %v4184
    %v4941 = vunpack.c.h.b16 %v4184
    %v4942 = vunpack.c.l.b16 %v4185
    %v4943 = vunpack.c.h.b16 %v4185
    %v4944 = vunpack.c.l.b16 %v4186
    %v4945 = vunpack.c.h.b16 %v4186
    %v4946 = vunpack.c.l.b16 %v4187
    %v4947 = vunpack.c.h.b16 %v4187
    %v4948 = vunpack.c.l.b16 %v4188
    %v4949 = vunpack.c.h.b16 %v4188
    %v4950 = vunpack.c.l.b16 %v4189
    %v4951 = vunpack.c.h.b16 %v4189
    %v4952 = vunpack.c.l.b16 %v4190
    %v4953 = vunpack.c.h.b16 %v4190
    %v4954 = vunpack.c.l.b16 %v4191
    %v4955 = vunpack.c.h.b16 %v4191
    %v4956 = vunpack.c.l.b16 %v4192
    %v4957 = vunpack.c.h.b16 %v4192
    %v4958 = vunpack.c.l.b16 %v4193
    %v4959 = vunpack.c.h.b16 %v4193
    %v4960 = vunpack.c.l.b16 %v4194
    %v4961 = vunpack.c.h.b16 %v4194
    %v4962 = vunpack.c.l.b16 %v4195
    %v4963 = vunpack.c.h.b16 %v4195
    %v4964 = vpack.c.b16 %v4456, %v4452
    %v4965 = vpack.c.b16 %v4457, %v4453
    %v4966 = vpack.c.b16 %v4458, %v4454
    %v4967 = vpack.c.b16 %v4459, %v4455
    %v4968 = vpack.c.b16 %v4464, %v4460
    %v4969 = vpack.c.b16 %v4465, %v4461
    %v4970 = vpack.c.b16 %v4466, %v4462
    %v4971 = vpack.c.b16 %v4467, %v4463
    %v4972 = vpack.c.b16 %v4472, %v4468
    %v4973 = vpack.c.b16 %v4473, %v4469
    %v4974 = vpack.c.b16 %v4474, %v4470
    %v4975 = vpack.c.b16 %v4475, %v4471
    %v4976 = vpack.c.b16 %v4480, %v4476
    %v4977 = vpack.c.b16 %v4481, %v4477
    %v4978 = vpack.c.b16 %v4482, %v4478
    %v4979 = vpack.c.b16 %v4483, %v4479
    %v4980 = vpack.c.b16 %v4488, %v4484
    %v4981 = vpack.c.b16 %v4489, %v4485
    %v4982 = vpack.c.b16 %v4490, %v4486
    %v4983 = vpack.c.b16 %v4491, %v4487
    %v4984 = vpack.c.b16 %v4496, %v4492
    %v4985 = vpack.c.b16 %v4497, %v4493
    %v4986 = vpack.c.b16 %v4498, %v4494
    %v4987 = vpack.c.b16 %v4499, %v4495
    %v4988 = vpack.c.b16 %v4504, %v4500
    %v4989 = vpack.c.b16 %v4505, %v4501
    %v4990 = vpack.c.b16 %v4506, %v4502
    %v4991 = vpack.c.b16 %v4507, %v4503
    %v4992 = vpack.c.b16 %v4512, %v4508
    %v4993 = vpack.c.b16 %v4513, %v4509
    %v4994 = vpack.c.b16 %v4514, %v4510
    %v4995 = vpack.c.b16 %v4515, %v4511
    %v4996 = vpack.c.b16 %v4520, %v4516
    %v4997 = vpack.c.b16 %v4521, %v4517
    %v4998 = vpack.c.b16 %v4522, %v4518
    %v4999 = vpack.c.b16 %v4523, %v4519
    %v5000 = vpack.c.b16 %v4528, %v4524
    %v5001 = vpack.c.b16 %v4529, %v4525
    %v5002 = vpack.c.b16 %v4530, %v4526
    %v5003 = vpack.c.b16 %v4531, %v4527
    %v5004 = vpack.c.b16 %v4536, %v4532
    %v5005 = vpack.c.b16 %v4537, %v4533
    %v5006 = vpack.c.b16 %v4538, %v4534
    %v5007 = vpack.c.b16 %v4539, %v4535
    %v5008 = vpack.c.b16 %v4544, %v4540
    %v5009 = vpack.c.b16 %v4545, %v4541
    %v5010 = vpack.c.b16 %v4546, %v4542
    %v5011 = vpack.c.b16 %v4547, %v4543
    %v5012 = vpack.c.b16 %v4552, %v4548
    %v5013 = vpack.c.b16 %v4553, %v4549
    %v5014 = vpack.c.b16 %v4554, %v4550
    %v5015 = vpack.c.b16 %v4555, %v4551
    %v5016 = vpack.c.b16 %v4560, %v4556
    %v5017 = vpack.c.b16 %v4561, %v4557
    %v5018 = vpack.c.b16 %v4562, %v4558
    %v5019 = vpack.c.b16 %v4563, %v4559
    %v5020 = vpack.c.b16 %v4568, %v4564
    %v5021 = vpack.c.b16 %v4569, %v4565
    %v5022 = vpack.c.b16 %v4570, %v4566
    %v5023 = vpack.c.b16 %v4571, %v4567
    %v5024 = vpack.c.b16 %v4576, %v4572
    %v5025 = vpack.c.b16 %v4577, %v4573
    %v5026 = vpack.c.b16 %v4578, %v4574
    %v5027 = vpack.c.b16 %v4579, %v4575
    %v5028 = vpack.c.b16 %v4584, %v4580
    %v5029 = vpack.c.b16 %v4585, %v4581
    %v5030 = vpack.c.b16 %v4586, %v4582
    %v5031 = vpack.c.b16 %v4587, %v4583
    %v5032 = vpack.c.b16 %v4592, %v4588
    %v5033 = vpack.c.b16 %v4593, %v4589
    %v5034 = vpack.c.b16 %v4594, %v4590
    %v5035 = vpack.c.b16 %v4595, %v4591
    %v5036 = vpack.c.b16 %v4600, %v4596
    %v5037 = vpack.c.b16 %v4601, %v4597
    %v5038 = vpack.c.b16 %v4602, %v4598
    %v5039 = vpack.c.b16 %v4603, %v4599
    %v5040 = vpack.c.b16 %v4608, %v4604
    %v5041 = vpack.c.b16 %v4609, %v4605
    %v5042 = vpack.c.b16 %v4610, %v4606
    %v5043 = vpack.c.b16 %v4611, %v4607
    %v5044 = vpack.c.b16 %v4616, %v4612
    %v5045 = vpack.c.b16 %v4617, %v4613
    %v5046 = vpack.c.b16 %v4618, %v4614
    %v5047 = vpack.c.b16 %v4619, %v4615
    %v5048 = vpack.c.b16 %v4624, %v4620
    %v5049 = vpack.c.b16 %v4625, %v4621
    %v5050 = vpack.c.b16 %v4626, %v4622
    %v5051 = vpack.c.b16 %v4627, %v4623
    %v5052 = vpack.c.b16 %v4632, %v4628
    %v5053 = vpack.c.b16 %v4633, %v4629
    %v5054 = vpack.c.b16 %v4634, %v4630
    %v5055 = vpack.c.b16 %v4635, %v4631
    %v5056 = vpack.c.b16 %v4640, %v4636
    %v5057 = vpack.c.b16 %v4641, %v4637
    %v5058 = vpack.c.b16 %v4642, %v4638
    %v5059 = vpack.c.b16 %v4643, %v4639
    %v5060 = vpack.c.b16 %v4648, %v4644
    %v5061 = vpack.c.b16 %v4649, %v4645
    %v5062 = vpack.c.b16 %v4650, %v4646
    %v5063 = vpack.c.b16 %v4651, %v4647
    %v5064 = vpack.c.b16 %v4656, %v4652
    %v5065 = vpack.c.b16 %v4657, %v4653
    %v5066 = vpack.c.b16 %v4658, %v4654
    %v5067 = vpack.c.b16 %v4659, %v4655
    %v5068 = vpack.c.b16 %v4664, %v4660
    %v5069 = vpack.c.b16 %v4665, %v4661
    %v5070 = vpack.c.b16 %v4666, %v4662
    %v5071 = vpack.c.b16 %v4667, %v4663
    %v5072 = vpack.c.b16 %v4672, %v4668
    %v5073 = vpack.c.b16 %v4673, %v4669
    %v5074 = vpack.c.b16 %v4674, %v4670
    %v5075 = vpack.c.b16 %v4675, %v4671
    %v5076 = vpack.c.b16 %v4680, %v4676
    %v5077 = vpack.c.b16 %v4681, %v4677
    %v5078 = vpack.c.b16 %v4682, %v4678
    %v5079 = vpack.c.b16 %v4683, %v4679
    %v5080 = vpack.c.b16 %v4688, %v4684
    %v5081 = vpack.c.b16 %v4689, %v4685
    %v5082 = vpack.c.b16 %v4690, %v4686
    %v5083 = vpack.c.b16 %v4691, %v4687
    %v5084 = vpack.c.b16 %v4696, %v4692
    %v5085 = vpack.c.b16 %v4697, %v4693
    %v5086 = vpack.c.b16 %v4698, %v4694
    %v5087 = vpack.c.b16 %v4699, %v4695
    %v5088 = vpack.c.b16 %v4704, %v4700
    %v5089 = vpack.c.b16 %v4705, %v4701
    %v5090 = vpack.c.b16 %v4706, %v4702
    %v5091 = vpack.c.b16 %v4707, %v4703
    %v5092 = vpack.c.b16 %v4712, %v4708
    %v5093 = vpack.c.b16 %v4713, %v4709
    %v5094 = vpack.c.b16 %v4714, %v4710
    %v5095 = vpack.c.b16 %v4715, %v4711
    %v5096 = vpack.c.b16 %v4720, %v4716
    %v5097 = vpack.c.b16 %v4721, %v4717
    %v5098 = vpack.c.b16 %v4722, %v4718
    %v5099 = vpack.c.b16 %v4723, %v4719
    %v5100 = vpack.c.b16 %v4728, %v4724
    %v5101 = vpack.c.b16 %v4729, %v4725
    %v5102 = vpack.c.b16 %v4730, %v4726
    %v5103 = vpack.c.b16 %v4731, %v4727
    %v5104 = vpack.c.b16 %v4736, %v4732
    %v5105 = vpack.c.b16 %v4737, %v4733
    %v5106 = vpack.c.b16 %v4738, %v4734
    %v5107 = vpack.c.b16 %v4739, %v4735
    %v5108 = vpack.c.b16 %v4744, %v4740
    %v5109 = vpack.c.b16 %v4745, %v4741
    %v5110 = vpack.c.b16 %v4746, %v4742
    %v5111 = vpack.c.b16 %v4747, %v4743
    %v5112 = vpack.c.b16 %v4752, %v4748
    %v5113 = vpack.c.b16 %v4753, %v4749
    %v5114 = vpack.c.b16 %v4754, %v4750
    %v5115 = vpack.c.b16 %v4755, %v4751
    %v5116 = vpack.c.b16 %v4760, %v4756
    %v5117 = vpack.c.b16 %v4761, %v4757
    %v5118 = vpack.c.b16 %v4762, %v4758
    %v5119 = vpack.c.b16 %v4763, %v4759
    %v5120 = vpack.c.b16 %v4768, %v4764
    %v5121 = vpack.c.b16 %v4769, %v4765
    %v5122 = vpack.c.b16 %v4770, %v4766
    %v5123 = vpack.c.b16 %v4771, %v4767
    %v5124 = vpack.c.b16 %v4776, %v4772
    %v5125 = vpack.c.b16 %v4777, %v4773
    %v5126 = vpack.c.b16 %v4778, %v4774
    %v5127 = vpack.c.b16 %v4779, %v4775
    %v5128 = vpack.c.b16 %v4784, %v4780
    %v5129 = vpack.c.b16 %v4785, %v4781
    %v5130 = vpack.c.b16 %v4786, %v4782
    %v5131 = vpack.c.b16 %v4787, %v4783
    %v5132 = vpack.c.b16 %v4792, %v4788
    %v5133 = vpack.c.b16 %v4793, %v4789
    %v5134 = vpack.c.b16 %v4794, %v4790
    %v5135 = vpack.c.b16 %v4795, %v4791
    %v5136 = vpack.c.b16 %v4800, %v4796
    %v5137 = vpack.c.b16 %v4801, %v4797
    %v5138 = vpack.c.b16 %v4802, %v4798
    %v5139 = vpack.c.b16 %v4803, %v4799
    %v5140 = vpack.c.b16 %v4808, %v4804
    %v5141 = vpack.c.b16 %v4809, %v4805
    %v5142 = vpack.c.b16 %v4810, %v4806
    %v5143 = vpack.c.b16 %v4811, %v4807
    %v5144 = vpack.c.b16 %v4816, %v4812
    %v5145 = vpack.c.b16 %v4817, %v4813
    %v5146 = vpack.c.b16 %v4818, %v4814
    %v5147 = vpack.c.b16 %v4819, %v4815
    %v5148 = vpack.c.b16 %v4824, %v4820
    %v5149 = vpack.c.b16 %v4825, %v4821
    %v5150 = vpack.c.b16 %v4826, %v4822
    %v5151 = vpack.c.b16 %v4827, %v4823
    %v5152 = vpack.c.b16 %v4832, %v4828
    %v5153 = vpack.c.b16 %v4833, %v4829
    %v5154 = vpack.c.b16 %v4834, %v4830
    %v5155 = vpack.c.b16 %v4835, %v4831
    %v5156 = vpack.c.b16 %v4840, %v4836
    %v5157 = vpack.c.b16 %v4841, %v4837
    %v5158 = vpack.c.b16 %v4842, %v4838
    %v5159 = vpack.c.b16 %v4843, %v4839
    %v5160 = vpack.c.b16 %v4848, %v4844
    %v5161 = vpack.c.b16 %v4849, %v4845
    %v5162 = vpack.c.b16 %v4850, %v4846
    %v5163 = vpack.c.b16 %v4851, %v4847
    %v5164 = vpack.c.b16 %v4856, %v4852
    %v5165 = vpack.c.b16 %v4857, %v4853
    %v5166 = vpack.c.b16 %v4858, %v4854
    %v5167 = vpack.c.b16 %v4859, %v4855
    %v5168 = vpack.c.b16 %v4864, %v4860
    %v5169 = vpack.c.b16 %v4865, %v4861
    %v5170 = vpack.c.b16 %v4866, %v4862
    %v5171 = vpack.c.b16 %v4867, %v4863
    %v5172 = vpack.c.b16 %v4872, %v4868
    %v5173 = vpack.c.b16 %v4873, %v4869
    %v5174 = vpack.c.b16 %v4874, %v4870
    %v5175 = vpack.c.b16 %v4875, %v4871
    %v5176 = vpack.c.b16 %v4880, %v4876
    %v5177 = vpack.c.b16 %v4881, %v4877
    %v5178 = vpack.c.b16 %v4882, %v4878
    %v5179 = vpack.c.b16 %v4883, %v4879
    %v5180 = vpack.c.b16 %v4888, %v4884
    %v5181 = vpack.c.b16 %v4889, %v4885
    %v5182 = vpack.c.b16 %v4890, %v4886
    %v5183 = vpack.c.b16 %v4891, %v4887
    %v5184 = vpack.c.b16 %v4896, %v4892
    %v5185 = vpack.c.b16 %v4897, %v4893
    %v5186 = vpack.c.b16 %v4898, %v4894
    %v5187 = vpack.c.b16 %v4899, %v4895
    %v5188 = vpack.c.b16 %v4904, %v4900
    %v5189 = vpack.c.b16 %v4905, %v4901
    %v5190 = vpack.c.b16 %v4906, %v4902
    %v5191 = vpack.c.b16 %v4907, %v4903
    %v5192 = vpack.c.b16 %v4912, %v4908
    %v5193 = vpack.c.b16 %v4913, %v4909
    %v5194 = vpack.c.b16 %v4914, %v4910
    %v5195 = vpack.c.b16 %v4915, %v4911
    %v5196 = vpack.c.b16 %v4920, %v4916
    %v5197 = vpack.c.b16 %v4921, %v4917
    %v5198 = vpack.c.b16 %v4922, %v4918
    %v5199 = vpack.c.b16 %v4923, %v4919
    %v5200 = vpack.c.b16 %v4928, %v4924
    %v5201 = vpack.c.b16 %v4929, %v4925
    %v5202 = vpack.c.b16 %v4930, %v4926
    %v5203 = vpack.c.b16 %v4931, %v4927
    %v5204 = vpack.c.b16 %v4936, %v4932
    %v5205 = vpack.c.b16 %v4937, %v4933
    %v5206 = vpack.c.b16 %v4938, %v4934
    %v5207 = vpack.c.b16 %v4939, %v4935
    %v5208 = vpack.c.b16 %v4944, %v4940
    %v5209 = vpack.c.b16 %v4945, %v4941
    %v5210 = vpack.c.b16 %v4946, %v4942
    %v5211 = vpack.c.b16 %v4947, %v4943
    %v5212 = vpack.c.b16 %v4952, %v4948
    %v5213 = vpack.c.b16 %v4953, %v4949
    %v5214 = vpack.c.b16 %v4954, %v4950
    %v5215 = vpack.c.b16 %v4955, %v4951
    %v5216 = vpack.c.b16 %v4960, %v4956
    %v5217 = vpack.c.b16 %v4961, %v4957
    %v5218 = vpack.c.b16 %v4962, %v4958
    %v5219 = vpack.c.b16 %v4963, %v4959
    %5476 = vmatprep.subr.bf16.mxu0 %v4965
    %5477 = vmatpush1.bf16.msra.mxu0 %v4964
    %5478 = vmatprep.subr.bf16.mxu0 %v4969
    %5479 = vmatpush1.bf16.msra.mxu0 %v4968
    %5480 = vmatprep.subr.bf16.mxu0 %v4973
    %5481 = vmatpush1.bf16.msra.mxu0 %v4972
    %5482 = vmatprep.subr.bf16.mxu0 %v4977
    %5483 = vmatpush1.bf16.msra.mxu0 %v4976
    %5484 = vmatprep.subr.bf16.mxu0 %v4981
    %5485 = vmatpush1.bf16.msra.mxu0 %v4980
    %5486 = vmatprep.subr.bf16.mxu0 %v4985
    %5487 = vmatpush1.bf16.msra.mxu0 %v4984
    %5488 = vmatprep.subr.bf16.mxu0 %v4989
    %5489 = vmatpush1.bf16.msra.mxu0 %v4988
    %5490 = vmatprep.subr.bf16.mxu0 %v4993
    %5491 = vmatpush1.bf16.msra.mxu0 %v4992
    %5492 = vmatprep.subr.bf16.mxu0 %v4997
    %5493 = vmatpush1.bf16.msra.mxu0 %v4996
    %5494 = vmatprep.subr.bf16.mxu0 %v5001
    %5495 = vmatpush1.bf16.msra.mxu0 %v5000
    %5496 = vmatprep.subr.bf16.mxu0 %v5005
    %5497 = vmatpush1.bf16.msra.mxu0 %v5004
    %5498 = vmatprep.subr.bf16.mxu0 %v5009
    %5499 = vmatpush1.bf16.msra.mxu0 %v5008
    %5500 = vmatprep.subr.bf16.mxu0 %v5013
    %5501 = vmatpush1.bf16.msra.mxu0 %v5012
    %5502 = vmatprep.subr.bf16.mxu0 %v5017
    %5503 = vmatpush1.bf16.msra.mxu0 %v5016
    %5504 = vmatprep.subr.bf16.mxu0 %v5021
    %5505 = vmatpush1.bf16.msra.mxu0 %v5020
    %5506 = vmatprep.subr.bf16.mxu0 %v5025
    %5507 = vmatpush1.bf16.msra.mxu0 %v5024
    %5508 = vmatprep.mubr.bf16.mxu0 %v3933
    %5509 = vmatmul.mubr.bf16.gmra.mrb[0].mxu0 %v3932
    %v5510 = vpop.f32.mrb[0].mxu0
    %v5511 = vadd.f32 0.0, %v5510
    %v5512 = vpop.f32.mrb[0].mxu0
    %v5513 = vadd.f32 0.0, %v5512
    %v5514 = vpop.f32.mrb[0].mxu0
    %v5515 = vpop.f32.mrb[0].mxu0
    %5516 = vdwg.mxu0
    %5517 = vmatprep.subr.bf16.mxu0 %v5029
    %5518 = vmatpush1.bf16.msra.mxu0 %v5028
    %5519 = vmatprep.subr.bf16.mxu0 %v5033
    %5520 = vmatpush1.bf16.msra.mxu0 %v5032
    %5521 = vmatprep.subr.bf16.mxu0 %v5037
    %5522 = vmatpush1.bf16.msra.mxu0 %v5036
    %5523 = vmatprep.subr.bf16.mxu0 %v5041
    %5524 = vmatpush1.bf16.msra.mxu0 %v5040
    %5525 = vmatprep.subr.bf16.mxu0 %v5045
    %5526 = vmatpush1.bf16.msra.mxu0 %v5044
    %5527 = vmatprep.subr.bf16.mxu0 %v5049
    %5528 = vmatpush1.bf16.msra.mxu0 %v5048
    %5529 = vmatprep.subr.bf16.mxu0 %v5053
    %5530 = vmatpush1.bf16.msra.mxu0 %v5052
    %5531 = vmatprep.subr.bf16.mxu0 %v5057
    %5532 = vmatpush1.bf16.msra.mxu0 %v5056
    %5533 = vmatprep.subr.bf16.mxu0 %v5061
    %5534 = vmatpush1.bf16.msra.mxu0 %v5060
    %5535 = vmatprep.subr.bf16.mxu0 %v5065
    %5536 = vmatpush1.bf16.msra.mxu0 %v5064
    %5537 = vmatprep.subr.bf16.mxu0 %v5069
    %5538 = vmatpush1.bf16.msra.mxu0 %v5068
    %5539 = vmatprep.subr.bf16.mxu0 %v5073
    %5540 = vmatpush1.bf16.msra.mxu0 %v5072
    %5541 = vmatprep.subr.bf16.mxu0 %v5077
    %5542 = vmatpush1.bf16.msra.mxu0 %v5076
    %5543 = vmatprep.subr.bf16.mxu0 %v5081
    %5544 = vmatpush1.bf16.msra.mxu0 %v5080
    %5545 = vmatprep.subr.bf16.mxu0 %v5085
    %5546 = vmatpush1.bf16.msra.mxu0 %v5084
    %5547 = vmatprep.subr.bf16.mxu0 %v5089
    %5548 = vmatpush1.bf16.msra.mxu0 %v5088
    %5549 = vmatprep.mubr.bf16.mxu0 %v3935
    %5550 = vmatmul.mubr.bf16.gmra.mrb[0].mxu0 %v3934
    %v5551 = vpop.f32.mrb[0].mxu0
    %v5552 = vadd.f32 %v5511, %v5551
    %v5553 = vpop.f32.mrb[0].mxu0
    %v5554 = vadd.f32 %v5513, %v5553
    %v5555 = vpop.f32.mrb[0].mxu0
    %v5556 = vpop.f32.mrb[0].mxu0
    %5557 = vdwg.mxu0
    %5558 = vmatprep.subr.bf16.mxu0 %v5093
    %5559 = vmatpush1.bf16.msra.mxu0 %v5092
    %5560 = vmatprep.subr.bf16.mxu0 %v5097
    %5561 = vmatpush1.bf16.msra.mxu0 %v5096
    %5562 = vmatprep.subr.bf16.mxu0 %v5101
    %5563 = vmatpush1.bf16.msra.mxu0 %v5100
    %5564 = vmatprep.subr.bf16.mxu0 %v5105
    %5565 = vmatpush1.bf16.msra.mxu0 %v5104
    %5566 = vmatprep.subr.bf16.mxu0 %v5109
    %5567 = vmatpush1.bf16.msra.mxu0 %v5108
    %5568 = vmatprep.subr.bf16.mxu0 %v5113
    %5569 = vmatpush1.bf16.msra.mxu0 %v5112
    %5570 = vmatprep.subr.bf16.mxu0 %v5117
    %5571 = vmatpush1.bf16.msra.mxu0 %v5116
    %5572 = vmatprep.subr.bf16.mxu0 %v5121
    %5573 = vmatpush1.bf16.msra.mxu0 %v5120
    %5574 = vmatprep.subr.bf16.mxu0 %v5125
    %5575 = vmatpush1.bf16.msra.mxu0 %v5124
    %5576 = vmatprep.subr.bf16.mxu0 %v5129
    %5577 = vmatpush1.bf16.msra.mxu0 %v5128
    %5578 = vmatprep.subr.bf16.mxu0 %v5133
    %5579 = vmatpush1.bf16.msra.mxu0 %v5132
    %5580 = vmatprep.subr.bf16.mxu0 %v5137
    %5581 = vmatpush1.bf16.msra.mxu0 %v5136
    %5582 = vmatprep.subr.bf16.mxu0 %v5141
    %5583 = vmatpush1.bf16.msra.mxu0 %v5140
    %5584 = vmatprep.subr.bf16.mxu0 %v5145
    %5585 = vmatpush1.bf16.msra.mxu0 %v5144
    %5586 = vmatprep.subr.bf16.mxu0 %v5149
    %5587 = vmatpush1.bf16.msra.mxu0 %v5148
    %5588 = vmatprep.subr.bf16.mxu0 %v5153
    %5589 = vmatpush1.bf16.msra.mxu0 %v5152
    %5590 = vmatprep.mubr.bf16.mxu0 %v3937
    %5591 = vmatmul.mubr.bf16.gmra.mrb[0].mxu0 %v3936
    %v5592 = vpop.f32.mrb[0].mxu0
    %v5593 = vadd.f32 %v5552, %v5592
    %v5594 = vpop.f32.mrb[0].mxu0
    %v5595 = vadd.f32 %v5554, %v5594
    %v5596 = vpop.f32.mrb[0].mxu0
    %v5597 = vpop.f32.mrb[0].mxu0
    %5598 = vdwg.mxu0
    %5599 = vmatprep.subr.bf16.mxu0 %v5157
    %5600 = vmatpush1.bf16.msra.mxu0 %v5156
    %5601 = vmatprep.subr.bf16.mxu0 %v5161
    %5602 = vmatpush1.bf16.msra.mxu0 %v5160
    %5603 = vmatprep.subr.bf16.mxu0 %v5165
    %5604 = vmatpush1.bf16.msra.mxu0 %v5164
    %5605 = vmatprep.subr.bf16.mxu0 %v5169
    %5606 = vmatpush1.bf16.msra.mxu0 %v5168
    %5607 = vmatprep.subr.bf16.mxu0 %v5173
    %5608 = vmatpush1.bf16.msra.mxu0 %v5172
    %5609 = vmatprep.subr.bf16.mxu0 %v5177
    %5610 = vmatpush1.bf16.msra.mxu0 %v5176
    %5611 = vmatprep.subr.bf16.mxu0 %v5181
    %5612 = vmatpush1.bf16.msra.mxu0 %v5180
    %5613 = vmatprep.subr.bf16.mxu0 %v5185
    %5614 = vmatpush1.bf16.msra.mxu0 %v5184
    %5615 = vmatprep.subr.bf16.mxu0 %v5189
    %5616 = vmatpush1.bf16.msra.mxu0 %v5188
    %5617 = vmatprep.subr.bf16.mxu0 %v5193
    %5618 = vmatpush1.bf16.msra.mxu0 %v5192
    %5619 = vmatprep.subr.bf16.mxu0 %v5197
    %5620 = vmatpush1.bf16.msra.mxu0 %v5196
    %5621 = vmatprep.subr.bf16.mxu0 %v5201
    %5622 = vmatpush1.bf16.msra.mxu0 %v5200
    %5623 = vmatprep.subr.bf16.mxu0 %v5205
    %5624 = vmatpush1.bf16.msra.mxu0 %v5204
    %5625 = vmatprep.subr.bf16.mxu0 %v5209
    %5626 = vmatpush1.bf16.msra.mxu0 %v5208
    %5627 = vmatprep.subr.bf16.mxu0 %v5213
    %5628 = vmatpush1.bf16.msra.mxu0 %v5212
    %5629 = vmatprep.subr.bf16.mxu0 %v5217
    %5630 = vmatpush1.bf16.msra.mxu0 %v5216
    %5631 = vmatprep.mubr.bf16.mxu0 %v3939
    %5632 = vmatmul.mubr.bf16.gmra.mrb[0].mxu0 %v3938
    %v5633 = vpop.f32.mrb[0].mxu0
    %v5634 = vadd.f32 %v5593, %v5633
    %v5635 = vpop.f32.mrb[0].mxu0
    %v5636 = vadd.f32 %v5595, %v5635
    %v5637 = vpop.f32.mrb[0].mxu0
    %v5638 = vpop.f32.mrb[0].mxu0
    %5639 = vdwg.mxu0
    %5640 = vmatprep.subr.bf16.mxu0 %v4967
    %5641 = vmatpush1.bf16.msra.mxu0 %v4966
    %5642 = vmatprep.subr.bf16.mxu0 %v4971
    %5643 = vmatpush1.bf16.msra.mxu0 %v4970
    %5644 = vmatprep.subr.bf16.mxu0 %v4975
    %5645 = vmatpush1.bf16.msra.mxu0 %v4974
    %5646 = vmatprep.subr.bf16.mxu0 %v4979
    %5647 = vmatpush1.bf16.msra.mxu0 %v4978
    %5648 = vmatprep.subr.bf16.mxu0 %v4983
    %5649 = vmatpush1.bf16.msra.mxu0 %v4982
    %5650 = vmatprep.subr.bf16.mxu0 %v4987
    %5651 = vmatpush1.bf16.msra.mxu0 %v4986
    %5652 = vmatprep.subr.bf16.mxu0 %v4991
    %5653 = vmatpush1.bf16.msra.mxu0 %v4990
    %5654 = vmatprep.subr.bf16.mxu0 %v4995
    %5655 = vmatpush1.bf16.msra.mxu0 %v4994
    %5656 = vmatprep.subr.bf16.mxu0 %v4999
    %5657 = vmatpush1.bf16.msra.mxu0 %v4998
    %5658 = vmatprep.subr.bf16.mxu0 %v5003
    %5659 = vmatpush1.bf16.msra.mxu0 %v5002
    %5660 = vmatprep.subr.bf16.mxu0 %v5007
    %5661 = vmatpush1.bf16.msra.mxu0 %v5006
    %5662 = vmatprep.subr.bf16.mxu0 %v5011
    %5663 = vmatpush1.bf16.msra.mxu0 %v5010
    %5664 = vmatprep.subr.bf16.mxu0 %v5015
    %5665 = vmatpush1.bf16.msra.mxu0 %v5014
    %5666 = vmatprep.subr.bf16.mxu0 %v5019
    %5667 = vmatpush1.bf16.msra.mxu0 %v5018
    %5668 = vmatprep.subr.bf16.mxu0 %v5023
    %5669 = vmatpush1.bf16.msra.mxu0 %v5022
    %5670 = vmatprep.subr.bf16.mxu0 %v5027
    %5671 = vmatpush1.bf16.msra.mxu0 %v5026
    %5672 = vmatprep.mubr.bf16.mxu0 %v3933
    %5673 = vmatmul.mubr.bf16.gmra.mrb[0].mxu0 %v3932
    %v5674 = vpop.f32.mrb[0].mxu0
    %v5675 = vadd.f32 0.0, %v5674
    %v5676 = vpop.f32.mrb[0].mxu0
    %v5677 = vadd.f32 0.0, %v5676
    %v5678 = vpop.f32.mrb[0].mxu0
    %v5679 = vpop.f32.mrb[0].mxu0
    %5680 = vdwg.mxu0
    %5681 = vmatprep.subr.bf16.mxu0 %v5031
    %5682 = vmatpush1.bf16.msra.mxu0 %v5030
    %5683 = vmatprep.subr.bf16.mxu0 %v5035
    %5684 = vmatpush1.bf16.msra.mxu0 %v5034
    %5685 = vmatprep.subr.bf16.mxu0 %v5039
    %5686 = vmatpush1.bf16.msra.mxu0 %v5038
    %5687 = vmatprep.subr.bf16.mxu0 %v5043
    %5688 = vmatpush1.bf16.msra.mxu0 %v5042
    %5689 = vmatprep.subr.bf16.mxu0 %v5047
    %5690 = vmatpush1.bf16.msra.mxu0 %v5046
    %5691 = vmatprep.subr.bf16.mxu0 %v5051
    %5692 = vmatpush1.bf16.msra.mxu0 %v5050
    %5693 = vmatprep.subr.bf16.mxu0 %v5055
    %5694 = vmatpush1.bf16.msra.mxu0 %v5054
    %5695 = vmatprep.subr.bf16.mxu0 %v5059
    %5696 = vmatpush1.bf16.msra.mxu0 %v5058
    %5697 = vmatprep.subr.bf16.mxu0 %v5063
    %5698 = vmatpush1.bf16.msra.mxu0 %v5062
    %5699 = vmatprep.subr.bf16.mxu0 %v5067
    %5700 = vmatpush1.bf16.msra.mxu0 %v5066
    %5701 = vmatprep.subr.bf16.mxu0 %v5071
    %5702 = vmatpush1.bf16.msra.mxu0 %v5070
    %5703 = vmatprep.subr.bf16.mxu0 %v5075
    %5704 = vmatpush1.bf16.msra.mxu0 %v5074
    %5705 = vmatprep.subr.bf16.mxu0 %v5079
    %5706 = vmatpush1.bf16.msra.mxu0 %v5078
    %5707 = vmatprep.subr.bf16.mxu0 %v5083
    %5708 = vmatpush1.bf16.msra.mxu0 %v5082
    %5709 = vmatprep.subr.bf16.mxu0 %v5087
    %5710 = vmatpush1.bf16.msra.mxu0 %v5086
    %5711 = vmatprep.subr.bf16.mxu0 %v5091
    %5712 = vmatpush1.bf16.msra.mxu0 %v5090
    %5713 = vmatprep.mubr.bf16.mxu0 %v3935
    %5714 = vmatmul.mubr.bf16.gmra.mrb[0].mxu0 %v3934
    %v5715 = vpop.f32.mrb[0].mxu0
    %v5716 = vadd.f32 %v5675, %v5715
    %v5717 = vpop.f32.mrb[0].mxu0
    %v5718 = vadd.f32 %v5677, %v5717
    %v5719 = vpop.f32.mrb[0].mxu0
    %v5720 = vpop.f32.mrb[0].mxu0
    %5721 = vdwg.mxu0
    %5722 = vmatprep.subr.bf16.mxu0 %v5095
    %5723 = vmatpush1.bf16.msra.mxu0 %v5094
    %5724 = vmatprep.subr.bf16.mxu0 %v5099
    %5725 = vmatpush1.bf16.msra.mxu0 %v5098
    %5726 = vmatprep.subr.bf16.mxu0 %v5103
    %5727 = vmatpush1.bf16.msra.mxu0 %v5102
    %5728 = vmatprep.subr.bf16.mxu0 %v5107
    %5729 = vmatpush1.bf16.msra.mxu0 %v5106
    %5730 = vmatprep.subr.bf16.mxu0 %v5111
    %5731 = vmatpush1.bf16.msra.mxu0 %v5110
    %5732 = vmatprep.subr.bf16.mxu0 %v5115
    %5733 = vmatpush1.bf16.msra.mxu0 %v5114
    %5734 = vmatprep.subr.bf16.mxu0 %v5119
    %5735 = vmatpush1.bf16.msra.mxu0 %v5118
    %5736 = vmatprep.subr.bf16.mxu0 %v5123
    %5737 = vmatpush1.bf16.msra.mxu0 %v5122
    %5738 = vmatprep.subr.bf16.mxu0 %v5127
    %5739 = vmatpush1.bf16.msra.mxu0 %v5126
    %5740 = vmatprep.subr.bf16.mxu0 %v5131
    %5741 = vmatpush1.bf16.msra.mxu0 %v5130
    %5742 = vmatprep.subr.bf16.mxu0 %v5135
    %5743 = vmatpush1.bf16.msra.mxu0 %v5134
    %5744 = vmatprep.subr.bf16.mxu0 %v5139
    %5745 = vmatpush1.bf16.msra.mxu0 %v5138
    %5746 = vmatprep.subr.bf16.mxu0 %v5143
    %5747 = vmatpush1.bf16.msra.mxu0 %v5142
    %5748 = vmatprep.subr.bf16.mxu0 %v5147
    %5749 = vmatpush1.bf16.msra.mxu0 %v5146
    %5750 = vmatprep.subr.bf16.mxu0 %v5151
    %5751 = vmatpush1.bf16.msra.mxu0 %v5150
    %5752 = vmatprep.subr.bf16.mxu0 %v5155
    %5753 = vmatpush1.bf16.msra.mxu0 %v5154
    %5754 = vmatprep.mubr.bf16.mxu0 %v3937
    %5755 = vmatmul.mubr.bf16.gmra.mrb[0].mxu0 %v3936
    %v5756 = vpop.f32.mrb[0].mxu0
    %v5757 = vadd.f32 %v5716, %v5756
    %v5758 = vpop.f32.mrb[0].mxu0
    %v5759 = vadd.f32 %v5718, %v5758
    %v5760 = vpop.f32.mrb[0].mxu0
    %v5761 = vpop.f32.mrb[0].mxu0
    %5762 = vdwg.mxu0
    %5763 = vmatprep.subr.bf16.mxu0 %v5159
    %5764 = vmatpush1.bf16.msra.mxu0 %v5158
    %5765 = vmatprep.subr.bf16.mxu0 %v5163
    %5766 = vmatpush1.bf16.msra.mxu0 %v5162
    %5767 = vmatprep.subr.bf16.mxu0 %v5167
    %5768 = vmatpush1.bf16.msra.mxu0 %v5166
    %5769 = vmatprep.subr.bf16.mxu0 %v5171
    %5770 = vmatpush1.bf16.msra.mxu0 %v5170
    %5771 = vmatprep.subr.bf16.mxu0 %v5175
    %5772 = vmatpush1.bf16.msra.mxu0 %v5174
    %5773 = vmatprep.subr.bf16.mxu0 %v5179
    %5774 = vmatpush1.bf16.msra.mxu0 %v5178
    %5775 = vmatprep.subr.bf16.mxu0 %v5183
    %5776 = vmatpush1.bf16.msra.mxu0 %v5182
    %5777 = vmatprep.subr.bf16.mxu0 %v5187
    %5778 = vmatpush1.bf16.msra.mxu0 %v5186
    %5779 = vmatprep.subr.bf16.mxu0 %v5191
    %5780 = vmatpush1.bf16.msra.mxu0 %v5190
    %5781 = vmatprep.subr.bf16.mxu0 %v5195
    %5782 = vmatpush1.bf16.msra.mxu0 %v5194
    %5783 = vmatprep.subr.bf16.mxu0 %v5199
    %5784 = vmatpush1.bf16.msra.mxu0 %v5198
    %5785 = vmatprep.subr.bf16.mxu0 %v5203
    %5786 = vmatpush1.bf16.msra.mxu0 %v5202
    %5787 = vmatprep.subr.bf16.mxu0 %v5207
    %5788 = vmatpush1.bf16.msra.mxu0 %v5206
    %5789 = vmatprep.subr.bf16.mxu0 %v5211
    %5790 = vmatpush1.bf16.msra.mxu0 %v5210
    %5791 = vmatprep.subr.bf16.mxu0 %v5215
    %5792 = vmatpush1.bf16.msra.mxu0 %v5214
    %5793 = vmatprep.subr.bf16.mxu0 %v5219
    %5794 = vmatpush1.bf16.msra.mxu0 %v5218
    %5795 = vmatprep.mubr.bf16.mxu0 %v3939
    %5796 = vmatmul.mubr.bf16.gmra.mrb[0].mxu0 %v3938
    %v5797 = vpop.f32.mrb[0].mxu0
    %v5798 = vadd.f32 %v5757, %v5797
    %v5799 = vpop.f32.mrb[0].mxu0
    %v5800 = vadd.f32 %v5759, %v5799
    %v5801 = vpop.f32.mrb[0].mxu0
    %v5802 = vpop.f32.mrb[0].mxu0
    %5803 = vdwg.mxu0
    %v6060 = vunpack.c.l.b16 %v3676
    %v6061 = vunpack.c.h.b16 %v3676
    %v6062 = vunpack.c.l.b16 %v3677
    %v6063 = vunpack.c.h.b16 %v3677
    %v6064 = vunpack.c.l.b16 %v3678
    %v6065 = vunpack.c.h.b16 %v3678
    %v6066 = vunpack.c.l.b16 %v3679
    %v6067 = vunpack.c.h.b16 %v3679
    %v6068 = vunpack.c.l.b16 %v3680
    %v6069 = vunpack.c.h.b16 %v3680
    %v6070 = vunpack.c.l.b16 %v3681
    %v6071 = vunpack.c.h.b16 %v3681
    %v6072 = vunpack.c.l.b16 %v3682
    %v6073 = vunpack.c.h.b16 %v3682
    %v6074 = vunpack.c.l.b16 %v3683
    %v6075 = vunpack.c.h.b16 %v3683
    %v6076 = vunpack.c.l.b16 %v3684
    %v6077 = vunpack.c.h.b16 %v3684
    %v6078 = vunpack.c.l.b16 %v3685
    %v6079 = vunpack.c.h.b16 %v3685
    %v6080 = vunpack.c.l.b16 %v3686
    %v6081 = vunpack.c.h.b16 %v3686
    %v6082 = vunpack.c.l.b16 %v3687
    %v6083 = vunpack.c.h.b16 %v3687
    %v6084 = vunpack.c.l.b16 %v3688
    %v6085 = vunpack.c.h.b16 %v3688
    %v6086 = vunpack.c.l.b16 %v3689
    %v6087 = vunpack.c.h.b16 %v3689
    %v6088 = vunpack.c.l.b16 %v3690
    %v6089 = vunpack.c.h.b16 %v3690
    %v6090 = vunpack.c.l.b16 %v3691
    %v6091 = vunpack.c.h.b16 %v3691
    %v6092 = vunpack.c.l.b16 %v3692
    %v6093 = vunpack.c.h.b16 %v3692
    %v6094 = vunpack.c.l.b16 %v3693
    %v6095 = vunpack.c.h.b16 %v3693
    %v6096 = vunpack.c.l.b16 %v3694
    %v6097 = vunpack.c.h.b16 %v3694
    %v6098 = vunpack.c.l.b16 %v3695
    %v6099 = vunpack.c.h.b16 %v3695
    %v6100 = vunpack.c.l.b16 %v3696
    %v6101 = vunpack.c.h.b16 %v3696
    %v6102 = vunpack.c.l.b16 %v3697
    %v6103 = vunpack.c.h.b16 %v3697
    %v6104 = vunpack.c.l.b16 %v3698
    %v6105 = vunpack.c.h.b16 %v3698
    %v6106 = vunpack.c.l.b16 %v3699
    %v6107 = vunpack.c.h.b16 %v3699
    %v6108 = vunpack.c.l.b16 %v3700
    %v6109 = vunpack.c.h.b16 %v3700
    %v6110 = vunpack.c.l.b16 %v3701
    %v6111 = vunpack.c.h.b16 %v3701
    %v6112 = vunpack.c.l.b16 %v3702
    %v6113 = vunpack.c.h.b16 %v3702
    %v6114 = vunpack.c.l.b16 %v3703
    %v6115 = vunpack.c.h.b16 %v3703
    %v6116 = vunpack.c.l.b16 %v3704
    %v6117 = vunpack.c.h.b16 %v3704
    %v6118 = vunpack.c.l.b16 %v3705
    %v6119 = vunpack.c.h.b16 %v3705
    %v6120 = vunpack.c.l.b16 %v3706
    %v6121 = vunpack.c.h.b16 %v3706
    %v6122 = vunpack.c.l.b16 %v3707
    %v6123 = vunpack.c.h.b16 %v3707
    %v6124 = vunpack.c.l.b16 %v3708
    %v6125 = vunpack.c.h.b16 %v3708
    %v6126 = vunpack.c.l.b16 %v3709
    %v6127 = vunpack.c.h.b16 %v3709
    %v6128 = vunpack.c.l.b16 %v3710
    %v6129 = vunpack.c.h.b16 %v3710
    %v6130 = vunpack.c.l.b16 %v3711
    %v6131 = vunpack.c.h.b16 %v3711
    %v6132 = vunpack.c.l.b16 %v3712
    %v6133 = vunpack.c.h.b16 %v3712
    %v6134 = vunpack.c.l.b16 %v3713
    %v6135 = vunpack.c.h.b16 %v3713
    %v6136 = vunpack.c.l.b16 %v3714
    %v6137 = vunpack.c.h.b16 %v3714
    %v6138 = vunpack.c.l.b16 %v3715
    %v6139 = vunpack.c.h.b16 %v3715
    %v6140 = vunpack.c.l.b16 %v3716
    %v6141 = vunpack.c.h.b16 %v3716
    %v6142 = vunpack.c.l.b16 %v3717
    %v6143 = vunpack.c.h.b16 %v3717
    %v6144 = vunpack.c.l.b16 %v3718
    %v6145 = vunpack.c.h.b16 %v3718
    %v6146 = vunpack.c.l.b16 %v3719
    %v6147 = vunpack.c.h.b16 %v3719
    %v6148 = vunpack.c.l.b16 %v3720
    %v6149 = vunpack.c.h.b16 %v3720
    %v6150 = vunpack.c.l.b16 %v3721
    %v6151 = vunpack.c.h.b16 %v3721
    %v6152 = vunpack.c.l.b16 %v3722
    %v6153 = vunpack.c.h.b16 %v3722
    %v6154 = vunpack.c.l.b16 %v3723
    %v6155 = vunpack.c.h.b16 %v3723
    %v6156 = vunpack.c.l.b16 %v3724
    %v6157 = vunpack.c.h.b16 %v3724
    %v6158 = vunpack.c.l.b16 %v3725
    %v6159 = vunpack.c.h.b16 %v3725
    %v6160 = vunpack.c.l.b16 %v3726
    %v6161 = vunpack.c.h.b16 %v3726
    %v6162 = vunpack.c.l.b16 %v3727
    %v6163 = vunpack.c.h.b16 %v3727
    %v6164 = vunpack.c.l.b16 %v3728
    %v6165 = vunpack.c.h.b16 %v3728
    %v6166 = vunpack.c.l.b16 %v3729
    %v6167 = vunpack.c.h.b16 %v3729
    %v6168 = vunpack.c.l.b16 %v3730
    %v6169 = vunpack.c.h.b16 %v3730
    %v6170 = vunpack.c.l.b16 %v3731
    %v6171 = vunpack.c.h.b16 %v3731
    %v6172 = vunpack.c.l.b16 %v3732
    %v6173 = vunpack.c.h.b16 %v3732
    %v6174 = vunpack.c.l.b16 %v3733
    %v6175 = vunpack.c.h.b16 %v3733
    %v6176 = vunpack.c.l.b16 %v3734
    %v6177 = vunpack.c.h.b16 %v3734
    %v6178 = vunpack.c.l.b16 %v3735
    %v6179 = vunpack.c.h.b16 %v3735
    %v6180 = vunpack.c.l.b16 %v3736
    %v6181 = vunpack.c.h.b16 %v3736
    %v6182 = vunpack.c.l.b16 %v3737
    %v6183 = vunpack.c.h.b16 %v3737
    %v6184 = vunpack.c.l.b16 %v3738
    %v6185 = vunpack.c.h.b16 %v3738
    %v6186 = vunpack.c.l.b16 %v3739
    %v6187 = vunpack.c.h.b16 %v3739
    %v6188 = vunpack.c.l.b16 %v3740
    %v6189 = vunpack.c.h.b16 %v3740
    %v6190 = vunpack.c.l.b16 %v3741
    %v6191 = vunpack.c.h.b16 %v3741
    %v6192 = vunpack.c.l.b16 %v3742
    %v6193 = vunpack.c.h.b16 %v3742
    %v6194 = vunpack.c.l.b16 %v3743
    %v6195 = vunpack.c.h.b16 %v3743
    %v6196 = vunpack.c.l.b16 %v3744
    %v6197 = vunpack.c.h.b16 %v3744
    %v6198 = vunpack.c.l.b16 %v3745
    %v6199 = vunpack.c.h.b16 %v3745
    %v6200 = vunpack.c.l.b16 %v3746
    %v6201 = vunpack.c.h.b16 %v3746
    %v6202 = vunpack.c.l.b16 %v3747
    %v6203 = vunpack.c.h.b16 %v3747
    %v6204 = vunpack.c.l.b16 %v3748
    %v6205 = vunpack.c.h.b16 %v3748
    %v6206 = vunpack.c.l.b16 %v3749
    %v6207 = vunpack.c.h.b16 %v3749
    %v6208 = vunpack.c.l.b16 %v3750
    %v6209 = vunpack.c.h.b16 %v3750
    %v6210 = vunpack.c.l.b16 %v3751
    %v6211 = vunpack.c.h.b16 %v3751
    %v6212 = vunpack.c.l.b16 %v3752
    %v6213 = vunpack.c.h.b16 %v3752
    %v6214 = vunpack.c.l.b16 %v3753
    %v6215 = vunpack.c.h.b16 %v3753
    %v6216 = vunpack.c.l.b16 %v3754
    %v6217 = vunpack.c.h.b16 %v3754
    %v6218 = vunpack.c.l.b16 %v3755
    %v6219 = vunpack.c.h.b16 %v3755
    %v6220 = vunpack.c.l.b16 %v3756
    %v6221 = vunpack.c.h.b16 %v3756
    %v6222 = vunpack.c.l.b16 %v3757
    %v6223 = vunpack.c.h.b16 %v3757
    %v6224 = vunpack.c.l.b16 %v3758
    %v6225 = vunpack.c.h.b16 %v3758
    %v6226 = vunpack.c.l.b16 %v3759
    %v6227 = vunpack.c.h.b16 %v3759
    %v6228 = vunpack.c.l.b16 %v3760
    %v6229 = vunpack.c.h.b16 %v3760
    %v6230 = vunpack.c.l.b16 %v3761
    %v6231 = vunpack.c.h.b16 %v3761
    %v6232 = vunpack.c.l.b16 %v3762
    %v6233 = vunpack.c.h.b16 %v3762
    %v6234 = vunpack.c.l.b16 %v3763
    %v6235 = vunpack.c.h.b16 %v3763
    %v6236 = vunpack.c.l.b16 %v3764
    %v6237 = vunpack.c.h.b16 %v3764
    %v6238 = vunpack.c.l.b16 %v3765
    %v6239 = vunpack.c.h.b16 %v3765
    %v6240 = vunpack.c.l.b16 %v3766
    %v6241 = vunpack.c.h.b16 %v3766
    %v6242 = vunpack.c.l.b16 %v3767
    %v6243 = vunpack.c.h.b16 %v3767
    %v6244 = vunpack.c.l.b16 %v3768
    %v6245 = vunpack.c.h.b16 %v3768
    %v6246 = vunpack.c.l.b16 %v3769
    %v6247 = vunpack.c.h.b16 %v3769
    %v6248 = vunpack.c.l.b16 %v3770
    %v6249 = vunpack.c.h.b16 %v3770
    %v6250 = vunpack.c.l.b16 %v3771
    %v6251 = vunpack.c.h.b16 %v3771
    %v6252 = vunpack.c.l.b16 %v3772
    %v6253 = vunpack.c.h.b16 %v3772
    %v6254 = vunpack.c.l.b16 %v3773
    %v6255 = vunpack.c.h.b16 %v3773
    %v6256 = vunpack.c.l.b16 %v3774
    %v6257 = vunpack.c.h.b16 %v3774
    %v6258 = vunpack.c.l.b16 %v3775
    %v6259 = vunpack.c.h.b16 %v3775
    %v6260 = vunpack.c.l.b16 %v3776
    %v6261 = vunpack.c.h.b16 %v3776
    %v6262 = vunpack.c.l.b16 %v3777
    %v6263 = vunpack.c.h.b16 %v3777
    %v6264 = vunpack.c.l.b16 %v3778
    %v6265 = vunpack.c.h.b16 %v3778
    %v6266 = vunpack.c.l.b16 %v3779
    %v6267 = vunpack.c.h.b16 %v3779
    %v6268 = vunpack.c.l.b16 %v3780
    %v6269 = vunpack.c.h.b16 %v3780
    %v6270 = vunpack.c.l.b16 %v3781
    %v6271 = vunpack.c.h.b16 %v3781
    %v6272 = vunpack.c.l.b16 %v3782
    %v6273 = vunpack.c.h.b16 %v3782
    %v6274 = vunpack.c.l.b16 %v3783
    %v6275 = vunpack.c.h.b16 %v3783
    %v6276 = vunpack.c.l.b16 %v3784
    %v6277 = vunpack.c.h.b16 %v3784
    %v6278 = vunpack.c.l.b16 %v3785
    %v6279 = vunpack.c.h.b16 %v3785
    %v6280 = vunpack.c.l.b16 %v3786
    %v6281 = vunpack.c.h.b16 %v3786
    %v6282 = vunpack.c.l.b16 %v3787
    %v6283 = vunpack.c.h.b16 %v3787
    %v6284 = vunpack.c.l.b16 %v3788
    %v6285 = vunpack.c.h.b16 %v3788
    %v6286 = vunpack.c.l.b16 %v3789
    %v6287 = vunpack.c.h.b16 %v3789
    %v6288 = vunpack.c.l.b16 %v3790
    %v6289 = vunpack.c.h.b16 %v3790
    %v6290 = vunpack.c.l.b16 %v3791
    %v6291 = vunpack.c.h.b16 %v3791
    %v6292 = vunpack.c.l.b16 %v3792
    %v6293 = vunpack.c.h.b16 %v3792
    %v6294 = vunpack.c.l.b16 %v3793
    %v6295 = vunpack.c.h.b16 %v3793
    %v6296 = vunpack.c.l.b16 %v3794
    %v6297 = vunpack.c.h.b16 %v3794
    %v6298 = vunpack.c.l.b16 %v3795
    %v6299 = vunpack.c.h.b16 %v3795
    %v6300 = vunpack.c.l.b16 %v3796
    %v6301 = vunpack.c.h.b16 %v3796
    %v6302 = vunpack.c.l.b16 %v3797
    %v6303 = vunpack.c.h.b16 %v3797
    %v6304 = vunpack.c.l.b16 %v3798
    %v6305 = vunpack.c.h.b16 %v3798
    %v6306 = vunpack.c.l.b16 %v3799
    %v6307 = vunpack.c.h.b16 %v3799
    %v6308 = vunpack.c.l.b16 %v3800
    %v6309 = vunpack.c.h.b16 %v3800
    %v6310 = vunpack.c.l.b16 %v3801
    %v6311 = vunpack.c.h.b16 %v3801
    %v6312 = vunpack.c.l.b16 %v3802
    %v6313 = vunpack.c.h.b16 %v3802
    %v6314 = vunpack.c.l.b16 %v3803
    %v6315 = vunpack.c.h.b16 %v3803
    %v6316 = vunpack.c.l.b16 %v3804
    %v6317 = vunpack.c.h.b16 %v3804
    %v6318 = vunpack.c.l.b16 %v3805
    %v6319 = vunpack.c.h.b16 %v3805
    %v6320 = vunpack.c.l.b16 %v3806
    %v6321 = vunpack.c.h.b16 %v3806
    %v6322 = vunpack.c.l.b16 %v3807
    %v6323 = vunpack.c.h.b16 %v3807
    %v6324 = vunpack.c.l.b16 %v3808
    %v6325 = vunpack.c.h.b16 %v3808
    %v6326 = vunpack.c.l.b16 %v3809
    %v6327 = vunpack.c.h.b16 %v3809
    %v6328 = vunpack.c.l.b16 %v3810
    %v6329 = vunpack.c.h.b16 %v3810
    %v6330 = vunpack.c.l.b16 %v3811
    %v6331 = vunpack.c.h.b16 %v3811
    %v6332 = vunpack.c.l.b16 %v3812
    %v6333 = vunpack.c.h.b16 %v3812
    %v6334 = vunpack.c.l.b16 %v3813
    %v6335 = vunpack.c.h.b16 %v3813
    %v6336 = vunpack.c.l.b16 %v3814
    %v6337 = vunpack.c.h.b16 %v3814
    %v6338 = vunpack.c.l.b16 %v3815
    %v6339 = vunpack.c.h.b16 %v3815
    %v6340 = vunpack.c.l.b16 %v3816
    %v6341 = vunpack.c.h.b16 %v3816
    %v6342 = vunpack.c.l.b16 %v3817
    %v6343 = vunpack.c.h.b16 %v3817
    %v6344 = vunpack.c.l.b16 %v3818
    %v6345 = vunpack.c.h.b16 %v3818
    %v6346 = vunpack.c.l.b16 %v3819
    %v6347 = vunpack.c.h.b16 %v3819
    %v6348 = vunpack.c.l.b16 %v3820
    %v6349 = vunpack.c.h.b16 %v3820
    %v6350 = vunpack.c.l.b16 %v3821
    %v6351 = vunpack.c.h.b16 %v3821
    %v6352 = vunpack.c.l.b16 %v3822
    %v6353 = vunpack.c.h.b16 %v3822
    %v6354 = vunpack.c.l.b16 %v3823
    %v6355 = vunpack.c.h.b16 %v3823
    %v6356 = vunpack.c.l.b16 %v3824
    %v6357 = vunpack.c.h.b16 %v3824
    %v6358 = vunpack.c.l.b16 %v3825
    %v6359 = vunpack.c.h.b16 %v3825
    %v6360 = vunpack.c.l.b16 %v3826
    %v6361 = vunpack.c.h.b16 %v3826
    %v6362 = vunpack.c.l.b16 %v3827
    %v6363 = vunpack.c.h.b16 %v3827
    %v6364 = vunpack.c.l.b16 %v3828
    %v6365 = vunpack.c.h.b16 %v3828
    %v6366 = vunpack.c.l.b16 %v3829
    %v6367 = vunpack.c.h.b16 %v3829
    %v6368 = vunpack.c.l.b16 %v3830
    %v6369 = vunpack.c.h.b16 %v3830
    %v6370 = vunpack.c.l.b16 %v3831
    %v6371 = vunpack.c.h.b16 %v3831
    %v6372 = vunpack.c.l.b16 %v3832
    %v6373 = vunpack.c.h.b16 %v3832
    %v6374 = vunpack.c.l.b16 %v3833
    %v6375 = vunpack.c.h.b16 %v3833
    %v6376 = vunpack.c.l.b16 %v3834
    %v6377 = vunpack.c.h.b16 %v3834
    %v6378 = vunpack.c.l.b16 %v3835
    %v6379 = vunpack.c.h.b16 %v3835
    %v6380 = vunpack.c.l.b16 %v3836
    %v6381 = vunpack.c.h.b16 %v3836
    %v6382 = vunpack.c.l.b16 %v3837
    %v6383 = vunpack.c.h.b16 %v3837
    %v6384 = vunpack.c.l.b16 %v3838
    %v6385 = vunpack.c.h.b16 %v3838
    %v6386 = vunpack.c.l.b16 %v3839
    %v6387 = vunpack.c.h.b16 %v3839
    %v6388 = vunpack.c.l.b16 %v3840
    %v6389 = vunpack.c.h.b16 %v3840
    %v6390 = vunpack.c.l.b16 %v3841
    %v6391 = vunpack.c.h.b16 %v3841
    %v6392 = vunpack.c.l.b16 %v3842
    %v6393 = vunpack.c.h.b16 %v3842
    %v6394 = vunpack.c.l.b16 %v3843
    %v6395 = vunpack.c.h.b16 %v3843
    %v6396 = vunpack.c.l.b16 %v3844
    %v6397 = vunpack.c.h.b16 %v3844
    %v6398 = vunpack.c.l.b16 %v3845
    %v6399 = vunpack.c.h.b16 %v3845
    %v6400 = vunpack.c.l.b16 %v3846
    %v6401 = vunpack.c.h.b16 %v3846
    %v6402 = vunpack.c.l.b16 %v3847
    %v6403 = vunpack.c.h.b16 %v3847
    %v6404 = vunpack.c.l.b16 %v3848
    %v6405 = vunpack.c.h.b16 %v3848
    %v6406 = vunpack.c.l.b16 %v3849
    %v6407 = vunpack.c.h.b16 %v3849
    %v6408 = vunpack.c.l.b16 %v3850
    %v6409 = vunpack.c.h.b16 %v3850
    %v6410 = vunpack.c.l.b16 %v3851
    %v6411 = vunpack.c.h.b16 %v3851
    %v6412 = vunpack.c.l.b16 %v3852
    %v6413 = vunpack.c.h.b16 %v3852
    %v6414 = vunpack.c.l.b16 %v3853
    %v6415 = vunpack.c.h.b16 %v3853
    %v6416 = vunpack.c.l.b16 %v3854
    %v6417 = vunpack.c.h.b16 %v3854
    %v6418 = vunpack.c.l.b16 %v3855
    %v6419 = vunpack.c.h.b16 %v3855
    %v6420 = vunpack.c.l.b16 %v3856
    %v6421 = vunpack.c.h.b16 %v3856
    %v6422 = vunpack.c.l.b16 %v3857
    %v6423 = vunpack.c.h.b16 %v3857
    %v6424 = vunpack.c.l.b16 %v3858
    %v6425 = vunpack.c.h.b16 %v3858
    %v6426 = vunpack.c.l.b16 %v3859
    %v6427 = vunpack.c.h.b16 %v3859
    %v6428 = vunpack.c.l.b16 %v3860
    %v6429 = vunpack.c.h.b16 %v3860
    %v6430 = vunpack.c.l.b16 %v3861
    %v6431 = vunpack.c.h.b16 %v3861
    %v6432 = vunpack.c.l.b16 %v3862
    %v6433 = vunpack.c.h.b16 %v3862
    %v6434 = vunpack.c.l.b16 %v3863
    %v6435 = vunpack.c.h.b16 %v3863
    %v6436 = vunpack.c.l.b16 %v3864
    %v6437 = vunpack.c.h.b16 %v3864
    %v6438 = vunpack.c.l.b16 %v3865
    %v6439 = vunpack.c.h.b16 %v3865
    %v6440 = vunpack.c.l.b16 %v3866
    %v6441 = vunpack.c.h.b16 %v3866
    %v6442 = vunpack.c.l.b16 %v3867
    %v6443 = vunpack.c.h.b16 %v3867
    %v6444 = vunpack.c.l.b16 %v3868
    %v6445 = vunpack.c.h.b16 %v3868
    %v6446 = vunpack.c.l.b16 %v3869
    %v6447 = vunpack.c.h.b16 %v3869
    %v6448 = vunpack.c.l.b16 %v3870
    %v6449 = vunpack.c.h.b16 %v3870
    %v6450 = vunpack.c.l.b16 %v3871
    %v6451 = vunpack.c.h.b16 %v3871
    %v6452 = vunpack.c.l.b16 %v3872
    %v6453 = vunpack.c.h.b16 %v3872
    %v6454 = vunpack.c.l.b16 %v3873
    %v6455 = vunpack.c.h.b16 %v3873
    %v6456 = vunpack.c.l.b16 %v3874
    %v6457 = vunpack.c.h.b16 %v3874
    %v6458 = vunpack.c.l.b16 %v3875
    %v6459 = vunpack.c.h.b16 %v3875
    %v6460 = vunpack.c.l.b16 %v3876
    %v6461 = vunpack.c.h.b16 %v3876
    %v6462 = vunpack.c.l.b16 %v3877
    %v6463 = vunpack.c.h.b16 %v3877
    %v6464 = vunpack.c.l.b16 %v3878
    %v6465 = vunpack.c.h.b16 %v3878
    %v6466 = vunpack.c.l.b16 %v3879
    %v6467 = vunpack.c.h.b16 %v3879
    %v6468 = vunpack.c.l.b16 %v3880
    %v6469 = vunpack.c.h.b16 %v3880
    %v6470 = vunpack.c.l.b16 %v3881
    %v6471 = vunpack.c.h.b16 %v3881
    %v6472 = vunpack.c.l.b16 %v3882
    %v6473 = vunpack.c.h.b16 %v3882
    %v6474 = vunpack.c.l.b16 %v3883
    %v6475 = vunpack.c.h.b16 %v3883
    %v6476 = vunpack.c.l.b16 %v3884
    %v6477 = vunpack.c.h.b16 %v3884
    %v6478 = vunpack.c.l.b16 %v3885
    %v6479 = vunpack.c.h.b16 %v3885
    %v6480 = vunpack.c.l.b16 %v3886
    %v6481 = vunpack.c.h.b16 %v3886
    %v6482 = vunpack.c.l.b16 %v3887
    %v6483 = vunpack.c.h.b16 %v3887
    %v6484 = vunpack.c.l.b16 %v3888
    %v6485 = vunpack.c.h.b16 %v3888
    %v6486 = vunpack.c.l.b16 %v3889
    %v6487 = vunpack.c.h.b16 %v3889
    %v6488 = vunpack.c.l.b16 %v3890
    %v6489 = vunpack.c.h.b16 %v3890
    %v6490 = vunpack.c.l.b16 %v3891
    %v6491 = vunpack.c.h.b16 %v3891
    %v6492 = vunpack.c.l.b16 %v3892
    %v6493 = vunpack.c.h.b16 %v3892
    %v6494 = vunpack.c.l.b16 %v3893
    %v6495 = vunpack.c.h.b16 %v3893
    %v6496 = vunpack.c.l.b16 %v3894
    %v6497 = vunpack.c.h.b16 %v3894
    %v6498 = vunpack.c.l.b16 %v3895
    %v6499 = vunpack.c.h.b16 %v3895
    %v6500 = vunpack.c.l.b16 %v3896
    %v6501 = vunpack.c.h.b16 %v3896
    %v6502 = vunpack.c.l.b16 %v3897
    %v6503 = vunpack.c.h.b16 %v3897
    %v6504 = vunpack.c.l.b16 %v3898
    %v6505 = vunpack.c.h.b16 %v3898
    %v6506 = vunpack.c.l.b16 %v3899
    %v6507 = vunpack.c.h.b16 %v3899
    %v6508 = vunpack.c.l.b16 %v3900
    %v6509 = vunpack.c.h.b16 %v3900
    %v6510 = vunpack.c.l.b16 %v3901
    %v6511 = vunpack.c.h.b16 %v3901
    %v6512 = vunpack.c.l.b16 %v3902
    %v6513 = vunpack.c.h.b16 %v3902
    %v6514 = vunpack.c.l.b16 %v3903
    %v6515 = vunpack.c.h.b16 %v3903
    %v6516 = vunpack.c.l.b16 %v3904
    %v6517 = vunpack.c.h.b16 %v3904
    %v6518 = vunpack.c.l.b16 %v3905
    %v6519 = vunpack.c.h.b16 %v3905
    %v6520 = vunpack.c.l.b16 %v3906
    %v6521 = vunpack.c.h.b16 %v3906
    %v6522 = vunpack.c.l.b16 %v3907
    %v6523 = vunpack.c.h.b16 %v3907
    %v6524 = vunpack.c.l.b16 %v3908
    %v6525 = vunpack.c.h.b16 %v3908
    %v6526 = vunpack.c.l.b16 %v3909
    %v6527 = vunpack.c.h.b16 %v3909
    %v6528 = vunpack.c.l.b16 %v3910
    %v6529 = vunpack.c.h.b16 %v3910
    %v6530 = vunpack.c.l.b16 %v3911
    %v6531 = vunpack.c.h.b16 %v3911
    %v6532 = vunpack.c.l.b16 %v3912
    %v6533 = vunpack.c.h.b16 %v3912
    %v6534 = vunpack.c.l.b16 %v3913
    %v6535 = vunpack.c.h.b16 %v3913
    %v6536 = vunpack.c.l.b16 %v3914
    %v6537 = vunpack.c.h.b16 %v3914
    %v6538 = vunpack.c.l.b16 %v3915
    %v6539 = vunpack.c.h.b16 %v3915
    %v6540 = vunpack.c.l.b16 %v3916
    %v6541 = vunpack.c.h.b16 %v3916
    %v6542 = vunpack.c.l.b16 %v3917
    %v6543 = vunpack.c.h.b16 %v3917
    %v6544 = vunpack.c.l.b16 %v3918
    %v6545 = vunpack.c.h.b16 %v3918
    %v6546 = vunpack.c.l.b16 %v3919
    %v6547 = vunpack.c.h.b16 %v3919
    %v6548 = vunpack.c.l.b16 %v3920
    %v6549 = vunpack.c.h.b16 %v3920
    %v6550 = vunpack.c.l.b16 %v3921
    %v6551 = vunpack.c.h.b16 %v3921
    %v6552 = vunpack.c.l.b16 %v3922
    %v6553 = vunpack.c.h.b16 %v3922
    %v6554 = vunpack.c.l.b16 %v3923
    %v6555 = vunpack.c.h.b16 %v3923
    %v6556 = vunpack.c.l.b16 %v3924
    %v6557 = vunpack.c.h.b16 %v3924
    %v6558 = vunpack.c.l.b16 %v3925
    %v6559 = vunpack.c.h.b16 %v3925
    %v6560 = vunpack.c.l.b16 %v3926
    %v6561 = vunpack.c.h.b16 %v3926
    %v6562 = vunpack.c.l.b16 %v3927
    %v6563 = vunpack.c.h.b16 %v3927
    %v6564 = vunpack.c.l.b16 %v3928
    %v6565 = vunpack.c.h.b16 %v3928
    %v6566 = vunpack.c.l.b16 %v3929
    %v6567 = vunpack.c.h.b16 %v3929
    %v6568 = vunpack.c.l.b16 %v3930
    %v6569 = vunpack.c.h.b16 %v3930
    %v6570 = vunpack.c.l.b16 %v3931
    %v6571 = vunpack.c.h.b16 %v3931
    %v6572 = vpack.c.b16 %v6064, %v6060
    %v6573 = vpack.c.b16 %v6065, %v6061
    %v6574 = vpack.c.b16 %v6066, %v6062
    %v6575 = vpack.c.b16 %v6067, %v6063
    %v6576 = vpack.c.b16 %v6072, %v6068
    %v6577 = vpack.c.b16 %v6073, %v6069
    %v6578 = vpack.c.b16 %v6074, %v6070
    %v6579 = vpack.c.b16 %v6075, %v6071
    %v6580 = vpack.c.b16 %v6080, %v6076
    %v6581 = vpack.c.b16 %v6081, %v6077
    %v6582 = vpack.c.b16 %v6082, %v6078
    %v6583 = vpack.c.b16 %v6083, %v6079
    %v6584 = vpack.c.b16 %v6088, %v6084
    %v6585 = vpack.c.b16 %v6089, %v6085
    %v6586 = vpack.c.b16 %v6090, %v6086
    %v6587 = vpack.c.b16 %v6091, %v6087
    %v6588 = vpack.c.b16 %v6096, %v6092
    %v6589 = vpack.c.b16 %v6097, %v6093
    %v6590 = vpack.c.b16 %v6098, %v6094
    %v6591 = vpack.c.b16 %v6099, %v6095
    %v6592 = vpack.c.b16 %v6104, %v6100
    %v6593 = vpack.c.b16 %v6105, %v6101
    %v6594 = vpack.c.b16 %v6106, %v6102
    %v6595 = vpack.c.b16 %v6107, %v6103
    %v6596 = vpack.c.b16 %v6112, %v6108
    %v6597 = vpack.c.b16 %v6113, %v6109
    %v6598 = vpack.c.b16 %v6114, %v6110
    %v6599 = vpack.c.b16 %v6115, %v6111
    %v6600 = vpack.c.b16 %v6120, %v6116
    %v6601 = vpack.c.b16 %v6121, %v6117
    %v6602 = vpack.c.b16 %v6122, %v6118
    %v6603 = vpack.c.b16 %v6123, %v6119
    %v6604 = vpack.c.b16 %v6128, %v6124
    %v6605 = vpack.c.b16 %v6129, %v6125
    %v6606 = vpack.c.b16 %v6130, %v6126
    %v6607 = vpack.c.b16 %v6131, %v6127
    %v6608 = vpack.c.b16 %v6136, %v6132
    %v6609 = vpack.c.b16 %v6137, %v6133
    %v6610 = vpack.c.b16 %v6138, %v6134
    %v6611 = vpack.c.b16 %v6139, %v6135
    %v6612 = vpack.c.b16 %v6144, %v6140
    %v6613 = vpack.c.b16 %v6145, %v6141
    %v6614 = vpack.c.b16 %v6146, %v6142
    %v6615 = vpack.c.b16 %v6147, %v6143
    %v6616 = vpack.c.b16 %v6152, %v6148
    %v6617 = vpack.c.b16 %v6153, %v6149
    %v6618 = vpack.c.b16 %v6154, %v6150
    %v6619 = vpack.c.b16 %v6155, %v6151
    %v6620 = vpack.c.b16 %v6160, %v6156
    %v6621 = vpack.c.b16 %v6161, %v6157
    %v6622 = vpack.c.b16 %v6162, %v6158
    %v6623 = vpack.c.b16 %v6163, %v6159
    %v6624 = vpack.c.b16 %v6168, %v6164
    %v6625 = vpack.c.b16 %v6169, %v6165
    %v6626 = vpack.c.b16 %v6170, %v6166
    %v6627 = vpack.c.b16 %v6171, %v6167
    %v6628 = vpack.c.b16 %v6176, %v6172
    %v6629 = vpack.c.b16 %v6177, %v6173
    %v6630 = vpack.c.b16 %v6178, %v6174
    %v6631 = vpack.c.b16 %v6179, %v6175
    %v6632 = vpack.c.b16 %v6184, %v6180
    %v6633 = vpack.c.b16 %v6185, %v6181
    %v6634 = vpack.c.b16 %v6186, %v6182
    %v6635 = vpack.c.b16 %v6187, %v6183
    %v6636 = vpack.c.b16 %v6192, %v6188
    %v6637 = vpack.c.b16 %v6193, %v6189
    %v6638 = vpack.c.b16 %v6194, %v6190
    %v6639 = vpack.c.b16 %v6195, %v6191
    %v6640 = vpack.c.b16 %v6200, %v6196
    %v6641 = vpack.c.b16 %v6201, %v6197
    %v6642 = vpack.c.b16 %v6202, %v6198
    %v6643 = vpack.c.b16 %v6203, %v6199
    %v6644 = vpack.c.b16 %v6208, %v6204
    %v6645 = vpack.c.b16 %v6209, %v6205
    %v6646 = vpack.c.b16 %v6210, %v6206
    %v6647 = vpack.c.b16 %v6211, %v6207
    %v6648 = vpack.c.b16 %v6216, %v6212
    %v6649 = vpack.c.b16 %v6217, %v6213
    %v6650 = vpack.c.b16 %v6218, %v6214
    %v6651 = vpack.c.b16 %v6219, %v6215
    %v6652 = vpack.c.b16 %v6224, %v6220
    %v6653 = vpack.c.b16 %v6225, %v6221
    %v6654 = vpack.c.b16 %v6226, %v6222
    %v6655 = vpack.c.b16 %v6227, %v6223
    %v6656 = vpack.c.b16 %v6232, %v6228
    %v6657 = vpack.c.b16 %v6233, %v6229
    %v6658 = vpack.c.b16 %v6234, %v6230
    %v6659 = vpack.c.b16 %v6235, %v6231
    %v6660 = vpack.c.b16 %v6240, %v6236
    %v6661 = vpack.c.b16 %v6241, %v6237
    %v6662 = vpack.c.b16 %v6242, %v6238
    %v6663 = vpack.c.b16 %v6243, %v6239
    %v6664 = vpack.c.b16 %v6248, %v6244
    %v6665 = vpack.c.b16 %v6249, %v6245
    %v6666 = vpack.c.b16 %v6250, %v6246
    %v6667 = vpack.c.b16 %v6251, %v6247
    %v6668 = vpack.c.b16 %v6256, %v6252
    %v6669 = vpack.c.b16 %v6257, %v6253
    %v6670 = vpack.c.b16 %v6258, %v6254
    %v6671 = vpack.c.b16 %v6259, %v6255
    %v6672 = vpack.c.b16 %v6264, %v6260
    %v6673 = vpack.c.b16 %v6265, %v6261
    %v6674 = vpack.c.b16 %v6266, %v6262
    %v6675 = vpack.c.b16 %v6267, %v6263
    %v6676 = vpack.c.b16 %v6272, %v6268
    %v6677 = vpack.c.b16 %v6273, %v6269
    %v6678 = vpack.c.b16 %v6274, %v6270
    %v6679 = vpack.c.b16 %v6275, %v6271
    %v6680 = vpack.c.b16 %v6280, %v6276
    %v6681 = vpack.c.b16 %v6281, %v6277
    %v6682 = vpack.c.b16 %v6282, %v6278
    %v6683 = vpack.c.b16 %v6283, %v6279
    %v6684 = vpack.c.b16 %v6288, %v6284
    %v6685 = vpack.c.b16 %v6289, %v6285
    %v6686 = vpack.c.b16 %v6290, %v6286
    %v6687 = vpack.c.b16 %v6291, %v6287
    %v6688 = vpack.c.b16 %v6296, %v6292
    %v6689 = vpack.c.b16 %v6297, %v6293
    %v6690 = vpack.c.b16 %v6298, %v6294
    %v6691 = vpack.c.b16 %v6299, %v6295
    %v6692 = vpack.c.b16 %v6304, %v6300
    %v6693 = vpack.c.b16 %v6305, %v6301
    %v6694 = vpack.c.b16 %v6306, %v6302
    %v6695 = vpack.c.b16 %v6307, %v6303
    %v6696 = vpack.c.b16 %v6312, %v6308
    %v6697 = vpack.c.b16 %v6313, %v6309
    %v6698 = vpack.c.b16 %v6314, %v6310
    %v6699 = vpack.c.b16 %v6315, %v6311
    %v6700 = vpack.c.b16 %v6320, %v6316
    %v6701 = vpack.c.b16 %v6321, %v6317
    %v6702 = vpack.c.b16 %v6322, %v6318
    %v6703 = vpack.c.b16 %v6323, %v6319
    %v6704 = vpack.c.b16 %v6328, %v6324
    %v6705 = vpack.c.b16 %v6329, %v6325
    %v6706 = vpack.c.b16 %v6330, %v6326
    %v6707 = vpack.c.b16 %v6331, %v6327
    %v6708 = vpack.c.b16 %v6336, %v6332
    %v6709 = vpack.c.b16 %v6337, %v6333
    %v6710 = vpack.c.b16 %v6338, %v6334
    %v6711 = vpack.c.b16 %v6339, %v6335
    %v6712 = vpack.c.b16 %v6344, %v6340
    %v6713 = vpack.c.b16 %v6345, %v6341
    %v6714 = vpack.c.b16 %v6346, %v6342
    %v6715 = vpack.c.b16 %v6347, %v6343
    %v6716 = vpack.c.b16 %v6352, %v6348
    %v6717 = vpack.c.b16 %v6353, %v6349
    %v6718 = vpack.c.b16 %v6354, %v6350
    %v6719 = vpack.c.b16 %v6355, %v6351
    %v6720 = vpack.c.b16 %v6360, %v6356
    %v6721 = vpack.c.b16 %v6361, %v6357
    %v6722 = vpack.c.b16 %v6362, %v6358
    %v6723 = vpack.c.b16 %v6363, %v6359
    %v6724 = vpack.c.b16 %v6368, %v6364
    %v6725 = vpack.c.b16 %v6369, %v6365
    %v6726 = vpack.c.b16 %v6370, %v6366
    %v6727 = vpack.c.b16 %v6371, %v6367
    %v6728 = vpack.c.b16 %v6376, %v6372
    %v6729 = vpack.c.b16 %v6377, %v6373
    %v6730 = vpack.c.b16 %v6378, %v6374
    %v6731 = vpack.c.b16 %v6379, %v6375
    %v6732 = vpack.c.b16 %v6384, %v6380
    %v6733 = vpack.c.b16 %v6385, %v6381
    %v6734 = vpack.c.b16 %v6386, %v6382
    %v6735 = vpack.c.b16 %v6387, %v6383
    %v6736 = vpack.c.b16 %v6392, %v6388
    %v6737 = vpack.c.b16 %v6393, %v6389
    %v6738 = vpack.c.b16 %v6394, %v6390
    %v6739 = vpack.c.b16 %v6395, %v6391
    %v6740 = vpack.c.b16 %v6400, %v6396
    %v6741 = vpack.c.b16 %v6401, %v6397
    %v6742 = vpack.c.b16 %v6402, %v6398
    %v6743 = vpack.c.b16 %v6403, %v6399
    %v6744 = vpack.c.b16 %v6408, %v6404
    %v6745 = vpack.c.b16 %v6409, %v6405
    %v6746 = vpack.c.b16 %v6410, %v6406
    %v6747 = vpack.c.b16 %v6411, %v6407
    %v6748 = vpack.c.b16 %v6416, %v6412
    %v6749 = vpack.c.b16 %v6417, %v6413
    %v6750 = vpack.c.b16 %v6418, %v6414
    %v6751 = vpack.c.b16 %v6419, %v6415
    %v6752 = vpack.c.b16 %v6424, %v6420
    %v6753 = vpack.c.b16 %v6425, %v6421
    %v6754 = vpack.c.b16 %v6426, %v6422
    %v6755 = vpack.c.b16 %v6427, %v6423
    %v6756 = vpack.c.b16 %v6432, %v6428
    %v6757 = vpack.c.b16 %v6433, %v6429
    %v6758 = vpack.c.b16 %v6434, %v6430
    %v6759 = vpack.c.b16 %v6435, %v6431
    %v6760 = vpack.c.b16 %v6440, %v6436
    %v6761 = vpack.c.b16 %v6441, %v6437
    %v6762 = vpack.c.b16 %v6442, %v6438
    %v6763 = vpack.c.b16 %v6443, %v6439
    %v6764 = vpack.c.b16 %v6448, %v6444
    %v6765 = vpack.c.b16 %v6449, %v6445
    %v6766 = vpack.c.b16 %v6450, %v6446
    %v6767 = vpack.c.b16 %v6451, %v6447
    %v6768 = vpack.c.b16 %v6456, %v6452
    %v6769 = vpack.c.b16 %v6457, %v6453
    %v6770 = vpack.c.b16 %v6458, %v6454
    %v6771 = vpack.c.b16 %v6459, %v6455
    %v6772 = vpack.c.b16 %v6464, %v6460
    %v6773 = vpack.c.b16 %v6465, %v6461
    %v6774 = vpack.c.b16 %v6466, %v6462
    %v6775 = vpack.c.b16 %v6467, %v6463
    %v6776 = vpack.c.b16 %v6472, %v6468
    %v6777 = vpack.c.b16 %v6473, %v6469
    %v6778 = vpack.c.b16 %v6474, %v6470
    %v6779 = vpack.c.b16 %v6475, %v6471
    %v6780 = vpack.c.b16 %v6480, %v6476
    %v6781 = vpack.c.b16 %v6481, %v6477
    %v6782 = vpack.c.b16 %v6482, %v6478
    %v6783 = vpack.c.b16 %v6483, %v6479
    %v6784 = vpack.c.b16 %v6488, %v6484
    %v6785 = vpack.c.b16 %v6489, %v6485
    %v6786 = vpack.c.b16 %v6490, %v6486
    %v6787 = vpack.c.b16 %v6491, %v6487
    %v6788 = vpack.c.b16 %v6496, %v6492
    %v6789 = vpack.c.b16 %v6497, %v6493
    %v6790 = vpack.c.b16 %v6498, %v6494
    %v6791 = vpack.c.b16 %v6499, %v6495
    %v6792 = vpack.c.b16 %v6504, %v6500
    %v6793 = vpack.c.b16 %v6505, %v6501
    %v6794 = vpack.c.b16 %v6506, %v6502
    %v6795 = vpack.c.b16 %v6507, %v6503
    %v6796 = vpack.c.b16 %v6512, %v6508
    %v6797 = vpack.c.b16 %v6513, %v6509
    %v6798 = vpack.c.b16 %v6514, %v6510
    %v6799 = vpack.c.b16 %v6515, %v6511
    %v6800 = vpack.c.b16 %v6520, %v6516
    %v6801 = vpack.c.b16 %v6521, %v6517
    %v6802 = vpack.c.b16 %v6522, %v6518
    %v6803 = vpack.c.b16 %v6523, %v6519
    %v6804 = vpack.c.b16 %v6528, %v6524
    %v6805 = vpack.c.b16 %v6529, %v6525
    %v6806 = vpack.c.b16 %v6530, %v6526
    %v6807 = vpack.c.b16 %v6531, %v6527
    %v6808 = vpack.c.b16 %v6536, %v6532
    %v6809 = vpack.c.b16 %v6537, %v6533
    %v6810 = vpack.c.b16 %v6538, %v6534
    %v6811 = vpack.c.b16 %v6539, %v6535
    %v6812 = vpack.c.b16 %v6544, %v6540
    %v6813 = vpack.c.b16 %v6545, %v6541
    %v6814 = vpack.c.b16 %v6546, %v6542
    %v6815 = vpack.c.b16 %v6547, %v6543
    %v6816 = vpack.c.b16 %v6552, %v6548
    %v6817 = vpack.c.b16 %v6553, %v6549
    %v6818 = vpack.c.b16 %v6554, %v6550
    %v6819 = vpack.c.b16 %v6555, %v6551
    %v6820 = vpack.c.b16 %v6560, %v6556
    %v6821 = vpack.c.b16 %v6561, %v6557
    %v6822 = vpack.c.b16 %v6562, %v6558
    %v6823 = vpack.c.b16 %v6563, %v6559
    %v6824 = vpack.c.b16 %v6568, %v6564
    %v6825 = vpack.c.b16 %v6569, %v6565
    %v6826 = vpack.c.b16 %v6570, %v6566
    %v6827 = vpack.c.b16 %v6571, %v6567
    %7084 = vmatprep.subr.bf16.mxu0 %v6573
    %7085 = vmatpush1.bf16.msra.mxu0 %v6572
    %7086 = vmatprep.subr.bf16.mxu0 %v6577
    %7087 = vmatpush1.bf16.msra.mxu0 %v6576
    %7088 = vmatprep.subr.bf16.mxu0 %v6581
    %7089 = vmatpush1.bf16.msra.mxu0 %v6580
    %7090 = vmatprep.subr.bf16.mxu0 %v6585
    %7091 = vmatpush1.bf16.msra.mxu0 %v6584
    %7092 = vmatprep.subr.bf16.mxu0 %v6589
    %7093 = vmatpush1.bf16.msra.mxu0 %v6588
    %7094 = vmatprep.subr.bf16.mxu0 %v6593
    %7095 = vmatpush1.bf16.msra.mxu0 %v6592
    %7096 = vmatprep.subr.bf16.mxu0 %v6597
    %7097 = vmatpush1.bf16.msra.mxu0 %v6596
    %7098 = vmatprep.subr.bf16.mxu0 %v6601
    %7099 = vmatpush1.bf16.msra.mxu0 %v6600
    %7100 = vmatprep.subr.bf16.mxu0 %v6605
    %7101 = vmatpush1.bf16.msra.mxu0 %v6604
    %7102 = vmatprep.subr.bf16.mxu0 %v6609
    %7103 = vmatpush1.bf16.msra.mxu0 %v6608
    %7104 = vmatprep.subr.bf16.mxu0 %v6613
    %7105 = vmatpush1.bf16.msra.mxu0 %v6612
    %7106 = vmatprep.subr.bf16.mxu0 %v6617
    %7107 = vmatpush1.bf16.msra.mxu0 %v6616
    %7108 = vmatprep.subr.bf16.mxu0 %v6621
    %7109 = vmatpush1.bf16.msra.mxu0 %v6620
    %7110 = vmatprep.subr.bf16.mxu0 %v6625
    %7111 = vmatpush1.bf16.msra.mxu0 %v6624
    %7112 = vmatprep.subr.bf16.mxu0 %v6629
    %7113 = vmatpush1.bf16.msra.mxu0 %v6628
    %7114 = vmatprep.subr.bf16.mxu0 %v6633
    %7115 = vmatpush1.bf16.msra.mxu0 %v6632
    %7116 = vmatprep.mubr.bf16.mxu0 %v3669
    %7117 = vmatmul.mubr.bf16.gmra.mrb[0].mxu0 %v3668
    %v7118 = vpop.f32.mrb[0].mxu0
    %v7119 = vadd.f32 %v5634, %v7118
    %v7120 = vpop.f32.mrb[0].mxu0
    %v7121 = vadd.f32 %v5636, %v7120
    %v7122 = vpop.f32.mrb[0].mxu0
    %v7123 = vpop.f32.mrb[0].mxu0
    %7124 = vdwg.mxu0
    %7125 = vmatprep.subr.bf16.mxu0 %v6637
    %7126 = vmatpush1.bf16.msra.mxu0 %v6636
    %7127 = vmatprep.subr.bf16.mxu0 %v6641
    %7128 = vmatpush1.bf16.msra.mxu0 %v6640
    %7129 = vmatprep.subr.bf16.mxu0 %v6645
    %7130 = vmatpush1.bf16.msra.mxu0 %v6644
    %7131 = vmatprep.subr.bf16.mxu0 %v6649
    %7132 = vmatpush1.bf16.msra.mxu0 %v6648
    %7133 = vmatprep.subr.bf16.mxu0 %v6653
    %7134 = vmatpush1.bf16.msra.mxu0 %v6652
    %7135 = vmatprep.subr.bf16.mxu0 %v6657
    %7136 = vmatpush1.bf16.msra.mxu0 %v6656
    %7137 = vmatprep.subr.bf16.mxu0 %v6661
    %7138 = vmatpush1.bf16.msra.mxu0 %v6660
    %7139 = vmatprep.subr.bf16.mxu0 %v6665
    %7140 = vmatpush1.bf16.msra.mxu0 %v6664
    %7141 = vmatprep.subr.bf16.mxu0 %v6669
    %7142 = vmatpush1.bf16.msra.mxu0 %v6668
    %7143 = vmatprep.subr.bf16.mxu0 %v6673
    %7144 = vmatpush1.bf16.msra.mxu0 %v6672
    %7145 = vmatprep.subr.bf16.mxu0 %v6677
    %7146 = vmatpush1.bf16.msra.mxu0 %v6676
    %7147 = vmatprep.subr.bf16.mxu0 %v6681
    %7148 = vmatpush1.bf16.msra.mxu0 %v6680
    %7149 = vmatprep.subr.bf16.mxu0 %v6685
    %7150 = vmatpush1.bf16.msra.mxu0 %v6684
    %7151 = vmatprep.subr.bf16.mxu0 %v6689
    %7152 = vmatpush1.bf16.msra.mxu0 %v6688
    %7153 = vmatprep.subr.bf16.mxu0 %v6693
    %7154 = vmatpush1.bf16.msra.mxu0 %v6692
    %7155 = vmatprep.subr.bf16.mxu0 %v6697
    %7156 = vmatpush1.bf16.msra.mxu0 %v6696
    %7157 = vmatprep.mubr.bf16.mxu0 %v3671
    %7158 = vmatmul.mubr.bf16.gmra.mrb[0].mxu0 %v3670
    %v7159 = vpop.f32.mrb[0].mxu0
    %v7160 = vadd.f32 %v7119, %v7159
    %v7161 = vpop.f32.mrb[0].mxu0
    %v7162 = vadd.f32 %v7121, %v7161
    %v7163 = vpop.f32.mrb[0].mxu0
    %v7164 = vpop.f32.mrb[0].mxu0
    %7165 = vdwg.mxu0
    %7166 = vmatprep.subr.bf16.mxu0 %v6701
    %7167 = vmatpush1.bf16.msra.mxu0 %v6700
    %7168 = vmatprep.subr.bf16.mxu0 %v6705
    %7169 = vmatpush1.bf16.msra.mxu0 %v6704
    %7170 = vmatprep.subr.bf16.mxu0 %v6709
    %7171 = vmatpush1.bf16.msra.mxu0 %v6708
    %7172 = vmatprep.subr.bf16.mxu0 %v6713
    %7173 = vmatpush1.bf16.msra.mxu0 %v6712
    %7174 = vmatprep.subr.bf16.mxu0 %v6717
    %7175 = vmatpush1.bf16.msra.mxu0 %v6716
    %7176 = vmatprep.subr.bf16.mxu0 %v6721
    %7177 = vmatpush1.bf16.msra.mxu0 %v6720
    %7178 = vmatprep.subr.bf16.mxu0 %v6725
    %7179 = vmatpush1.bf16.msra.mxu0 %v6724
    %7180 = vmatprep.subr.bf16.mxu0 %v6729
    %7181 = vmatpush1.bf16.msra.mxu0 %v6728
    %7182 = vmatprep.subr.bf16.mxu0 %v6733
    %7183 = vmatpush1.bf16.msra.mxu0 %v6732
    %7184 = vmatprep.subr.bf16.mxu0 %v6737
    %7185 = vmatpush1.bf16.msra.mxu0 %v6736
    %7186 = vmatprep.subr.bf16.mxu0 %v6741
    %7187 = vmatpush1.bf16.msra.mxu0 %v6740
    %7188 = vmatprep.subr.bf16.mxu0 %v6745
    %7189 = vmatpush1.bf16.msra.mxu0 %v6744
    %7190 = vmatprep.subr.bf16.mxu0 %v6749
    %7191 = vmatpush1.bf16.msra.mxu0 %v6748
    %7192 = vmatprep.subr.bf16.mxu0 %v6753
    %7193 = vmatpush1.bf16.msra.mxu0 %v6752
    %7194 = vmatprep.subr.bf16.mxu0 %v6757
    %7195 = vmatpush1.bf16.msra.mxu0 %v6756
    %7196 = vmatprep.subr.bf16.mxu0 %v6761
    %7197 = vmatpush1.bf16.msra.mxu0 %v6760
    %7198 = vmatprep.mubr.bf16.mxu0 %v3673
    %7199 = vmatmul.mubr.bf16.gmra.mrb[0].mxu0 %v3672
    %v7200 = vpop.f32.mrb[0].mxu0
    %v7201 = vadd.f32 %v7160, %v7200
    %v7202 = vpop.f32.mrb[0].mxu0
    %v7203 = vadd.f32 %v7162, %v7202
    %v7204 = vpop.f32.mrb[0].mxu0
    %v7205 = vpop.f32.mrb[0].mxu0
    %7206 = vdwg.mxu0
    %7207 = vmatprep.subr.bf16.mxu0 %v6765
    %7208 = vmatpush1.bf16.msra.mxu0 %v6764
    %7209 = vmatprep.subr.bf16.mxu0 %v6769
    %7210 = vmatpush1.bf16.msra.mxu0 %v6768
    %7211 = vmatprep.subr.bf16.mxu0 %v6773
    %7212 = vmatpush1.bf16.msra.mxu0 %v6772
    %7213 = vmatprep.subr.bf16.mxu0 %v6777
    %7214 = vmatpush1.bf16.msra.mxu0 %v6776
    %7215 = vmatprep.subr.bf16.mxu0 %v6781
    %7216 = vmatpush1.bf16.msra.mxu0 %v6780
    %7217 = vmatprep.subr.bf16.mxu0 %v6785
    %7218 = vmatpush1.bf16.msra.mxu0 %v6784
    %7219 = vmatprep.subr.bf16.mxu0 %v6789
    %7220 = vmatpush1.bf16.msra.mxu0 %v6788
    %7221 = vmatprep.subr.bf16.mxu0 %v6793
    %7222 = vmatpush1.bf16.msra.mxu0 %v6792
    %7223 = vmatprep.subr.bf16.mxu0 %v6797
    %7224 = vmatpush1.bf16.msra.mxu0 %v6796
    %7225 = vmatprep.subr.bf16.mxu0 %v6801
    %7226 = vmatpush1.bf16.msra.mxu0 %v6800
    %7227 = vmatprep.subr.bf16.mxu0 %v6805
    %7228 = vmatpush1.bf16.msra.mxu0 %v6804
    %7229 = vmatprep.subr.bf16.mxu0 %v6809
    %7230 = vmatpush1.bf16.msra.mxu0 %v6808
    %7231 = vmatprep.subr.bf16.mxu0 %v6813
    %7232 = vmatpush1.bf16.msra.mxu0 %v6812
    %7233 = vmatprep.subr.bf16.mxu0 %v6817
    %7234 = vmatpush1.bf16.msra.mxu0 %v6816
    %7235 = vmatprep.subr.bf16.mxu0 %v6821
    %7236 = vmatpush1.bf16.msra.mxu0 %v6820
    %7237 = vmatprep.subr.bf16.mxu0 %v6825
    %7238 = vmatpush1.bf16.msra.mxu0 %v6824
    %7239 = vmatprep.mubr.bf16.mxu0 %v3675
    %7240 = vmatmul.mubr.bf16.gmra.mrb[0].mxu0 %v3674
    %v7241 = vpop.f32.mrb[0].mxu0
    %v7242 = vadd.f32 %v7201, %v7241
    %v7243 = vpop.f32.mrb[0].mxu0
    %v7244 = vadd.f32 %v7203, %v7243
    %v7245 = vpop.f32.mrb[0].mxu0
    %v7246 = vpop.f32.mrb[0].mxu0
    %7247 = vdwg.mxu0
    %7248 = vmatprep.subr.bf16.mxu0 %v6575
    %7249 = vmatpush1.bf16.msra.mxu0 %v6574
    %7250 = vmatprep.subr.bf16.mxu0 %v6579
    %7251 = vmatpush1.bf16.msra.mxu0 %v6578
    %7252 = vmatprep.subr.bf16.mxu0 %v6583
    %7253 = vmatpush1.bf16.msra.mxu0 %v6582
    %7254 = vmatprep.subr.bf16.mxu0 %v6587
    %7255 = vmatpush1.bf16.msra.mxu0 %v6586
    %7256 = vmatprep.subr.bf16.mxu0 %v6591
    %7257 = vmatpush1.bf16.msra.mxu0 %v6590
    %7258 = vmatprep.subr.bf16.mxu0 %v6595
    %7259 = vmatpush1.bf16.msra.mxu0 %v6594
    %7260 = vmatprep.subr.bf16.mxu0 %v6599
    %7261 = vmatpush1.bf16.msra.mxu0 %v6598
    %7262 = vmatprep.subr.bf16.mxu0 %v6603
    %7263 = vmatpush1.bf16.msra.mxu0 %v6602
    %7264 = vmatprep.subr.bf16.mxu0 %v6607
    %7265 = vmatpush1.bf16.msra.mxu0 %v6606
    %7266 = vmatprep.subr.bf16.mxu0 %v6611
    %7267 = vmatpush1.bf16.msra.mxu0 %v6610
    %7268 = vmatprep.subr.bf16.mxu0 %v6615
    %7269 = vmatpush1.bf16.msra.mxu0 %v6614
    %7270 = vmatprep.subr.bf16.mxu0 %v6619
    %7271 = vmatpush1.bf16.msra.mxu0 %v6618
    %7272 = vmatprep.subr.bf16.mxu0 %v6623
    %7273 = vmatpush1.bf16.msra.mxu0 %v6622
    %7274 = vmatprep.subr.bf16.mxu0 %v6627
    %7275 = vmatpush1.bf16.msra.mxu0 %v6626
    %7276 = vmatprep.subr.bf16.mxu0 %v6631
    %7277 = vmatpush1.bf16.msra.mxu0 %v6630
    %7278 = vmatprep.subr.bf16.mxu0 %v6635
    %7279 = vmatpush1.bf16.msra.mxu0 %v6634
    %7280 = vmatprep.mubr.bf16.mxu0 %v3669
    %7281 = vmatmul.mubr.bf16.gmra.mrb[0].mxu0 %v3668
    %v7282 = vpop.f32.mrb[0].mxu0
    %v7283 = vadd.f32 %v5798, %v7282
    %v7284 = vpop.f32.mrb[0].mxu0
    %v7285 = vadd.f32 %v5800, %v7284
    %v7286 = vpop.f32.mrb[0].mxu0
    %v7287 = vpop.f32.mrb[0].mxu0
    %7288 = vdwg.mxu0
    %7289 = vmatprep.subr.bf16.mxu0 %v6639
    %7290 = vmatpush1.bf16.msra.mxu0 %v6638
    %7291 = vmatprep.subr.bf16.mxu0 %v6643
    %7292 = vmatpush1.bf16.msra.mxu0 %v6642
    %7293 = vmatprep.subr.bf16.mxu0 %v6647
    %7294 = vmatpush1.bf16.msra.mxu0 %v6646
    %7295 = vmatprep.subr.bf16.mxu0 %v6651
    %7296 = vmatpush1.bf16.msra.mxu0 %v6650
    %7297 = vmatprep.subr.bf16.mxu0 %v6655
    %7298 = vmatpush1.bf16.msra.mxu0 %v6654
    %7299 = vmatprep.subr.bf16.mxu0 %v6659
    %7300 = vmatpush1.bf16.msra.mxu0 %v6658
    %7301 = vmatprep.subr.bf16.mxu0 %v6663
    %7302 = vmatpush1.bf16.msra.mxu0 %v6662
    %7303 = vmatprep.subr.bf16.mxu0 %v6667
    %7304 = vmatpush1.bf16.msra.mxu0 %v6666
    %7305 = vmatprep.subr.bf16.mxu0 %v6671
    %7306 = vmatpush1.bf16.msra.mxu0 %v6670
    %7307 = vmatprep.subr.bf16.mxu0 %v6675
    %7308 = vmatpush1.bf16.msra.mxu0 %v6674
    %7309 = vmatprep.subr.bf16.mxu0 %v6679
    %7310 = vmatpush1.bf16.msra.mxu0 %v6678
    %7311 = vmatprep.subr.bf16.mxu0 %v6683
    %7312 = vmatpush1.bf16.msra.mxu0 %v6682
    %7313 = vmatprep.subr.bf16.mxu0 %v6687
    %7314 = vmatpush1.bf16.msra.mxu0 %v6686
    %7315 = vmatprep.subr.bf16.mxu0 %v6691
    %7316 = vmatpush1.bf16.msra.mxu0 %v6690
    %7317 = vmatprep.subr.bf16.mxu0 %v6695
    %7318 = vmatpush1.bf16.msra.mxu0 %v6694
    %7319 = vmatprep.subr.bf16.mxu0 %v6699
    %7320 = vmatpush1.bf16.msra.mxu0 %v6698
    %7321 = vmatprep.mubr.bf16.mxu0 %v3671
    %7322 = vmatmul.mubr.bf16.gmra.mrb[0].mxu0 %v3670
    %v7323 = vpop.f32.mrb[0].mxu0
    %v7324 = vadd.f32 %v7283, %v7323
    %v7325 = vpop.f32.mrb[0].mxu0
    %v7326 = vadd.f32 %v7285, %v7325
    %v7327 = vpop.f32.mrb[0].mxu0
    %v7328 = vpop.f32.mrb[0].mxu0
    %7329 = vdwg.mxu0
    %7330 = vmatprep.subr.bf16.mxu0 %v6703
    %7331 = vmatpush1.bf16.msra.mxu0 %v6702
    %7332 = vmatprep.subr.bf16.mxu0 %v6707
    %7333 = vmatpush1.bf16.msra.mxu0 %v6706
    %7334 = vmatprep.subr.bf16.mxu0 %v6711
    %7335 = vmatpush1.bf16.msra.mxu0 %v6710
    %7336 = vmatprep.subr.bf16.mxu0 %v6715
    %7337 = vmatpush1.bf16.msra.mxu0 %v6714
    %7338 = vmatprep.subr.bf16.mxu0 %v6719
    %7339 = vmatpush1.bf16.msra.mxu0 %v6718
    %7340 = vmatprep.subr.bf16.mxu0 %v6723
    %7341 = vmatpush1.bf16.msra.mxu0 %v6722
    %7342 = vmatprep.subr.bf16.mxu0 %v6727
    %7343 = vmatpush1.bf16.msra.mxu0 %v6726
    %7344 = vmatprep.subr.bf16.mxu0 %v6731
    %7345 = vmatpush1.bf16.msra.mxu0 %v6730
    %7346 = vmatprep.subr.bf16.mxu0 %v6735
    %7347 = vmatpush1.bf16.msra.mxu0 %v6734
    %7348 = vmatprep.subr.bf16.mxu0 %v6739
    %7349 = vmatpush1.bf16.msra.mxu0 %v6738
    %7350 = vmatprep.subr.bf16.mxu0 %v6743
    %7351 = vmatpush1.bf16.msra.mxu0 %v6742
    %7352 = vmatprep.subr.bf16.mxu0 %v6747
    %7353 = vmatpush1.bf16.msra.mxu0 %v6746
    %7354 = vmatprep.subr.bf16.mxu0 %v6751
    %7355 = vmatpush1.bf16.msra.mxu0 %v6750
    %7356 = vmatprep.subr.bf16.mxu0 %v6755
    %7357 = vmatpush1.bf16.msra.mxu0 %v6754
    %7358 = vmatprep.subr.bf16.mxu0 %v6759
    %7359 = vmatpush1.bf16.msra.mxu0 %v6758
    %7360 = vmatprep.subr.bf16.mxu0 %v6763
    %7361 = vmatpush1.bf16.msra.mxu0 %v6762
    %7362 = vmatprep.mubr.bf16.mxu0 %v3673
    %7363 = vmatmul.mubr.bf16.gmra.mrb[0].mxu0 %v3672
    %v7364 = vpop.f32.mrb[0].mxu0
    %v7365 = vadd.f32 %v7324, %v7364
    %v7366 = vpop.f32.mrb[0].mxu0
    %v7367 = vadd.f32 %v7326, %v7366
    %v7368 = vpop.f32.mrb[0].mxu0
    %v7369 = vpop.f32.mrb[0].mxu0
    %7370 = vdwg.mxu0
    %7371 = vmatprep.subr.bf16.mxu0 %v6767
    %7372 = vmatpush1.bf16.msra.mxu0 %v6766
    %7373 = vmatprep.subr.bf16.mxu0 %v6771
    %7374 = vmatpush1.bf16.msra.mxu0 %v6770
    %7375 = vmatprep.subr.bf16.mxu0 %v6775
    %7376 = vmatpush1.bf16.msra.mxu0 %v6774
    %7377 = vmatprep.subr.bf16.mxu0 %v6779
    %7378 = vmatpush1.bf16.msra.mxu0 %v6778
    %7379 = vmatprep.subr.bf16.mxu0 %v6783
    %7380 = vmatpush1.bf16.msra.mxu0 %v6782
    %7381 = vmatprep.subr.bf16.mxu0 %v6787
    %7382 = vmatpush1.bf16.msra.mxu0 %v6786
    %7383 = vmatprep.subr.bf16.mxu0 %v6791
    %7384 = vmatpush1.bf16.msra.mxu0 %v6790
    %7385 = vmatprep.subr.bf16.mxu0 %v6795
    %7386 = vmatpush1.bf16.msra.mxu0 %v6794
    %7387 = vmatprep.subr.bf16.mxu0 %v6799
    %7388 = vmatpush1.bf16.msra.mxu0 %v6798
    %7389 = vmatprep.subr.bf16.mxu0 %v6803
    %7390 = vmatpush1.bf16.msra.mxu0 %v6802
    %7391 = vmatprep.subr.bf16.mxu0 %v6807
    %7392 = vmatpush1.bf16.msra.mxu0 %v6806
    %7393 = vmatprep.subr.bf16.mxu0 %v6811
    %7394 = vmatpush1.bf16.msra.mxu0 %v6810
    %7395 = vmatprep.subr.bf16.mxu0 %v6815
    %7396 = vmatpush1.bf16.msra.mxu0 %v6814
    %7397 = vmatprep.subr.bf16.mxu0 %v6819
    %7398 = vmatpush1.bf16.msra.mxu0 %v6818
    %7399 = vmatprep.subr.bf16.mxu0 %v6823
    %7400 = vmatpush1.bf16.msra.mxu0 %v6822
    %7401 = vmatprep.subr.bf16.mxu0 %v6827
    %7402 = vmatpush1.bf16.msra.mxu0 %v6826
    %7403 = vmatprep.mubr.bf16.mxu0 %v3675
    %7404 = vmatmul.mubr.bf16.gmra.mrb[0].mxu0 %v3674
    %v7405 = vpop.f32.mrb[0].mxu0
    %v7406 = vadd.f32 %v7365, %v7405
    %v7407 = vpop.f32.mrb[0].mxu0
    %v7408 = vadd.f32 %v7367, %v7407
    %v7409 = vpop.f32.mrb[0].mxu0
    %v7410 = vpop.f32.mrb[0].mxu0
    %7411 = vdwg.mxu0
    %v7412 = vld [vmem:[#allocation14] sm:$0xf]
    %v7414 = vlaneseq
    %v7415 = vshrl.u32 %v7414, 7
    %v7416 = vsub.s32 0, %v7415
    %v7417 = vrot.slane %v7412, %v7416
    %v7418 = vlaneseq
    %v7419 = vshrl.u32 %v7418, 7
    %v7420 = vsub.s32 1, %v7419
    %v7421 = vrot.slane %v7412, %v7420
    %v7422 = vlaneseq
    %v7423 = vshrl.u32 %v7422, 7
    %v7424 = vsub.s32 2, %v7423
    %v7425 = vrot.slane %v7412, %v7424
    %v7426 = vlaneseq
    %v7427 = vshrl.u32 %v7426, 7
    %v7428 = vsub.s32 3, %v7427
    %v7429 = vrot.slane %v7412, %v7428
    %v7434 = vadd.f32 %v7242, %v7417
    %v7435 = vadd.f32 %v7244, %v7421
    %v7436 = vadd.f32 %v7406, %v7425
    %v7437 = vadd.f32 %v7408, %v7429
    %v7438 = vrot.slane %v7434, 4
    %v7439 = vadd.f32 %v7434, %v7438
    %v7440 = vrot.slane %v7439, 2
    %v7441 = vadd.f32 %v7439, %v7440
    %v7442 = vrot.slane %v7441, 1
    %v7443 = vadd.f32 %v7441, %v7442
    %v7444 = vrot.slane %v7435, 4
    %v7445 = vadd.f32 %v7435, %v7444
    %v7446 = vrot.slane %v7445, 2
    %v7447 = vadd.f32 %v7445, %v7446
    %v7448 = vrot.slane %v7447, 1
    %v7449 = vadd.f32 %v7447, %v7448
    %v7450 = vrot.slane %v7436, 4
    %v7451 = vadd.f32 %v7436, %v7450
    %v7452 = vrot.slane %v7451, 2
    %v7453 = vadd.f32 %v7451, %v7452
    %v7454 = vrot.slane %v7453, 1
    %v7455 = vadd.f32 %v7453, %v7454
    %v7456 = vrot.slane %v7437, 4
    %v7457 = vadd.f32 %v7437, %v7456
    %v7458 = vrot.slane %v7457, 2
    %v7459 = vadd.f32 %v7457, %v7458
    %v7460 = vrot.slane %v7459, 1
    %v7461 = vadd.f32 %v7459, %v7460
    %v7462 = vmul.f32 %v7443, 0.125
    %v7463 = vmul.f32 %v7449, 0.125
    %v7464 = vmul.f32 %v7455, 0.125
    %v7465 = vmul.f32 %v7461, 0.125
    %v7466 = vmul.f32 %v7434, %v7434
    %v7467 = vmul.f32 %v7435, %v7435
    %v7468 = vmul.f32 %v7436, %v7436
    %v7469 = vmul.f32 %v7437, %v7437
    %v7470 = vrot.slane %v7466, 4
    %v7471 = vadd.f32 %v7466, %v7470
    %v7472 = vrot.slane %v7471, 2
    %v7473 = vadd.f32 %v7471, %v7472
    %v7474 = vrot.slane %v7473, 1
    %v7475 = vadd.f32 %v7473, %v7474
    %v7476 = vrot.slane %v7467, 4
    %v7477 = vadd.f32 %v7467, %v7476
    %v7478 = vrot.slane %v7477, 2
    %v7479 = vadd.f32 %v7477, %v7478
    %v7480 = vrot.slane %v7479, 1
    %v7481 = vadd.f32 %v7479, %v7480
    %v7482 = vrot.slane %v7468, 4
    %v7483 = vadd.f32 %v7468, %v7482
    %v7484 = vrot.slane %v7483, 2
    %v7485 = vadd.f32 %v7483, %v7484
    %v7486 = vrot.slane %v7485, 1
    %v7487 = vadd.f32 %v7485, %v7486
    %v7488 = vrot.slane %v7469, 4
    %v7489 = vadd.f32 %v7469, %v7488
    %v7490 = vrot.slane %v7489, 2
    %v7491 = vadd.f32 %v7489, %v7490
    %v7492 = vrot.slane %v7491, 1
    %v7493 = vadd.f32 %v7491, %v7492
    %v7494 = vmul.f32 %v7475, 0.125
    %v7495 = vmul.f32 %v7481, 0.125
    %v7496 = vmul.f32 %v7487, 0.125
    %v7497 = vmul.f32 %v7493, 0.125
    %v7498 = vmul.f32 %v7462, %v7462
    %v7499 = vmul.f32 %v7463, %v7463
    %v7500 = vmul.f32 %v7464, %v7464
    %v7501 = vmul.f32 %v7465, %v7465
    %v7502 = vsub.f32 %v7494, %v7498
    %v7503 = vsub.f32 %v7495, %v7499
    %v7504 = vsub.f32 %v7496, %v7500
    %v7505 = vsub.f32 %v7497, %v7501
    %v7506 = vld [vmem:[#allocation16] sm:$0xf]
    %v7507 = vld [vmem:[#allocation17] sm:$0xf]
    %v7508 = vmax.f32 %v7502, 0.0
    %v7509 = vmax.f32 %v7503, 0.0
    %v7510 = vmax.f32 %v7504, 0.0
    %v7511 = vmax.f32 %v7505, 0.0
    %v7512 = vadd.f32 %v7508, 1e-05
    %v7513 = vadd.f32 %v7509, 1e-05
    %v7514 = vadd.f32 %v7510, 1e-05
    %v7515 = vadd.f32 %v7511, 1e-05
    %v7516 = vrsqrt.pop %v7512
    %v7517 = vrsqrt.pop %v7513
    %v7518 = vrsqrt.pop %v7514
    %v7519 = vrsqrt.pop %v7515
    %v7524 = vcombine.low %v7516, %v7517
    %v7525 = vcombine.low %v7518, %v7519
    %v7527 = vunpack.c.l.s4 1966171168
    %v7528 = vunpack.c.0.s8 %v7527
    %v7529 = vlaneseq
    %v7530 = vshrl.u32 %v7529, 7
    %v7531 = vsub.s32 %v7528, %v7530
    %v7532 = vrot.slane %v7524, %v7531
    %v7534 = vunpack.c.l.s4 1966171168
    %v7535 = vunpack.c.0.s8 %v7534
    %v7536 = vlaneseq
    %v7537 = vshrl.u32 %v7536, 7
    %v7538 = vsub.s32 %v7535, %v7537
    %v7539 = vrot.slane %v7525, %v7538
    %v7540 = vcombine.low %v7532, %v7539
    %v7542 = vunpack.c.l.s4 1966171168
    %v7543 = vunpack.c.0.s8 %v7542
    %v7544 = vlaneseq
    %v7545 = vshrl.u32 %v7544, 7
    %v7546 = vsub.s32 %v7543, %v7545
    %v7547 = vrot.slane %v7540, %v7546
    %v7549 = vmul.f32 %v7506, %v7547
    %v7551 = vlaneseq
    %v7552 = vshrl.u32 %v7551, 7
    %v7553 = vsub.s32 0, %v7552
    %v7554 = vrot.slane %v7549, %v7553
    %v7555 = vlaneseq
    %v7556 = vshrl.u32 %v7555, 7
    %v7557 = vsub.s32 1, %v7556
    %v7558 = vrot.slane %v7549, %v7557
    %v7559 = vlaneseq
    %v7560 = vshrl.u32 %v7559, 7
    %v7561 = vsub.s32 2, %v7560
    %v7562 = vrot.slane %v7549, %v7561
    %v7563 = vlaneseq
    %v7564 = vshrl.u32 %v7563, 7
    %v7565 = vsub.s32 3, %v7564
    %v7566 = vrot.slane %v7549, %v7565
    %v7571 = vmul.f32 %v7462, %v7554
    %v7572 = vmul.f32 %v7463, %v7558
    %v7573 = vmul.f32 %v7464, %v7562
    %v7574 = vmul.f32 %v7465, %v7566
    %v7579 = vcombine.low %v7571, %v7572
    %v7580 = vcombine.low %v7573, %v7574
    %v7582 = vunpack.c.l.s4 1966171168
    %v7583 = vunpack.c.0.s8 %v7582
    %v7584 = vlaneseq
    %v7585 = vshrl.u32 %v7584, 7
    %v7586 = vsub.s32 %v7583, %v7585
    %v7587 = vrot.slane %v7579, %v7586
    %v7589 = vunpack.c.l.s4 1966171168
    %v7590 = vunpack.c.0.s8 %v7589
    %v7591 = vlaneseq
    %v7592 = vshrl.u32 %v7591, 7
    %v7593 = vsub.s32 %v7590, %v7592
    %v7594 = vrot.slane %v7580, %v7593
    %v7595 = vcombine.low %v7587, %v7594
    %v7597 = vunpack.c.l.s4 1966171168
    %v7598 = vunpack.c.0.s8 %v7597
    %v7599 = vlaneseq
    %v7600 = vshrl.u32 %v7599, 7
    %v7601 = vsub.s32 %v7598, %v7600
    %v7602 = vrot.slane %v7595, %v7601
    %v7604 = vsub.f32 %v7507, %v7602
    %v7605 = vmul.f32 %v7434, %v7554
    %v7606 = vmul.f32 %v7435, %v7558
    %v7607 = vmul.f32 %v7436, %v7562
    %v7608 = vmul.f32 %v7437, %v7566
    %v7610 = vlaneseq
    %v7611 = vshrl.u32 %v7610, 7
    %v7612 = vsub.s32 0, %v7611
    %v7613 = vrot.slane %v7604, %v7612
    %v7614 = vlaneseq
    %v7615 = vshrl.u32 %v7614, 7
    %v7616 = vsub.s32 1, %v7615
    %v7617 = vrot.slane %v7604, %v7616
    %v7618 = vlaneseq
    %v7619 = vshrl.u32 %v7618, 7
    %v7620 = vsub.s32 2, %v7619
    %v7621 = vrot.slane %v7604, %v7620
    %v7622 = vlaneseq
    %v7623 = vshrl.u32 %v7622, 7
    %v7624 = vsub.s32 3, %v7623
    %v7625 = vrot.slane %v7604, %v7624
    %v7630 = vadd.f32 %v7605, %v7613
    %v7631 = vadd.f32 %v7606, %v7617
    %v7632 = vadd.f32 %v7607, %v7621
    %v7633 = vadd.f32 %v7608, %v7625
    %v7634 = vmul.f32 %v7630, 0.2
    %v7635 = vmul.f32 %v7631, 0.2
    %v7636 = vmul.f32 %v7632, 0.2
    %v7637 = vmul.f32 %v7633, 0.2
    %v7638 = vmax.f32 %v7630, %v7634
    %v7639 = vmax.f32 %v7631, %v7635
    %v7640 = vmax.f32 %v7632, %v7636
    %v7641 = vmax.f32 %v7633, %v7637
    %v7642 = vpack.c.bf16 %v7638, %v7638
    %v7643 = vpack.c.bf16 %v7639, %v7639
    %v7644 = vpack.c.bf16 %v7640, %v7640
    %v7645 = vpack.c.bf16 %v7641, %v7641
    %v7646 = vld [vmem:[#allocation19] sm:$0xff]
    %v7647 = vld [vmem:[#allocation19 + $0x8] sm:$0xff]
    %v7648 = vld [vmem:[#allocation19 + $0x10] sm:$0xff]
    %v7649 = vld [vmem:[#allocation19 + $0x18] sm:$0xff]
    %v7650 = vld [vmem:[#allocation19 + $0x20] sm:$0xff]
    %v7651 = vld [vmem:[#allocation19 + $0x28] sm:$0xff]
    %v7652 = vld [vmem:[#allocation19 + $0x30] sm:$0xff]
    %v7653 = vld [vmem:[#allocation19 + $0x38] sm:$0xff]
    %v7654 = vld [vmem:[#allocation19 + $0x40] sm:$0xff]
    %v7655 = vld [vmem:[#allocation19 + $0x48] sm:$0xff]
    %v7656 = vld [vmem:[#allocation19 + $0x50] sm:$0xff]
    %v7657 = vld [vmem:[#allocation19 + $0x58] sm:$0xff]
    %v7658 = vld [vmem:[#allocation19 + $0x60] sm:$0xff]
    %v7659 = vld [vmem:[#allocation19 + $0x68] sm:$0xff]
    %v7660 = vld [vmem:[#allocation19 + $0x70] sm:$0xff]
    %v7661 = vld [vmem:[#allocation19 + $0x78] sm:$0xff]
    %v7662 = vld [vmem:[#allocation19 + $0x80] sm:$0xff]
    %v7663 = vld [vmem:[#allocation19 + $0x88] sm:$0xff]
    %v7664 = vld [vmem:[#allocation19 + $0x90] sm:$0xff]
    %v7665 = vld [vmem:[#allocation19 + $0x98] sm:$0xff]
    %v7666 = vld [vmem:[#allocation19 + $0xa0] sm:$0xff]
    %v7667 = vld [vmem:[#allocation19 + $0xa8] sm:$0xff]
    %v7668 = vld [vmem:[#allocation19 + $0xb0] sm:$0xff]
    %v7669 = vld [vmem:[#allocation19 + $0xb8] sm:$0xff]
    %v7670 = vld [vmem:[#allocation19 + $0xc0] sm:$0xff]
    %v7671 = vld [vmem:[#allocation19 + $0xc8] sm:$0xff]
    %v7672 = vld [vmem:[#allocation19 + $0xd0] sm:$0xff]
    %v7673 = vld [vmem:[#allocation19 + $0xd8] sm:$0xff]
    %v7674 = vld [vmem:[#allocation19 + $0xe0] sm:$0xff]
    %v7675 = vld [vmem:[#allocation19 + $0xe8] sm:$0xff]
    %v7676 = vld [vmem:[#allocation19 + $0xf0] sm:$0xff]
    %v7677 = vld [vmem:[#allocation19 + $0xf8] sm:$0xff]
    %v7678 = vld [vmem:[#allocation19 + $0x100] sm:$0xff]
    %v7679 = vld [vmem:[#allocation19 + $0x108] sm:$0xff]
    %v7680 = vld [vmem:[#allocation19 + $0x110] sm:$0xff]
    %v7681 = vld [vmem:[#allocation19 + $0x118] sm:$0xff]
    %v7682 = vld [vmem:[#allocation19 + $0x120] sm:$0xff]
    %v7683 = vld [vmem:[#allocation19 + $0x128] sm:$0xff]
    %v7684 = vld [vmem:[#allocation19 + $0x130] sm:$0xff]
    %v7685 = vld [vmem:[#allocation19 + $0x138] sm:$0xff]
    %v7686 = vld [vmem:[#allocation19 + $0x140] sm:$0xff]
    %v7687 = vld [vmem:[#allocation19 + $0x148] sm:$0xff]
    %v7688 = vld [vmem:[#allocation19 + $0x150] sm:$0xff]
    %v7689 = vld [vmem:[#allocation19 + $0x158] sm:$0xff]
    %v7690 = vld [vmem:[#allocation19 + $0x160] sm:$0xff]
    %v7691 = vld [vmem:[#allocation19 + $0x168] sm:$0xff]
    %v7692 = vld [vmem:[#allocation19 + $0x170] sm:$0xff]
    %v7693 = vld [vmem:[#allocation19 + $0x178] sm:$0xff]
    %v7694 = vld [vmem:[#allocation19 + $0x180] sm:$0xff]
    %v7695 = vld [vmem:[#allocation19 + $0x188] sm:$0xff]
    %v7696 = vld [vmem:[#allocation19 + $0x190] sm:$0xff]
    %v7697 = vld [vmem:[#allocation19 + $0x198] sm:$0xff]
    %v7698 = vld [vmem:[#allocation19 + $0x1a0] sm:$0xff]
    %v7699 = vld [vmem:[#allocation19 + $0x1a8] sm:$0xff]
    %v7700 = vld [vmem:[#allocation19 + $0x1b0] sm:$0xff]
    %v7701 = vld [vmem:[#allocation19 + $0x1b8] sm:$0xff]
    %v7702 = vld [vmem:[#allocation19 + $0x1c0] sm:$0xff]
    %v7703 = vld [vmem:[#allocation19 + $0x1c8] sm:$0xff]
    %v7704 = vld [vmem:[#allocation19 + $0x1d0] sm:$0xff]
    %v7705 = vld [vmem:[#allocation19 + $0x1d8] sm:$0xff]
    %v7706 = vld [vmem:[#allocation19 + $0x1e0] sm:$0xff]
    %v7707 = vld [vmem:[#allocation19 + $0x1e8] sm:$0xff]
    %v7708 = vld [vmem:[#allocation19 + $0x1f0] sm:$0xff]
    %v7709 = vld [vmem:[#allocation19 + $0x1f8] sm:$0xff]
    %v7710 = vld [vmem:[#allocation20] sm:$0x3]
    %v7712 = vlaneseq
    %v7713 = vshrl.u32 %v7712, 7
    %v7714 = vsub.s32 0, %v7713
    %v7715 = vrot.slane %v7710, %v7714
    %v7716 = vlaneseq
    %v7717 = vshrl.u32 %v7716, 7
    %v7718 = vsub.s32 1, %v7717
    %v7719 = vrot.slane %v7710, %v7718
    %v7786 = vunpack.c.l.b16 %v7646
    %v7787 = vunpack.c.h.b16 %v7646
    %v7788 = vunpack.c.l.b16 %v7647
    %v7789 = vunpack.c.h.b16 %v7647
    %v7790 = vunpack.c.l.b16 %v7648
    %v7791 = vunpack.c.h.b16 %v7648
    %v7792 = vunpack.c.l.b16 %v7649
    %v7793 = vunpack.c.h.b16 %v7649
    %v7794 = vunpack.c.l.b16 %v7650
    %v7795 = vunpack.c.h.b16 %v7650
    %v7796 = vunpack.c.l.b16 %v7651
    %v7797 = vunpack.c.h.b16 %v7651
    %v7798 = vunpack.c.l.b16 %v7652
    %v7799 = vunpack.c.h.b16 %v7652
    %v7800 = vunpack.c.l.b16 %v7653
    %v7801 = vunpack.c.h.b16 %v7653
    %v7802 = vunpack.c.l.b16 %v7654
    %v7803 = vunpack.c.h.b16 %v7654
    %v7804 = vunpack.c.l.b16 %v7655
    %v7805 = vunpack.c.h.b16 %v7655
    %v7806 = vunpack.c.l.b16 %v7656
    %v7807 = vunpack.c.h.b16 %v7656
    %v7808 = vunpack.c.l.b16 %v7657
    %v7809 = vunpack.c.h.b16 %v7657
    %v7810 = vunpack.c.l.b16 %v7658
    %v7811 = vunpack.c.h.b16 %v7658
    %v7812 = vunpack.c.l.b16 %v7659
    %v7813 = vunpack.c.h.b16 %v7659
    %v7814 = vunpack.c.l.b16 %v7660
    %v7815 = vunpack.c.h.b16 %v7660
    %v7816 = vunpack.c.l.b16 %v7661
    %v7817 = vunpack.c.h.b16 %v7661
    %v7818 = vunpack.c.l.b16 %v7662
    %v7819 = vunpack.c.h.b16 %v7662
    %v7820 = vunpack.c.l.b16 %v7663
    %v7821 = vunpack.c.h.b16 %v7663
    %v7822 = vunpack.c.l.b16 %v7664
    %v7823 = vunpack.c.h.b16 %v7664
    %v7824 = vunpack.c.l.b16 %v7665
    %v7825 = vunpack.c.h.b16 %v7665
    %v7826 = vunpack.c.l.b16 %v7666
    %v7827 = vunpack.c.h.b16 %v7666
    %v7828 = vunpack.c.l.b16 %v7667
    %v7829 = vunpack.c.h.b16 %v7667
    %v7830 = vunpack.c.l.b16 %v7668
    %v7831 = vunpack.c.h.b16 %v7668
    %v7832 = vunpack.c.l.b16 %v7669
    %v7833 = vunpack.c.h.b16 %v7669
    %v7834 = vunpack.c.l.b16 %v7670
    %v7835 = vunpack.c.h.b16 %v7670
    %v7836 = vunpack.c.l.b16 %v7671
    %v7837 = vunpack.c.h.b16 %v7671
    %v7838 = vunpack.c.l.b16 %v7672
    %v7839 = vunpack.c.h.b16 %v7672
    %v7840 = vunpack.c.l.b16 %v7673
    %v7841 = vunpack.c.h.b16 %v7673
    %v7842 = vunpack.c.l.b16 %v7674
    %v7843 = vunpack.c.h.b16 %v7674
    %v7844 = vunpack.c.l.b16 %v7675
    %v7845 = vunpack.c.h.b16 %v7675
    %v7846 = vunpack.c.l.b16 %v7676
    %v7847 = vunpack.c.h.b16 %v7676
    %v7848 = vunpack.c.l.b16 %v7677
    %v7849 = vunpack.c.h.b16 %v7677
    %v7850 = vunpack.c.l.b16 %v7678
    %v7851 = vunpack.c.h.b16 %v7678
    %v7852 = vunpack.c.l.b16 %v7679
    %v7853 = vunpack.c.h.b16 %v7679
    %v7854 = vunpack.c.l.b16 %v7680
    %v7855 = vunpack.c.h.b16 %v7680
    %v7856 = vunpack.c.l.b16 %v7681
    %v7857 = vunpack.c.h.b16 %v7681
    %v7858 = vunpack.c.l.b16 %v7682
    %v7859 = vunpack.c.h.b16 %v7682
    %v7860 = vunpack.c.l.b16 %v7683
    %v7861 = vunpack.c.h.b16 %v7683
    %v7862 = vunpack.c.l.b16 %v7684
    %v7863 = vunpack.c.h.b16 %v7684
    %v7864 = vunpack.c.l.b16 %v7685
    %v7865 = vunpack.c.h.b16 %v7685
    %v7866 = vunpack.c.l.b16 %v7686
    %v7867 = vunpack.c.h.b16 %v7686
    %v7868 = vunpack.c.l.b16 %v7687
    %v7869 = vunpack.c.h.b16 %v7687
    %v7870 = vunpack.c.l.b16 %v7688
    %v7871 = vunpack.c.h.b16 %v7688
    %v7872 = vunpack.c.l.b16 %v7689
    %v7873 = vunpack.c.h.b16 %v7689
    %v7874 = vunpack.c.l.b16 %v7690
    %v7875 = vunpack.c.h.b16 %v7690
    %v7876 = vunpack.c.l.b16 %v7691
    %v7877 = vunpack.c.h.b16 %v7691
    %v7878 = vunpack.c.l.b16 %v7692
    %v7879 = vunpack.c.h.b16 %v7692
    %v7880 = vunpack.c.l.b16 %v7693
    %v7881 = vunpack.c.h.b16 %v7693
    %v7882 = vunpack.c.l.b16 %v7694
    %v7883 = vunpack.c.h.b16 %v7694
    %v7884 = vunpack.c.l.b16 %v7695
    %v7885 = vunpack.c.h.b16 %v7695
    %v7886 = vunpack.c.l.b16 %v7696
    %v7887 = vunpack.c.h.b16 %v7696
    %v7888 = vunpack.c.l.b16 %v7697
    %v7889 = vunpack.c.h.b16 %v7697
    %v7890 = vunpack.c.l.b16 %v7698
    %v7891 = vunpack.c.h.b16 %v7698
    %v7892 = vunpack.c.l.b16 %v7699
    %v7893 = vunpack.c.h.b16 %v7699
    %v7894 = vunpack.c.l.b16 %v7700
    %v7895 = vunpack.c.h.b16 %v7700
    %v7896 = vunpack.c.l.b16 %v7701
    %v7897 = vunpack.c.h.b16 %v7701
    %v7898 = vunpack.c.l.b16 %v7702
    %v7899 = vunpack.c.h.b16 %v7702
    %v7900 = vunpack.c.l.b16 %v7703
    %v7901 = vunpack.c.h.b16 %v7703
    %v7902 = vunpack.c.l.b16 %v7704
    %v7903 = vunpack.c.h.b16 %v7704
    %v7904 = vunpack.c.l.b16 %v7705
    %v7905 = vunpack.c.h.b16 %v7705
    %v7906 = vunpack.c.l.b16 %v7706
    %v7907 = vunpack.c.h.b16 %v7706
    %v7908 = vunpack.c.l.b16 %v7707
    %v7909 = vunpack.c.h.b16 %v7707
    %v7910 = vunpack.c.l.b16 %v7708
    %v7911 = vunpack.c.h.b16 %v7708
    %v7912 = vunpack.c.l.b16 %v7709
    %v7913 = vunpack.c.h.b16 %v7709
    %v7914 = vpack.c.b16 %v7788, %v7786
    %v7915 = vpack.c.b16 %v7789, %v7787
    %v7916 = vpack.c.b16 %v7792, %v7790
    %v7917 = vpack.c.b16 %v7793, %v7791
    %v7918 = vpack.c.b16 %v7796, %v7794
    %v7919 = vpack.c.b16 %v7797, %v7795
    %v7920 = vpack.c.b16 %v7800, %v7798
    %v7921 = vpack.c.b16 %v7801, %v7799
    %v7922 = vpack.c.b16 %v7804, %v7802
    %v7923 = vpack.c.b16 %v7805, %v7803
    %v7924 = vpack.c.b16 %v7808, %v7806
    %v7925 = vpack.c.b16 %v7809, %v7807
    %v7926 = vpack.c.b16 %v7812, %v7810
    %v7927 = vpack.c.b16 %v7813, %v7811
    %v7928 = vpack.c.b16 %v7816, %v7814
    %v7929 = vpack.c.b16 %v7817, %v7815
    %v7930 = vpack.c.b16 %v7820, %v7818
    %v7931 = vpack.c.b16 %v7821, %v7819
    %v7932 = vpack.c.b16 %v7824, %v7822
    %v7933 = vpack.c.b16 %v7825, %v7823
    %v7934 = vpack.c.b16 %v7828, %v7826
    %v7935 = vpack.c.b16 %v7829, %v7827
    %v7936 = vpack.c.b16 %v7832, %v7830
    %v7937 = vpack.c.b16 %v7833, %v7831
    %v7938 = vpack.c.b16 %v7836, %v7834
    %v7939 = vpack.c.b16 %v7837, %v7835
    %v7940 = vpack.c.b16 %v7840, %v7838
    %v7941 = vpack.c.b16 %v7841, %v7839
    %v7942 = vpack.c.b16 %v7844, %v7842
    %v7943 = vpack.c.b16 %v7845, %v7843
    %v7944 = vpack.c.b16 %v7848, %v7846
    %v7945 = vpack.c.b16 %v7849, %v7847
    %v7946 = vpack.c.b16 %v7852, %v7850
    %v7947 = vpack.c.b16 %v7853, %v7851
    %v7948 = vpack.c.b16 %v7856, %v7854
    %v7949 = vpack.c.b16 %v7857, %v7855
    %v7950 = vpack.c.b16 %v7860, %v7858
    %v7951 = vpack.c.b16 %v7861, %v7859
    %v7952 = vpack.c.b16 %v7864, %v7862
    %v7953 = vpack.c.b16 %v7865, %v7863
    %v7954 = vpack.c.b16 %v7868, %v7866
    %v7955 = vpack.c.b16 %v7869, %v7867
    %v7956 = vpack.c.b16 %v7872, %v7870
    %v7957 = vpack.c.b16 %v7873, %v7871
    %v7958 = vpack.c.b16 %v7876, %v7874
    %v7959 = vpack.c.b16 %v7877, %v7875
    %v7960 = vpack.c.b16 %v7880, %v7878
    %v7961 = vpack.c.b16 %v7881, %v7879
    %v7962 = vpack.c.b16 %v7884, %v7882
    %v7963 = vpack.c.b16 %v7885, %v7883
    %v7964 = vpack.c.b16 %v7888, %v7886
    %v7965 = vpack.c.b16 %v7889, %v7887
    %v7966 = vpack.c.b16 %v7892, %v7890
    %v7967 = vpack.c.b16 %v7893, %v7891
    %v7968 = vpack.c.b16 %v7896, %v7894
    %v7969 = vpack.c.b16 %v7897, %v7895
    %v7970 = vpack.c.b16 %v7900, %v7898
    %v7971 = vpack.c.b16 %v7901, %v7899
    %v7972 = vpack.c.b16 %v7904, %v7902
    %v7973 = vpack.c.b16 %v7905, %v7903
    %v7974 = vpack.c.b16 %v7908, %v7906
    %v7975 = vpack.c.b16 %v7909, %v7907
    %v7976 = vpack.c.b16 %v7912, %v7910
    %v7977 = vpack.c.b16 %v7913, %v7911
    %8042 = vmatprep.subr.bf16.mxu0 %v7915
    %8043 = vmatpush1.bf16.msra.mxu0 %v7914
    %8044 = vmatprep.subr.bf16.mxu0 %v7917
    %8045 = vmatpush1.bf16.msra.mxu0 %v7916
    %8046 = vmatprep.subr.bf16.mxu0 %v7919
    %8047 = vmatpush1.bf16.msra.mxu0 %v7918
    %8048 = vmatprep.subr.bf16.mxu0 %v7921
    %8049 = vmatpush1.bf16.msra.mxu0 %v7920
    %8050 = vmatprep.subr.bf16.mxu0 %v7923
    %8051 = vmatpush1.bf16.msra.mxu0 %v7922
    %8052 = vmatprep.subr.bf16.mxu0 %v7925
    %8053 = vmatpush1.bf16.msra.mxu0 %v7924
    %8054 = vmatprep.subr.bf16.mxu0 %v7927
    %8055 = vmatpush1.bf16.msra.mxu0 %v7926
    %8056 = vmatprep.subr.bf16.mxu0 %v7929
    %8057 = vmatpush1.bf16.msra.mxu0 %v7928
    %8058 = vmatprep.subr.bf16.mxu0 %v7931
    %8059 = vmatpush1.bf16.msra.mxu0 %v7930
    %8060 = vmatprep.subr.bf16.mxu0 %v7933
    %8061 = vmatpush1.bf16.msra.mxu0 %v7932
    %8062 = vmatprep.subr.bf16.mxu0 %v7935
    %8063 = vmatpush1.bf16.msra.mxu0 %v7934
    %8064 = vmatprep.subr.bf16.mxu0 %v7937
    %8065 = vmatpush1.bf16.msra.mxu0 %v7936
    %8066 = vmatprep.subr.bf16.mxu0 %v7939
    %8067 = vmatpush1.bf16.msra.mxu0 %v7938
    %8068 = vmatprep.subr.bf16.mxu0 %v7941
    %8069 = vmatpush1.bf16.msra.mxu0 %v7940
    %8070 = vmatprep.subr.bf16.mxu0 %v7943
    %8071 = vmatpush1.bf16.msra.mxu0 %v7942
    %8072 = vmatprep.subr.bf16.mxu0 %v7945
    %8073 = vmatpush1.bf16.msra.mxu0 %v7944
    %8074 = vmatprep.mubr.bf16.mxu0 %v7643
    %8075 = vmatmul.mubr.bf16.gmra.mrb[0].mxu0 %v7642
    %v8076 = vpop.f32.mrb[0].mxu0
    %v8077 = vadd.f32 %v7715, %v8076
    %v8078 = vpop.f32.mrb[0].mxu0
    %v8079 = vadd.f32 %v7719, %v8078
    %v8080 = vpop.f32.mrb[0].mxu0
    %v8081 = vpop.f32.mrb[0].mxu0
    %8082 = vdwg.mxu0
    %8083 = vmatprep.subr.bf16.mxu0 %v7947
    %8084 = vmatpush1.bf16.msra.mxu0 %v7946
    %8085 = vmatprep.subr.bf16.mxu0 %v7949
    %8086 = vmatpush1.bf16.msra.mxu0 %v7948
    %8087 = vmatprep.subr.bf16.mxu0 %v7951
    %8088 = vmatpush1.bf16.msra.mxu0 %v7950
    %8089 = vmatprep.subr.bf16.mxu0 %v7953
    %8090 = vmatpush1.bf16.msra.mxu0 %v7952
    %8091 = vmatprep.subr.bf16.mxu0 %v7955
    %8092 = vmatpush1.bf16.msra.mxu0 %v7954
    %8093 = vmatprep.subr.bf16.mxu0 %v7957
    %8094 = vmatpush1.bf16.msra.mxu0 %v7956
    %8095 = vmatprep.subr.bf16.mxu0 %v7959
    %8096 = vmatpush1.bf16.msra.mxu0 %v7958
    %8097 = vmatprep.subr.bf16.mxu0 %v7961
    %8098 = vmatpush1.bf16.msra.mxu0 %v7960
    %8099 = vmatprep.subr.bf16.mxu0 %v7963
    %8100 = vmatpush1.bf16.msra.mxu0 %v7962
    %8101 = vmatprep.subr.bf16.mxu0 %v7965
    %8102 = vmatpush1.bf16.msra.mxu0 %v7964
    %8103 = vmatprep.subr.bf16.mxu0 %v7967
    %8104 = vmatpush1.bf16.msra.mxu0 %v7966
    %8105 = vmatprep.subr.bf16.mxu0 %v7969
    %8106 = vmatpush1.bf16.msra.mxu0 %v7968
    %8107 = vmatprep.subr.bf16.mxu0 %v7971
    %8108 = vmatpush1.bf16.msra.mxu0 %v7970
    %8109 = vmatprep.subr.bf16.mxu0 %v7973
    %8110 = vmatpush1.bf16.msra.mxu0 %v7972
    %8111 = vmatprep.subr.bf16.mxu0 %v7975
    %8112 = vmatpush1.bf16.msra.mxu0 %v7974
    %8113 = vmatprep.subr.bf16.mxu0 %v7977
    %8114 = vmatpush1.bf16.msra.mxu0 %v7976
    %8115 = vmatprep.mubr.bf16.mxu0 %v7645
    %8116 = vmatmul.mubr.bf16.gmra.mrb[0].mxu0 %v7644
    %v8117 = vpop.f32.mrb[0].mxu0
    %v8118 = vadd.f32 %v8077, %v8117
    %v8119 = vpop.f32.mrb[0].mxu0
    %v8120 = vadd.f32 %v8079, %v8119
    %v8121 = vpop.f32.mrb[0].mxu0
    %v8122 = vpop.f32.mrb[0].mxu0
    %8123 = vdwg.mxu0
    %v8124 = vrot.slane %v8118, 4
    %v8125 = vadd.f32 %v8118, %v8124
    %v8126 = vrot.slane %v8125, 2
    %v8127 = vadd.f32 %v8125, %v8126
    %v8128 = vrot.slane %v8127, 1
    %v8129 = vadd.f32 %v8127, %v8128
    %v8130 = vrot.slane %v8120, 4
    %v8131 = vadd.f32 %v8120, %v8130
    %v8132 = vrot.slane %v8131, 2
    %v8133 = vadd.f32 %v8131, %v8132
    %v8134 = vrot.slane %v8133, 1
    %v8135 = vadd.f32 %v8133, %v8134
    %v8136 = vmul.f32 %v8129, 0.125
    %v8137 = vmul.f32 %v8135, 0.125
    %v8138 = vmul.f32 %v8118, %v8118
    %v8139 = vmul.f32 %v8120, %v8120
    %v8140 = vrot.slane %v8138, 4
    %v8141 = vadd.f32 %v8138, %v8140
    %v8142 = vrot.slane %v8141, 2
    %v8143 = vadd.f32 %v8141, %v8142
    %v8144 = vrot.slane %v8143, 1
    %v8145 = vadd.f32 %v8143, %v8144
    %v8146 = vrot.slane %v8139, 4
    %v8147 = vadd.f32 %v8139, %v8146
    %v8148 = vrot.slane %v8147, 2
    %v8149 = vadd.f32 %v8147, %v8148
    %v8150 = vrot.slane %v8149, 1
    %v8151 = vadd.f32 %v8149, %v8150
    %v8152 = vmul.f32 %v8145, 0.125
    %v8153 = vmul.f32 %v8151, 0.125
    %v8154 = vmul.f32 %v8136, %v8136
    %v8155 = vmul.f32 %v8137, %v8137
    %v8156 = vsub.f32 %v8152, %v8154
    %v8157 = vsub.f32 %v8153, %v8155
    %v8158 = vld [vmem:[#allocation22] sm:$0x3]
    %v8159 = vld [vmem:[#allocation23] sm:$0x3]
    %v8160 = vmax.f32 %v8156, 0.0
    %v8161 = vmax.f32 %v8157, 0.0
    %v8162 = vadd.f32 %v8160, 1e-05
    %v8163 = vadd.f32 %v8161, 1e-05
    %v8164 = vrsqrt.pop %v8162
    %v8165 = vrsqrt.pop %v8163
    %v8168 = vcombine.low %v8164, %v8165
    %v8170 = vunpack.c.l.s4 1966171168
    %v8171 = vunpack.c.0.s8 %v8170
    %v8172 = vlaneseq
    %v8173 = vshrl.u32 %v8172, 7
    %v8174 = vsub.s32 %v8171, %v8173
    %v8175 = vrot.slane %v8168, %v8174
    %v8177 = vunpack.c.l.s4 1966171168
    %v8178 = vunpack.c.0.s8 %v8177
    %v8179 = vlaneseq
    %v8180 = vshrl.u32 %v8179, 7
    %v8181 = vsub.s32 %v8178, %v8180
    %v8182 = vrot.slane %v8175, %v8181
    %v8184 = vmul.f32 %v8158, %v8182
    %v8186 = vlaneseq
    %v8187 = vshrl.u32 %v8186, 7
    %v8188 = vsub.s32 0, %v8187
    %v8189 = vrot.slane %v8184, %v8188
    %v8190 = vlaneseq
    %v8191 = vshrl.u32 %v8190, 7
    %v8192 = vsub.s32 1, %v8191
    %v8193 = vrot.slane %v8184, %v8192
    %v8196 = vmul.f32 %v8136, %v8189
    %v8197 = vmul.f32 %v8137, %v8193
    %v8200 = vcombine.low %v8196, %v8197
    %v8202 = vunpack.c.l.s4 1966171168
    %v8203 = vunpack.c.0.s8 %v8202
    %v8204 = vlaneseq
    %v8205 = vshrl.u32 %v8204, 7
    %v8206 = vsub.s32 %v8203, %v8205
    %v8207 = vrot.slane %v8200, %v8206
    %v8209 = vunpack.c.l.s4 1966171168
    %v8210 = vunpack.c.0.s8 %v8209
    %v8211 = vlaneseq
    %v8212 = vshrl.u32 %v8211, 7
    %v8213 = vsub.s32 %v8210, %v8212
    %v8214 = vrot.slane %v8207, %v8213
    %v8216 = vsub.f32 %v8159, %v8214
    %v8217 = vmul.f32 %v8118, %v8189
    %v8218 = vmul.f32 %v8120, %v8193
    %v8220 = vlaneseq
    %v8221 = vshrl.u32 %v8220, 7
    %v8222 = vsub.s32 0, %v8221
    %v8223 = vrot.slane %v8216, %v8222
    %v8224 = vlaneseq
    %v8225 = vshrl.u32 %v8224, 7
    %v8226 = vsub.s32 1, %v8225
    %v8227 = vrot.slane %v8216, %v8226
    %v8230 = vadd.f32 %v8217, %v8223
    %v8231 = vadd.f32 %v8218, %v8227
    %v8232 = vmul.f32 %v8230, 0.2
    %v8233 = vmul.f32 %v8231, 0.2
    %v8234 = vmax.f32 %v8230, %v8232
    %v8235 = vmax.f32 %v8231, %v8233
    %v8236 = vld [vmem:[#allocation25] sm:$0x3]
    %v8238 = vlaneseq
    %v8239 = vshrl.u32 %v8238, 7
    %v8240 = vsub.s32 0, %v8239
    %v8241 = vrot.slane %v8236, %v8240
    %v8242 = vlaneseq
    %v8243 = vshrl.u32 %v8242, 7
    %v8244 = vsub.s32 1, %v8243
    %v8245 = vrot.slane %v8236, %v8244
    %v8248 = vmul.f32 %v8234, %v8241
    %v8249 = vmul.f32 %v8235, %v8245
    %v8250 = vadd.f32 %v8248, %v8249
    %8251 = vadd.xlane.f32.xlu0 %v8250
    %v8252 = vpop.xlane.xlu0 %8251
    %v8253 = vld [vmem:[#allocation2] sm:$0x1]
    %v8255 = vlaneseq
    %v8256 = vshrl.u32 %v8255, 7
    %v8257 = vsub.s32 0, %v8256
    %v8258 = vrot.slane %v8253, %v8257
    %v8260 = vadd.f32 %v8252, %v8258
    %v8261 = vsub.f32 0.0, %v8260
    %v8262 = vmul.f32 %v8261, 1.442695
    %v8263 = vpow.pop %v8262
    %v8264 = vadd.f32 %v8263, 1.0
    %v8265 = vrcp.pop %v8264
    %v8266 = vmul.f32 1.0, %v8265
    %vm8267 = vcmask 7168
    %8268 = vst.msk [vmem:[%s17] sm:$0xff] %vm8267, %v8266
    // Predicated region
    $region130: #{tpu_custom_call.1} parent=1 // pred_check
      _
    $region131: #{tpu_custom_call.1} parent=1 // pred_check_branch
      %8270 = sbr.rel (0) target = $region133
    $region132: #{tpu_custom_call.1} parent=1 // pred_region
      _
    $region133: #{tpu_custom_call.1} parent=1 // pred_fallthru
      _
    // Predicated region
    $region134: #{tpu_custom_call.1} parent=1 // pred_check
      _
    $region135: #{tpu_custom_call.1} parent=1 // pred_check_branch
      %8272 = sbr.rel (0) target = $region137
    $region136: #{tpu_custom_call.1} parent=1 // pred_region
      _
    $region137: #{tpu_custom_call.1} parent=1 // pred_fallthru
      _
    %8273 = vsyncpa [#allocation4], 1
    %8274 = vsyncpa [#allocation6], 1
    %8275 = vsyncpa [#allocation9], 1
    %8276 = vsyncpa [#allocation12], 1
    %8277 = vsyncpa [#allocation15], 1
    %8278 = vsyncpa [#allocation18], 1
    %8279 = vsyncpa [#allocation21], 1
    %8280 = vsyncpa [#allocation24], 1

</llo_original>
